<compile_context>
chip_gen: v6e
topology: v6e:2x2x1
jax: 0.10.0
libtpu: 0.0.40
codegen_flags: <defaults>
</compile_context>

<pallas_src>
import jax
import jax.numpy as jnp
import numpy as np
from jax.experimental import pallas as pl
from jax.experimental.pallas import tpu as pltpu


# ---------------------------------------------------------------------------
# Fused Bottleneck kernel (one grid step == one batch element's full volume)
# ---------------------------------------------------------------------------
def _bottleneck_kernel(x_ref, w1_ref, w2_ref, w3_ref,
                       b1_ref, b2_ref, b3_ref, o_ref, h1_pad):
    _, D, H, W, Cin = x_ref.shape
    planes = w1_ref.shape[1]
    cout = w3_ref.shape[1]
    rows = D * H * W
    bf16 = jnp.bfloat16

    # Residual source (kept in f32 for an exact residual add).
    x2d = x_ref[0].reshape(rows, Cin)

    # --- stage 1: conv1 (1x1x1) + bn1 + relu  (BN scale folded into w1) ------
    h1 = jnp.dot(x2d.astype(bf16), w1_ref[...],
                 preferred_element_type=jnp.float32)
    h1 = jnp.maximum(h1 + b1_ref[...], 0.0)

    # Zero-padded halo buffer in VMEM: conv2 zero-pads its *input* (= h1).
    h1_pad[...] = jnp.zeros_like(h1_pad)
    h1_pad[1:D + 1, 1:H + 1, 1:W + 1, :] = h1.reshape(D, H, W, planes)

    # --- stage 2: conv2 (3x3x3, pad=1, stride=1) + bn2 + relu ----------------
    # 27 shifted windows of the halo'd h1, each a (rows, planes) matmul,
    # accumulated in f32.  No im2col tensor is ever materialized.
    acc = jnp.zeros((rows, planes), jnp.float32)
    k = 0
    for kd in range(3):
        for kh in range(3):
            for kw in range(3):
                patch = h1_pad[kd:kd + D, kh:kh + H, kw:kw + W, :]
                patch = patch.reshape(rows, planes).astype(bf16)
                acc = acc + jnp.dot(patch, w2_ref[k],
                                    preferred_element_type=jnp.float32)
                k += 1
    h2 = jnp.maximum(acc + b2_ref[...], 0.0)

    # --- stage 3: conv3 (1x1x1) + bn3 + residual + relu ----------------------
    out = jnp.dot(h2.astype(bf16), w3_ref[...],
                  preferred_element_type=jnp.float32)
    out = jnp.maximum(out + b3_ref[...] + x2d, 0.0)
    o_ref[0] = out.reshape(D, H, W, cout).astype(o_ref.dtype)


# ---------------------------------------------------------------------------
# Wrapper
# ---------------------------------------------------------------------------
def bottleneck_forward(x_ndhwc, params):
    """x_ndhwc: (N, D, H, W, Cin) float32.  Returns (N, D, H, W, Cin)."""
    N, D, H, W, Cin = x_ndhwc.shape
    planes = params["w1"].shape[1]
    cout3 = params["w3"].shape[1]

    # Identity residual path requires inplanes == planes * expansion.
    assert Cin == cout3, "identity residual needs inplanes == planes*expansion"
    # Layout-friendly demo constraints (sublane / lane alignment).
    assert W % 8 == 0, "W must be a multiple of 8 (f32 sublane tile)"

    rows_total = N * D * H * W
    flops = 2 * rows_total * (Cin * planes + 27 * planes * planes + planes * cout3)
    param_bytes = sum(int(np.prod(p.shape)) * p.dtype.itemsize
                      for p in params.values())
    bytes_accessed = int(x_ndhwc.size) * 4 + rows_total * cout3 * 4 + param_bytes

    return pl.pallas_call(
        _bottleneck_kernel,
        out_shape=jax.ShapeDtypeStruct((N, D, H, W, cout3), x_ndhwc.dtype),
        grid=(N,),
        in_specs=[
            pl.BlockSpec((1, D, H, W, Cin), lambda n: (n, 0, 0, 0, 0)),
            pl.BlockSpec((Cin, planes), lambda n: (0, 0)),
            pl.BlockSpec((27, planes, planes), lambda n: (0, 0, 0)),
            pl.BlockSpec((planes, cout3), lambda n: (0, 0)),
            pl.BlockSpec((1, planes), lambda n: (0, 0)),
            pl.BlockSpec((1, planes), lambda n: (0, 0)),
            pl.BlockSpec((1, cout3), lambda n: (0, 0)),
        ],
        out_specs=pl.BlockSpec((1, D, H, W, cout3), lambda n: (n, 0, 0, 0, 0)),
        scratch_shapes=[pltpu.VMEM((D + 2, H + 2, W + 2, planes), jnp.float32)],
        compiler_params=pltpu.CompilerParams(dimension_semantics=("parallel",)),
        cost_estimate=pl.CostEstimate(flops=int(flops), transcendentals=0,
                                      bytes_accessed=int(bytes_accessed)),
    )(x_ndhwc, params["w1"], params["w2"], params["w3"],
      params["b1"], params["b2"], params["b3"])


# ---------------------------------------------------------------------------
# Pure-JAX reference (same math, same bf16 casts / accumulation order)
# ---------------------------------------------------------------------------
def bottleneck_reference(x_ndhwc, params):
    N, D, H, W, Cin = x_ndhwc.shape
    planes = params["w1"].shape[1]
    rows = N * D * H * W
    bf16 = jnp.bfloat16

    x2d = x_ndhwc.reshape(rows, Cin)
    h1 = jnp.maximum(
        jnp.dot(x2d.astype(bf16), params["w1"],
                preferred_element_type=jnp.float32) + params["b1"], 0.0)
    h1p = jnp.pad(h1.reshape(N, D, H, W, planes),
                  ((0, 0), (1, 1), (1, 1), (1, 1), (0, 0)))
    acc = jnp.zeros((rows, planes), jnp.float32)
    k = 0
    for kd in range(3):
        for kh in range(3):
            for kw in range(3):
                patch = h1p[:, kd:kd + D, kh:kh + H, kw:kw + W, :]
                patch = patch.reshape(rows, planes).astype(bf16)
                acc = acc + jnp.dot(patch, params["w2"][k],
                                    preferred_element_type=jnp.float32)
                k += 1
    h2 = jnp.maximum(acc + params["b2"], 0.0)
    out = jnp.dot(h2.astype(bf16), params["w3"],
                  preferred_element_type=jnp.float32)
    out = jnp.maximum(out + params["b3"] + x2d, 0.0)
    return out.reshape(N, D, H, W, Cin)


# ---------------------------------------------------------------------------
# Deterministic synthetic parameters (shapes from Bottleneck.__init__),
# with eval-mode BN folded: scale goes into the weight, shift stays as bias.
# ---------------------------------------------------------------------------
def make_params(key, inplanes, planes, expansion=4, eps=1e-5):
    cout3 = planes * expansion
    ks = jax.random.split(key, 15)

    def bn_fold(kg, kb, km, kv, c):
        gamma = 1.0 + 0.1 * jax.random.normal(kg, (c,), jnp.float32)
        beta = 0.1 * jax.random.normal(kb, (c,), jnp.float32)
        mean = 0.05 * jax.random.normal(km, (c,), jnp.float32)
        var = jnp.abs(0.5 + 0.1 * jax.random.normal(kv, (c,), jnp.float32))
        scale = gamma / jnp.sqrt(var + eps)
        bias = beta - mean * scale
        return scale, bias

    # Conv weights stored in matmul layout:
    #   w1: (Cin, planes); w2: (27, planes, planes) with (kd,kh,kw)-major rows;
    #   w3: (planes, 4*planes)
    w1 = 0.1 * jax.random.normal(ks[0], (inplanes, planes), jnp.float32)
    w2 = 0.05 * jax.random.normal(ks[1], (27, planes, planes), jnp.float32)
    w3 = 0.1 * jax.random.normal(ks[2], (planes, cout3), jnp.float32)

    s1, b1 = bn_fold(ks[3], ks[4], ks[5], ks[6], planes)
    s2, b2 = bn_fold(ks[7], ks[8], ks[9], ks[10], planes)
    s3, b3 = bn_fold(ks[11], ks[12], ks[13], ks[14], cout3)

    # Fold BN scale into the weights; cast weights to bf16 for the MXU.
    w1 = (w1 * s1[None, :]).astype(jnp.bfloat16)
    w2 = (w2 * s2[None, None, :]).astype(jnp.bfloat16)
    w3 = (w3 * s3[None, :]).astype(jnp.bfloat16)

    return dict(w1=w1, w2=w2, w3=w3,
                b1=b1.reshape(1, planes),
                b2=b2.reshape(1, planes),
                b3=b3.reshape(1, cout3))


if __name__ == "__main__":
    key = jax.random.PRNGKey(0)
    k_x, k_p = jax.random.split(key)

    # PyTorch module input is NCDHW.  Pick inplanes = planes*expansion so the
    # identity residual applies (downsample=None), with lane-friendly channels.
    N, Cin, D, H, W = 2, 128, 4, 8, 8
    planes = 32                       # planes * 4 == Cin

    x_ncdhw = jax.random.normal(k_x, (N, Cin, D, H, W), jnp.float32)
    x = jnp.transpose(x_ncdhw, (0, 2, 3, 4, 1))     # -> NDHWC

    params = make_params(k_p, inplanes=Cin, planes=planes)

    out = bottleneck_forward(x, params)
    out = jax.block_until_ready(out)

    ref = bottleneck_reference(x, params)
    np.testing.assert_allclose(np.asarray(out), np.asarray(ref),
                               rtol=2e-3, atol=2e-3)

    print("KERNEL_OK")
</pallas_src>

<mosaic_0001>
module attributes {stable_mosaic.version = 11 : i64} {
  func.func @_bottleneck_kernel(%arg0: i32, %arg1: memref<1x4x8x8x128xf32, #tpu.memory_space<vmem>>, %arg2: memref<128x32xbf16, #tpu.memory_space<vmem>>, %arg3: memref<27x32x32xbf16, #tpu.memory_space<vmem>>, %arg4: memref<32x128xbf16, #tpu.memory_space<vmem>>, %arg5: memref<1x32xf32, #tpu.memory_space<vmem>>, %arg6: memref<1x32xf32, #tpu.memory_space<vmem>>, %arg7: memref<1x128xf32, #tpu.memory_space<vmem>>, %arg8: memref<1x4x8x8x128xf32, #tpu.memory_space<vmem>>, %arg9: memref<6x10x10x32xf32, #tpu.memory_space<vmem>>) attributes {dimension_semantics = [#tpu.dimension_semantics<parallel>], iteration_bounds = array<i64: 2>, scalar_prefetch = 0 : i64, scratch_operands = 1 : i64, tpu.core_type = #tpu.core_type<tc>, window_params = [{transform_indices = @transform_0, window_bounds = array<i64: 1, 4, 8, 8, 128>}, {pipeline_mode = #tpu.pipeline_mode<synchronous>, transform_indices = @transform_1, window_bounds = array<i64: 128, 32>}, {pipeline_mode = #tpu.pipeline_mode<synchronous>, transform_indices = @transform_2, window_bounds = array<i64: 27, 32, 32>}, {pipeline_mode = #tpu.pipeline_mode<synchronous>, transform_indices = @transform_3, window_bounds = array<i64: 32, 128>}, {pipeline_mode = #tpu.pipeline_mode<synchronous>, transform_indices = @transform_4, window_bounds = array<i64: 1, 32>}, {pipeline_mode = #tpu.pipeline_mode<synchronous>, transform_indices = @transform_5, window_bounds = array<i64: 1, 32>}, {pipeline_mode = #tpu.pipeline_mode<synchronous>, transform_indices = @transform_6, window_bounds = array<i64: 1, 128>}, {transform_indices = @transform_7, window_bounds = array<i64: 1, 4, 8, 8, 128>}]} {
    %c0 = arith.constant 0 : index
    %c0_0 = arith.constant 0 : index
    %c0_1 = arith.constant 0 : index
    %c0_2 = arith.constant 0 : index
    %c0_3 = arith.constant 0 : index
    %0 = vector.load %arg1[%c0, %c0_0, %c0_1, %c0_2, %c0_3] : memref<1x4x8x8x128xf32, #tpu.memory_space<vmem>>, vector<1x4x8x8x128xf32>
    %1 = vector.shape_cast %0 : vector<1x4x8x8x128xf32> to vector<4x8x8x128xf32>
    %2 = vector.shape_cast %1 : vector<4x8x8x128xf32> to vector<256x128xf32>
    %3 = arith.truncf %2 : vector<256x128xf32> to vector<256x128xbf16>
    %c0_4 = arith.constant 0 : index
    %c0_5 = arith.constant 0 : index
    %4 = vector.load %arg2[%c0_4, %c0_5] : memref<128x32xbf16, #tpu.memory_space<vmem>>, vector<128x32xbf16>
    %cst = arith.constant dense<0.000000e+00> : vector<256x32xf32>
    %5 = tpu.matmul %3, %4, %cst {dimension_numbers = #tpu.dot_dimension_numbers<[1], [0], [0], [1], [0, 0, 1, 1], [], []>} : vector<256x128xbf16>, vector<128x32xbf16>, vector<256x32xf32> -> vector<256x32xf32>
    %c0_6 = arith.constant 0 : index
    %c0_7 = arith.constant 0 : index
    %6 = vector.load %arg5[%c0_6, %c0_7] : memref<1x32xf32, #tpu.memory_space<vmem>>, vector<1x32xf32>
    %7 = vector.broadcast %6 : vector<1x32xf32> to vector<256x32xf32>
    %8 = arith.addf %5, %7 : vector<256x32xf32>
    %cst_8 = arith.constant 0.000000e+00 : f32
    %9 = vector.broadcast %cst_8 : f32 to vector<256x32xf32>
    %10 = arith.maximumf %8, %9 : vector<256x32xf32>
    %cst_9 = arith.constant 0.000000e+00 : f32
    %11 = vector.broadcast %cst_9 : f32 to vector<6x10x10x32xf32>
    %c0_10 = arith.constant 0 : index
    %c0_11 = arith.constant 0 : index
    %c0_12 = arith.constant 0 : index
    %c0_13 = arith.constant 0 : index
    %12 = vector.load %arg9[%c0_10, %c0_11, %c0_12, %c0_13] : memref<6x10x10x32xf32, #tpu.memory_space<vmem>>, vector<6x10x10x32xf32>
    tpu.vector_store %arg9[%c0_10, %c0_11, %c0_12, %c0_13], %11 {strides = array<i32>} : memref<6x10x10x32xf32, #tpu.memory_space<vmem>>, vector<6x10x10x32xf32>,
    %13 = vector.shape_cast %10 : vector<256x32xf32> to vector<4x8x8x32xf32>
    %c1 = arith.constant 1 : index
    %c1_14 = arith.constant 1 : index
    %c1_15 = arith.constant 1 : index
    %c0_16 = arith.constant 0 : index
    %14 = vector.load %arg9[%c1, %c1_14, %c1_15, %c0_16] : memref<6x10x10x32xf32, #tpu.memory_space<vmem>>, vector<4x8x8x32xf32>
    tpu.vector_store %arg9[%c1, %c1_14, %c1_15, %c0_16], %13 {strides = array<i32>} : memref<6x10x10x32xf32, #tpu.memory_space<vmem>>, vector<4x8x8x32xf32>,
    %cst_17 = arith.constant 0.000000e+00 : f32
    %15 = vector.broadcast %cst_17 : f32 to vector<256x32xf32>
    %c0_18 = arith.constant 0 : index
    %c0_19 = arith.constant 0 : index
    %c0_20 = arith.constant 0 : index
    %c0_21 = arith.constant 0 : index
    %16 = vector.load %arg9[%c0_18, %c0_19, %c0_20, %c0_21] : memref<6x10x10x32xf32, #tpu.memory_space<vmem>>, vector<4x8x8x32xf32>
    %17 = vector.shape_cast %16 : vector<4x8x8x32xf32> to vector<256x32xf32>
    %18 = arith.truncf %17 : vector<256x32xf32> to vector<256x32xbf16>
    %c0_22 = arith.constant 0 : index
    %c0_23 = arith.constant 0 : index
    %c0_24 = arith.constant 0 : index
    %19 = vector.load %arg3[%c0_22, %c0_23, %c0_24] : memref<27x32x32xbf16, #tpu.memory_space<vmem>>, vector<1x32x32xbf16>
    %20 = vector.shape_cast %19 : vector<1x32x32xbf16> to vector<32x32xbf16>
    %cst_25 = arith.constant dense<0.000000e+00> : vector<256x32xf32>
    %21 = tpu.matmul %18, %20, %cst_25 {dimension_numbers = #tpu.dot_dimension_numbers<[1], [0], [0], [1], [0, 0, 1, 1], [], []>} : vector<256x32xbf16>, vector<32x32xbf16>, vector<256x32xf32> -> vector<256x32xf32>
    %22 = arith.addf %15, %21 : vector<256x32xf32>
    %c0_26 = arith.constant 0 : index
    %c0_27 = arith.constant 0 : index
    %c1_28 = arith.constant 1 : index
    %c0_29 = arith.constant 0 : index
    %23 = vector.load %arg9[%c0_26, %c0_27, %c1_28, %c0_29] : memref<6x10x10x32xf32, #tpu.memory_space<vmem>>, vector<4x8x8x32xf32>
    %24 = vector.shape_cast %23 : vector<4x8x8x32xf32> to vector<256x32xf32>
    %25 = arith.truncf %24 : vector<256x32xf32> to vector<256x32xbf16>
    %c1_30 = arith.constant 1 : index
    %c0_31 = arith.constant 0 : index
    %c0_32 = arith.constant 0 : index
    %26 = vector.load %arg3[%c1_30, %c0_31, %c0_32] : memref<27x32x32xbf16, #tpu.memory_space<vmem>>, vector<1x32x32xbf16>
    %27 = vector.shape_cast %26 : vector<1x32x32xbf16> to vector<32x32xbf16>
    %cst_33 = arith.constant dense<0.000000e+00> : vector<256x32xf32>
    %28 = tpu.matmul %25, %27, %cst_33 {dimension_numbers = #tpu.dot_dimension_numbers<[1], [0], [0], [1], [0, 0, 1, 1], [], []>} : vector<256x32xbf16>, vector<32x32xbf16>, vector<256x32xf32> -> vector<256x32xf32>
    %29 = arith.addf %22, %28 : vector<256x32xf32>
    %c0_34 = arith.constant 0 : index
    %c0_35 = arith.constant 0 : index
    %c2 = arith.constant 2 : index
    %c0_36 = arith.constant 0 : index
    %30 = vector.load %arg9[%c0_34, %c0_35, %c2, %c0_36] : memref<6x10x10x32xf32, #tpu.memory_space<vmem>>, vector<4x8x8x32xf32>
    %31 = vector.shape_cast %30 : vector<4x8x8x32xf32> to vector<256x32xf32>
    %32 = arith.truncf %31 : vector<256x32xf32> to vector<256x32xbf16>
    %c2_37 = arith.constant 2 : index
    %c0_38 = arith.constant 0 : index
    %c0_39 = arith.constant 0 : index
    %33 = vector.load %arg3[%c2_37, %c0_38, %c0_39] : memref<27x32x32xbf16, #tpu.memory_space<vmem>>, vector<1x32x32xbf16>
    %34 = vector.shape_cast %33 : vector<1x32x32xbf16> to vector<32x32xbf16>
    %cst_40 = arith.constant dense<0.000000e+00> : vector<256x32xf32>
    %35 = tpu.matmul %32, %34, %cst_40 {dimension_numbers = #tpu.dot_dimension_numbers<[1], [0], [0], [1], [0, 0, 1, 1], [], []>} : vector<256x32xbf16>, vector<32x32xbf16>, vector<256x32xf32> -> vector<256x32xf32>
    %36 = arith.addf %29, %35 : vector<256x32xf32>
    %c0_41 = arith.constant 0 : index
    %c1_42 = arith.constant 1 : index
    %c0_43 = arith.constant 0 : index
    %c0_44 = arith.constant 0 : index
    %37 = vector.load %arg9[%c0_41, %c1_42, %c0_43, %c0_44] : memref<6x10x10x32xf32, #tpu.memory_space<vmem>>, vector<4x8x8x32xf32>
    %38 = vector.shape_cast %37 : vector<4x8x8x32xf32> to vector<256x32xf32>
    %39 = arith.truncf %38 : vector<256x32xf32> to vector<256x32xbf16>
    %c3 = arith.constant 3 : index
    %c0_45 = arith.constant 0 : index
    %c0_46 = arith.constant 0 : index
    %40 = vector.load %arg3[%c3, %c0_45, %c0_46] : memref<27x32x32xbf16, #tpu.memory_space<vmem>>, vector<1x32x32xbf16>
    %41 = vector.shape_cast %40 : vector<1x32x32xbf16> to vector<32x32xbf16>
    %cst_47 = arith.constant dense<0.000000e+00> : vector<256x32xf32>
    %42 = tpu.matmul %39, %41, %cst_47 {dimension_numbers = #tpu.dot_dimension_numbers<[1], [0], [0], [1], [0, 0, 1, 1], [], []>} : vector<256x32xbf16>, vector<32x32xbf16>, vector<256x32xf32> -> vector<256x32xf32>
    %43 = arith.addf %36, %42 : vector<256x32xf32>
    %c0_48 = arith.constant 0 : index
    %c1_49 = arith.constant 1 : index
    %c1_50 = arith.constant 1 : index
    %c0_51 = arith.constant 0 : index
    %44 = vector.load %arg9[%c0_48, %c1_49, %c1_50, %c0_51] : memref<6x10x10x32xf32, #tpu.memory_space<vmem>>, vector<4x8x8x32xf32>
    %45 = vector.shape_cast %44 : vector<4x8x8x32xf32> to vector<256x32xf32>
    %46 = arith.truncf %45 : vector<256x32xf32> to vector<256x32xbf16>
    %c4 = arith.constant 4 : index
    %c0_52 = arith.constant 0 : index
    %c0_53 = arith.constant 0 : index
    %47 = vector.load %arg3[%c4, %c0_52, %c0_53] : memref<27x32x32xbf16, #tpu.memory_space<vmem>>, vector<1x32x32xbf16>
    %48 = vector.shape_cast %47 : vector<1x32x32xbf16> to vector<32x32xbf16>
    %cst_54 = arith.constant dense<0.000000e+00> : vector<256x32xf32>
    %49 = tpu.matmul %46, %48, %cst_54 {dimension_numbers = #tpu.dot_dimension_numbers<[1], [0], [0], [1], [0, 0, 1, 1], [], []>} : vector<256x32xbf16>, vector<32x32xbf16>, vector<256x32xf32> -> vector<256x32xf32>
    %50 = arith.addf %43, %49 : vector<256x32xf32>
    %c0_55 = arith.constant 0 : index
    %c1_56 = arith.constant 1 : index
    %c2_57 = arith.constant 2 : index
    %c0_58 = arith.constant 0 : index
    %51 = vector.load %arg9[%c0_55, %c1_56, %c2_57, %c0_58] : memref<6x10x10x32xf32, #tpu.memory_space<vmem>>, vector<4x8x8x32xf32>
    %52 = vector.shape_cast %51 : vector<4x8x8x32xf32> to vector<256x32xf32>
    %53 = arith.truncf %52 : vector<256x32xf32> to vector<256x32xbf16>
    %c5 = arith.constant 5 : index
    %c0_59 = arith.constant 0 : index
    %c0_60 = arith.constant 0 : index
    %54 = vector.load %arg3[%c5, %c0_59, %c0_60] : memref<27x32x32xbf16, #tpu.memory_space<vmem>>, vector<1x32x32xbf16>
    %55 = vector.shape_cast %54 : vector<1x32x32xbf16> to vector<32x32xbf16>
    %cst_61 = arith.constant dense<0.000000e+00> : vector<256x32xf32>
    %56 = tpu.matmul %53, %55, %cst_61 {dimension_numbers = #tpu.dot_dimension_numbers<[1], [0], [0], [1], [0, 0, 1, 1], [], []>} : vector<256x32xbf16>, vector<32x32xbf16>, vector<256x32xf32> -> vector<256x32xf32>
    %57 = arith.addf %50, %56 : vector<256x32xf32>
    %c0_62 = arith.constant 0 : index
    %c2_63 = arith.constant 2 : index
    %c0_64 = arith.constant 0 : index
    %c0_65 = arith.constant 0 : index
    %58 = vector.load %arg9[%c0_62, %c2_63, %c0_64, %c0_65] : memref<6x10x10x32xf32, #tpu.memory_space<vmem>>, vector<4x8x8x32xf32>
    %59 = vector.shape_cast %58 : vector<4x8x8x32xf32> to vector<256x32xf32>
    %60 = arith.truncf %59 : vector<256x32xf32> to vector<256x32xbf16>
    %c6 = arith.constant 6 : index
    %c0_66 = arith.constant 0 : index
    %c0_67 = arith.constant 0 : index
    %61 = vector.load %arg3[%c6, %c0_66, %c0_67] : memref<27x32x32xbf16, #tpu.memory_space<vmem>>, vector<1x32x32xbf16>
    %62 = vector.shape_cast %61 : vector<1x32x32xbf16> to vector<32x32xbf16>
    %cst_68 = arith.constant dense<0.000000e+00> : vector<256x32xf32>
    %63 = tpu.matmul %60, %62, %cst_68 {dimension_numbers = #tpu.dot_dimension_numbers<[1], [0], [0], [1], [0, 0, 1, 1], [], []>} : vector<256x32xbf16>, vector<32x32xbf16>, vector<256x32xf32> -> vector<256x32xf32>
    %64 = arith.addf %57, %63 : vector<256x32xf32>
    %c0_69 = arith.constant 0 : index
    %c2_70 = arith.constant 2 : index
    %c1_71 = arith.constant 1 : index
    %c0_72 = arith.constant 0 : index
    %65 = vector.load %arg9[%c0_69, %c2_70, %c1_71, %c0_72] : memref<6x10x10x32xf32, #tpu.memory_space<vmem>>, vector<4x8x8x32xf32>
    %66 = vector.shape_cast %65 : vector<4x8x8x32xf32> to vector<256x32xf32>
    %67 = arith.truncf %66 : vector<256x32xf32> to vector<256x32xbf16>
    %c7 = arith.constant 7 : index
    %c0_73 = arith.constant 0 : index
    %c0_74 = arith.constant 0 : index
    %68 = vector.load %arg3[%c7, %c0_73, %c0_74] : memref<27x32x32xbf16, #tpu.memory_space<vmem>>, vector<1x32x32xbf16>
    %69 = vector.shape_cast %68 : vector<1x32x32xbf16> to vector<32x32xbf16>
    %cst_75 = arith.constant dense<0.000000e+00> : vector<256x32xf32>
    %70 = tpu.matmul %67, %69, %cst_75 {dimension_numbers = #tpu.dot_dimension_numbers<[1], [0], [0], [1], [0, 0, 1, 1], [], []>} : vector<256x32xbf16>, vector<32x32xbf16>, vector<256x32xf32> -> vector<256x32xf32>
    %71 = arith.addf %64, %70 : vector<256x32xf32>
    %c0_76 = arith.constant 0 : index
    %c2_77 = arith.constant 2 : index
    %c2_78 = arith.constant 2 : index
    %c0_79 = arith.constant 0 : index
    %72 = vector.load %arg9[%c0_76, %c2_77, %c2_78, %c0_79] : memref<6x10x10x32xf32, #tpu.memory_space<vmem>>, vector<4x8x8x32xf32>
    %73 = vector.shape_cast %72 : vector<4x8x8x32xf32> to vector<256x32xf32>
    %74 = arith.truncf %73 : vector<256x32xf32> to vector<256x32xbf16>
    %c8 = arith.constant 8 : index
    %c0_80 = arith.constant 0 : index
    %c0_81 = arith.constant 0 : index
    %75 = vector.load %arg3[%c8, %c0_80, %c0_81] : memref<27x32x32xbf16, #tpu.memory_space<vmem>>, vector<1x32x32xbf16>
    %76 = vector.shape_cast %75 : vector<1x32x32xbf16> to vector<32x32xbf16>
    %cst_82 = arith.constant dense<0.000000e+00> : vector<256x32xf32>
    %77 = tpu.matmul %74, %76, %cst_82 {dimension_numbers = #tpu.dot_dimension_numbers<[1], [0], [0], [1], [0, 0, 1, 1], [], []>} : vector<256x32xbf16>, vector<32x32xbf16>, vector<256x32xf32> -> vector<256x32xf32>
    %78 = arith.addf %71, %77 : vector<256x32xf32>
    %c1_83 = arith.constant 1 : index
    %c0_84 = arith.constant 0 : index
    %c0_85 = arith.constant 0 : index
    %c0_86 = arith.constant 0 : index
    %79 = vector.load %arg9[%c1_83, %c0_84, %c0_85, %c0_86] : memref<6x10x10x32xf32, #tpu.memory_space<vmem>>, vector<4x8x8x32xf32>
    %80 = vector.shape_cast %79 : vector<4x8x8x32xf32> to vector<256x32xf32>
    %81 = arith.truncf %80 : vector<256x32xf32> to vector<256x32xbf16>
    %c9 = arith.constant 9 : index
    %c0_87 = arith.constant 0 : index
    %c0_88 = arith.constant 0 : index
    %82 = vector.load %arg3[%c9, %c0_87, %c0_88] : memref<27x32x32xbf16, #tpu.memory_space<vmem>>, vector<1x32x32xbf16>
    %83 = vector.shape_cast %82 : vector<1x32x32xbf16> to vector<32x32xbf16>
    %cst_89 = arith.constant dense<0.000000e+00> : vector<256x32xf32>
    %84 = tpu.matmul %81, %83, %cst_89 {dimension_numbers = #tpu.dot_dimension_numbers<[1], [0], [0], [1], [0, 0, 1, 1], [], []>} : vector<256x32xbf16>, vector<32x32xbf16>, vector<256x32xf32> -> vector<256x32xf32>
    %85 = arith.addf %78, %84 : vector<256x32xf32>
    %c1_90 = arith.constant 1 : index
    %c0_91 = arith.constant 0 : index
    %c1_92 = arith.constant 1 : index
    %c0_93 = arith.constant 0 : index
    %86 = vector.load %arg9[%c1_90, %c0_91, %c1_92, %c0_93] : memref<6x10x10x32xf32, #tpu.memory_space<vmem>>, vector<4x8x8x32xf32>
    %87 = vector.shape_cast %86 : vector<4x8x8x32xf32> to vector<256x32xf32>
    %88 = arith.truncf %87 : vector<256x32xf32> to vector<256x32xbf16>
    %c10 = arith.constant 10 : index
    %c0_94 = arith.constant 0 : index
    %c0_95 = arith.constant 0 : index
    %89 = vector.load %arg3[%c10, %c0_94, %c0_95] : memref<27x32x32xbf16, #tpu.memory_space<vmem>>, vector<1x32x32xbf16>
    %90 = vector.shape_cast %89 : vector<1x32x32xbf16> to vector<32x32xbf16>
    %cst_96 = arith.constant dense<0.000000e+00> : vector<256x32xf32>
    %91 = tpu.matmul %88, %90, %cst_96 {dimension_numbers = #tpu.dot_dimension_numbers<[1], [0], [0], [1], [0, 0, 1, 1], [], []>} : vector<256x32xbf16>, vector<32x32xbf16>, vector<256x32xf32> -> vector<256x32xf32>
    %92 = arith.addf %85, %91 : vector<256x32xf32>
    %c1_97 = arith.constant 1 : index
    %c0_98 = arith.constant 0 : index
    %c2_99 = arith.constant 2 : index
    %c0_100 = arith.constant 0 : index
    %93 = vector.load %arg9[%c1_97, %c0_98, %c2_99, %c0_100] : memref<6x10x10x32xf32, #tpu.memory_space<vmem>>, vector<4x8x8x32xf32>
    %94 = vector.shape_cast %93 : vector<4x8x8x32xf32> to vector<256x32xf32>
    %95 = arith.truncf %94 : vector<256x32xf32> to vector<256x32xbf16>
    %c11 = arith.constant 11 : index
    %c0_101 = arith.constant 0 : index
    %c0_102 = arith.constant 0 : index
    %96 = vector.load %arg3[%c11, %c0_101, %c0_102] : memref<27x32x32xbf16, #tpu.memory_space<vmem>>, vector<1x32x32xbf16>
    %97 = vector.shape_cast %96 : vector<1x32x32xbf16> to vector<32x32xbf16>
    %cst_103 = arith.constant dense<0.000000e+00> : vector<256x32xf32>
    %98 = tpu.matmul %95, %97, %cst_103 {dimension_numbers = #tpu.dot_dimension_numbers<[1], [0], [0], [1], [0, 0, 1, 1], [], []>} : vector<256x32xbf16>, vector<32x32xbf16>, vector<256x32xf32> -> vector<256x32xf32>
    %99 = arith.addf %92, %98 : vector<256x32xf32>
    %c1_104 = arith.constant 1 : index
    %c1_105 = arith.constant 1 : index
    %c0_106 = arith.constant 0 : index
    %c0_107 = arith.constant 0 : index
    %100 = vector.load %arg9[%c1_104, %c1_105, %c0_106, %c0_107] : memref<6x10x10x32xf32, #tpu.memory_space<vmem>>, vector<4x8x8x32xf32>
    %101 = vector.shape_cast %100 : vector<4x8x8x32xf32> to vector<256x32xf32>
    %102 = arith.truncf %101 : vector<256x32xf32> to vector<256x32xbf16>
    %c12 = arith.constant 12 : index
    %c0_108 = arith.constant 0 : index
    %c0_109 = arith.constant 0 : index
    %103 = vector.load %arg3[%c12, %c0_108, %c0_109] : memref<27x32x32xbf16, #tpu.memory_space<vmem>>, vector<1x32x32xbf16>
    %104 = vector.shape_cast %103 : vector<1x32x32xbf16> to vector<32x32xbf16>
    %cst_110 = arith.constant dense<0.000000e+00> : vector<256x32xf32>
    %105 = tpu.matmul %102, %104, %cst_110 {dimension_numbers = #tpu.dot_dimension_numbers<[1], [0], [0], [1], [0, 0, 1, 1], [], []>} : vector<256x32xbf16>, vector<32x32xbf16>, vector<256x32xf32> -> vector<256x32xf32>
    %106 = arith.addf %99, %105 : vector<256x32xf32>
    %c1_111 = arith.constant 1 : index
    %c1_112 = arith.constant 1 : index
    %c1_113 = arith.constant 1 : index
    %c0_114 = arith.constant 0 : index
    %107 = vector.load %arg9[%c1_111, %c1_112, %c1_113, %c0_114] : memref<6x10x10x32xf32, #tpu.memory_space<vmem>>, vector<4x8x8x32xf32>
    %108 = vector.shape_cast %107 : vector<4x8x8x32xf32> to vector<256x32xf32>
    %109 = arith.truncf %108 : vector<256x32xf32> to vector<256x32xbf16>
    %c13 = arith.constant 13 : index
    %c0_115 = arith.constant 0 : index
    %c0_116 = arith.constant 0 : index
    %110 = vector.load %arg3[%c13, %c0_115, %c0_116] : memref<27x32x32xbf16, #tpu.memory_space<vmem>>, vector<1x32x32xbf16>
    %111 = vector.shape_cast %110 : vector<1x32x32xbf16> to vector<32x32xbf16>
    %cst_117 = arith.constant dense<0.000000e+00> : vector<256x32xf32>
    %112 = tpu.matmul %109, %111, %cst_117 {dimension_numbers = #tpu.dot_dimension_numbers<[1], [0], [0], [1], [0, 0, 1, 1], [], []>} : vector<256x32xbf16>, vector<32x32xbf16>, vector<256x32xf32> -> vector<256x32xf32>
    %113 = arith.addf %106, %112 : vector<256x32xf32>
    %c1_118 = arith.constant 1 : index
    %c1_119 = arith.constant 1 : index
    %c2_120 = arith.constant 2 : index
    %c0_121 = arith.constant 0 : index
    %114 = vector.load %arg9[%c1_118, %c1_119, %c2_120, %c0_121] : memref<6x10x10x32xf32, #tpu.memory_space<vmem>>, vector<4x8x8x32xf32>
    %115 = vector.shape_cast %114 : vector<4x8x8x32xf32> to vector<256x32xf32>
    %116 = arith.truncf %115 : vector<256x32xf32> to vector<256x32xbf16>
    %c14 = arith.constant 14 : index
    %c0_122 = arith.constant 0 : index
    %c0_123 = arith.constant 0 : index
    %117 = vector.load %arg3[%c14, %c0_122, %c0_123] : memref<27x32x32xbf16, #tpu.memory_space<vmem>>, vector<1x32x32xbf16>
    %118 = vector.shape_cast %117 : vector<1x32x32xbf16> to vector<32x32xbf16>
    %cst_124 = arith.constant dense<0.000000e+00> : vector<256x32xf32>
    %119 = tpu.matmul %116, %118, %cst_124 {dimension_numbers = #tpu.dot_dimension_numbers<[1], [0], [0], [1], [0, 0, 1, 1], [], []>} : vector<256x32xbf16>, vector<32x32xbf16>, vector<256x32xf32> -> vector<256x32xf32>
    %120 = arith.addf %113, %119 : vector<256x32xf32>
    %c1_125 = arith.constant 1 : index
    %c2_126 = arith.constant 2 : index
    %c0_127 = arith.constant 0 : index
    %c0_128 = arith.constant 0 : index
    %121 = vector.load %arg9[%c1_125, %c2_126, %c0_127, %c0_128] : memref<6x10x10x32xf32, #tpu.memory_space<vmem>>, vector<4x8x8x32xf32>
    %122 = vector.shape_cast %121 : vector<4x8x8x32xf32> to vector<256x32xf32>
    %123 = arith.truncf %122 : vector<256x32xf32> to vector<256x32xbf16>
    %c15 = arith.constant 15 : index
    %c0_129 = arith.constant 0 : index
    %c0_130 = arith.constant 0 : index
    %124 = vector.load %arg3[%c15, %c0_129, %c0_130] : memref<27x32x32xbf16, #tpu.memory_space<vmem>>, vector<1x32x32xbf16>
    %125 = vector.shape_cast %124 : vector<1x32x32xbf16> to vector<32x32xbf16>
    %cst_131 = arith.constant dense<0.000000e+00> : vector<256x32xf32>
    %126 = tpu.matmul %123, %125, %cst_131 {dimension_numbers = #tpu.dot_dimension_numbers<[1], [0], [0], [1], [0, 0, 1, 1], [], []>} : vector<256x32xbf16>, vector<32x32xbf16>, vector<256x32xf32> -> vector<256x32xf32>
    %127 = arith.addf %120, %126 : vector<256x32xf32>
    %c1_132 = arith.constant 1 : index
    %c2_133 = arith.constant 2 : index
    %c1_134 = arith.constant 1 : index
    %c0_135 = arith.constant 0 : index
    %128 = vector.load %arg9[%c1_132, %c2_133, %c1_134, %c0_135] : memref<6x10x10x32xf32, #tpu.memory_space<vmem>>, vector<4x8x8x32xf32>
    %129 = vector.shape_cast %128 : vector<4x8x8x32xf32> to vector<256x32xf32>
    %130 = arith.truncf %129 : vector<256x32xf32> to vector<256x32xbf16>
    %c16 = arith.constant 16 : index
    %c0_136 = arith.constant 0 : index
    %c0_137 = arith.constant 0 : index
    %131 = vector.load %arg3[%c16, %c0_136, %c0_137] : memref<27x32x32xbf16, #tpu.memory_space<vmem>>, vector<1x32x32xbf16>
    %132 = vector.shape_cast %131 : vector<1x32x32xbf16> to vector<32x32xbf16>
    %cst_138 = arith.constant dense<0.000000e+00> : vector<256x32xf32>
    %133 = tpu.matmul %130, %132, %cst_138 {dimension_numbers = #tpu.dot_dimension_numbers<[1], [0], [0], [1], [0, 0, 1, 1], [], []>} : vector<256x32xbf16>, vector<32x32xbf16>, vector<256x32xf32> -> vector<256x32xf32>
    %134 = arith.addf %127, %133 : vector<256x32xf32>
    %c1_139 = arith.constant 1 : index
    %c2_140 = arith.constant 2 : index
    %c2_141 = arith.constant 2 : index
    %c0_142 = arith.constant 0 : index
    %135 = vector.load %arg9[%c1_139, %c2_140, %c2_141, %c0_142] : memref<6x10x10x32xf32, #tpu.memory_space<vmem>>, vector<4x8x8x32xf32>
    %136 = vector.shape_cast %135 : vector<4x8x8x32xf32> to vector<256x32xf32>
    %137 = arith.truncf %136 : vector<256x32xf32> to vector<256x32xbf16>
    %c17 = arith.constant 17 : index
    %c0_143 = arith.constant 0 : index
    %c0_144 = arith.constant 0 : index
    %138 = vector.load %arg3[%c17, %c0_143, %c0_144] : memref<27x32x32xbf16, #tpu.memory_space<vmem>>, vector<1x32x32xbf16>
    %139 = vector.shape_cast %138 : vector<1x32x32xbf16> to vector<32x32xbf16>
    %cst_145 = arith.constant dense<0.000000e+00> : vector<256x32xf32>
    %140 = tpu.matmul %137, %139, %cst_145 {dimension_numbers = #tpu.dot_dimension_numbers<[1], [0], [0], [1], [0, 0, 1, 1], [], []>} : vector<256x32xbf16>, vector<32x32xbf16>, vector<256x32xf32> -> vector<256x32xf32>
    %141 = arith.addf %134, %140 : vector<256x32xf32>
    %c2_146 = arith.constant 2 : index
    %c0_147 = arith.constant 0 : index
    %c0_148 = arith.constant 0 : index
    %c0_149 = arith.constant 0 : index
    %142 = vector.load %arg9[%c2_146, %c0_147, %c0_148, %c0_149] : memref<6x10x10x32xf32, #tpu.memory_space<vmem>>, vector<4x8x8x32xf32>
    %143 = vector.shape_cast %142 : vector<4x8x8x32xf32> to vector<256x32xf32>
    %144 = arith.truncf %143 : vector<256x32xf32> to vector<256x32xbf16>
    %c18 = arith.constant 18 : index
    %c0_150 = arith.constant 0 : index
    %c0_151 = arith.constant 0 : index
    %145 = vector.load %arg3[%c18, %c0_150, %c0_151] : memref<27x32x32xbf16, #tpu.memory_space<vmem>>, vector<1x32x32xbf16>
    %146 = vector.shape_cast %145 : vector<1x32x32xbf16> to vector<32x32xbf16>
    %cst_152 = arith.constant dense<0.000000e+00> : vector<256x32xf32>
    %147 = tpu.matmul %144, %146, %cst_152 {dimension_numbers = #tpu.dot_dimension_numbers<[1], [0], [0], [1], [0, 0, 1, 1], [], []>} : vector<256x32xbf16>, vector<32x32xbf16>, vector<256x32xf32> -> vector<256x32xf32>
    %148 = arith.addf %141, %147 : vector<256x32xf32>
    %c2_153 = arith.constant 2 : index
    %c0_154 = arith.constant 0 : index
    %c1_155 = arith.constant 1 : index
    %c0_156 = arith.constant 0 : index
    %149 = vector.load %arg9[%c2_153, %c0_154, %c1_155, %c0_156] : memref<6x10x10x32xf32, #tpu.memory_space<vmem>>, vector<4x8x8x32xf32>
    %150 = vector.shape_cast %149 : vector<4x8x8x32xf32> to vector<256x32xf32>
    %151 = arith.truncf %150 : vector<256x32xf32> to vector<256x32xbf16>
    %c19 = arith.constant 19 : index
    %c0_157 = arith.constant 0 : index
    %c0_158 = arith.constant 0 : index
    %152 = vector.load %arg3[%c19, %c0_157, %c0_158] : memref<27x32x32xbf16, #tpu.memory_space<vmem>>, vector<1x32x32xbf16>
    %153 = vector.shape_cast %152 : vector<1x32x32xbf16> to vector<32x32xbf16>
    %cst_159 = arith.constant dense<0.000000e+00> : vector<256x32xf32>
    %154 = tpu.matmul %151, %153, %cst_159 {dimension_numbers = #tpu.dot_dimension_numbers<[1], [0], [0], [1], [0, 0, 1, 1], [], []>} : vector<256x32xbf16>, vector<32x32xbf16>, vector<256x32xf32> -> vector<256x32xf32>
    %155 = arith.addf %148, %154 : vector<256x32xf32>
    %c2_160 = arith.constant 2 : index
    %c0_161 = arith.constant 0 : index
    %c2_162 = arith.constant 2 : index
    %c0_163 = arith.constant 0 : index
    %156 = vector.load %arg9[%c2_160, %c0_161, %c2_162, %c0_163] : memref<6x10x10x32xf32, #tpu.memory_space<vmem>>, vector<4x8x8x32xf32>
    %157 = vector.shape_cast %156 : vector<4x8x8x32xf32> to vector<256x32xf32>
    %158 = arith.truncf %157 : vector<256x32xf32> to vector<256x32xbf16>
    %c20 = arith.constant 20 : index
    %c0_164 = arith.constant 0 : index
    %c0_165 = arith.constant 0 : index
    %159 = vector.load %arg3[%c20, %c0_164, %c0_165] : memref<27x32x32xbf16, #tpu.memory_space<vmem>>, vector<1x32x32xbf16>
    %160 = vector.shape_cast %159 : vector<1x32x32xbf16> to vector<32x32xbf16>
    %cst_166 = arith.constant dense<0.000000e+00> : vector<256x32xf32>
    %161 = tpu.matmul %158, %160, %cst_166 {dimension_numbers = #tpu.dot_dimension_numbers<[1], [0], [0], [1], [0, 0, 1, 1], [], []>} : vector<256x32xbf16>, vector<32x32xbf16>, vector<256x32xf32> -> vector<256x32xf32>
    %162 = arith.addf %155, %161 : vector<256x32xf32>
    %c2_167 = arith.constant 2 : index
    %c1_168 = arith.constant 1 : index
    %c0_169 = arith.constant 0 : index
    %c0_170 = arith.constant 0 : index
    %163 = vector.load %arg9[%c2_167, %c1_168, %c0_169, %c0_170] : memref<6x10x10x32xf32, #tpu.memory_space<vmem>>, vector<4x8x8x32xf32>
    %164 = vector.shape_cast %163 : vector<4x8x8x32xf32> to vector<256x32xf32>
    %165 = arith.truncf %164 : vector<256x32xf32> to vector<256x32xbf16>
    %c21 = arith.constant 21 : index
    %c0_171 = arith.constant 0 : index
    %c0_172 = arith.constant 0 : index
    %166 = vector.load %arg3[%c21, %c0_171, %c0_172] : memref<27x32x32xbf16, #tpu.memory_space<vmem>>, vector<1x32x32xbf16>
    %167 = vector.shape_cast %166 : vector<1x32x32xbf16> to vector<32x32xbf16>
    %cst_173 = arith.constant dense<0.000000e+00> : vector<256x32xf32>
    %168 = tpu.matmul %165, %167, %cst_173 {dimension_numbers = #tpu.dot_dimension_numbers<[1], [0], [0], [1], [0, 0, 1, 1], [], []>} : vector<256x32xbf16>, vector<32x32xbf16>, vector<256x32xf32> -> vector<256x32xf32>
    %169 = arith.addf %162, %168 : vector<256x32xf32>
    %c2_174 = arith.constant 2 : index
    %c1_175 = arith.constant 1 : index
    %c1_176 = arith.constant 1 : index
    %c0_177 = arith.constant 0 : index
    %170 = vector.load %arg9[%c2_174, %c1_175, %c1_176, %c0_177] : memref<6x10x10x32xf32, #tpu.memory_space<vmem>>, vector<4x8x8x32xf32>
    %171 = vector.shape_cast %170 : vector<4x8x8x32xf32> to vector<256x32xf32>
    %172 = arith.truncf %171 : vector<256x32xf32> to vector<256x32xbf16>
    %c22 = arith.constant 22 : index
    %c0_178 = arith.constant 0 : index
    %c0_179 = arith.constant 0 : index
    %173 = vector.load %arg3[%c22, %c0_178, %c0_179] : memref<27x32x32xbf16, #tpu.memory_space<vmem>>, vector<1x32x32xbf16>
    %174 = vector.shape_cast %173 : vector<1x32x32xbf16> to vector<32x32xbf16>
    %cst_180 = arith.constant dense<0.000000e+00> : vector<256x32xf32>
    %175 = tpu.matmul %172, %174, %cst_180 {dimension_numbers = #tpu.dot_dimension_numbers<[1], [0], [0], [1], [0, 0, 1, 1], [], []>} : vector<256x32xbf16>, vector<32x32xbf16>, vector<256x32xf32> -> vector<256x32xf32>
    %176 = arith.addf %169, %175 : vector<256x32xf32>
    %c2_181 = arith.constant 2 : index
    %c1_182 = arith.constant 1 : index
    %c2_183 = arith.constant 2 : index
    %c0_184 = arith.constant 0 : index
    %177 = vector.load %arg9[%c2_181, %c1_182, %c2_183, %c0_184] : memref<6x10x10x32xf32, #tpu.memory_space<vmem>>, vector<4x8x8x32xf32>
    %178 = vector.shape_cast %177 : vector<4x8x8x32xf32> to vector<256x32xf32>
    %179 = arith.truncf %178 : vector<256x32xf32> to vector<256x32xbf16>
    %c23 = arith.constant 23 : index
    %c0_185 = arith.constant 0 : index
    %c0_186 = arith.constant 0 : index
    %180 = vector.load %arg3[%c23, %c0_185, %c0_186] : memref<27x32x32xbf16, #tpu.memory_space<vmem>>, vector<1x32x32xbf16>
    %181 = vector.shape_cast %180 : vector<1x32x32xbf16> to vector<32x32xbf16>
    %cst_187 = arith.constant dense<0.000000e+00> : vector<256x32xf32>
    %182 = tpu.matmul %179, %181, %cst_187 {dimension_numbers = #tpu.dot_dimension_numbers<[1], [0], [0], [1], [0, 0, 1, 1], [], []>} : vector<256x32xbf16>, vector<32x32xbf16>, vector<256x32xf32> -> vector<256x32xf32>
    %183 = arith.addf %176, %182 : vector<256x32xf32>
    %c2_188 = arith.constant 2 : index
    %c2_189 = arith.constant 2 : index
    %c0_190 = arith.constant 0 : index
    %c0_191 = arith.constant 0 : index
    %184 = vector.load %arg9[%c2_188, %c2_189, %c0_190, %c0_191] : memref<6x10x10x32xf32, #tpu.memory_space<vmem>>, vector<4x8x8x32xf32>
    %185 = vector.shape_cast %184 : vector<4x8x8x32xf32> to vector<256x32xf32>
    %186 = arith.truncf %185 : vector<256x32xf32> to vector<256x32xbf16>
    %c24 = arith.constant 24 : index
    %c0_192 = arith.constant 0 : index
    %c0_193 = arith.constant 0 : index
    %187 = vector.load %arg3[%c24, %c0_192, %c0_193] : memref<27x32x32xbf16, #tpu.memory_space<vmem>>, vector<1x32x32xbf16>
    %188 = vector.shape_cast %187 : vector<1x32x32xbf16> to vector<32x32xbf16>
    %cst_194 = arith.constant dense<0.000000e+00> : vector<256x32xf32>
    %189 = tpu.matmul %186, %188, %cst_194 {dimension_numbers = #tpu.dot_dimension_numbers<[1], [0], [0], [1], [0, 0, 1, 1], [], []>} : vector<256x32xbf16>, vector<32x32xbf16>, vector<256x32xf32> -> vector<256x32xf32>
    %190 = arith.addf %183, %189 : vector<256x32xf32>
    %c2_195 = arith.constant 2 : index
    %c2_196 = arith.constant 2 : index
    %c1_197 = arith.constant 1 : index
    %c0_198 = arith.constant 0 : index
    %191 = vector.load %arg9[%c2_195, %c2_196, %c1_197, %c0_198] : memref<6x10x10x32xf32, #tpu.memory_space<vmem>>, vector<4x8x8x32xf32>
    %192 = vector.shape_cast %191 : vector<4x8x8x32xf32> to vector<256x32xf32>
    %193 = arith.truncf %192 : vector<256x32xf32> to vector<256x32xbf16>
    %c25 = arith.constant 25 : index
    %c0_199 = arith.constant 0 : index
    %c0_200 = arith.constant 0 : index
    %194 = vector.load %arg3[%c25, %c0_199, %c0_200] : memref<27x32x32xbf16, #tpu.memory_space<vmem>>, vector<1x32x32xbf16>
    %195 = vector.shape_cast %194 : vector<1x32x32xbf16> to vector<32x32xbf16>
    %cst_201 = arith.constant dense<0.000000e+00> : vector<256x32xf32>
    %196 = tpu.matmul %193, %195, %cst_201 {dimension_numbers = #tpu.dot_dimension_numbers<[1], [0], [0], [1], [0, 0, 1, 1], [], []>} : vector<256x32xbf16>, vector<32x32xbf16>, vector<256x32xf32> -> vector<256x32xf32>
    %197 = arith.addf %190, %196 : vector<256x32xf32>
    %c2_202 = arith.constant 2 : index
    %c2_203 = arith.constant 2 : index
    %c2_204 = arith.constant 2 : index
    %c0_205 = arith.constant 0 : index
    %198 = vector.load %arg9[%c2_202, %c2_203, %c2_204, %c0_205] : memref<6x10x10x32xf32, #tpu.memory_space<vmem>>, vector<4x8x8x32xf32>
    %199 = vector.shape_cast %198 : vector<4x8x8x32xf32> to vector<256x32xf32>
    %200 = arith.truncf %199 : vector<256x32xf32> to vector<256x32xbf16>
    %c26 = arith.constant 26 : index
    %c0_206 = arith.constant 0 : index
    %c0_207 = arith.constant 0 : index
    %201 = vector.load %arg3[%c26, %c0_206, %c0_207] : memref<27x32x32xbf16, #tpu.memory_space<vmem>>, vector<1x32x32xbf16>
    %202 = vector.shape_cast %201 : vector<1x32x32xbf16> to vector<32x32xbf16>
    %cst_208 = arith.constant dense<0.000000e+00> : vector<256x32xf32>
    %203 = tpu.matmul %200, %202, %cst_208 {dimension_numbers = #tpu.dot_dimension_numbers<[1], [0], [0], [1], [0, 0, 1, 1], [], []>} : vector<256x32xbf16>, vector<32x32xbf16>, vector<256x32xf32> -> vector<256x32xf32>
    %204 = arith.addf %197, %203 : vector<256x32xf32>
    %c0_209 = arith.constant 0 : index
    %c0_210 = arith.constant 0 : index
    %205 = vector.load %arg6[%c0_209, %c0_210] : memref<1x32xf32, #tpu.memory_space<vmem>>, vector<1x32xf32>
    %206 = vector.broadcast %205 : vector<1x32xf32> to vector<256x32xf32>
    %207 = arith.addf %204, %206 : vector<256x32xf32>
    %cst_211 = arith.constant 0.000000e+00 : f32
    %208 = vector.broadcast %cst_211 : f32 to vector<256x32xf32>
    %209 = arith.maximumf %207, %208 : vector<256x32xf32>
    %210 = arith.truncf %209 : vector<256x32xf32> to vector<256x32xbf16>
    %c0_212 = arith.constant 0 : index
    %c0_213 = arith.constant 0 : index
    %211 = vector.load %arg4[%c0_212, %c0_213] : memref<32x128xbf16, #tpu.memory_space<vmem>>, vector<32x128xbf16>
    %cst_214 = arith.constant dense<0.000000e+00> : vector<256x128xf32>
    %212 = tpu.matmul %210, %211, %cst_214 {dimension_numbers = #tpu.dot_dimension_numbers<[1], [0], [0], [1], [0, 0, 1, 1], [], []>} : vector<256x32xbf16>, vector<32x128xbf16>, vector<256x128xf32> -> vector<256x128xf32>
    %c0_215 = arith.constant 0 : index
    %c0_216 = arith.constant 0 : index
    %213 = vector.load %arg7[%c0_215, %c0_216] : memref<1x128xf32, #tpu.memory_space<vmem>>, vector<1x128xf32>
    %214 = vector.broadcast %213 : vector<1x128xf32> to vector<256x128xf32>
    %215 = arith.addf %212, %214 : vector<256x128xf32>
    %216 = arith.addf %215, %2 : vector<256x128xf32>
    %cst_217 = arith.constant 0.000000e+00 : f32
    %217 = vector.broadcast %cst_217 : f32 to vector<256x128xf32>
    %218 = arith.maximumf %216, %217 : vector<256x128xf32>
    %219 = vector.shape_cast %218 : vector<256x128xf32> to vector<4x8x8x128xf32>
    %c0_218 = arith.constant 0 : index
    %c0_219 = arith.constant 0 : index
    %c0_220 = arith.constant 0 : index
    %c0_221 = arith.constant 0 : index
    %c0_222 = arith.constant 0 : index
    %220 = vector.load %arg8[%c0_218, %c0_219, %c0_220, %c0_221, %c0_222] : memref<1x4x8x8x128xf32, #tpu.memory_space<vmem>>, vector<1x4x8x8x128xf32>
    %221 = vector.shape_cast %220 : vector<1x4x8x8x128xf32> to vector<4x8x8x128xf32>
    %222 = vector.shape_cast %219 : vector<4x8x8x128xf32> to vector<1x4x8x8x128xf32>
    tpu.vector_store %arg8[%c0_218, %c0_219, %c0_220, %c0_221, %c0_222], %222 {strides = array<i32>} : memref<1x4x8x8x128xf32, #tpu.memory_space<vmem>>, vector<1x4x8x8x128xf32>,
    return
  }
  func.func @transform_0(%arg0: i32) -> (i32, i32, i32, i32, i32) {
    %c0_i32 = arith.constant 0 : i32
    %c0_i32_0 = arith.constant 0 : i32
    %c0_i32_1 = arith.constant 0 : i32
    %c0_i32_2 = arith.constant 0 : i32
    %c0_i32_3 = arith.constant 0 : i32
    return %arg0, %c0_i32, %c0_i32_0, %c0_i32_1, %c0_i32_2 : i32, i32, i32, i32, i32
  }
  func.func @transform_1(%arg0: i32) -> (i32, i32) {
    %c0_i32 = arith.constant 0 : i32
    %c0_i32_0 = arith.constant 0 : i32
    %c0_i32_1 = arith.constant 0 : i32
    return %c0_i32, %c0_i32_0 : i32, i32
  }
  func.func @transform_2(%arg0: i32) -> (i32, i32, i32) {
    %c0_i32 = arith.constant 0 : i32
    %c0_i32_0 = arith.constant 0 : i32
    %c0_i32_1 = arith.constant 0 : i32
    %c0_i32_2 = arith.constant 0 : i32
    return %c0_i32, %c0_i32_0, %c0_i32_1 : i32, i32, i32
  }
  func.func @transform_3(%arg0: i32) -> (i32, i32) {
    %c0_i32 = arith.constant 0 : i32
    %c0_i32_0 = arith.constant 0 : i32
    %c0_i32_1 = arith.constant 0 : i32
    return %c0_i32, %c0_i32_0 : i32, i32
  }
  func.func @transform_4(%arg0: i32) -> (i32, i32) {
    %c0_i32 = arith.constant 0 : i32
    %c0_i32_0 = arith.constant 0 : i32
    %c0_i32_1 = arith.constant 0 : i32
    return %c0_i32, %c0_i32_0 : i32, i32
  }
  func.func @transform_5(%arg0: i32) -> (i32, i32) {
    %c0_i32 = arith.constant 0 : i32
    %c0_i32_0 = arith.constant 0 : i32
    %c0_i32_1 = arith.constant 0 : i32
    return %c0_i32, %c0_i32_0 : i32, i32
  }
  func.func @transform_6(%arg0: i32) -> (i32, i32) {
    %c0_i32 = arith.constant 0 : i32
    %c0_i32_0 = arith.constant 0 : i32
    %c0_i32_1 = arith.constant 0 : i32
    return %c0_i32, %c0_i32_0 : i32, i32
  }
  func.func @transform_7(%arg0: i32) -> (i32, i32, i32, i32, i32) {
    %c0_i32 = arith.constant 0 : i32
    %c0_i32_0 = arith.constant 0 : i32
    %c0_i32_1 = arith.constant 0 : i32
    %c0_i32_2 = arith.constant 0 : i32
    %c0_i32_3 = arith.constant 0 : i32
    return %arg0, %c0_i32, %c0_i32_0, %c0_i32_1, %c0_i32_2 : i32, i32, i32, i32, i32
  }
}

</mosaic_0001>

<llo_original>
// kernel: tpu_custom_call.1
$region0: #{tpu_custom_call.1}
  #allocation0 [shape = 'u32[]', space=smem, size = 0x4, offset = 0x4, fixed_abs, tag = 'smem constant byte address 0x4 - core index']
  #allocation1 [shape = 'u32[144,128]{1,0:T(1,128)}', space=vmem, size = 0x12000, scoped, tag = 'internal scratch']
  #allocation2 [shape = 'f32[6,10,10,32]{3,2,1,0:T(8,128)}', space=vmem, size = 0x78000, scoped, tag = 'scratch operand']
  %s0 = inlined_call_operand.hbm [shape: f32[2,4,8,8,128], index: 0, kind: input, shape index: {}]
  %s1 = inlined_call_operand.vmem [shape: bf16[128,32], index: 1, kind: input, shape index: {}]
  %s2 = inlined_call_operand.hbm [shape: bf16[27,32,32], index: 2, kind: input, shape index: {}]
  %s3 = inlined_call_operand.vmem [shape: bf16[32,128], index: 3, kind: input, shape index: {}]
  %s4 = inlined_call_operand.vmem [shape: f32[1,32], index: 4, kind: input, shape index: {}]
  %s5 = inlined_call_operand.vmem [shape: f32[1,32], index: 5, kind: input, shape index: {}]
  %s6 = inlined_call_operand.vmem [shape: f32[1,128], index: 6, kind: input, shape index: {}]
  %s7 = inlined_call_operand.hbm [shape: f32[2,4,8,8,128], index: 7, kind: output, shape index: {}]
  %s8 = sld [smem:[#allocation0]]
  $region69: #{tpu_custom_call.1} parent=0
    _
  %s10 = ssub.s32 1, %s8
  %s11 = scalar_select 0, %s10, %s8
  $region1: #{tpu_custom_call.1} parent=0
    #allocation3 [shape = 'u8[262144]{0}', space=vmem, size = 0x40000, scoped, tag = 'input window, operand 0']
    #allocation4 [shape = 's32[2]{0}', space=sflag, size = 0x8, scoped, tag = 'scoped memory for tpu_custom_call.1']
    #allocation5 [shape = 's32[2]{0}', space=sflag, size = 0x8, scoped, tag = 'scoped memory for tpu_custom_call.1']
    #allocation6 [shape = 'u8[221184]{0}', space=vmem, size = 0x36000, scoped, tag = 'input window, operand 2, single buffered']
    #allocation7 [shape = 's32[1]{0}', space=sflag, size = 0x4, scoped, tag = 'scoped memory for tpu_custom_call.1']
    #allocation8 [shape = 'u8[262144]{0}', space=vmem, size = 0x40000, scoped, tag = 'output window, operand 0']
    %12 = vsyncpa [#allocation4], 0
    %s13 = scalar_lea.sflag [#allocation4], 1
    %14 = vsyncpa %s13, 0
    %15 = vsyncpa [#allocation7], 0
    %16 = vsyncpa [#allocation5], 0
    %s17 = scalar_lea.sflag [#allocation5], 1
    %18 = vsyncpa %s17, 0
    loop: start=0, step=1, limit=4
    $region2: #{tpu_custom_call.1} parent=1 // loop_pre_header
      _
    $region3: #{tpu_custom_call.1} parent=1 // loop_header
      %s20 = sphi 0, %s24
      %p21 = scmp.ge.s32.totalorder %s20, 4
      %s30 = sphi 0, %s32
      %s33 = sphi 0, %s30
      %s34 = sphi 0, %s33
      %s50 = sphi 0, %s34
      %s54 = sphi 0, %s54
      %s56 = sphi 0, %s54
      %s57 = sphi 0, %s56
      %s71 = sphi 0, %s57
      %s75 = sphi 0, %s75
      %s77 = sphi 0, %s75
      %s78 = sphi 0, %s77
      %s92 = sphi 0, %s78
      %s96 = sphi 0, %s96
      %s98 = sphi 0, %s96
      %s99 = sphi 0, %s98
      %s113 = sphi 0, %s99
      %s117 = sphi 0, %s117
      %s119 = sphi 0, %s117
      %s120 = sphi 0, %s119
      %s134 = sphi 0, %s120
      %s138 = sphi 0, %s138
      %s140 = sphi 0, %s138
      %s141 = sphi 0, %s140
      %s155 = sphi 0, %s141
      %s159 = sphi 0, %s159
      %s161 = sphi 0, %s159
      %s162 = sphi 0, %s161
      %s176 = sphi 0, %s162
      %s182 = sphi 0, %s184
      %s185 = sphi 0, %s182
      %s186 = sphi 0, %s185
      %s202 = sphi 0, %s186
    $region4: #{tpu_custom_call.1} parent=1 // loop_header_branch
      %23 = sbr.rel (%p21) target = $region8
    $region5: #{tpu_custom_call.1} parent=1 // loop_body
      %s25 = ssub.s32 %s20, 1
      %s26 = ssub.s32 %s20, 2
      %s27 = sadd.s32 %s20, 1
      %s28 = ssub.s32 %s20, %s27
      %p29 = scmp.eq.s32.totalorder %s28, 0
      %s31 = sadd.s32 %s30, 1
      %s32 = scalar_select %p29, %s30, %s31
      %p35 = pneg %p29
      %p36 = scmp.eq.s32.totalorder %s20, 1
      %p37 = por %p35, %p36
      %p38 = scmp.ne.s32.totalorder %s30, %s33
      %p39 = scmp.eq.s32.totalorder %s20, 0
      %p40 = por %p38, %p39
      %p41 = scmp.ne.s32.totalorder %s30, %s33
      %p42 = scmp.eq.s32.totalorder %s25, 1
      %p43 = por %p41, %p42
      %p44 = scmp.ne.s32.totalorder %s33, %s34
      %p45 = scmp.eq.s32.totalorder %s25, 0
      %p46 = por %p44, %p45
      %p47 = scmp.ne.s32.totalorder %s33, %s34
      %p48 = scmp.eq.s32.totalorder %s26, 1
      %p49 = por %p47, %p48
      %p51 = scmp.ne.s32.totalorder %s34, %s50
      %p52 = scmp.eq.s32.totalorder %s26, 0
      %p53 = por %p51, %p52
      %s55 = sadd.s32 %s54, 1
      %p58 = scmp.eq.s32.totalorder %s20, 1
      %p59 = scmp.ne.s32.totalorder %s54, %s56
      %p60 = scmp.eq.s32.totalorder %s20, 0
      %p61 = por %p59, %p60
      %p62 = scmp.ne.s32.totalorder %s54, %s56
      %p63 = scmp.eq.s32.totalorder %s25, 1
      %p64 = por %p62, %p63
      %p65 = scmp.ne.s32.totalorder %s56, %s57
      %p66 = scmp.eq.s32.totalorder %s25, 0
      %p67 = por %p65, %p66
      %p68 = scmp.ne.s32.totalorder %s56, %s57
      %p69 = scmp.eq.s32.totalorder %s26, 1
      %p70 = por %p68, %p69
      %p72 = scmp.ne.s32.totalorder %s57, %s71
      %p73 = scmp.eq.s32.totalorder %s26, 0
      %p74 = por %p72, %p73
      %s76 = sadd.s32 %s75, 1
      %p79 = scmp.eq.s32.totalorder %s20, 1
      %p80 = scmp.ne.s32.totalorder %s75, %s77
      %p81 = scmp.eq.s32.totalorder %s20, 0
      %p82 = por %p80, %p81
      %p83 = scmp.ne.s32.totalorder %s75, %s77
      %p84 = scmp.eq.s32.totalorder %s25, 1
      %p85 = por %p83, %p84
      %p86 = scmp.ne.s32.totalorder %s77, %s78
      %p87 = scmp.eq.s32.totalorder %s25, 0
      %p88 = por %p86, %p87
      %p89 = scmp.ne.s32.totalorder %s77, %s78
      %p90 = scmp.eq.s32.totalorder %s26, 1
      %p91 = por %p89, %p90
      %p93 = scmp.ne.s32.totalorder %s78, %s92
      %p94 = scmp.eq.s32.totalorder %s26, 0
      %p95 = por %p93, %p94
      %s97 = sadd.s32 %s96, 1
      %p100 = scmp.eq.s32.totalorder %s20, 1
      %p101 = scmp.ne.s32.totalorder %s96, %s98
      %p102 = scmp.eq.s32.totalorder %s20, 0
      %p103 = por %p101, %p102
      %p104 = scmp.ne.s32.totalorder %s96, %s98
      %p105 = scmp.eq.s32.totalorder %s25, 1
      %p106 = por %p104, %p105
      %p107 = scmp.ne.s32.totalorder %s98, %s99
      %p108 = scmp.eq.s32.totalorder %s25, 0
      %p109 = por %p107, %p108
      %p110 = scmp.ne.s32.totalorder %s98, %s99
      %p111 = scmp.eq.s32.totalorder %s26, 1
      %p112 = por %p110, %p111
      %p114 = scmp.ne.s32.totalorder %s99, %s113
      %p115 = scmp.eq.s32.totalorder %s26, 0
      %p116 = por %p114, %p115
      %s118 = sadd.s32 %s117, 1
      %p121 = scmp.eq.s32.totalorder %s20, 1
      %p122 = scmp.ne.s32.totalorder %s117, %s119
      %p123 = scmp.eq.s32.totalorder %s20, 0
      %p124 = por %p122, %p123
      %p125 = scmp.ne.s32.totalorder %s117, %s119
      %p126 = scmp.eq.s32.totalorder %s25, 1
      %p127 = por %p125, %p126
      %p128 = scmp.ne.s32.totalorder %s119, %s120
      %p129 = scmp.eq.s32.totalorder %s25, 0
      %p130 = por %p128, %p129
      %p131 = scmp.ne.s32.totalorder %s119, %s120
      %p132 = scmp.eq.s32.totalorder %s26, 1
      %p133 = por %p131, %p132
      %p135 = scmp.ne.s32.totalorder %s120, %s134
      %p136 = scmp.eq.s32.totalorder %s26, 0
      %p137 = por %p135, %p136
      %s139 = sadd.s32 %s138, 1
      %p142 = scmp.eq.s32.totalorder %s20, 1
      %p143 = scmp.ne.s32.totalorder %s138, %s140
      %p144 = scmp.eq.s32.totalorder %s20, 0
      %p145 = por %p143, %p144
      %p146 = scmp.ne.s32.totalorder %s138, %s140
      %p147 = scmp.eq.s32.totalorder %s25, 1
      %p148 = por %p146, %p147
      %p149 = scmp.ne.s32.totalorder %s140, %s141
      %p150 = scmp.eq.s32.totalorder %s25, 0
      %p151 = por %p149, %p150
      %p152 = scmp.ne.s32.totalorder %s140, %s141
      %p153 = scmp.eq.s32.totalorder %s26, 1
      %p154 = por %p152, %p153
      %p156 = scmp.ne.s32.totalorder %s141, %s155
      %p157 = scmp.eq.s32.totalorder %s26, 0
      %p158 = por %p156, %p157
      %s160 = sadd.s32 %s159, 1
      %p163 = scmp.eq.s32.totalorder %s20, 1
      %p164 = scmp.ne.s32.totalorder %s159, %s161
      %p165 = scmp.eq.s32.totalorder %s20, 0
      %p166 = por %p164, %p165
      %p167 = scmp.ne.s32.totalorder %s159, %s161
      %p168 = scmp.eq.s32.totalorder %s25, 1
      %p169 = por %p167, %p168
      %p170 = scmp.ne.s32.totalorder %s161, %s162
      %p171 = scmp.eq.s32.totalorder %s25, 0
      %p172 = por %p170, %p171
      %p173 = scmp.ne.s32.totalorder %s161, %s162
      %p174 = scmp.eq.s32.totalorder %s26, 1
      %p175 = por %p173, %p174
      %p177 = scmp.ne.s32.totalorder %s162, %s176
      %p178 = scmp.eq.s32.totalorder %s26, 0
      %p179 = por %p177, %p178
      %s180 = ssub.s32 %s20, %s27
      %p181 = scmp.eq.s32.totalorder %s180, 0
      %s183 = sadd.s32 %s182, 1
      %s184 = scalar_select %p181, %s182, %s183
      %p187 = pneg %p181
      %p188 = scmp.eq.s32.totalorder %s20, 1
      %p189 = por %p187, %p188
      %p190 = scmp.ne.s32.totalorder %s182, %s185
      %p191 = scmp.eq.s32.totalorder %s20, 0
      %p192 = por %p190, %p191
      %p193 = scmp.ne.s32.totalorder %s182, %s185
      %p194 = scmp.eq.s32.totalorder %s25, 1
      %p195 = por %p193, %p194
      %p196 = scmp.ne.s32.totalorder %s185, %s186
      %p197 = scmp.eq.s32.totalorder %s25, 0
      %p198 = por %p196, %p197
      %p199 = scmp.ne.s32.totalorder %s185, %s186
      %p200 = scmp.eq.s32.totalorder %s26, 1
      %p201 = por %p199, %p200
      %p203 = scmp.ne.s32.totalorder %s186, %s202
      %p204 = scmp.eq.s32.totalorder %s26, 0
      %p205 = por %p203, %p204
      %p206 = scmp.le.s32.totalorder 1, %s20
      %p207 = scmp.lt.s32.totalorder %s20, 3
      %p208 = pnand %p206, %p207
      %p209 = pneg %p208
      // Predicated region
      $region9: #{tpu_custom_call.1} parent=5 // pred_check
        _
      $region10: #{tpu_custom_call.1} parent=5 // pred_check_branch
        %211 = sbr.rel (%p208) target = $region12
      $region11: #{tpu_custom_call.1} parent=5 // pred_region
        %s212 = ssub.s32 %s20, 1
        // Predicated region
        $region13: #{tpu_custom_call.1} parent=11 // pred_check
          %p213 = pneg %p67
        $region14: #{tpu_custom_call.1} parent=11 // pred_check_branch
          %215 = sbr.rel (%p213) target = $region16
        $region15: #{tpu_custom_call.1} parent=11 // pred_region
          _
        $region16: #{tpu_custom_call.1} parent=11 // pred_fallthru
          _
        // Predicated region
        $region17: #{tpu_custom_call.1} parent=11 // pred_check
          %p216 = pneg %p88
        $region18: #{tpu_custom_call.1} parent=11 // pred_check_branch
          %218 = sbr.rel (%p216) target = $region20
        $region19: #{tpu_custom_call.1} parent=11 // pred_region
          %s220 = ssub.s32 6912, 6912
          %221 = vsyncadd [#allocation7], %s220
          %s222 = sshll.u32 [#allocation6], 4
          %s223 = int_to_ptr.vmem [resolvable:$true] %s222
          %228 = dma.hbm_to_vmem [thread:$0]  %s2, 6912, %s223, [#allocation7], 64, 64, 4
        $region20: #{tpu_custom_call.1} parent=11 // pred_fallthru
          _
        // Predicated region
        $region21: #{tpu_custom_call.1} parent=11 // pred_check
          %p229 = pneg %p109
        $region22: #{tpu_custom_call.1} parent=11 // pred_check_branch
          %231 = sbr.rel (%p229) target = $region24
        $region23: #{tpu_custom_call.1} parent=11 // pred_region
          _
        $region24: #{tpu_custom_call.1} parent=11 // pred_fallthru
          _
        // Predicated region
        $region25: #{tpu_custom_call.1} parent=11 // pred_check
          %p232 = pneg %p130
        $region26: #{tpu_custom_call.1} parent=11 // pred_check_branch
          %234 = sbr.rel (%p232) target = $region28
        $region27: #{tpu_custom_call.1} parent=11 // pred_region
          _
        $region28: #{tpu_custom_call.1} parent=11 // pred_fallthru
          _
        // Predicated region
        $region29: #{tpu_custom_call.1} parent=11 // pred_check
          %p235 = pneg %p151
        $region30: #{tpu_custom_call.1} parent=11 // pred_check_branch
          %237 = sbr.rel (%p235) target = $region32
        $region31: #{tpu_custom_call.1} parent=11 // pred_region
          _
        $region32: #{tpu_custom_call.1} parent=11 // pred_fallthru
          _
        // Predicated region
        $region33: #{tpu_custom_call.1} parent=11 // pred_check
          %p238 = pneg %p172
        $region34: #{tpu_custom_call.1} parent=11 // pred_check_branch
          %240 = sbr.rel (%p238) target = $region36
        $region35: #{tpu_custom_call.1} parent=11 // pred_region
          _
        $region36: #{tpu_custom_call.1} parent=11 // pred_fallthru
          _
      $region12: #{tpu_custom_call.1} parent=5 // pred_fallthru
        _
      %p241 = scmp.lt.s32.totalorder %s20, 2
      // Predicated region
      $region37: #{tpu_custom_call.1} parent=5 // pred_check
        %p242 = pneg %p241
      $region38: #{tpu_custom_call.1} parent=5 // pred_check_branch
        %244 = sbr.rel (%p242) target = $region40
      $region39: #{tpu_custom_call.1} parent=5 // pred_region
        // Predicated region
        $region41: #{tpu_custom_call.1} parent=39 // pred_check
          %p245 = pneg %p40
        $region42: #{tpu_custom_call.1} parent=39 // pred_check_branch
          %247 = sbr.rel (%p245) target = $region44
        $region43: #{tpu_custom_call.1} parent=39 // pred_region
          %s248 = sand.u32 %s30, 1
          %s249 = scalar_lea.sflag [#allocation4], %s248
          %s250 = sand.u32 %s30, 1
          %s251 = smul.addr %s250, 256
          %s252 = scalar_lea.vmem [#allocation3], %s251
          %s254 = ssub.s32 4096, 4096
          %255 = vsyncadd %s249, %s254
          %s256 = smul.addr %s20, 32
          %s257 = smul.addr %s256, 128
          %s258 = scalar_lea.hbm %s0, %s257
          %s259 = sshll.u32 %s252, 4
          %s260 = int_to_ptr.vmem [resolvable:$true] %s259
          %265 = dma.hbm_to_vmem [thread:$0]  %s258, 4096, %s260, %s249, 128, 128, 8
        $region44: #{tpu_custom_call.1} parent=39 // pred_fallthru
          _
      $region40: #{tpu_custom_call.1} parent=5 // pred_fallthru
        _
      %p266 = scmp.le.s32.totalorder 1, %s20
      %p267 = scmp.lt.s32.totalorder %s20, 3
      %p268 = pnand %p266, %p267
      %p269 = pneg %p268
      // Predicated region
      $region45: #{tpu_custom_call.1} parent=5 // pred_check
        _
      $region46: #{tpu_custom_call.1} parent=5 // pred_check_branch
        %271 = sbr.rel (%p268) target = $region48
      $region47: #{tpu_custom_call.1} parent=5 // pred_region
        %s272 = ssub.s32 %s20, 1
        %s273 = sand.u32 %s33, 1
        %s274 = scalar_lea.sflag [#allocation4], %s273
        %s275 = sand.u32 %s33, 1
        %s276 = smul.addr %s275, 256
        %s277 = scalar_lea.vmem [#allocation3], %s276
        // Predicated region
        $region49: #{tpu_custom_call.1} parent=47 // pred_check
          %p278 = pneg %p46
        $region50: #{tpu_custom_call.1} parent=47 // pred_check_branch
          %280 = sbr.rel (%p278) target = $region52
        $region51: #{tpu_custom_call.1} parent=47 // pred_region
          %281 = dma.done %s274, 4096
        $region52: #{tpu_custom_call.1} parent=47 // pred_fallthru
          _
        // Predicated region
        $region53: #{tpu_custom_call.1} parent=47 // pred_check
          %p282 = pneg %p88
        $region54: #{tpu_custom_call.1} parent=47 // pred_check_branch
          %284 = sbr.rel (%p282) target = $region56
        $region55: #{tpu_custom_call.1} parent=47 // pred_region
          %285 = dma.done [#allocation7], 6912
        $region56: #{tpu_custom_call.1} parent=47 // pred_fallthru
          _
        %s286 = sand.u32 %s33, 1
        %s287 = scalar_lea.sflag [#allocation4], %s286
        %s288 = sand.u32 %s33, 1
        %s289 = smul.addr %s288, 256
        %s290 = scalar_lea.vmem [#allocation3], %s289
        %p291 = pneg %p46
        %p292 = pneg %p43
        %p293 = pneg %p67
        %p294 = pneg %p64
        %p295 = pneg %p88
        %p296 = pneg %p85
        %p297 = pneg %p109
        %p298 = pneg %p106
        %p299 = pneg %p130
        %p300 = pneg %p127
        %p301 = pneg %p151
        %p302 = pneg %p148
        %p303 = pneg %p172
        %p304 = pneg %p169
        %p305 = pneg %p198
        %p306 = pneg %p195
        %s307 = sand.u32 %s185, 1
        %s308 = scalar_lea.sflag [#allocation5], %s307
        %s309 = sand.u32 %s185, 1
        %s310 = smul.addr %s309, 256
        %s311 = scalar_lea.vmem [#allocation8], %s310
        %v313 = vld [vmem:[%s277] sm:$0xff]
        %v314 = vld [vmem:[%s277 + $0x8] sm:$0xff]
        %v315 = vld [vmem:[%s277 + $0x10] sm:$0xff]
        %v316 = vld [vmem:[%s277 + $0x18] sm:$0xff]
        %v317 = vld [vmem:[%s277 + $0x20] sm:$0xff]
        %v318 = vld [vmem:[%s277 + $0x28] sm:$0xff]
        %v319 = vld [vmem:[%s277 + $0x30] sm:$0xff]
        %v320 = vld [vmem:[%s277 + $0x38] sm:$0xff]
        %v321 = vld [vmem:[%s277 + $0x40] sm:$0xff]
        %v322 = vld [vmem:[%s277 + $0x48] sm:$0xff]
        %v323 = vld [vmem:[%s277 + $0x50] sm:$0xff]
        %v324 = vld [vmem:[%s277 + $0x58] sm:$0xff]
        %v325 = vld [vmem:[%s277 + $0x60] sm:$0xff]
        %v326 = vld [vmem:[%s277 + $0x68] sm:$0xff]
        %v327 = vld [vmem:[%s277 + $0x70] sm:$0xff]
        %v328 = vld [vmem:[%s277 + $0x78] sm:$0xff]
        %v329 = vld [vmem:[%s277 + $0x80] sm:$0xff]
        %v330 = vld [vmem:[%s277 + $0x88] sm:$0xff]
        %v331 = vld [vmem:[%s277 + $0x90] sm:$0xff]
        %v332 = vld [vmem:[%s277 + $0x98] sm:$0xff]
        %v333 = vld [vmem:[%s277 + $0xa0] sm:$0xff]
        %v334 = vld [vmem:[%s277 + $0xa8] sm:$0xff]
        %v335 = vld [vmem:[%s277 + $0xb0] sm:$0xff]
        %v336 = vld [vmem:[%s277 + $0xb8] sm:$0xff]
        %v337 = vld [vmem:[%s277 + $0xc0] sm:$0xff]
        %v338 = vld [vmem:[%s277 + $0xc8] sm:$0xff]
        %v339 = vld [vmem:[%s277 + $0xd0] sm:$0xff]
        %v340 = vld [vmem:[%s277 + $0xd8] sm:$0xff]
        %v341 = vld [vmem:[%s277 + $0xe0] sm:$0xff]
        %v342 = vld [vmem:[%s277 + $0xe8] sm:$0xff]
        %v343 = vld [vmem:[%s277 + $0xf0] sm:$0xff]
        %v344 = vld [vmem:[%s277 + $0xf8] sm:$0xff]
        %v345 = vpack.c.bf16 %v314, %v313
        %v346 = vpack.c.bf16 %v316, %v315
        %v347 = vpack.c.bf16 %v318, %v317
        %v348 = vpack.c.bf16 %v320, %v319
        %v349 = vpack.c.bf16 %v322, %v321
        %v350 = vpack.c.bf16 %v324, %v323
        %v351 = vpack.c.bf16 %v326, %v325
        %v352 = vpack.c.bf16 %v328, %v327
        %v353 = vpack.c.bf16 %v330, %v329
        %v354 = vpack.c.bf16 %v332, %v331
        %v355 = vpack.c.bf16 %v334, %v333
        %v356 = vpack.c.bf16 %v336, %v335
        %v357 = vpack.c.bf16 %v338, %v337
        %v358 = vpack.c.bf16 %v340, %v339
        %v359 = vpack.c.bf16 %v342, %v341
        %v360 = vpack.c.bf16 %v344, %v343
        %v361 = vld [vmem:[%s1] sm:$0xf]
        %v362 = vld [vmem:[%s1 + $0x4] sm:$0xf]
        %v363 = vld [vmem:[%s1 + $0x8] sm:$0xf]
        %v364 = vld [vmem:[%s1 + $0xc] sm:$0xf]
        %v365 = vld [vmem:[%s1 + $0x10] sm:$0xf]
        %v366 = vld [vmem:[%s1 + $0x14] sm:$0xf]
        %v367 = vld [vmem:[%s1 + $0x18] sm:$0xf]
        %v368 = vld [vmem:[%s1 + $0x1c] sm:$0xf]
        %v369 = vld [vmem:[%s1 + $0x20] sm:$0xf]
        %v370 = vld [vmem:[%s1 + $0x24] sm:$0xf]
        %v371 = vld [vmem:[%s1 + $0x28] sm:$0xf]
        %v372 = vld [vmem:[%s1 + $0x2c] sm:$0xf]
        %v373 = vld [vmem:[%s1 + $0x30] sm:$0xf]
        %v374 = vld [vmem:[%s1 + $0x34] sm:$0xf]
        %v375 = vld [vmem:[%s1 + $0x38] sm:$0xf]
        %v376 = vld [vmem:[%s1 + $0x3c] sm:$0xf]
        %v377 = vld [vmem:[%s4] sm:$0x1]
        %v379 = vlaneseq
        %v380 = vshrl.u32 %v379, 7
        %v381 = vsub.s32 0, %v380
        %v382 = vrot.slane %v377, %v381
        %v400 = vunpack.c.l.b16 %v361
        %v401 = vunpack.c.l.b16 %v362
        %v402 = vunpack.c.l.b16 %v363
        %v403 = vunpack.c.l.b16 %v364
        %v404 = vunpack.c.l.b16 %v365
        %v405 = vunpack.c.l.b16 %v366
        %v406 = vunpack.c.l.b16 %v367
        %v407 = vunpack.c.l.b16 %v368
        %v408 = vunpack.c.l.b16 %v369
        %v409 = vunpack.c.l.b16 %v370
        %v410 = vunpack.c.l.b16 %v371
        %v411 = vunpack.c.l.b16 %v372
        %v412 = vunpack.c.l.b16 %v373
        %v413 = vunpack.c.l.b16 %v374
        %v414 = vunpack.c.l.b16 %v375
        %v415 = vunpack.c.l.b16 %v376
        %v416 = vpack.c.b16 %v401, %v400
        %v417 = vpack.c.b16 %v403, %v402
        %v418 = vpack.c.b16 %v405, %v404
        %v419 = vpack.c.b16 %v407, %v406
        %v420 = vpack.c.b16 %v409, %v408
        %v421 = vpack.c.b16 %v411, %v410
        %v422 = vpack.c.b16 %v413, %v412
        %v423 = vpack.c.b16 %v415, %v414
        %432 = vmatprep.subr.bf16.mxu0 0
        %433 = vmatpush1.bf16.msra.mxu0 %v423
        %434 = vmatprep.subr.bf16.mxu0 0
        %435 = vmatpush1.bf16.msra.mxu0 %v422
        %436 = vmatprep.subr.bf16.mxu0 0
        %437 = vmatpush1.bf16.msra.mxu0 %v421
        %438 = vmatprep.subr.bf16.mxu0 0
        %439 = vmatpush1.bf16.msra.mxu0 %v420
        %440 = vmatprep.subr.bf16.mxu0 0
        %441 = vmatpush1.bf16.msra.mxu0 %v419
        %442 = vmatprep.subr.bf16.mxu0 0
        %443 = vmatpush1.bf16.msra.mxu0 %v418
        %444 = vmatprep.subr.bf16.mxu0 0
        %445 = vmatpush1.bf16.msra.mxu0 %v417
        %446 = vmatprep.subr.bf16.mxu0 0
        %447 = vmatpush1.bf16.msra.mxu0 %v416
        %448 = vmatprep.subr.bf16.mxu0 0
        %449 = vmatpush2.bf16.msra.mxu0 0
        %450 = vmatprep.subr.bf16.mxu0 0
        %451 = vmatpush2.bf16.msra.mxu0 0
        %452 = vmatprep.subr.bf16.mxu0 0
        %453 = vmatpush2.bf16.msra.mxu0 0
        %454 = vmatprep.subr.bf16.mxu0 0
        %455 = vmatpush2.bf16.msra.mxu0 0
        %456 = vmatprep.subr.bf16.mxu0 0
        %457 = vmatpush2.bf16.msra.mxu0 0
        %458 = vmatprep.subr.bf16.mxu0 0
        %459 = vmatpush2.bf16.msra.mxu0 0
        %460 = vmatprep.subr.bf16.mxu0 0
        %461 = vmatpush2.bf16.msra.mxu0 0
        %462 = vmatprep.subr.bf16.mxu0 0
        %463 = vmatpush2.bf16.msra.mxu0 0
        %464 = vmatprep.mubr.bf16.mxu0 0
        %465 = vmatmul.mubr.bf16.gmra.mxu0 %v345
        %v466 = vpop.f32.mrf.mxu0
        %v467 = vadd.f32 %v382, %v466
        %v468 = vpop.f32.mrf.mxu0
        %v469 = vpop.f32.mrf.mxu0
        %v470 = vadd.f32 %v382, %v469
        %v471 = vpop.f32.mrf.mxu0
        %472 = vmatprep.mubr.bf16.mxu0 0
        %473 = vmatmul.mubr.bf16.gmra.mxu0 %v346
        %v474 = vpop.f32.mrf.mxu0
        %v475 = vadd.f32 %v382, %v474
        %v476 = vpop.f32.mrf.mxu0
        %v477 = vpop.f32.mrf.mxu0
        %v478 = vadd.f32 %v382, %v477
        %v479 = vpop.f32.mrf.mxu0
        %480 = vmatprep.mubr.bf16.mxu0 0
        %481 = vmatmul.mubr.bf16.gmra.mxu0 %v347
        %v482 = vpop.f32.mrf.mxu0
        %v483 = vadd.f32 %v382, %v482
        %v484 = vpop.f32.mrf.mxu0
        %v485 = vpop.f32.mrf.mxu0
        %v486 = vadd.f32 %v382, %v485
        %v487 = vpop.f32.mrf.mxu0
        %488 = vmatprep.mubr.bf16.mxu0 0
        %489 = vmatmul.mubr.bf16.gmra.mxu0 %v348
        %v490 = vpop.f32.mrf.mxu0
        %v491 = vadd.f32 %v382, %v490
        %v492 = vpop.f32.mrf.mxu0
        %v493 = vpop.f32.mrf.mxu0
        %v494 = vadd.f32 %v382, %v493
        %v495 = vpop.f32.mrf.mxu0
        %496 = vmatprep.mubr.bf16.mxu0 0
        %497 = vmatmul.mubr.bf16.gmra.mxu0 %v349
        %v498 = vpop.f32.mrf.mxu0
        %v499 = vadd.f32 %v382, %v498
        %v500 = vpop.f32.mrf.mxu0
        %v501 = vpop.f32.mrf.mxu0
        %v502 = vadd.f32 %v382, %v501
        %v503 = vpop.f32.mrf.mxu0
        %504 = vmatprep.mubr.bf16.mxu0 0
        %505 = vmatmul.mubr.bf16.gmra.mxu0 %v350
        %v506 = vpop.f32.mrf.mxu0
        %v507 = vadd.f32 %v382, %v506
        %v508 = vpop.f32.mrf.mxu0
        %v509 = vpop.f32.mrf.mxu0
        %v510 = vadd.f32 %v382, %v509
        %v511 = vpop.f32.mrf.mxu0
        %512 = vmatprep.mubr.bf16.mxu0 0
        %513 = vmatmul.mubr.bf16.gmra.mxu0 %v351
        %v514 = vpop.f32.mrf.mxu0
        %v515 = vadd.f32 %v382, %v514
        %v516 = vpop.f32.mrf.mxu0
        %v517 = vpop.f32.mrf.mxu0
        %v518 = vadd.f32 %v382, %v517
        %v519 = vpop.f32.mrf.mxu0
        %520 = vmatprep.mubr.bf16.mxu0 0
        %521 = vmatmul.mubr.bf16.gmra.mxu0 %v352
        %v522 = vpop.f32.mrf.mxu0
        %v523 = vadd.f32 %v382, %v522
        %v524 = vpop.f32.mrf.mxu0
        %v525 = vpop.f32.mrf.mxu0
        %v526 = vadd.f32 %v382, %v525
        %v527 = vpop.f32.mrf.mxu0
        %528 = vmatprep.mubr.bf16.mxu0 0
        %529 = vmatmul.mubr.bf16.gmra.mxu0 %v353
        %v530 = vpop.f32.mrf.mxu0
        %v531 = vadd.f32 %v382, %v530
        %v532 = vpop.f32.mrf.mxu0
        %v533 = vpop.f32.mrf.mxu0
        %v534 = vadd.f32 %v382, %v533
        %v535 = vpop.f32.mrf.mxu0
        %536 = vmatprep.mubr.bf16.mxu0 0
        %537 = vmatmul.mubr.bf16.gmra.mxu0 %v354
        %v538 = vpop.f32.mrf.mxu0
        %v539 = vadd.f32 %v382, %v538
        %v540 = vpop.f32.mrf.mxu0
        %v541 = vpop.f32.mrf.mxu0
        %v542 = vadd.f32 %v382, %v541
        %v543 = vpop.f32.mrf.mxu0
        %544 = vmatprep.mubr.bf16.mxu0 0
        %545 = vmatmul.mubr.bf16.gmra.mxu0 %v355
        %v546 = vpop.f32.mrf.mxu0
        %v547 = vadd.f32 %v382, %v546
        %v548 = vpop.f32.mrf.mxu0
        %v549 = vpop.f32.mrf.mxu0
        %v550 = vadd.f32 %v382, %v549
        %v551 = vpop.f32.mrf.mxu0
        %552 = vmatprep.mubr.bf16.mxu0 0
        %553 = vmatmul.mubr.bf16.gmra.mxu0 %v356
        %v554 = vpop.f32.mrf.mxu0
        %v555 = vadd.f32 %v382, %v554
        %v556 = vpop.f32.mrf.mxu0
        %v557 = vpop.f32.mrf.mxu0
        %v558 = vadd.f32 %v382, %v557
        %v559 = vpop.f32.mrf.mxu0
        %560 = vmatprep.mubr.bf16.mxu0 0
        %561 = vmatmul.mubr.bf16.gmra.mxu0 %v357
        %v562 = vpop.f32.mrf.mxu0
        %v563 = vadd.f32 %v382, %v562
        %v564 = vpop.f32.mrf.mxu0
        %v565 = vpop.f32.mrf.mxu0
        %v566 = vadd.f32 %v382, %v565
        %v567 = vpop.f32.mrf.mxu0
        %568 = vmatprep.mubr.bf16.mxu0 0
        %569 = vmatmul.mubr.bf16.gmra.mxu0 %v358
        %v570 = vpop.f32.mrf.mxu0
        %v571 = vadd.f32 %v382, %v570
        %v572 = vpop.f32.mrf.mxu0
        %v573 = vpop.f32.mrf.mxu0
        %v574 = vadd.f32 %v382, %v573
        %v575 = vpop.f32.mrf.mxu0
        %576 = vmatprep.mubr.bf16.mxu0 0
        %577 = vmatmul.mubr.bf16.gmra.mxu0 %v359
        %v578 = vpop.f32.mrf.mxu0
        %v579 = vadd.f32 %v382, %v578
        %v580 = vpop.f32.mrf.mxu0
        %v581 = vpop.f32.mrf.mxu0
        %v582 = vadd.f32 %v382, %v581
        %v583 = vpop.f32.mrf.mxu0
        %584 = vmatprep.mubr.bf16.mxu0 0
        %585 = vmatmul.mubr.bf16.gmra.mxu0 %v360
        %v586 = vpop.f32.mrf.mxu0
        %v587 = vadd.f32 %v382, %v586
        %v588 = vpop.f32.mrf.mxu0
        %v589 = vpop.f32.mrf.mxu0
        %v590 = vadd.f32 %v382, %v589
        %v591 = vpop.f32.mrf.mxu0
        %592 = vdwg.mxu0
        %v593 = vmax.f32 %v467, 0.0
        %v594 = vmax.f32 %v470, 0.0
        %v595 = vmax.f32 %v475, 0.0
        %v596 = vmax.f32 %v478, 0.0
        %v597 = vmax.f32 %v483, 0.0
        %v598 = vmax.f32 %v486, 0.0
        %v599 = vmax.f32 %v491, 0.0
        %v600 = vmax.f32 %v494, 0.0
        %v601 = vmax.f32 %v499, 0.0
        %v602 = vmax.f32 %v502, 0.0
        %v603 = vmax.f32 %v507, 0.0
        %v604 = vmax.f32 %v510, 0.0
        %v605 = vmax.f32 %v515, 0.0
        %v606 = vmax.f32 %v518, 0.0
        %v607 = vmax.f32 %v523, 0.0
        %v608 = vmax.f32 %v526, 0.0
        %v609 = vmax.f32 %v531, 0.0
        %v610 = vmax.f32 %v534, 0.0
        %v611 = vmax.f32 %v539, 0.0
        %v612 = vmax.f32 %v542, 0.0
        %v613 = vmax.f32 %v547, 0.0
        %v614 = vmax.f32 %v550, 0.0
        %v615 = vmax.f32 %v555, 0.0
        %v616 = vmax.f32 %v558, 0.0
        %v617 = vmax.f32 %v563, 0.0
        %v618 = vmax.f32 %v566, 0.0
        %v619 = vmax.f32 %v571, 0.0
        %v620 = vmax.f32 %v574, 0.0
        %v621 = vmax.f32 %v579, 0.0
        %v622 = vmax.f32 %v582, 0.0
        %v623 = vmax.f32 %v587, 0.0
        %v624 = vmax.f32 %v590, 0.0
        %vm625 = vcmask 261120
        %626 = vst.msk [vmem:[#allocation2] sm:$0xff] %vm625, 0.0
        %vm627 = vcmask 254976
        %628 = vst.msk [vmem:[#allocation2 + $0x8] sm:$0x3] %vm627, 0.0
        %629 = vst.msk [vmem:[#allocation2 + $0x10] sm:$0xff] %vm625, 0.0
        %630 = vst.msk [vmem:[#allocation2 + $0x18] sm:$0x3] %vm627, 0.0
        %631 = vst.msk [vmem:[#allocation2 + $0x20] sm:$0xff] %vm625, 0.0
        %632 = vst.msk [vmem:[#allocation2 + $0x28] sm:$0x3] %vm627, 0.0
        %633 = vst.msk [vmem:[#allocation2 + $0x30] sm:$0xff] %vm625, 0.0
        %634 = vst.msk [vmem:[#allocation2 + $0x38] sm:$0x3] %vm627, 0.0
        %635 = vst.msk [vmem:[#allocation2 + $0x40] sm:$0xff] %vm625, 0.0
        %636 = vst.msk [vmem:[#allocation2 + $0x48] sm:$0x3] %vm627, 0.0
        %637 = vst.msk [vmem:[#allocation2 + $0x50] sm:$0xff] %vm625, 0.0
        %638 = vst.msk [vmem:[#allocation2 + $0x58] sm:$0x3] %vm627, 0.0
        %639 = vst.msk [vmem:[#allocation2 + $0x60] sm:$0xff] %vm625, 0.0
        %640 = vst.msk [vmem:[#allocation2 + $0x68] sm:$0x3] %vm627, 0.0
        %641 = vst.msk [vmem:[#allocation2 + $0x70] sm:$0xff] %vm625, 0.0
        %642 = vst.msk [vmem:[#allocation2 + $0x78] sm:$0x3] %vm627, 0.0
        %643 = vst.msk [vmem:[#allocation2 + $0x80] sm:$0xff] %vm625, 0.0
        %644 = vst.msk [vmem:[#allocation2 + $0x88] sm:$0x3] %vm627, 0.0
        %645 = vst.msk [vmem:[#allocation2 + $0x90] sm:$0xff] %vm625, 0.0
        %646 = vst.msk [vmem:[#allocation2 + $0x98] sm:$0x3] %vm627, 0.0
        %647 = vst.msk [vmem:[#allocation2 + $0xa0] sm:$0xff] %vm625, 0.0
        %648 = vst.msk [vmem:[#allocation2 + $0xa8] sm:$0x3] %vm627, 0.0
        %649 = vst.msk [vmem:[#allocation2 + $0xb0] sm:$0xff] %vm625, 0.0
        %650 = vst.msk [vmem:[#allocation2 + $0xb8] sm:$0x3] %vm627, 0.0
        %651 = vst.msk [vmem:[#allocation2 + $0xc0] sm:$0xff] %vm625, 0.0
        %652 = vst.msk [vmem:[#allocation2 + $0xc8] sm:$0x3] %vm627, 0.0
        %653 = vst.msk [vmem:[#allocation2 + $0xd0] sm:$0xff] %vm625, 0.0
        %654 = vst.msk [vmem:[#allocation2 + $0xd8] sm:$0x3] %vm627, 0.0
        %655 = vst.msk [vmem:[#allocation2 + $0xe0] sm:$0xff] %vm625, 0.0
        %656 = vst.msk [vmem:[#allocation2 + $0xe8] sm:$0x3] %vm627, 0.0
        %657 = vst.msk [vmem:[#allocation2 + $0xf0] sm:$0xff] %vm625, 0.0
        %658 = vst.msk [vmem:[#allocation2 + $0xf8] sm:$0x3] %vm627, 0.0
        %659 = vst.msk [vmem:[#allocation2 + $0x100] sm:$0xff] %vm625, 0.0
        %660 = vst.msk [vmem:[#allocation2 + $0x108] sm:$0x3] %vm627, 0.0
        %661 = vst.msk [vmem:[#allocation2 + $0x110] sm:$0xff] %vm625, 0.0
        %662 = vst.msk [vmem:[#allocation2 + $0x118] sm:$0x3] %vm627, 0.0
        %663 = vst.msk [vmem:[#allocation2 + $0x120] sm:$0xff] %vm625, 0.0
        %664 = vst.msk [vmem:[#allocation2 + $0x128] sm:$0x3] %vm627, 0.0
        %665 = vst.msk [vmem:[#allocation2 + $0x130] sm:$0xff] %vm625, 0.0
        %666 = vst.msk [vmem:[#allocation2 + $0x138] sm:$0x3] %vm627, 0.0
        %667 = vst.msk [vmem:[#allocation2 + $0x140] sm:$0xff] %vm625, 0.0
        %668 = vst.msk [vmem:[#allocation2 + $0x148] sm:$0x3] %vm627, 0.0
        %669 = vst.msk [vmem:[#allocation2 + $0x150] sm:$0xff] %vm625, 0.0
        %670 = vst.msk [vmem:[#allocation2 + $0x158] sm:$0x3] %vm627, 0.0
        %671 = vst.msk [vmem:[#allocation2 + $0x160] sm:$0xff] %vm625, 0.0
        %672 = vst.msk [vmem:[#allocation2 + $0x168] sm:$0x3] %vm627, 0.0
        %673 = vst.msk [vmem:[#allocation2 + $0x170] sm:$0xff] %vm625, 0.0
        %674 = vst.msk [vmem:[#allocation2 + $0x178] sm:$0x3] %vm627, 0.0
        %675 = vst.msk [vmem:[#allocation2 + $0x180] sm:$0xff] %vm625, 0.0
        %676 = vst.msk [vmem:[#allocation2 + $0x188] sm:$0x3] %vm627, 0.0
        %677 = vst.msk [vmem:[#allocation2 + $0x190] sm:$0xff] %vm625, 0.0
        %678 = vst.msk [vmem:[#allocation2 + $0x198] sm:$0x3] %vm627, 0.0
        %679 = vst.msk [vmem:[#allocation2 + $0x1a0] sm:$0xff] %vm625, 0.0
        %680 = vst.msk [vmem:[#allocation2 + $0x1a8] sm:$0x3] %vm627, 0.0
        %681 = vst.msk [vmem:[#allocation2 + $0x1b0] sm:$0xff] %vm625, 0.0
        %682 = vst.msk [vmem:[#allocation2 + $0x1b8] sm:$0x3] %vm627, 0.0
        %683 = vst.msk [vmem:[#allocation2 + $0x1c0] sm:$0xff] %vm625, 0.0
        %684 = vst.msk [vmem:[#allocation2 + $0x1c8] sm:$0x3] %vm627, 0.0
        %685 = vst.msk [vmem:[#allocation2 + $0x1d0] sm:$0xff] %vm625, 0.0
        %686 = vst.msk [vmem:[#allocation2 + $0x1d8] sm:$0x3] %vm627, 0.0
        %687 = vst.msk [vmem:[#allocation2 + $0x1e0] sm:$0xff] %vm625, 0.0
        %688 = vst.msk [vmem:[#allocation2 + $0x1e8] sm:$0x3] %vm627, 0.0
        %689 = vst.msk [vmem:[#allocation2 + $0x1f0] sm:$0xff] %vm625, 0.0
        %690 = vst.msk [vmem:[#allocation2 + $0x1f8] sm:$0x3] %vm627, 0.0
        %691 = vst.msk [vmem:[#allocation2 + $0x200] sm:$0xff] %vm625, 0.0
        %692 = vst.msk [vmem:[#allocation2 + $0x208] sm:$0x3] %vm627, 0.0
        %693 = vst.msk [vmem:[#allocation2 + $0x210] sm:$0xff] %vm625, 0.0
        %694 = vst.msk [vmem:[#allocation2 + $0x218] sm:$0x3] %vm627, 0.0
        %695 = vst.msk [vmem:[#allocation2 + $0x220] sm:$0xff] %vm625, 0.0
        %696 = vst.msk [vmem:[#allocation2 + $0x228] sm:$0x3] %vm627, 0.0
        %697 = vst.msk [vmem:[#allocation2 + $0x230] sm:$0xff] %vm625, 0.0
        %698 = vst.msk [vmem:[#allocation2 + $0x238] sm:$0x3] %vm627, 0.0
        %699 = vst.msk [vmem:[#allocation2 + $0x240] sm:$0xff] %vm625, 0.0
        %700 = vst.msk [vmem:[#allocation2 + $0x248] sm:$0x3] %vm627, 0.0
        %701 = vst.msk [vmem:[#allocation2 + $0x250] sm:$0xff] %vm625, 0.0
        %702 = vst.msk [vmem:[#allocation2 + $0x258] sm:$0x3] %vm627, 0.0
        %703 = vst.msk [vmem:[#allocation2 + $0x260] sm:$0xff] %vm625, 0.0
        %704 = vst.msk [vmem:[#allocation2 + $0x268] sm:$0x3] %vm627, 0.0
        %705 = vst.msk [vmem:[#allocation2 + $0x270] sm:$0xff] %vm625, 0.0
        %706 = vst.msk [vmem:[#allocation2 + $0x278] sm:$0x3] %vm627, 0.0
        %707 = vst.msk [vmem:[#allocation2 + $0x280] sm:$0xff] %vm625, 0.0
        %708 = vst.msk [vmem:[#allocation2 + $0x288] sm:$0x3] %vm627, 0.0
        %709 = vst.msk [vmem:[#allocation2 + $0x290] sm:$0xff] %vm625, 0.0
        %710 = vst.msk [vmem:[#allocation2 + $0x298] sm:$0x3] %vm627, 0.0
        %711 = vst.msk [vmem:[#allocation2 + $0x2a0] sm:$0xff] %vm625, 0.0
        %712 = vst.msk [vmem:[#allocation2 + $0x2a8] sm:$0x3] %vm627, 0.0
        %713 = vst.msk [vmem:[#allocation2 + $0x2b0] sm:$0xff] %vm625, 0.0
        %714 = vst.msk [vmem:[#allocation2 + $0x2b8] sm:$0x3] %vm627, 0.0
        %715 = vst.msk [vmem:[#allocation2 + $0x2c0] sm:$0xff] %vm625, 0.0
        %716 = vst.msk [vmem:[#allocation2 + $0x2c8] sm:$0x3] %vm627, 0.0
        %717 = vst.msk [vmem:[#allocation2 + $0x2d0] sm:$0xff] %vm625, 0.0
        %718 = vst.msk [vmem:[#allocation2 + $0x2d8] sm:$0x3] %vm627, 0.0
        %719 = vst.msk [vmem:[#allocation2 + $0x2e0] sm:$0xff] %vm625, 0.0
        %720 = vst.msk [vmem:[#allocation2 + $0x2e8] sm:$0x3] %vm627, 0.0
        %721 = vst.msk [vmem:[#allocation2 + $0x2f0] sm:$0xff] %vm625, 0.0
        %722 = vst.msk [vmem:[#allocation2 + $0x2f8] sm:$0x3] %vm627, 0.0
        %723 = vst.msk [vmem:[#allocation2 + $0x300] sm:$0xff] %vm625, 0.0
        %724 = vst.msk [vmem:[#allocation2 + $0x308] sm:$0x3] %vm627, 0.0
        %725 = vst.msk [vmem:[#allocation2 + $0x310] sm:$0xff] %vm625, 0.0
        %726 = vst.msk [vmem:[#allocation2 + $0x318] sm:$0x3] %vm627, 0.0
        %727 = vst.msk [vmem:[#allocation2 + $0x320] sm:$0xff] %vm625, 0.0
        %728 = vst.msk [vmem:[#allocation2 + $0x328] sm:$0x3] %vm627, 0.0
        %729 = vst.msk [vmem:[#allocation2 + $0x330] sm:$0xff] %vm625, 0.0
        %730 = vst.msk [vmem:[#allocation2 + $0x338] sm:$0x3] %vm627, 0.0
        %731 = vst.msk [vmem:[#allocation2 + $0x340] sm:$0xff] %vm625, 0.0
        %732 = vst.msk [vmem:[#allocation2 + $0x348] sm:$0x3] %vm627, 0.0
        %733 = vst.msk [vmem:[#allocation2 + $0x350] sm:$0xff] %vm625, 0.0
        %734 = vst.msk [vmem:[#allocation2 + $0x358] sm:$0x3] %vm627, 0.0
        %735 = vst.msk [vmem:[#allocation2 + $0x360] sm:$0xff] %vm625, 0.0
        %736 = vst.msk [vmem:[#allocation2 + $0x368] sm:$0x3] %vm627, 0.0
        %737 = vst.msk [vmem:[#allocation2 + $0x370] sm:$0xff] %vm625, 0.0
        %738 = vst.msk [vmem:[#allocation2 + $0x378] sm:$0x3] %vm627, 0.0
        %739 = vst.msk [vmem:[#allocation2 + $0x380] sm:$0xff] %vm625, 0.0
        %740 = vst.msk [vmem:[#allocation2 + $0x388] sm:$0x3] %vm627, 0.0
        %741 = vst.msk [vmem:[#allocation2 + $0x390] sm:$0xff] %vm625, 0.0
        %742 = vst.msk [vmem:[#allocation2 + $0x398] sm:$0x3] %vm627, 0.0
        %743 = vst.msk [vmem:[#allocation2 + $0x3a0] sm:$0xff] %vm625, 0.0
        %744 = vst.msk [vmem:[#allocation2 + $0x3a8] sm:$0x3] %vm627, 0.0
        %745 = vst.msk [vmem:[#allocation2 + $0x3b0] sm:$0xff] %vm625, 0.0
        %746 = vst.msk [vmem:[#allocation2 + $0x3b8] sm:$0x3] %vm627, 0.0
        %s747 = scalar_lea.vmem [#allocation2], 176
        %748 = vst.msk [vmem:[%s747 + $0x1] sm:$0xff] %vm625, %v593
        %749 = vst.msk [vmem:[%s747 + $0x11] sm:$0xff] %vm625, %v594
        %750 = vst.msk [vmem:[%s747 + $0x21] sm:$0xff] %vm625, %v595
        %751 = vst.msk [vmem:[%s747 + $0x31] sm:$0xff] %vm625, %v596
        %752 = vst.msk [vmem:[%s747 + $0x41] sm:$0xff] %vm625, %v597
        %753 = vst.msk [vmem:[%s747 + $0x51] sm:$0xff] %vm625, %v598
        %754 = vst.msk [vmem:[%s747 + $0x61] sm:$0xff] %vm625, %v599
        %755 = vst.msk [vmem:[%s747 + $0x71] sm:$0xff] %vm625, %v600
        %756 = vst.msk [vmem:[%s747 + $0xa1] sm:$0xff] %vm625, %v601
        %757 = vst.msk [vmem:[%s747 + $0xb1] sm:$0xff] %vm625, %v602
        %758 = vst.msk [vmem:[%s747 + $0xc1] sm:$0xff] %vm625, %v603
        %759 = vst.msk [vmem:[%s747 + $0xd1] sm:$0xff] %vm625, %v604
        %760 = vst.msk [vmem:[%s747 + $0xe1] sm:$0xff] %vm625, %v605
        %761 = vst.msk [vmem:[%s747 + $0xf1] sm:$0xff] %vm625, %v606
        %762 = vst.msk [vmem:[%s747 + $0x101] sm:$0xff] %vm625, %v607
        %763 = vst.msk [vmem:[%s747 + $0x111] sm:$0xff] %vm625, %v608
        %764 = vst.msk [vmem:[%s747 + $0x141] sm:$0xff] %vm625, %v609
        %765 = vst.msk [vmem:[%s747 + $0x151] sm:$0xff] %vm625, %v610
        %766 = vst.msk [vmem:[%s747 + $0x161] sm:$0xff] %vm625, %v611
        %767 = vst.msk [vmem:[%s747 + $0x171] sm:$0xff] %vm625, %v612
        %768 = vst.msk [vmem:[%s747 + $0x181] sm:$0xff] %vm625, %v613
        %769 = vst.msk [vmem:[%s747 + $0x191] sm:$0xff] %vm625, %v614
        %770 = vst.msk [vmem:[%s747 + $0x1a1] sm:$0xff] %vm625, %v615
        %771 = vst.msk [vmem:[%s747 + $0x1b1] sm:$0xff] %vm625, %v616
        %772 = vst.msk [vmem:[%s747 + $0x1e1] sm:$0xff] %vm625, %v617
        %773 = vst.msk [vmem:[%s747 + $0x1f1] sm:$0xff] %vm625, %v618
        %774 = vst.msk [vmem:[%s747 + $0x201] sm:$0xff] %vm625, %v619
        %775 = vst.msk [vmem:[%s747 + $0x211] sm:$0xff] %vm625, %v620
        %776 = vst.msk [vmem:[%s747 + $0x221] sm:$0xff] %vm625, %v621
        %777 = vst.msk [vmem:[%s747 + $0x231] sm:$0xff] %vm625, %v622
        %778 = vst.msk [vmem:[%s747 + $0x241] sm:$0xff] %vm625, %v623
        %779 = vst.msk [vmem:[%s747 + $0x251] sm:$0xff] %vm625, %v624
        %v780 = vld [vmem:[#allocation2] sm:$0xff]
        %v781 = vld [vmem:[#allocation2 + $0x10] sm:$0xff]
        %v782 = vld [vmem:[#allocation2 + $0x20] sm:$0xff]
        %v783 = vld [vmem:[#allocation2 + $0x30] sm:$0xff]
        %v784 = vld [vmem:[#allocation2 + $0x40] sm:$0xff]
        %v785 = vld [vmem:[#allocation2 + $0x50] sm:$0xff]
        %v786 = vld [vmem:[#allocation2 + $0x60] sm:$0xff]
        %v787 = vld [vmem:[#allocation2 + $0x70] sm:$0xff]
        %v788 = vld [vmem:[#allocation2 + $0xa0] sm:$0xff]
        %v789 = vld [vmem:[#allocation2 + $0xb0] sm:$0xff]
        %v790 = vld [vmem:[#allocation2 + $0xc0] sm:$0xff]
        %v791 = vld [vmem:[#allocation2 + $0xd0] sm:$0xff]
        %v792 = vld [vmem:[#allocation2 + $0xe0] sm:$0xff]
        %v793 = vld [vmem:[#allocation2 + $0xf0] sm:$0xff]
        %v794 = vld [vmem:[#allocation2 + $0x100] sm:$0xff]
        %v795 = vld [vmem:[#allocation2 + $0x110] sm:$0xff]
        %v796 = vld [vmem:[#allocation2 + $0x140] sm:$0xff]
        %v797 = vld [vmem:[#allocation2 + $0x150] sm:$0xff]
        %v798 = vld [vmem:[#allocation2 + $0x160] sm:$0xff]
        %v799 = vld [vmem:[#allocation2 + $0x170] sm:$0xff]
        %v800 = vld [vmem:[#allocation2 + $0x180] sm:$0xff]
        %v801 = vld [vmem:[#allocation2 + $0x190] sm:$0xff]
        %v802 = vld [vmem:[#allocation2 + $0x1a0] sm:$0xff]
        %v803 = vld [vmem:[#allocation2 + $0x1b0] sm:$0xff]
        %v804 = vld [vmem:[#allocation2 + $0x1e0] sm:$0xff]
        %v805 = vld [vmem:[#allocation2 + $0x1f0] sm:$0xff]
        %v806 = vld [vmem:[#allocation2 + $0x200] sm:$0xff]
        %v807 = vld [vmem:[#allocation2 + $0x210] sm:$0xff]
        %v808 = vld [vmem:[#allocation2 + $0x220] sm:$0xff]
        %v809 = vld [vmem:[#allocation2 + $0x230] sm:$0xff]
        %v810 = vld [vmem:[#allocation2 + $0x240] sm:$0xff]
        %v811 = vld [vmem:[#allocation2 + $0x250] sm:$0xff]
        %v812 = vpack.c.bf16 %v781, %v780
        %v813 = vpack.c.bf16 %v783, %v782
        %v814 = vpack.c.bf16 %v785, %v784
        %v815 = vpack.c.bf16 %v787, %v786
        %v816 = vpack.c.bf16 %v789, %v788
        %v817 = vpack.c.bf16 %v791, %v790
        %v818 = vpack.c.bf16 %v793, %v792
        %v819 = vpack.c.bf16 %v795, %v794
        %v820 = vpack.c.bf16 %v797, %v796
        %v821 = vpack.c.bf16 %v799, %v798
        %v822 = vpack.c.bf16 %v801, %v800
        %v823 = vpack.c.bf16 %v803, %v802
        %v824 = vpack.c.bf16 %v805, %v804
        %v825 = vpack.c.bf16 %v807, %v806
        %v826 = vpack.c.bf16 %v809, %v808
        %v827 = vpack.c.bf16 %v811, %v810
        %v828 = vld [vmem:[#allocation6] sm:$0xf]
        %v829 = vld [vmem:[#allocation6 + $0x4] sm:$0xf]
        %v830 = vld [vmem:[#allocation6 + $0x8] sm:$0xf]
        %v831 = vld [vmem:[#allocation6 + $0xc] sm:$0xf]
        %v832 = vld [vmem:[#allocation2 + $0x1] sm:$0xff]
        %v833 = vld [vmem:[#allocation2 + $0x11] sm:$0xff]
        %v834 = vld [vmem:[#allocation2 + $0x21] sm:$0xff]
        %v835 = vld [vmem:[#allocation2 + $0x31] sm:$0xff]
        %v836 = vld [vmem:[#allocation2 + $0x41] sm:$0xff]
        %v837 = vld [vmem:[#allocation2 + $0x51] sm:$0xff]
        %v838 = vld [vmem:[#allocation2 + $0x61] sm:$0xff]
        %v839 = vld [vmem:[#allocation2 + $0x71] sm:$0xff]
        %v840 = vld [vmem:[#allocation2 + $0xa1] sm:$0xff]
        %v841 = vld [vmem:[#allocation2 + $0xb1] sm:$0xff]
        %v842 = vld [vmem:[#allocation2 + $0xc1] sm:$0xff]
        %v843 = vld [vmem:[#allocation2 + $0xd1] sm:$0xff]
        %v844 = vld [vmem:[#allocation2 + $0xe1] sm:$0xff]
        %v845 = vld [vmem:[#allocation2 + $0xf1] sm:$0xff]
        %v846 = vld [vmem:[#allocation2 + $0x101] sm:$0xff]
        %v847 = vld [vmem:[#allocation2 + $0x111] sm:$0xff]
        %v848 = vld [vmem:[#allocation2 + $0x141] sm:$0xff]
        %v849 = vld [vmem:[#allocation2 + $0x151] sm:$0xff]
        %v850 = vld [vmem:[#allocation2 + $0x161] sm:$0xff]
        %v851 = vld [vmem:[#allocation2 + $0x171] sm:$0xff]
        %v852 = vld [vmem:[#allocation2 + $0x181] sm:$0xff]
        %v853 = vld [vmem:[#allocation2 + $0x191] sm:$0xff]
        %v854 = vld [vmem:[#allocation2 + $0x1a1] sm:$0xff]
        %v855 = vld [vmem:[#allocation2 + $0x1b1] sm:$0xff]
        %v856 = vld [vmem:[#allocation2 + $0x1e1] sm:$0xff]
        %v857 = vld [vmem:[#allocation2 + $0x1f1] sm:$0xff]
        %v858 = vld [vmem:[#allocation2 + $0x201] sm:$0xff]
        %v859 = vld [vmem:[#allocation2 + $0x211] sm:$0xff]
        %v860 = vld [vmem:[#allocation2 + $0x221] sm:$0xff]
        %v861 = vld [vmem:[#allocation2 + $0x231] sm:$0xff]
        %v862 = vld [vmem:[#allocation2 + $0x241] sm:$0xff]
        %v863 = vld [vmem:[#allocation2 + $0x251] sm:$0xff]
        %v864 = vpack.c.bf16 %v833, %v832
        %v865 = vpack.c.bf16 %v835, %v834
        %v866 = vpack.c.bf16 %v837, %v836
        %v867 = vpack.c.bf16 %v839, %v838
        %v868 = vpack.c.bf16 %v841, %v840
        %v869 = vpack.c.bf16 %v843, %v842
        %v870 = vpack.c.bf16 %v845, %v844
        %v871 = vpack.c.bf16 %v847, %v846
        %v872 = vpack.c.bf16 %v849, %v848
        %v873 = vpack.c.bf16 %v851, %v850
        %v874 = vpack.c.bf16 %v853, %v852
        %v875 = vpack.c.bf16 %v855, %v854
        %v876 = vpack.c.bf16 %v857, %v856
        %v877 = vpack.c.bf16 %v859, %v858
        %v878 = vpack.c.bf16 %v861, %v860
        %v879 = vpack.c.bf16 %v863, %v862
        %s880 = scalar_lea.vmem [#allocation6], 16
        %v881 = vld [vmem:[%s880] sm:$0xf]
        %v882 = vld [vmem:[%s880 + $0x4] sm:$0xf]
        %v883 = vld [vmem:[%s880 + $0x8] sm:$0xf]
        %v884 = vld [vmem:[%s880 + $0xc] sm:$0xf]
        %v889 = vunpack.c.l.b16 %v881
        %v890 = vunpack.c.l.b16 %v882
        %v891 = vunpack.c.l.b16 %v883
        %v892 = vunpack.c.l.b16 %v884
        %v893 = vpack.c.b16 %v890, %v889
        %v894 = vpack.c.b16 %v892, %v891
        %v898 = vsel %vm625, %v864, 0
        %v901 = vsel %vm625, %v865, 0
        %v904 = vsel %vm625, %v866, 0
        %v907 = vsel %vm625, %v867, 0
        %v910 = vsel %vm625, %v868, 0
        %v913 = vsel %vm625, %v869, 0
        %v916 = vsel %vm625, %v870, 0
        %v919 = vsel %vm625, %v871, 0
        %v922 = vsel %vm625, %v872, 0
        %v925 = vsel %vm625, %v873, 0
        %v928 = vsel %vm625, %v874, 0
        %v931 = vsel %vm625, %v875, 0
        %v934 = vsel %vm625, %v876, 0
        %v937 = vsel %vm625, %v877, 0
        %v940 = vsel %vm625, %v878, 0
        %v943 = vsel %vm625, %v879, 0
        %945 = vmatprep.subr.bf16.mxu0 0
        %946 = vmatpush1.bf16.msra.mxu0 0
        %947 = vmatprep.subr.bf16.mxu0 0
        %948 = vmatpush1.bf16.msra.mxu0 0
        %949 = vmatprep.subr.bf16.mxu0 0
        %950 = vmatpush1.bf16.msra.mxu0 0
        %951 = vmatprep.subr.bf16.mxu0 0
        %952 = vmatpush1.bf16.msra.mxu0 0
        %953 = vmatprep.subr.bf16.mxu0 0
        %954 = vmatpush1.bf16.msra.mxu0 0
        %955 = vmatprep.subr.bf16.mxu0 0
        %956 = vmatpush1.bf16.msra.mxu0 0
        %957 = vmatprep.subr.bf16.mxu0 0
        %958 = vmatpush1.bf16.msra.mxu0 %v894
        %959 = vmatprep.subr.bf16.mxu0 0
        %960 = vmatpush1.bf16.msra.mxu0 %v893
        %961 = vmatprep.subr.bf16.mxu0 0
        %962 = vmatpush2.bf16.msra.mxu0 0
        %963 = vmatprep.subr.bf16.mxu0 0
        %964 = vmatpush2.bf16.msra.mxu0 0
        %965 = vmatprep.subr.bf16.mxu0 0
        %966 = vmatpush2.bf16.msra.mxu0 0
        %967 = vmatprep.subr.bf16.mxu0 0
        %968 = vmatpush2.bf16.msra.mxu0 0
        %969 = vmatprep.subr.bf16.mxu0 0
        %970 = vmatpush2.bf16.msra.mxu0 0
        %971 = vmatprep.subr.bf16.mxu0 0
        %972 = vmatpush2.bf16.msra.mxu0 0
        %973 = vmatprep.subr.bf16.mxu0 0
        %974 = vmatpush2.bf16.msra.mxu0 0
        %975 = vmatprep.subr.bf16.mxu0 0
        %976 = vmatpush2.bf16.msra.mxu0 0
        %977 = vmatprep.mubr.bf16.mxu0 0
        %978 = vmatmul.mubr.bf16.gmra.mxu0 %v898
        %v979 = vpop.f32.mrf.mxu0
        %v980 = vadd.f32 0.0, %v979
        %v981 = vpop.f32.mrf.mxu0
        %v982 = vpop.f32.mrf.mxu0
        %v983 = vadd.f32 0.0, %v982
        %v984 = vpop.f32.mrf.mxu0
        %985 = vmatprep.mubr.bf16.mxu0 0
        %986 = vmatmul.mubr.bf16.gmra.mxu0 %v901
        %v987 = vpop.f32.mrf.mxu0
        %v988 = vadd.f32 0.0, %v987
        %v989 = vpop.f32.mrf.mxu0
        %v990 = vpop.f32.mrf.mxu0
        %v991 = vadd.f32 0.0, %v990
        %v992 = vpop.f32.mrf.mxu0
        %993 = vmatprep.mubr.bf16.mxu0 0
        %994 = vmatmul.mubr.bf16.gmra.mxu0 %v904
        %v995 = vpop.f32.mrf.mxu0
        %v996 = vadd.f32 0.0, %v995
        %v997 = vpop.f32.mrf.mxu0
        %v998 = vpop.f32.mrf.mxu0
        %v999 = vadd.f32 0.0, %v998
        %v1000 = vpop.f32.mrf.mxu0
        %1001 = vmatprep.mubr.bf16.mxu0 0
        %1002 = vmatmul.mubr.bf16.gmra.mxu0 %v907
        %v1003 = vpop.f32.mrf.mxu0
        %v1004 = vadd.f32 0.0, %v1003
        %v1005 = vpop.f32.mrf.mxu0
        %v1006 = vpop.f32.mrf.mxu0
        %v1007 = vadd.f32 0.0, %v1006
        %v1008 = vpop.f32.mrf.mxu0
        %1009 = vmatprep.mubr.bf16.mxu0 0
        %1010 = vmatmul.mubr.bf16.gmra.mxu0 %v910
        %v1011 = vpop.f32.mrf.mxu0
        %v1012 = vadd.f32 0.0, %v1011
        %v1013 = vpop.f32.mrf.mxu0
        %v1014 = vpop.f32.mrf.mxu0
        %v1015 = vadd.f32 0.0, %v1014
        %v1016 = vpop.f32.mrf.mxu0
        %1017 = vmatprep.mubr.bf16.mxu0 0
        %1018 = vmatmul.mubr.bf16.gmra.mxu0 %v913
        %v1019 = vpop.f32.mrf.mxu0
        %v1020 = vadd.f32 0.0, %v1019
        %v1021 = vpop.f32.mrf.mxu0
        %v1022 = vpop.f32.mrf.mxu0
        %v1023 = vadd.f32 0.0, %v1022
        %v1024 = vpop.f32.mrf.mxu0
        %1025 = vmatprep.mubr.bf16.mxu0 0
        %1026 = vmatmul.mubr.bf16.gmra.mxu0 %v916
        %v1027 = vpop.f32.mrf.mxu0
        %v1028 = vadd.f32 0.0, %v1027
        %v1029 = vpop.f32.mrf.mxu0
        %v1030 = vpop.f32.mrf.mxu0
        %v1031 = vadd.f32 0.0, %v1030
        %v1032 = vpop.f32.mrf.mxu0
        %1033 = vmatprep.mubr.bf16.mxu0 0
        %1034 = vmatmul.mubr.bf16.gmra.mxu0 %v919
        %v1035 = vpop.f32.mrf.mxu0
        %v1036 = vadd.f32 0.0, %v1035
        %v1037 = vpop.f32.mrf.mxu0
        %v1038 = vpop.f32.mrf.mxu0
        %v1039 = vadd.f32 0.0, %v1038
        %v1040 = vpop.f32.mrf.mxu0
        %1041 = vmatprep.mubr.bf16.mxu0 0
        %1042 = vmatmul.mubr.bf16.gmra.mxu0 %v922
        %v1043 = vpop.f32.mrf.mxu0
        %v1044 = vadd.f32 0.0, %v1043
        %v1045 = vpop.f32.mrf.mxu0
        %v1046 = vpop.f32.mrf.mxu0
        %v1047 = vadd.f32 0.0, %v1046
        %v1048 = vpop.f32.mrf.mxu0
        %1049 = vmatprep.mubr.bf16.mxu0 0
        %1050 = vmatmul.mubr.bf16.gmra.mxu0 %v925
        %v1051 = vpop.f32.mrf.mxu0
        %v1052 = vadd.f32 0.0, %v1051
        %v1053 = vpop.f32.mrf.mxu0
        %v1054 = vpop.f32.mrf.mxu0
        %v1055 = vadd.f32 0.0, %v1054
        %v1056 = vpop.f32.mrf.mxu0
        %1057 = vmatprep.mubr.bf16.mxu0 0
        %1058 = vmatmul.mubr.bf16.gmra.mxu0 %v928
        %v1059 = vpop.f32.mrf.mxu0
        %v1060 = vadd.f32 0.0, %v1059
        %v1061 = vpop.f32.mrf.mxu0
        %v1062 = vpop.f32.mrf.mxu0
        %v1063 = vadd.f32 0.0, %v1062
        %v1064 = vpop.f32.mrf.mxu0
        %1065 = vmatprep.mubr.bf16.mxu0 0
        %1066 = vmatmul.mubr.bf16.gmra.mxu0 %v931
        %v1067 = vpop.f32.mrf.mxu0
        %v1068 = vadd.f32 0.0, %v1067
        %v1069 = vpop.f32.mrf.mxu0
        %v1070 = vpop.f32.mrf.mxu0
        %v1071 = vadd.f32 0.0, %v1070
        %v1072 = vpop.f32.mrf.mxu0
        %1073 = vmatprep.mubr.bf16.mxu0 0
        %1074 = vmatmul.mubr.bf16.gmra.mxu0 %v934
        %v1075 = vpop.f32.mrf.mxu0
        %v1076 = vadd.f32 0.0, %v1075
        %v1077 = vpop.f32.mrf.mxu0
        %v1078 = vpop.f32.mrf.mxu0
        %v1079 = vadd.f32 0.0, %v1078
        %v1080 = vpop.f32.mrf.mxu0
        %1081 = vmatprep.mubr.bf16.mxu0 0
        %1082 = vmatmul.mubr.bf16.gmra.mxu0 %v937
        %v1083 = vpop.f32.mrf.mxu0
        %v1084 = vadd.f32 0.0, %v1083
        %v1085 = vpop.f32.mrf.mxu0
        %v1086 = vpop.f32.mrf.mxu0
        %v1087 = vadd.f32 0.0, %v1086
        %v1088 = vpop.f32.mrf.mxu0
        %1089 = vmatprep.mubr.bf16.mxu0 0
        %1090 = vmatmul.mubr.bf16.gmra.mxu0 %v940
        %v1091 = vpop.f32.mrf.mxu0
        %v1092 = vadd.f32 0.0, %v1091
        %v1093 = vpop.f32.mrf.mxu0
        %v1094 = vpop.f32.mrf.mxu0
        %v1095 = vadd.f32 0.0, %v1094
        %v1096 = vpop.f32.mrf.mxu0
        %1097 = vmatprep.mubr.bf16.mxu0 0
        %1098 = vmatmul.mubr.bf16.gmra.mxu0 %v943
        %v1099 = vpop.f32.mrf.mxu0
        %v1100 = vadd.f32 0.0, %v1099
        %v1101 = vpop.f32.mrf.mxu0
        %v1102 = vpop.f32.mrf.mxu0
        %v1103 = vadd.f32 0.0, %v1102
        %v1104 = vpop.f32.mrf.mxu0
        %1105 = vdwg.mxu0
        %v1110 = vunpack.c.l.b16 %v828
        %v1111 = vunpack.c.l.b16 %v829
        %v1112 = vunpack.c.l.b16 %v830
        %v1113 = vunpack.c.l.b16 %v831
        %v1114 = vpack.c.b16 %v1111, %v1110
        %v1115 = vpack.c.b16 %v1113, %v1112
        %v1119 = vsel %vm625, %v812, 0
        %v1122 = vsel %vm625, %v813, 0
        %v1125 = vsel %vm625, %v814, 0
        %v1128 = vsel %vm625, %v815, 0
        %v1131 = vsel %vm625, %v816, 0
        %v1134 = vsel %vm625, %v817, 0
        %v1137 = vsel %vm625, %v818, 0
        %v1140 = vsel %vm625, %v819, 0
        %v1143 = vsel %vm625, %v820, 0
        %v1146 = vsel %vm625, %v821, 0
        %v1149 = vsel %vm625, %v822, 0
        %v1152 = vsel %vm625, %v823, 0
        %v1155 = vsel %vm625, %v824, 0
        %v1158 = vsel %vm625, %v825, 0
        %v1161 = vsel %vm625, %v826, 0
        %v1164 = vsel %vm625, %v827, 0
        %1166 = vmatprep.subr.bf16.mxu0 0
        %1167 = vmatpush1.bf16.msra.mxu0 0
        %1168 = vmatprep.subr.bf16.mxu0 0
        %1169 = vmatpush1.bf16.msra.mxu0 0
        %1170 = vmatprep.subr.bf16.mxu0 0
        %1171 = vmatpush1.bf16.msra.mxu0 0
        %1172 = vmatprep.subr.bf16.mxu0 0
        %1173 = vmatpush1.bf16.msra.mxu0 0
        %1174 = vmatprep.subr.bf16.mxu0 0
        %1175 = vmatpush1.bf16.msra.mxu0 0
        %1176 = vmatprep.subr.bf16.mxu0 0
        %1177 = vmatpush1.bf16.msra.mxu0 0
        %1178 = vmatprep.subr.bf16.mxu0 0
        %1179 = vmatpush1.bf16.msra.mxu0 %v1115
        %1180 = vmatprep.subr.bf16.mxu0 0
        %1181 = vmatpush1.bf16.msra.mxu0 %v1114
        %1182 = vmatprep.subr.bf16.mxu0 0
        %1183 = vmatpush2.bf16.msra.mxu0 0
        %1184 = vmatprep.subr.bf16.mxu0 0
        %1185 = vmatpush2.bf16.msra.mxu0 0
        %1186 = vmatprep.subr.bf16.mxu0 0
        %1187 = vmatpush2.bf16.msra.mxu0 0
        %1188 = vmatprep.subr.bf16.mxu0 0
        %1189 = vmatpush2.bf16.msra.mxu0 0
        %1190 = vmatprep.subr.bf16.mxu0 0
        %1191 = vmatpush2.bf16.msra.mxu0 0
        %1192 = vmatprep.subr.bf16.mxu0 0
        %1193 = vmatpush2.bf16.msra.mxu0 0
        %1194 = vmatprep.subr.bf16.mxu0 0
        %1195 = vmatpush2.bf16.msra.mxu0 0
        %1196 = vmatprep.subr.bf16.mxu0 0
        %1197 = vmatpush2.bf16.msra.mxu0 0
        %1198 = vmatprep.mubr.bf16.mxu0 0
        %1199 = vmatmul.mubr.bf16.gmra.mxu0 %v1119
        %v1200 = vpop.f32.mrf.mxu0
        %v1201 = vadd.f32 %v980, %v1200
        %v1202 = vpop.f32.mrf.mxu0
        %v1203 = vpop.f32.mrf.mxu0
        %v1204 = vadd.f32 %v983, %v1203
        %v1205 = vpop.f32.mrf.mxu0
        %1206 = vmatprep.mubr.bf16.mxu0 0
        %1207 = vmatmul.mubr.bf16.gmra.mxu0 %v1122
        %v1208 = vpop.f32.mrf.mxu0
        %v1209 = vadd.f32 %v988, %v1208
        %v1210 = vpop.f32.mrf.mxu0
        %v1211 = vpop.f32.mrf.mxu0
        %v1212 = vadd.f32 %v991, %v1211
        %v1213 = vpop.f32.mrf.mxu0
        %1214 = vmatprep.mubr.bf16.mxu0 0
        %1215 = vmatmul.mubr.bf16.gmra.mxu0 %v1125
        %v1216 = vpop.f32.mrf.mxu0
        %v1217 = vadd.f32 %v996, %v1216
        %v1218 = vpop.f32.mrf.mxu0
        %v1219 = vpop.f32.mrf.mxu0
        %v1220 = vadd.f32 %v999, %v1219
        %v1221 = vpop.f32.mrf.mxu0
        %1222 = vmatprep.mubr.bf16.mxu0 0
        %1223 = vmatmul.mubr.bf16.gmra.mxu0 %v1128
        %v1224 = vpop.f32.mrf.mxu0
        %v1225 = vadd.f32 %v1004, %v1224
        %v1226 = vpop.f32.mrf.mxu0
        %v1227 = vpop.f32.mrf.mxu0
        %v1228 = vadd.f32 %v1007, %v1227
        %v1229 = vpop.f32.mrf.mxu0
        %1230 = vmatprep.mubr.bf16.mxu0 0
        %1231 = vmatmul.mubr.bf16.gmra.mxu0 %v1131
        %v1232 = vpop.f32.mrf.mxu0
        %v1233 = vadd.f32 %v1012, %v1232
        %v1234 = vpop.f32.mrf.mxu0
        %v1235 = vpop.f32.mrf.mxu0
        %v1236 = vadd.f32 %v1015, %v1235
        %v1237 = vpop.f32.mrf.mxu0
        %1238 = vmatprep.mubr.bf16.mxu0 0
        %1239 = vmatmul.mubr.bf16.gmra.mxu0 %v1134
        %v1240 = vpop.f32.mrf.mxu0
        %v1241 = vadd.f32 %v1020, %v1240
        %v1242 = vpop.f32.mrf.mxu0
        %v1243 = vpop.f32.mrf.mxu0
        %v1244 = vadd.f32 %v1023, %v1243
        %v1245 = vpop.f32.mrf.mxu0
        %1246 = vmatprep.mubr.bf16.mxu0 0
        %1247 = vmatmul.mubr.bf16.gmra.mxu0 %v1137
        %v1248 = vpop.f32.mrf.mxu0
        %v1249 = vadd.f32 %v1028, %v1248
        %v1250 = vpop.f32.mrf.mxu0
        %v1251 = vpop.f32.mrf.mxu0
        %v1252 = vadd.f32 %v1031, %v1251
        %v1253 = vpop.f32.mrf.mxu0
        %1254 = vmatprep.mubr.bf16.mxu0 0
        %1255 = vmatmul.mubr.bf16.gmra.mxu0 %v1140
        %v1256 = vpop.f32.mrf.mxu0
        %v1257 = vadd.f32 %v1036, %v1256
        %v1258 = vpop.f32.mrf.mxu0
        %v1259 = vpop.f32.mrf.mxu0
        %v1260 = vadd.f32 %v1039, %v1259
        %v1261 = vpop.f32.mrf.mxu0
        %1262 = vmatprep.mubr.bf16.mxu0 0
        %1263 = vmatmul.mubr.bf16.gmra.mxu0 %v1143
        %v1264 = vpop.f32.mrf.mxu0
        %v1265 = vadd.f32 %v1044, %v1264
        %v1266 = vpop.f32.mrf.mxu0
        %v1267 = vpop.f32.mrf.mxu0
        %v1268 = vadd.f32 %v1047, %v1267
        %v1269 = vpop.f32.mrf.mxu0
        %1270 = vmatprep.mubr.bf16.mxu0 0
        %1271 = vmatmul.mubr.bf16.gmra.mxu0 %v1146
        %v1272 = vpop.f32.mrf.mxu0
        %v1273 = vadd.f32 %v1052, %v1272
        %v1274 = vpop.f32.mrf.mxu0
        %v1275 = vpop.f32.mrf.mxu0
        %v1276 = vadd.f32 %v1055, %v1275
        %v1277 = vpop.f32.mrf.mxu0
        %1278 = vmatprep.mubr.bf16.mxu0 0
        %1279 = vmatmul.mubr.bf16.gmra.mxu0 %v1149
        %v1280 = vpop.f32.mrf.mxu0
        %v1281 = vadd.f32 %v1060, %v1280
        %v1282 = vpop.f32.mrf.mxu0
        %v1283 = vpop.f32.mrf.mxu0
        %v1284 = vadd.f32 %v1063, %v1283
        %v1285 = vpop.f32.mrf.mxu0
        %1286 = vmatprep.mubr.bf16.mxu0 0
        %1287 = vmatmul.mubr.bf16.gmra.mxu0 %v1152
        %v1288 = vpop.f32.mrf.mxu0
        %v1289 = vadd.f32 %v1068, %v1288
        %v1290 = vpop.f32.mrf.mxu0
        %v1291 = vpop.f32.mrf.mxu0
        %v1292 = vadd.f32 %v1071, %v1291
        %v1293 = vpop.f32.mrf.mxu0
        %1294 = vmatprep.mubr.bf16.mxu0 0
        %1295 = vmatmul.mubr.bf16.gmra.mxu0 %v1155
        %v1296 = vpop.f32.mrf.mxu0
        %v1297 = vadd.f32 %v1076, %v1296
        %v1298 = vpop.f32.mrf.mxu0
        %v1299 = vpop.f32.mrf.mxu0
        %v1300 = vadd.f32 %v1079, %v1299
        %v1301 = vpop.f32.mrf.mxu0
        %1302 = vmatprep.mubr.bf16.mxu0 0
        %1303 = vmatmul.mubr.bf16.gmra.mxu0 %v1158
        %v1304 = vpop.f32.mrf.mxu0
        %v1305 = vadd.f32 %v1084, %v1304
        %v1306 = vpop.f32.mrf.mxu0
        %v1307 = vpop.f32.mrf.mxu0
        %v1308 = vadd.f32 %v1087, %v1307
        %v1309 = vpop.f32.mrf.mxu0
        %1310 = vmatprep.mubr.bf16.mxu0 0
        %1311 = vmatmul.mubr.bf16.gmra.mxu0 %v1161
        %v1312 = vpop.f32.mrf.mxu0
        %v1313 = vadd.f32 %v1092, %v1312
        %v1314 = vpop.f32.mrf.mxu0
        %v1315 = vpop.f32.mrf.mxu0
        %v1316 = vadd.f32 %v1095, %v1315
        %v1317 = vpop.f32.mrf.mxu0
        %1318 = vmatprep.mubr.bf16.mxu0 0
        %1319 = vmatmul.mubr.bf16.gmra.mxu0 %v1164
        %v1320 = vpop.f32.mrf.mxu0
        %v1321 = vadd.f32 %v1100, %v1320
        %v1322 = vpop.f32.mrf.mxu0
        %v1323 = vpop.f32.mrf.mxu0
        %v1324 = vadd.f32 %v1103, %v1323
        %v1325 = vpop.f32.mrf.mxu0
        %1326 = vdwg.mxu0
        %v1327 = vld [vmem:[#allocation2 + $0x2] sm:$0xff]
        %v1328 = vld [vmem:[#allocation2 + $0x12] sm:$0xff]
        %v1329 = vld [vmem:[#allocation2 + $0x22] sm:$0xff]
        %v1330 = vld [vmem:[#allocation2 + $0x32] sm:$0xff]
        %v1331 = vld [vmem:[#allocation2 + $0x42] sm:$0xff]
        %v1332 = vld [vmem:[#allocation2 + $0x52] sm:$0xff]
        %v1333 = vld [vmem:[#allocation2 + $0x62] sm:$0xff]
        %v1334 = vld [vmem:[#allocation2 + $0x72] sm:$0xff]
        %v1335 = vld [vmem:[#allocation2 + $0xa2] sm:$0xff]
        %v1336 = vld [vmem:[#allocation2 + $0xb2] sm:$0xff]
        %v1337 = vld [vmem:[#allocation2 + $0xc2] sm:$0xff]
        %v1338 = vld [vmem:[#allocation2 + $0xd2] sm:$0xff]
        %v1339 = vld [vmem:[#allocation2 + $0xe2] sm:$0xff]
        %v1340 = vld [vmem:[#allocation2 + $0xf2] sm:$0xff]
        %v1341 = vld [vmem:[#allocation2 + $0x102] sm:$0xff]
        %v1342 = vld [vmem:[#allocation2 + $0x112] sm:$0xff]
        %v1343 = vld [vmem:[#allocation2 + $0x142] sm:$0xff]
        %v1344 = vld [vmem:[#allocation2 + $0x152] sm:$0xff]
        %v1345 = vld [vmem:[#allocation2 + $0x162] sm:$0xff]
        %v1346 = vld [vmem:[#allocation2 + $0x172] sm:$0xff]
        %v1347 = vld [vmem:[#allocation2 + $0x182] sm:$0xff]
        %v1348 = vld [vmem:[#allocation2 + $0x192] sm:$0xff]
        %v1349 = vld [vmem:[#allocation2 + $0x1a2] sm:$0xff]
        %v1350 = vld [vmem:[#allocation2 + $0x1b2] sm:$0xff]
        %v1351 = vld [vmem:[#allocation2 + $0x1e2] sm:$0xff]
        %v1352 = vld [vmem:[#allocation2 + $0x1f2] sm:$0xff]
        %v1353 = vld [vmem:[#allocation2 + $0x202] sm:$0xff]
        %v1354 = vld [vmem:[#allocation2 + $0x212] sm:$0xff]
        %v1355 = vld [vmem:[#allocation2 + $0x222] sm:$0xff]
        %v1356 = vld [vmem:[#allocation2 + $0x232] sm:$0xff]
        %v1357 = vld [vmem:[#allocation2 + $0x242] sm:$0xff]
        %v1358 = vld [vmem:[#allocation2 + $0x252] sm:$0xff]
        %v1359 = vpack.c.bf16 %v1328, %v1327
        %v1360 = vpack.c.bf16 %v1330, %v1329
        %v1361 = vpack.c.bf16 %v1332, %v1331
        %v1362 = vpack.c.bf16 %v1334, %v1333
        %v1363 = vpack.c.bf16 %v1336, %v1335
        %v1364 = vpack.c.bf16 %v1338, %v1337
        %v1365 = vpack.c.bf16 %v1340, %v1339
        %v1366 = vpack.c.bf16 %v1342, %v1341
        %v1367 = vpack.c.bf16 %v1344, %v1343
        %v1368 = vpack.c.bf16 %v1346, %v1345
        %v1369 = vpack.c.bf16 %v1348, %v1347
        %v1370 = vpack.c.bf16 %v1350, %v1349
        %v1371 = vpack.c.bf16 %v1352, %v1351
        %v1372 = vpack.c.bf16 %v1354, %v1353
        %v1373 = vpack.c.bf16 %v1356, %v1355
        %v1374 = vpack.c.bf16 %v1358, %v1357
        %s1375 = scalar_lea.vmem [#allocation6], 32
        %v1376 = vld [vmem:[%s1375] sm:$0xf]
        %v1377 = vld [vmem:[%s1375 + $0x4] sm:$0xf]
        %v1378 = vld [vmem:[%s1375 + $0x8] sm:$0xf]
        %v1379 = vld [vmem:[%s1375 + $0xc] sm:$0xf]
        %v1384 = vunpack.c.l.b16 %v1376
        %v1385 = vunpack.c.l.b16 %v1377
        %v1386 = vunpack.c.l.b16 %v1378
        %v1387 = vunpack.c.l.b16 %v1379
        %v1388 = vpack.c.b16 %v1385, %v1384
        %v1389 = vpack.c.b16 %v1387, %v1386
        %v1393 = vsel %vm625, %v1359, 0
        %v1396 = vsel %vm625, %v1360, 0
        %v1399 = vsel %vm625, %v1361, 0
        %v1402 = vsel %vm625, %v1362, 0
        %v1405 = vsel %vm625, %v1363, 0
        %v1408 = vsel %vm625, %v1364, 0
        %v1411 = vsel %vm625, %v1365, 0
        %v1414 = vsel %vm625, %v1366, 0
        %v1417 = vsel %vm625, %v1367, 0
        %v1420 = vsel %vm625, %v1368, 0
        %v1423 = vsel %vm625, %v1369, 0
        %v1426 = vsel %vm625, %v1370, 0
        %v1429 = vsel %vm625, %v1371, 0
        %v1432 = vsel %vm625, %v1372, 0
        %v1435 = vsel %vm625, %v1373, 0
        %v1438 = vsel %vm625, %v1374, 0
        %1440 = vmatprep.subr.bf16.mxu0 0
        %1441 = vmatpush1.bf16.msra.mxu0 0
        %1442 = vmatprep.subr.bf16.mxu0 0
        %1443 = vmatpush1.bf16.msra.mxu0 0
        %1444 = vmatprep.subr.bf16.mxu0 0
        %1445 = vmatpush1.bf16.msra.mxu0 0
        %1446 = vmatprep.subr.bf16.mxu0 0
        %1447 = vmatpush1.bf16.msra.mxu0 0
        %1448 = vmatprep.subr.bf16.mxu0 0
        %1449 = vmatpush1.bf16.msra.mxu0 0
        %1450 = vmatprep.subr.bf16.mxu0 0
        %1451 = vmatpush1.bf16.msra.mxu0 0
        %1452 = vmatprep.subr.bf16.mxu0 0
        %1453 = vmatpush1.bf16.msra.mxu0 %v1389
        %1454 = vmatprep.subr.bf16.mxu0 0
        %1455 = vmatpush1.bf16.msra.mxu0 %v1388
        %1456 = vmatprep.subr.bf16.mxu0 0
        %1457 = vmatpush2.bf16.msra.mxu0 0
        %1458 = vmatprep.subr.bf16.mxu0 0
        %1459 = vmatpush2.bf16.msra.mxu0 0
        %1460 = vmatprep.subr.bf16.mxu0 0
        %1461 = vmatpush2.bf16.msra.mxu0 0
        %1462 = vmatprep.subr.bf16.mxu0 0
        %1463 = vmatpush2.bf16.msra.mxu0 0
        %1464 = vmatprep.subr.bf16.mxu0 0
        %1465 = vmatpush2.bf16.msra.mxu0 0
        %1466 = vmatprep.subr.bf16.mxu0 0
        %1467 = vmatpush2.bf16.msra.mxu0 0
        %1468 = vmatprep.subr.bf16.mxu0 0
        %1469 = vmatpush2.bf16.msra.mxu0 0
        %1470 = vmatprep.subr.bf16.mxu0 0
        %1471 = vmatpush2.bf16.msra.mxu0 0
        %1472 = vmatprep.mubr.bf16.mxu0 0
        %1473 = vmatmul.mubr.bf16.gmra.mxu0 %v1393
        %v1474 = vpop.f32.mrf.mxu0
        %v1475 = vadd.f32 0.0, %v1474
        %v1476 = vpop.f32.mrf.mxu0
        %v1477 = vpop.f32.mrf.mxu0
        %v1478 = vadd.f32 0.0, %v1477
        %v1479 = vpop.f32.mrf.mxu0
        %1480 = vmatprep.mubr.bf16.mxu0 0
        %1481 = vmatmul.mubr.bf16.gmra.mxu0 %v1396
        %v1482 = vpop.f32.mrf.mxu0
        %v1483 = vadd.f32 0.0, %v1482
        %v1484 = vpop.f32.mrf.mxu0
        %v1485 = vpop.f32.mrf.mxu0
        %v1486 = vadd.f32 0.0, %v1485
        %v1487 = vpop.f32.mrf.mxu0
        %1488 = vmatprep.mubr.bf16.mxu0 0
        %1489 = vmatmul.mubr.bf16.gmra.mxu0 %v1399
        %v1490 = vpop.f32.mrf.mxu0
        %v1491 = vadd.f32 0.0, %v1490
        %v1492 = vpop.f32.mrf.mxu0
        %v1493 = vpop.f32.mrf.mxu0
        %v1494 = vadd.f32 0.0, %v1493
        %v1495 = vpop.f32.mrf.mxu0
        %1496 = vmatprep.mubr.bf16.mxu0 0
        %1497 = vmatmul.mubr.bf16.gmra.mxu0 %v1402
        %v1498 = vpop.f32.mrf.mxu0
        %v1499 = vadd.f32 0.0, %v1498
        %v1500 = vpop.f32.mrf.mxu0
        %v1501 = vpop.f32.mrf.mxu0
        %v1502 = vadd.f32 0.0, %v1501
        %v1503 = vpop.f32.mrf.mxu0
        %1504 = vmatprep.mubr.bf16.mxu0 0
        %1505 = vmatmul.mubr.bf16.gmra.mxu0 %v1405
        %v1506 = vpop.f32.mrf.mxu0
        %v1507 = vadd.f32 0.0, %v1506
        %v1508 = vpop.f32.mrf.mxu0
        %v1509 = vpop.f32.mrf.mxu0
        %v1510 = vadd.f32 0.0, %v1509
        %v1511 = vpop.f32.mrf.mxu0
        %1512 = vmatprep.mubr.bf16.mxu0 0
        %1513 = vmatmul.mubr.bf16.gmra.mxu0 %v1408
        %v1514 = vpop.f32.mrf.mxu0
        %v1515 = vadd.f32 0.0, %v1514
        %v1516 = vpop.f32.mrf.mxu0
        %v1517 = vpop.f32.mrf.mxu0
        %v1518 = vadd.f32 0.0, %v1517
        %v1519 = vpop.f32.mrf.mxu0
        %1520 = vmatprep.mubr.bf16.mxu0 0
        %1521 = vmatmul.mubr.bf16.gmra.mxu0 %v1411
        %v1522 = vpop.f32.mrf.mxu0
        %v1523 = vadd.f32 0.0, %v1522
        %v1524 = vpop.f32.mrf.mxu0
        %v1525 = vpop.f32.mrf.mxu0
        %v1526 = vadd.f32 0.0, %v1525
        %v1527 = vpop.f32.mrf.mxu0
        %1528 = vmatprep.mubr.bf16.mxu0 0
        %1529 = vmatmul.mubr.bf16.gmra.mxu0 %v1414
        %v1530 = vpop.f32.mrf.mxu0
        %v1531 = vadd.f32 0.0, %v1530
        %v1532 = vpop.f32.mrf.mxu0
        %v1533 = vpop.f32.mrf.mxu0
        %v1534 = vadd.f32 0.0, %v1533
        %v1535 = vpop.f32.mrf.mxu0
        %1536 = vmatprep.mubr.bf16.mxu0 0
        %1537 = vmatmul.mubr.bf16.gmra.mxu0 %v1417
        %v1538 = vpop.f32.mrf.mxu0
        %v1539 = vadd.f32 0.0, %v1538
        %v1540 = vpop.f32.mrf.mxu0
        %v1541 = vpop.f32.mrf.mxu0
        %v1542 = vadd.f32 0.0, %v1541
        %v1543 = vpop.f32.mrf.mxu0
        %1544 = vmatprep.mubr.bf16.mxu0 0
        %1545 = vmatmul.mubr.bf16.gmra.mxu0 %v1420
        %v1546 = vpop.f32.mrf.mxu0
        %v1547 = vadd.f32 0.0, %v1546
        %v1548 = vpop.f32.mrf.mxu0
        %v1549 = vpop.f32.mrf.mxu0
        %v1550 = vadd.f32 0.0, %v1549
        %v1551 = vpop.f32.mrf.mxu0
        %1552 = vmatprep.mubr.bf16.mxu0 0
        %1553 = vmatmul.mubr.bf16.gmra.mxu0 %v1423
        %v1554 = vpop.f32.mrf.mxu0
        %v1555 = vadd.f32 0.0, %v1554
        %v1556 = vpop.f32.mrf.mxu0
        %v1557 = vpop.f32.mrf.mxu0
        %v1558 = vadd.f32 0.0, %v1557
        %v1559 = vpop.f32.mrf.mxu0
        %1560 = vmatprep.mubr.bf16.mxu0 0
        %1561 = vmatmul.mubr.bf16.gmra.mxu0 %v1426
        %v1562 = vpop.f32.mrf.mxu0
        %v1563 = vadd.f32 0.0, %v1562
        %v1564 = vpop.f32.mrf.mxu0
        %v1565 = vpop.f32.mrf.mxu0
        %v1566 = vadd.f32 0.0, %v1565
        %v1567 = vpop.f32.mrf.mxu0
        %1568 = vmatprep.mubr.bf16.mxu0 0
        %1569 = vmatmul.mubr.bf16.gmra.mxu0 %v1429
        %v1570 = vpop.f32.mrf.mxu0
        %v1571 = vadd.f32 0.0, %v1570
        %v1572 = vpop.f32.mrf.mxu0
        %v1573 = vpop.f32.mrf.mxu0
        %v1574 = vadd.f32 0.0, %v1573
        %v1575 = vpop.f32.mrf.mxu0
        %1576 = vmatprep.mubr.bf16.mxu0 0
        %1577 = vmatmul.mubr.bf16.gmra.mxu0 %v1432
        %v1578 = vpop.f32.mrf.mxu0
        %v1579 = vadd.f32 0.0, %v1578
        %v1580 = vpop.f32.mrf.mxu0
        %v1581 = vpop.f32.mrf.mxu0
        %v1582 = vadd.f32 0.0, %v1581
        %v1583 = vpop.f32.mrf.mxu0
        %1584 = vmatprep.mubr.bf16.mxu0 0
        %1585 = vmatmul.mubr.bf16.gmra.mxu0 %v1435
        %v1586 = vpop.f32.mrf.mxu0
        %v1587 = vadd.f32 0.0, %v1586
        %v1588 = vpop.f32.mrf.mxu0
        %v1589 = vpop.f32.mrf.mxu0
        %v1590 = vadd.f32 0.0, %v1589
        %v1591 = vpop.f32.mrf.mxu0
        %1592 = vmatprep.mubr.bf16.mxu0 0
        %1593 = vmatmul.mubr.bf16.gmra.mxu0 %v1438
        %v1594 = vpop.f32.mrf.mxu0
        %v1595 = vadd.f32 0.0, %v1594
        %v1596 = vpop.f32.mrf.mxu0
        %v1597 = vpop.f32.mrf.mxu0
        %v1598 = vadd.f32 0.0, %v1597
        %v1599 = vpop.f32.mrf.mxu0
        %1600 = vdwg.mxu0
        %v1601 = vadd.f32 %v1201, %v1475
        %v1602 = vadd.f32 %v1204, %v1478
        %v1603 = vadd.f32 %v1209, %v1483
        %v1604 = vadd.f32 %v1212, %v1486
        %v1605 = vadd.f32 %v1217, %v1491
        %v1606 = vadd.f32 %v1220, %v1494
        %v1607 = vadd.f32 %v1225, %v1499
        %v1608 = vadd.f32 %v1228, %v1502
        %v1609 = vadd.f32 %v1233, %v1507
        %v1610 = vadd.f32 %v1236, %v1510
        %v1611 = vadd.f32 %v1241, %v1515
        %v1612 = vadd.f32 %v1244, %v1518
        %v1613 = vadd.f32 %v1249, %v1523
        %v1614 = vadd.f32 %v1252, %v1526
        %v1615 = vadd.f32 %v1257, %v1531
        %v1616 = vadd.f32 %v1260, %v1534
        %v1617 = vadd.f32 %v1265, %v1539
        %v1618 = vadd.f32 %v1268, %v1542
        %v1619 = vadd.f32 %v1273, %v1547
        %v1620 = vadd.f32 %v1276, %v1550
        %v1621 = vadd.f32 %v1281, %v1555
        %v1622 = vadd.f32 %v1284, %v1558
        %v1623 = vadd.f32 %v1289, %v1563
        %v1624 = vadd.f32 %v1292, %v1566
        %v1625 = vadd.f32 %v1297, %v1571
        %v1626 = vadd.f32 %v1300, %v1574
        %v1627 = vadd.f32 %v1305, %v1579
        %v1628 = vadd.f32 %v1308, %v1582
        %v1629 = vadd.f32 %v1313, %v1587
        %v1630 = vadd.f32 %v1316, %v1590
        %v1631 = vadd.f32 %v1321, %v1595
        %v1632 = vadd.f32 %v1324, %v1598
        %s1633 = scalar_lea.vmem [#allocation2], 16
        %v1634 = vld [vmem:[%s1633] sm:$0xff]
        %v1635 = vld [vmem:[%s1633 + $0x10] sm:$0xff]
        %v1636 = vld [vmem:[%s1633 + $0x20] sm:$0xff]
        %v1637 = vld [vmem:[%s1633 + $0x30] sm:$0xff]
        %v1638 = vld [vmem:[%s1633 + $0x40] sm:$0xff]
        %v1639 = vld [vmem:[%s1633 + $0x50] sm:$0xff]
        %v1640 = vld [vmem:[%s1633 + $0x60] sm:$0xff]
        %v1641 = vld [vmem:[%s1633 + $0x70] sm:$0xff]
        %v1642 = vld [vmem:[%s1633 + $0xa0] sm:$0xff]
        %v1643 = vld [vmem:[%s1633 + $0xb0] sm:$0xff]
        %v1644 = vld [vmem:[%s1633 + $0xc0] sm:$0xff]
        %v1645 = vld [vmem:[%s1633 + $0xd0] sm:$0xff]
        %v1646 = vld [vmem:[%s1633 + $0xe0] sm:$0xff]
        %v1647 = vld [vmem:[%s1633 + $0xf0] sm:$0xff]
        %v1648 = vld [vmem:[%s1633 + $0x100] sm:$0xff]
        %v1649 = vld [vmem:[%s1633 + $0x110] sm:$0xff]
        %v1650 = vld [vmem:[%s1633 + $0x140] sm:$0xff]
        %v1651 = vld [vmem:[%s1633 + $0x150] sm:$0xff]
        %v1652 = vld [vmem:[%s1633 + $0x160] sm:$0xff]
        %v1653 = vld [vmem:[%s1633 + $0x170] sm:$0xff]
        %v1654 = vld [vmem:[%s1633 + $0x180] sm:$0xff]
        %v1655 = vld [vmem:[%s1633 + $0x190] sm:$0xff]
        %v1656 = vld [vmem:[%s1633 + $0x1a0] sm:$0xff]
        %v1657 = vld [vmem:[%s1633 + $0x1b0] sm:$0xff]
        %v1658 = vld [vmem:[%s1633 + $0x1e0] sm:$0xff]
        %v1659 = vld [vmem:[%s1633 + $0x1f0] sm:$0xff]
        %v1660 = vld [vmem:[%s1633 + $0x200] sm:$0xff]
        %v1661 = vld [vmem:[%s1633 + $0x210] sm:$0xff]
        %v1662 = vld [vmem:[%s1633 + $0x220] sm:$0xff]
        %v1663 = vld [vmem:[%s1633 + $0x230] sm:$0xff]
        %v1664 = vld [vmem:[%s1633 + $0x240] sm:$0xff]
        %v1665 = vld [vmem:[%s1633 + $0x250] sm:$0xff]
        %v1666 = vpack.c.bf16 %v1635, %v1634
        %v1667 = vpack.c.bf16 %v1637, %v1636
        %v1668 = vpack.c.bf16 %v1639, %v1638
        %v1669 = vpack.c.bf16 %v1641, %v1640
        %v1670 = vpack.c.bf16 %v1643, %v1642
        %v1671 = vpack.c.bf16 %v1645, %v1644
        %v1672 = vpack.c.bf16 %v1647, %v1646
        %v1673 = vpack.c.bf16 %v1649, %v1648
        %v1674 = vpack.c.bf16 %v1651, %v1650
        %v1675 = vpack.c.bf16 %v1653, %v1652
        %v1676 = vpack.c.bf16 %v1655, %v1654
        %v1677 = vpack.c.bf16 %v1657, %v1656
        %v1678 = vpack.c.bf16 %v1659, %v1658
        %v1679 = vpack.c.bf16 %v1661, %v1660
        %v1680 = vpack.c.bf16 %v1663, %v1662
        %v1681 = vpack.c.bf16 %v1665, %v1664
        %s1682 = scalar_lea.vmem [#allocation6], 48
        %v1683 = vld [vmem:[%s1682] sm:$0xf]
        %v1684 = vld [vmem:[%s1682 + $0x4] sm:$0xf]
        %v1685 = vld [vmem:[%s1682 + $0x8] sm:$0xf]
        %v1686 = vld [vmem:[%s1682 + $0xc] sm:$0xf]
        %v1691 = vunpack.c.l.b16 %v1683
        %v1692 = vunpack.c.l.b16 %v1684
        %v1693 = vunpack.c.l.b16 %v1685
        %v1694 = vunpack.c.l.b16 %v1686
        %v1695 = vpack.c.b16 %v1692, %v1691
        %v1696 = vpack.c.b16 %v1694, %v1693
        %v1700 = vsel %vm625, %v1666, 0
        %v1703 = vsel %vm625, %v1667, 0
        %v1706 = vsel %vm625, %v1668, 0
        %v1709 = vsel %vm625, %v1669, 0
        %v1712 = vsel %vm625, %v1670, 0
        %v1715 = vsel %vm625, %v1671, 0
        %v1718 = vsel %vm625, %v1672, 0
        %v1721 = vsel %vm625, %v1673, 0
        %v1724 = vsel %vm625, %v1674, 0
        %v1727 = vsel %vm625, %v1675, 0
        %v1730 = vsel %vm625, %v1676, 0
        %v1733 = vsel %vm625, %v1677, 0
        %v1736 = vsel %vm625, %v1678, 0
        %v1739 = vsel %vm625, %v1679, 0
        %v1742 = vsel %vm625, %v1680, 0
        %v1745 = vsel %vm625, %v1681, 0
        %1747 = vmatprep.subr.bf16.mxu0 0
        %1748 = vmatpush1.bf16.msra.mxu0 0
        %1749 = vmatprep.subr.bf16.mxu0 0
        %1750 = vmatpush1.bf16.msra.mxu0 0
        %1751 = vmatprep.subr.bf16.mxu0 0
        %1752 = vmatpush1.bf16.msra.mxu0 0
        %1753 = vmatprep.subr.bf16.mxu0 0
        %1754 = vmatpush1.bf16.msra.mxu0 0
        %1755 = vmatprep.subr.bf16.mxu0 0
        %1756 = vmatpush1.bf16.msra.mxu0 0
        %1757 = vmatprep.subr.bf16.mxu0 0
        %1758 = vmatpush1.bf16.msra.mxu0 0
        %1759 = vmatprep.subr.bf16.mxu0 0
        %1760 = vmatpush1.bf16.msra.mxu0 %v1696
        %1761 = vmatprep.subr.bf16.mxu0 0
        %1762 = vmatpush1.bf16.msra.mxu0 %v1695
        %1763 = vmatprep.subr.bf16.mxu0 0
        %1764 = vmatpush2.bf16.msra.mxu0 0
        %1765 = vmatprep.subr.bf16.mxu0 0
        %1766 = vmatpush2.bf16.msra.mxu0 0
        %1767 = vmatprep.subr.bf16.mxu0 0
        %1768 = vmatpush2.bf16.msra.mxu0 0
        %1769 = vmatprep.subr.bf16.mxu0 0
        %1770 = vmatpush2.bf16.msra.mxu0 0
        %1771 = vmatprep.subr.bf16.mxu0 0
        %1772 = vmatpush2.bf16.msra.mxu0 0
        %1773 = vmatprep.subr.bf16.mxu0 0
        %1774 = vmatpush2.bf16.msra.mxu0 0
        %1775 = vmatprep.subr.bf16.mxu0 0
        %1776 = vmatpush2.bf16.msra.mxu0 0
        %1777 = vmatprep.subr.bf16.mxu0 0
        %1778 = vmatpush2.bf16.msra.mxu0 0
        %1779 = vmatprep.mubr.bf16.mxu0 0
        %1780 = vmatmul.mubr.bf16.gmra.mxu0 %v1700
        %v1781 = vpop.f32.mrf.mxu0
        %v1782 = vadd.f32 0.0, %v1781
        %v1783 = vpop.f32.mrf.mxu0
        %v1784 = vpop.f32.mrf.mxu0
        %v1785 = vadd.f32 0.0, %v1784
        %v1786 = vpop.f32.mrf.mxu0
        %1787 = vmatprep.mubr.bf16.mxu0 0
        %1788 = vmatmul.mubr.bf16.gmra.mxu0 %v1703
        %v1789 = vpop.f32.mrf.mxu0
        %v1790 = vadd.f32 0.0, %v1789
        %v1791 = vpop.f32.mrf.mxu0
        %v1792 = vpop.f32.mrf.mxu0
        %v1793 = vadd.f32 0.0, %v1792
        %v1794 = vpop.f32.mrf.mxu0
        %1795 = vmatprep.mubr.bf16.mxu0 0
        %1796 = vmatmul.mubr.bf16.gmra.mxu0 %v1706
        %v1797 = vpop.f32.mrf.mxu0
        %v1798 = vadd.f32 0.0, %v1797
        %v1799 = vpop.f32.mrf.mxu0
        %v1800 = vpop.f32.mrf.mxu0
        %v1801 = vadd.f32 0.0, %v1800
        %v1802 = vpop.f32.mrf.mxu0
        %1803 = vmatprep.mubr.bf16.mxu0 0
        %1804 = vmatmul.mubr.bf16.gmra.mxu0 %v1709
        %v1805 = vpop.f32.mrf.mxu0
        %v1806 = vadd.f32 0.0, %v1805
        %v1807 = vpop.f32.mrf.mxu0
        %v1808 = vpop.f32.mrf.mxu0
        %v1809 = vadd.f32 0.0, %v1808
        %v1810 = vpop.f32.mrf.mxu0
        %1811 = vmatprep.mubr.bf16.mxu0 0
        %1812 = vmatmul.mubr.bf16.gmra.mxu0 %v1712
        %v1813 = vpop.f32.mrf.mxu0
        %v1814 = vadd.f32 0.0, %v1813
        %v1815 = vpop.f32.mrf.mxu0
        %v1816 = vpop.f32.mrf.mxu0
        %v1817 = vadd.f32 0.0, %v1816
        %v1818 = vpop.f32.mrf.mxu0
        %1819 = vmatprep.mubr.bf16.mxu0 0
        %1820 = vmatmul.mubr.bf16.gmra.mxu0 %v1715
        %v1821 = vpop.f32.mrf.mxu0
        %v1822 = vadd.f32 0.0, %v1821
        %v1823 = vpop.f32.mrf.mxu0
        %v1824 = vpop.f32.mrf.mxu0
        %v1825 = vadd.f32 0.0, %v1824
        %v1826 = vpop.f32.mrf.mxu0
        %1827 = vmatprep.mubr.bf16.mxu0 0
        %1828 = vmatmul.mubr.bf16.gmra.mxu0 %v1718
        %v1829 = vpop.f32.mrf.mxu0
        %v1830 = vadd.f32 0.0, %v1829
        %v1831 = vpop.f32.mrf.mxu0
        %v1832 = vpop.f32.mrf.mxu0
        %v1833 = vadd.f32 0.0, %v1832
        %v1834 = vpop.f32.mrf.mxu0
        %1835 = vmatprep.mubr.bf16.mxu0 0
        %1836 = vmatmul.mubr.bf16.gmra.mxu0 %v1721
        %v1837 = vpop.f32.mrf.mxu0
        %v1838 = vadd.f32 0.0, %v1837
        %v1839 = vpop.f32.mrf.mxu0
        %v1840 = vpop.f32.mrf.mxu0
        %v1841 = vadd.f32 0.0, %v1840
        %v1842 = vpop.f32.mrf.mxu0
        %1843 = vmatprep.mubr.bf16.mxu0 0
        %1844 = vmatmul.mubr.bf16.gmra.mxu0 %v1724
        %v1845 = vpop.f32.mrf.mxu0
        %v1846 = vadd.f32 0.0, %v1845
        %v1847 = vpop.f32.mrf.mxu0
        %v1848 = vpop.f32.mrf.mxu0
        %v1849 = vadd.f32 0.0, %v1848
        %v1850 = vpop.f32.mrf.mxu0
        %1851 = vmatprep.mubr.bf16.mxu0 0
        %1852 = vmatmul.mubr.bf16.gmra.mxu0 %v1727
        %v1853 = vpop.f32.mrf.mxu0
        %v1854 = vadd.f32 0.0, %v1853
        %v1855 = vpop.f32.mrf.mxu0
        %v1856 = vpop.f32.mrf.mxu0
        %v1857 = vadd.f32 0.0, %v1856
        %v1858 = vpop.f32.mrf.mxu0
        %1859 = vmatprep.mubr.bf16.mxu0 0
        %1860 = vmatmul.mubr.bf16.gmra.mxu0 %v1730
        %v1861 = vpop.f32.mrf.mxu0
        %v1862 = vadd.f32 0.0, %v1861
        %v1863 = vpop.f32.mrf.mxu0
        %v1864 = vpop.f32.mrf.mxu0
        %v1865 = vadd.f32 0.0, %v1864
        %v1866 = vpop.f32.mrf.mxu0
        %1867 = vmatprep.mubr.bf16.mxu0 0
        %1868 = vmatmul.mubr.bf16.gmra.mxu0 %v1733
        %v1869 = vpop.f32.mrf.mxu0
        %v1870 = vadd.f32 0.0, %v1869
        %v1871 = vpop.f32.mrf.mxu0
        %v1872 = vpop.f32.mrf.mxu0
        %v1873 = vadd.f32 0.0, %v1872
        %v1874 = vpop.f32.mrf.mxu0
        %1875 = vmatprep.mubr.bf16.mxu0 0
        %1876 = vmatmul.mubr.bf16.gmra.mxu0 %v1736
        %v1877 = vpop.f32.mrf.mxu0
        %v1878 = vadd.f32 0.0, %v1877
        %v1879 = vpop.f32.mrf.mxu0
        %v1880 = vpop.f32.mrf.mxu0
        %v1881 = vadd.f32 0.0, %v1880
        %v1882 = vpop.f32.mrf.mxu0
        %1883 = vmatprep.mubr.bf16.mxu0 0
        %1884 = vmatmul.mubr.bf16.gmra.mxu0 %v1739
        %v1885 = vpop.f32.mrf.mxu0
        %v1886 = vadd.f32 0.0, %v1885
        %v1887 = vpop.f32.mrf.mxu0
        %v1888 = vpop.f32.mrf.mxu0
        %v1889 = vadd.f32 0.0, %v1888
        %v1890 = vpop.f32.mrf.mxu0
        %1891 = vmatprep.mubr.bf16.mxu0 0
        %1892 = vmatmul.mubr.bf16.gmra.mxu0 %v1742
        %v1893 = vpop.f32.mrf.mxu0
        %v1894 = vadd.f32 0.0, %v1893
        %v1895 = vpop.f32.mrf.mxu0
        %v1896 = vpop.f32.mrf.mxu0
        %v1897 = vadd.f32 0.0, %v1896
        %v1898 = vpop.f32.mrf.mxu0
        %1899 = vmatprep.mubr.bf16.mxu0 0
        %1900 = vmatmul.mubr.bf16.gmra.mxu0 %v1745
        %v1901 = vpop.f32.mrf.mxu0
        %v1902 = vadd.f32 0.0, %v1901
        %v1903 = vpop.f32.mrf.mxu0
        %v1904 = vpop.f32.mrf.mxu0
        %v1905 = vadd.f32 0.0, %v1904
        %v1906 = vpop.f32.mrf.mxu0
        %1907 = vdwg.mxu0
        %v1908 = vadd.f32 %v1601, %v1782
        %v1909 = vadd.f32 %v1602, %v1785
        %v1910 = vadd.f32 %v1603, %v1790
        %v1911 = vadd.f32 %v1604, %v1793
        %v1912 = vadd.f32 %v1605, %v1798
        %v1913 = vadd.f32 %v1606, %v1801
        %v1914 = vadd.f32 %v1607, %v1806
        %v1915 = vadd.f32 %v1608, %v1809
        %v1916 = vadd.f32 %v1609, %v1814
        %v1917 = vadd.f32 %v1610, %v1817
        %v1918 = vadd.f32 %v1611, %v1822
        %v1919 = vadd.f32 %v1612, %v1825
        %v1920 = vadd.f32 %v1613, %v1830
        %v1921 = vadd.f32 %v1614, %v1833
        %v1922 = vadd.f32 %v1615, %v1838
        %v1923 = vadd.f32 %v1616, %v1841
        %v1924 = vadd.f32 %v1617, %v1846
        %v1925 = vadd.f32 %v1618, %v1849
        %v1926 = vadd.f32 %v1619, %v1854
        %v1927 = vadd.f32 %v1620, %v1857
        %v1928 = vadd.f32 %v1621, %v1862
        %v1929 = vadd.f32 %v1622, %v1865
        %v1930 = vadd.f32 %v1623, %v1870
        %v1931 = vadd.f32 %v1624, %v1873
        %v1932 = vadd.f32 %v1625, %v1878
        %v1933 = vadd.f32 %v1626, %v1881
        %v1934 = vadd.f32 %v1627, %v1886
        %v1935 = vadd.f32 %v1628, %v1889
        %v1936 = vadd.f32 %v1629, %v1894
        %v1937 = vadd.f32 %v1630, %v1897
        %v1938 = vadd.f32 %v1631, %v1902
        %v1939 = vadd.f32 %v1632, %v1905
        %v1940 = vld [vmem:[%s1633 + $0x1] sm:$0xff]
        %v1941 = vld [vmem:[%s1633 + $0x11] sm:$0xff]
        %v1942 = vld [vmem:[%s1633 + $0x21] sm:$0xff]
        %v1943 = vld [vmem:[%s1633 + $0x31] sm:$0xff]
        %v1944 = vld [vmem:[%s1633 + $0x41] sm:$0xff]
        %v1945 = vld [vmem:[%s1633 + $0x51] sm:$0xff]
        %v1946 = vld [vmem:[%s1633 + $0x61] sm:$0xff]
        %v1947 = vld [vmem:[%s1633 + $0x71] sm:$0xff]
        %v1948 = vld [vmem:[%s1633 + $0xa1] sm:$0xff]
        %v1949 = vld [vmem:[%s1633 + $0xb1] sm:$0xff]
        %v1950 = vld [vmem:[%s1633 + $0xc1] sm:$0xff]
        %v1951 = vld [vmem:[%s1633 + $0xd1] sm:$0xff]
        %v1952 = vld [vmem:[%s1633 + $0xe1] sm:$0xff]
        %v1953 = vld [vmem:[%s1633 + $0xf1] sm:$0xff]
        %v1954 = vld [vmem:[%s1633 + $0x101] sm:$0xff]
        %v1955 = vld [vmem:[%s1633 + $0x111] sm:$0xff]
        %v1956 = vld [vmem:[%s1633 + $0x141] sm:$0xff]
        %v1957 = vld [vmem:[%s1633 + $0x151] sm:$0xff]
        %v1958 = vld [vmem:[%s1633 + $0x161] sm:$0xff]
        %v1959 = vld [vmem:[%s1633 + $0x171] sm:$0xff]
        %v1960 = vld [vmem:[%s1633 + $0x181] sm:$0xff]
        %v1961 = vld [vmem:[%s1633 + $0x191] sm:$0xff]
        %v1962 = vld [vmem:[%s1633 + $0x1a1] sm:$0xff]
        %v1963 = vld [vmem:[%s1633 + $0x1b1] sm:$0xff]
        %v1964 = vld [vmem:[%s1633 + $0x1e1] sm:$0xff]
        %v1965 = vld [vmem:[%s1633 + $0x1f1] sm:$0xff]
        %v1966 = vld [vmem:[%s1633 + $0x201] sm:$0xff]
        %v1967 = vld [vmem:[%s1633 + $0x211] sm:$0xff]
        %v1968 = vld [vmem:[%s1633 + $0x221] sm:$0xff]
        %v1969 = vld [vmem:[%s1633 + $0x231] sm:$0xff]
        %v1970 = vld [vmem:[%s1633 + $0x241] sm:$0xff]
        %v1971 = vld [vmem:[%s1633 + $0x251] sm:$0xff]
        %v1972 = vpack.c.bf16 %v1941, %v1940
        %v1973 = vpack.c.bf16 %v1943, %v1942
        %v1974 = vpack.c.bf16 %v1945, %v1944
        %v1975 = vpack.c.bf16 %v1947, %v1946
        %v1976 = vpack.c.bf16 %v1949, %v1948
        %v1977 = vpack.c.bf16 %v1951, %v1950
        %v1978 = vpack.c.bf16 %v1953, %v1952
        %v1979 = vpack.c.bf16 %v1955, %v1954
        %v1980 = vpack.c.bf16 %v1957, %v1956
        %v1981 = vpack.c.bf16 %v1959, %v1958
        %v1982 = vpack.c.bf16 %v1961, %v1960
        %v1983 = vpack.c.bf16 %v1963, %v1962
        %v1984 = vpack.c.bf16 %v1965, %v1964
        %v1985 = vpack.c.bf16 %v1967, %v1966
        %v1986 = vpack.c.bf16 %v1969, %v1968
        %v1987 = vpack.c.bf16 %v1971, %v1970
        %s1988 = scalar_lea.vmem [#allocation6], 64
        %v1989 = vld [vmem:[%s1988] sm:$0xf]
        %v1990 = vld [vmem:[%s1988 + $0x4] sm:$0xf]
        %v1991 = vld [vmem:[%s1988 + $0x8] sm:$0xf]
        %v1992 = vld [vmem:[%s1988 + $0xc] sm:$0xf]
        %v1997 = vunpack.c.l.b16 %v1989
        %v1998 = vunpack.c.l.b16 %v1990
        %v1999 = vunpack.c.l.b16 %v1991
        %v2000 = vunpack.c.l.b16 %v1992
        %v2001 = vpack.c.b16 %v1998, %v1997
        %v2002 = vpack.c.b16 %v2000, %v1999
        %v2006 = vsel %vm625, %v1972, 0
        %v2009 = vsel %vm625, %v1973, 0
        %v2012 = vsel %vm625, %v1974, 0
        %v2015 = vsel %vm625, %v1975, 0
        %v2018 = vsel %vm625, %v1976, 0
        %v2021 = vsel %vm625, %v1977, 0
        %v2024 = vsel %vm625, %v1978, 0
        %v2027 = vsel %vm625, %v1979, 0
        %v2030 = vsel %vm625, %v1980, 0
        %v2033 = vsel %vm625, %v1981, 0
        %v2036 = vsel %vm625, %v1982, 0
        %v2039 = vsel %vm625, %v1983, 0
        %v2042 = vsel %vm625, %v1984, 0
        %v2045 = vsel %vm625, %v1985, 0
        %v2048 = vsel %vm625, %v1986, 0
        %v2051 = vsel %vm625, %v1987, 0
        %2053 = vmatprep.subr.bf16.mxu0 0
        %2054 = vmatpush1.bf16.msra.mxu0 0
        %2055 = vmatprep.subr.bf16.mxu0 0
        %2056 = vmatpush1.bf16.msra.mxu0 0
        %2057 = vmatprep.subr.bf16.mxu0 0
        %2058 = vmatpush1.bf16.msra.mxu0 0
        %2059 = vmatprep.subr.bf16.mxu0 0
        %2060 = vmatpush1.bf16.msra.mxu0 0
        %2061 = vmatprep.subr.bf16.mxu0 0
        %2062 = vmatpush1.bf16.msra.mxu0 0
        %2063 = vmatprep.subr.bf16.mxu0 0
        %2064 = vmatpush1.bf16.msra.mxu0 0
        %2065 = vmatprep.subr.bf16.mxu0 0
        %2066 = vmatpush1.bf16.msra.mxu0 %v2002
        %2067 = vmatprep.subr.bf16.mxu0 0
        %2068 = vmatpush1.bf16.msra.mxu0 %v2001
        %2069 = vmatprep.subr.bf16.mxu0 0
        %2070 = vmatpush2.bf16.msra.mxu0 0
        %2071 = vmatprep.subr.bf16.mxu0 0
        %2072 = vmatpush2.bf16.msra.mxu0 0
        %2073 = vmatprep.subr.bf16.mxu0 0
        %2074 = vmatpush2.bf16.msra.mxu0 0
        %2075 = vmatprep.subr.bf16.mxu0 0
        %2076 = vmatpush2.bf16.msra.mxu0 0
        %2077 = vmatprep.subr.bf16.mxu0 0
        %2078 = vmatpush2.bf16.msra.mxu0 0
        %2079 = vmatprep.subr.bf16.mxu0 0
        %2080 = vmatpush2.bf16.msra.mxu0 0
        %2081 = vmatprep.subr.bf16.mxu0 0
        %2082 = vmatpush2.bf16.msra.mxu0 0
        %2083 = vmatprep.subr.bf16.mxu0 0
        %2084 = vmatpush2.bf16.msra.mxu0 0
        %2085 = vmatprep.mubr.bf16.mxu0 0
        %2086 = vmatmul.mubr.bf16.gmra.mxu0 %v2006
        %v2087 = vpop.f32.mrf.mxu0
        %v2088 = vadd.f32 0.0, %v2087
        %v2089 = vpop.f32.mrf.mxu0
        %v2090 = vpop.f32.mrf.mxu0
        %v2091 = vadd.f32 0.0, %v2090
        %v2092 = vpop.f32.mrf.mxu0
        %2093 = vmatprep.mubr.bf16.mxu0 0
        %2094 = vmatmul.mubr.bf16.gmra.mxu0 %v2009
        %v2095 = vpop.f32.mrf.mxu0
        %v2096 = vadd.f32 0.0, %v2095
        %v2097 = vpop.f32.mrf.mxu0
        %v2098 = vpop.f32.mrf.mxu0
        %v2099 = vadd.f32 0.0, %v2098
        %v2100 = vpop.f32.mrf.mxu0
        %2101 = vmatprep.mubr.bf16.mxu0 0
        %2102 = vmatmul.mubr.bf16.gmra.mxu0 %v2012
        %v2103 = vpop.f32.mrf.mxu0
        %v2104 = vadd.f32 0.0, %v2103
        %v2105 = vpop.f32.mrf.mxu0
        %v2106 = vpop.f32.mrf.mxu0
        %v2107 = vadd.f32 0.0, %v2106
        %v2108 = vpop.f32.mrf.mxu0
        %2109 = vmatprep.mubr.bf16.mxu0 0
        %2110 = vmatmul.mubr.bf16.gmra.mxu0 %v2015
        %v2111 = vpop.f32.mrf.mxu0
        %v2112 = vadd.f32 0.0, %v2111
        %v2113 = vpop.f32.mrf.mxu0
        %v2114 = vpop.f32.mrf.mxu0
        %v2115 = vadd.f32 0.0, %v2114
        %v2116 = vpop.f32.mrf.mxu0
        %2117 = vmatprep.mubr.bf16.mxu0 0
        %2118 = vmatmul.mubr.bf16.gmra.mxu0 %v2018
        %v2119 = vpop.f32.mrf.mxu0
        %v2120 = vadd.f32 0.0, %v2119
        %v2121 = vpop.f32.mrf.mxu0
        %v2122 = vpop.f32.mrf.mxu0
        %v2123 = vadd.f32 0.0, %v2122
        %v2124 = vpop.f32.mrf.mxu0
        %2125 = vmatprep.mubr.bf16.mxu0 0
        %2126 = vmatmul.mubr.bf16.gmra.mxu0 %v2021
        %v2127 = vpop.f32.mrf.mxu0
        %v2128 = vadd.f32 0.0, %v2127
        %v2129 = vpop.f32.mrf.mxu0
        %v2130 = vpop.f32.mrf.mxu0
        %v2131 = vadd.f32 0.0, %v2130
        %v2132 = vpop.f32.mrf.mxu0
        %2133 = vmatprep.mubr.bf16.mxu0 0
        %2134 = vmatmul.mubr.bf16.gmra.mxu0 %v2024
        %v2135 = vpop.f32.mrf.mxu0
        %v2136 = vadd.f32 0.0, %v2135
        %v2137 = vpop.f32.mrf.mxu0
        %v2138 = vpop.f32.mrf.mxu0
        %v2139 = vadd.f32 0.0, %v2138
        %v2140 = vpop.f32.mrf.mxu0
        %2141 = vmatprep.mubr.bf16.mxu0 0
        %2142 = vmatmul.mubr.bf16.gmra.mxu0 %v2027
        %v2143 = vpop.f32.mrf.mxu0
        %v2144 = vadd.f32 0.0, %v2143
        %v2145 = vpop.f32.mrf.mxu0
        %v2146 = vpop.f32.mrf.mxu0
        %v2147 = vadd.f32 0.0, %v2146
        %v2148 = vpop.f32.mrf.mxu0
        %2149 = vmatprep.mubr.bf16.mxu0 0
        %2150 = vmatmul.mubr.bf16.gmra.mxu0 %v2030
        %v2151 = vpop.f32.mrf.mxu0
        %v2152 = vadd.f32 0.0, %v2151
        %v2153 = vpop.f32.mrf.mxu0
        %v2154 = vpop.f32.mrf.mxu0
        %v2155 = vadd.f32 0.0, %v2154
        %v2156 = vpop.f32.mrf.mxu0
        %2157 = vmatprep.mubr.bf16.mxu0 0
        %2158 = vmatmul.mubr.bf16.gmra.mxu0 %v2033
        %v2159 = vpop.f32.mrf.mxu0
        %v2160 = vadd.f32 0.0, %v2159
        %v2161 = vpop.f32.mrf.mxu0
        %v2162 = vpop.f32.mrf.mxu0
        %v2163 = vadd.f32 0.0, %v2162
        %v2164 = vpop.f32.mrf.mxu0
        %2165 = vmatprep.mubr.bf16.mxu0 0
        %2166 = vmatmul.mubr.bf16.gmra.mxu0 %v2036
        %v2167 = vpop.f32.mrf.mxu0
        %v2168 = vadd.f32 0.0, %v2167
        %v2169 = vpop.f32.mrf.mxu0
        %v2170 = vpop.f32.mrf.mxu0
        %v2171 = vadd.f32 0.0, %v2170
        %v2172 = vpop.f32.mrf.mxu0
        %2173 = vmatprep.mubr.bf16.mxu0 0
        %2174 = vmatmul.mubr.bf16.gmra.mxu0 %v2039
        %v2175 = vpop.f32.mrf.mxu0
        %v2176 = vadd.f32 0.0, %v2175
        %v2177 = vpop.f32.mrf.mxu0
        %v2178 = vpop.f32.mrf.mxu0
        %v2179 = vadd.f32 0.0, %v2178
        %v2180 = vpop.f32.mrf.mxu0
        %2181 = vmatprep.mubr.bf16.mxu0 0
        %2182 = vmatmul.mubr.bf16.gmra.mxu0 %v2042
        %v2183 = vpop.f32.mrf.mxu0
        %v2184 = vadd.f32 0.0, %v2183
        %v2185 = vpop.f32.mrf.mxu0
        %v2186 = vpop.f32.mrf.mxu0
        %v2187 = vadd.f32 0.0, %v2186
        %v2188 = vpop.f32.mrf.mxu0
        %2189 = vmatprep.mubr.bf16.mxu0 0
        %2190 = vmatmul.mubr.bf16.gmra.mxu0 %v2045
        %v2191 = vpop.f32.mrf.mxu0
        %v2192 = vadd.f32 0.0, %v2191
        %v2193 = vpop.f32.mrf.mxu0
        %v2194 = vpop.f32.mrf.mxu0
        %v2195 = vadd.f32 0.0, %v2194
        %v2196 = vpop.f32.mrf.mxu0
        %2197 = vmatprep.mubr.bf16.mxu0 0
        %2198 = vmatmul.mubr.bf16.gmra.mxu0 %v2048
        %v2199 = vpop.f32.mrf.mxu0
        %v2200 = vadd.f32 0.0, %v2199
        %v2201 = vpop.f32.mrf.mxu0
        %v2202 = vpop.f32.mrf.mxu0
        %v2203 = vadd.f32 0.0, %v2202
        %v2204 = vpop.f32.mrf.mxu0
        %2205 = vmatprep.mubr.bf16.mxu0 0
        %2206 = vmatmul.mubr.bf16.gmra.mxu0 %v2051
        %v2207 = vpop.f32.mrf.mxu0
        %v2208 = vadd.f32 0.0, %v2207
        %v2209 = vpop.f32.mrf.mxu0
        %v2210 = vpop.f32.mrf.mxu0
        %v2211 = vadd.f32 0.0, %v2210
        %v2212 = vpop.f32.mrf.mxu0
        %2213 = vdwg.mxu0
        %v2214 = vadd.f32 %v1908, %v2088
        %v2215 = vadd.f32 %v1909, %v2091
        %v2216 = vadd.f32 %v1910, %v2096
        %v2217 = vadd.f32 %v1911, %v2099
        %v2218 = vadd.f32 %v1912, %v2104
        %v2219 = vadd.f32 %v1913, %v2107
        %v2220 = vadd.f32 %v1914, %v2112
        %v2221 = vadd.f32 %v1915, %v2115
        %v2222 = vadd.f32 %v1916, %v2120
        %v2223 = vadd.f32 %v1917, %v2123
        %v2224 = vadd.f32 %v1918, %v2128
        %v2225 = vadd.f32 %v1919, %v2131
        %v2226 = vadd.f32 %v1920, %v2136
        %v2227 = vadd.f32 %v1921, %v2139
        %v2228 = vadd.f32 %v1922, %v2144
        %v2229 = vadd.f32 %v1923, %v2147
        %v2230 = vadd.f32 %v1924, %v2152
        %v2231 = vadd.f32 %v1925, %v2155
        %v2232 = vadd.f32 %v1926, %v2160
        %v2233 = vadd.f32 %v1927, %v2163
        %v2234 = vadd.f32 %v1928, %v2168
        %v2235 = vadd.f32 %v1929, %v2171
        %v2236 = vadd.f32 %v1930, %v2176
        %v2237 = vadd.f32 %v1931, %v2179
        %v2238 = vadd.f32 %v1932, %v2184
        %v2239 = vadd.f32 %v1933, %v2187
        %v2240 = vadd.f32 %v1934, %v2192
        %v2241 = vadd.f32 %v1935, %v2195
        %v2242 = vadd.f32 %v1936, %v2200
        %v2243 = vadd.f32 %v1937, %v2203
        %v2244 = vadd.f32 %v1938, %v2208
        %v2245 = vadd.f32 %v1939, %v2211
        %v2246 = vld [vmem:[%s1633 + $0x2] sm:$0xff]
        %v2247 = vld [vmem:[%s1633 + $0x12] sm:$0xff]
        %v2248 = vld [vmem:[%s1633 + $0x22] sm:$0xff]
        %v2249 = vld [vmem:[%s1633 + $0x32] sm:$0xff]
        %v2250 = vld [vmem:[%s1633 + $0x42] sm:$0xff]
        %v2251 = vld [vmem:[%s1633 + $0x52] sm:$0xff]
        %v2252 = vld [vmem:[%s1633 + $0x62] sm:$0xff]
        %v2253 = vld [vmem:[%s1633 + $0x72] sm:$0xff]
        %v2254 = vld [vmem:[%s1633 + $0xa2] sm:$0xff]
        %v2255 = vld [vmem:[%s1633 + $0xb2] sm:$0xff]
        %v2256 = vld [vmem:[%s1633 + $0xc2] sm:$0xff]
        %v2257 = vld [vmem:[%s1633 + $0xd2] sm:$0xff]
        %v2258 = vld [vmem:[%s1633 + $0xe2] sm:$0xff]
        %v2259 = vld [vmem:[%s1633 + $0xf2] sm:$0xff]
        %v2260 = vld [vmem:[%s1633 + $0x102] sm:$0xff]
        %v2261 = vld [vmem:[%s1633 + $0x112] sm:$0xff]
        %v2262 = vld [vmem:[%s1633 + $0x142] sm:$0xff]
        %v2263 = vld [vmem:[%s1633 + $0x152] sm:$0xff]
        %v2264 = vld [vmem:[%s1633 + $0x162] sm:$0xff]
        %v2265 = vld [vmem:[%s1633 + $0x172] sm:$0xff]
        %v2266 = vld [vmem:[%s1633 + $0x182] sm:$0xff]
        %v2267 = vld [vmem:[%s1633 + $0x192] sm:$0xff]
        %v2268 = vld [vmem:[%s1633 + $0x1a2] sm:$0xff]
        %v2269 = vld [vmem:[%s1633 + $0x1b2] sm:$0xff]
        %v2270 = vld [vmem:[%s1633 + $0x1e2] sm:$0xff]
        %v2271 = vld [vmem:[%s1633 + $0x1f2] sm:$0xff]
        %v2272 = vld [vmem:[%s1633 + $0x202] sm:$0xff]
        %v2273 = vld [vmem:[%s1633 + $0x212] sm:$0xff]
        %v2274 = vld [vmem:[%s1633 + $0x222] sm:$0xff]
        %v2275 = vld [vmem:[%s1633 + $0x232] sm:$0xff]
        %v2276 = vld [vmem:[%s1633 + $0x242] sm:$0xff]
        %v2277 = vld [vmem:[%s1633 + $0x252] sm:$0xff]
        %v2278 = vpack.c.bf16 %v2247, %v2246
        %v2279 = vpack.c.bf16 %v2249, %v2248
        %v2280 = vpack.c.bf16 %v2251, %v2250
        %v2281 = vpack.c.bf16 %v2253, %v2252
        %v2282 = vpack.c.bf16 %v2255, %v2254
        %v2283 = vpack.c.bf16 %v2257, %v2256
        %v2284 = vpack.c.bf16 %v2259, %v2258
        %v2285 = vpack.c.bf16 %v2261, %v2260
        %v2286 = vpack.c.bf16 %v2263, %v2262
        %v2287 = vpack.c.bf16 %v2265, %v2264
        %v2288 = vpack.c.bf16 %v2267, %v2266
        %v2289 = vpack.c.bf16 %v2269, %v2268
        %v2290 = vpack.c.bf16 %v2271, %v2270
        %v2291 = vpack.c.bf16 %v2273, %v2272
        %v2292 = vpack.c.bf16 %v2275, %v2274
        %v2293 = vpack.c.bf16 %v2277, %v2276
        %s2294 = scalar_lea.vmem [#allocation6], 80
        %v2295 = vld [vmem:[%s2294] sm:$0xf]
        %v2296 = vld [vmem:[%s2294 + $0x4] sm:$0xf]
        %v2297 = vld [vmem:[%s2294 + $0x8] sm:$0xf]
        %v2298 = vld [vmem:[%s2294 + $0xc] sm:$0xf]
        %v2303 = vunpack.c.l.b16 %v2295
        %v2304 = vunpack.c.l.b16 %v2296
        %v2305 = vunpack.c.l.b16 %v2297
        %v2306 = vunpack.c.l.b16 %v2298
        %v2307 = vpack.c.b16 %v2304, %v2303
        %v2308 = vpack.c.b16 %v2306, %v2305
        %v2312 = vsel %vm625, %v2278, 0
        %v2315 = vsel %vm625, %v2279, 0
        %v2318 = vsel %vm625, %v2280, 0
        %v2321 = vsel %vm625, %v2281, 0
        %v2324 = vsel %vm625, %v2282, 0
        %v2327 = vsel %vm625, %v2283, 0
        %v2330 = vsel %vm625, %v2284, 0
        %v2333 = vsel %vm625, %v2285, 0
        %v2336 = vsel %vm625, %v2286, 0
        %v2339 = vsel %vm625, %v2287, 0
        %v2342 = vsel %vm625, %v2288, 0
        %v2345 = vsel %vm625, %v2289, 0
        %v2348 = vsel %vm625, %v2290, 0
        %v2351 = vsel %vm625, %v2291, 0
        %v2354 = vsel %vm625, %v2292, 0
        %v2357 = vsel %vm625, %v2293, 0
        %2359 = vmatprep.subr.bf16.mxu0 0
        %2360 = vmatpush1.bf16.msra.mxu0 0
        %2361 = vmatprep.subr.bf16.mxu0 0
        %2362 = vmatpush1.bf16.msra.mxu0 0
        %2363 = vmatprep.subr.bf16.mxu0 0
        %2364 = vmatpush1.bf16.msra.mxu0 0
        %2365 = vmatprep.subr.bf16.mxu0 0
        %2366 = vmatpush1.bf16.msra.mxu0 0
        %2367 = vmatprep.subr.bf16.mxu0 0
        %2368 = vmatpush1.bf16.msra.mxu0 0
        %2369 = vmatprep.subr.bf16.mxu0 0
        %2370 = vmatpush1.bf16.msra.mxu0 0
        %2371 = vmatprep.subr.bf16.mxu0 0
        %2372 = vmatpush1.bf16.msra.mxu0 %v2308
        %2373 = vmatprep.subr.bf16.mxu0 0
        %2374 = vmatpush1.bf16.msra.mxu0 %v2307
        %2375 = vmatprep.subr.bf16.mxu0 0
        %2376 = vmatpush2.bf16.msra.mxu0 0
        %2377 = vmatprep.subr.bf16.mxu0 0
        %2378 = vmatpush2.bf16.msra.mxu0 0
        %2379 = vmatprep.subr.bf16.mxu0 0
        %2380 = vmatpush2.bf16.msra.mxu0 0
        %2381 = vmatprep.subr.bf16.mxu0 0
        %2382 = vmatpush2.bf16.msra.mxu0 0
        %2383 = vmatprep.subr.bf16.mxu0 0
        %2384 = vmatpush2.bf16.msra.mxu0 0
        %2385 = vmatprep.subr.bf16.mxu0 0
        %2386 = vmatpush2.bf16.msra.mxu0 0
        %2387 = vmatprep.subr.bf16.mxu0 0
        %2388 = vmatpush2.bf16.msra.mxu0 0
        %2389 = vmatprep.subr.bf16.mxu0 0
        %2390 = vmatpush2.bf16.msra.mxu0 0
        %2391 = vmatprep.mubr.bf16.mxu0 0
        %2392 = vmatmul.mubr.bf16.gmra.mxu0 %v2312
        %v2393 = vpop.f32.mrf.mxu0
        %v2394 = vadd.f32 0.0, %v2393
        %v2395 = vpop.f32.mrf.mxu0
        %v2396 = vpop.f32.mrf.mxu0
        %v2397 = vadd.f32 0.0, %v2396
        %v2398 = vpop.f32.mrf.mxu0
        %2399 = vmatprep.mubr.bf16.mxu0 0
        %2400 = vmatmul.mubr.bf16.gmra.mxu0 %v2315
        %v2401 = vpop.f32.mrf.mxu0
        %v2402 = vadd.f32 0.0, %v2401
        %v2403 = vpop.f32.mrf.mxu0
        %v2404 = vpop.f32.mrf.mxu0
        %v2405 = vadd.f32 0.0, %v2404
        %v2406 = vpop.f32.mrf.mxu0
        %2407 = vmatprep.mubr.bf16.mxu0 0
        %2408 = vmatmul.mubr.bf16.gmra.mxu0 %v2318
        %v2409 = vpop.f32.mrf.mxu0
        %v2410 = vadd.f32 0.0, %v2409
        %v2411 = vpop.f32.mrf.mxu0
        %v2412 = vpop.f32.mrf.mxu0
        %v2413 = vadd.f32 0.0, %v2412
        %v2414 = vpop.f32.mrf.mxu0
        %2415 = vmatprep.mubr.bf16.mxu0 0
        %2416 = vmatmul.mubr.bf16.gmra.mxu0 %v2321
        %v2417 = vpop.f32.mrf.mxu0
        %v2418 = vadd.f32 0.0, %v2417
        %v2419 = vpop.f32.mrf.mxu0
        %v2420 = vpop.f32.mrf.mxu0
        %v2421 = vadd.f32 0.0, %v2420
        %v2422 = vpop.f32.mrf.mxu0
        %2423 = vmatprep.mubr.bf16.mxu0 0
        %2424 = vmatmul.mubr.bf16.gmra.mxu0 %v2324
        %v2425 = vpop.f32.mrf.mxu0
        %v2426 = vadd.f32 0.0, %v2425
        %v2427 = vpop.f32.mrf.mxu0
        %v2428 = vpop.f32.mrf.mxu0
        %v2429 = vadd.f32 0.0, %v2428
        %v2430 = vpop.f32.mrf.mxu0
        %2431 = vmatprep.mubr.bf16.mxu0 0
        %2432 = vmatmul.mubr.bf16.gmra.mxu0 %v2327
        %v2433 = vpop.f32.mrf.mxu0
        %v2434 = vadd.f32 0.0, %v2433
        %v2435 = vpop.f32.mrf.mxu0
        %v2436 = vpop.f32.mrf.mxu0
        %v2437 = vadd.f32 0.0, %v2436
        %v2438 = vpop.f32.mrf.mxu0
        %2439 = vmatprep.mubr.bf16.mxu0 0
        %2440 = vmatmul.mubr.bf16.gmra.mxu0 %v2330
        %v2441 = vpop.f32.mrf.mxu0
        %v2442 = vadd.f32 0.0, %v2441
        %v2443 = vpop.f32.mrf.mxu0
        %v2444 = vpop.f32.mrf.mxu0
        %v2445 = vadd.f32 0.0, %v2444
        %v2446 = vpop.f32.mrf.mxu0
        %2447 = vmatprep.mubr.bf16.mxu0 0
        %2448 = vmatmul.mubr.bf16.gmra.mxu0 %v2333
        %v2449 = vpop.f32.mrf.mxu0
        %v2450 = vadd.f32 0.0, %v2449
        %v2451 = vpop.f32.mrf.mxu0
        %v2452 = vpop.f32.mrf.mxu0
        %v2453 = vadd.f32 0.0, %v2452
        %v2454 = vpop.f32.mrf.mxu0
        %2455 = vmatprep.mubr.bf16.mxu0 0
        %2456 = vmatmul.mubr.bf16.gmra.mxu0 %v2336
        %v2457 = vpop.f32.mrf.mxu0
        %v2458 = vadd.f32 0.0, %v2457
        %v2459 = vpop.f32.mrf.mxu0
        %v2460 = vpop.f32.mrf.mxu0
        %v2461 = vadd.f32 0.0, %v2460
        %v2462 = vpop.f32.mrf.mxu0
        %2463 = vmatprep.mubr.bf16.mxu0 0
        %2464 = vmatmul.mubr.bf16.gmra.mxu0 %v2339
        %v2465 = vpop.f32.mrf.mxu0
        %v2466 = vadd.f32 0.0, %v2465
        %v2467 = vpop.f32.mrf.mxu0
        %v2468 = vpop.f32.mrf.mxu0
        %v2469 = vadd.f32 0.0, %v2468
        %v2470 = vpop.f32.mrf.mxu0
        %2471 = vmatprep.mubr.bf16.mxu0 0
        %2472 = vmatmul.mubr.bf16.gmra.mxu0 %v2342
        %v2473 = vpop.f32.mrf.mxu0
        %v2474 = vadd.f32 0.0, %v2473
        %v2475 = vpop.f32.mrf.mxu0
        %v2476 = vpop.f32.mrf.mxu0
        %v2477 = vadd.f32 0.0, %v2476
        %v2478 = vpop.f32.mrf.mxu0
        %2479 = vmatprep.mubr.bf16.mxu0 0
        %2480 = vmatmul.mubr.bf16.gmra.mxu0 %v2345
        %v2481 = vpop.f32.mrf.mxu0
        %v2482 = vadd.f32 0.0, %v2481
        %v2483 = vpop.f32.mrf.mxu0
        %v2484 = vpop.f32.mrf.mxu0
        %v2485 = vadd.f32 0.0, %v2484
        %v2486 = vpop.f32.mrf.mxu0
        %2487 = vmatprep.mubr.bf16.mxu0 0
        %2488 = vmatmul.mubr.bf16.gmra.mxu0 %v2348
        %v2489 = vpop.f32.mrf.mxu0
        %v2490 = vadd.f32 0.0, %v2489
        %v2491 = vpop.f32.mrf.mxu0
        %v2492 = vpop.f32.mrf.mxu0
        %v2493 = vadd.f32 0.0, %v2492
        %v2494 = vpop.f32.mrf.mxu0
        %2495 = vmatprep.mubr.bf16.mxu0 0
        %2496 = vmatmul.mubr.bf16.gmra.mxu0 %v2351
        %v2497 = vpop.f32.mrf.mxu0
        %v2498 = vadd.f32 0.0, %v2497
        %v2499 = vpop.f32.mrf.mxu0
        %v2500 = vpop.f32.mrf.mxu0
        %v2501 = vadd.f32 0.0, %v2500
        %v2502 = vpop.f32.mrf.mxu0
        %2503 = vmatprep.mubr.bf16.mxu0 0
        %2504 = vmatmul.mubr.bf16.gmra.mxu0 %v2354
        %v2505 = vpop.f32.mrf.mxu0
        %v2506 = vadd.f32 0.0, %v2505
        %v2507 = vpop.f32.mrf.mxu0
        %v2508 = vpop.f32.mrf.mxu0
        %v2509 = vadd.f32 0.0, %v2508
        %v2510 = vpop.f32.mrf.mxu0
        %2511 = vmatprep.mubr.bf16.mxu0 0
        %2512 = vmatmul.mubr.bf16.gmra.mxu0 %v2357
        %v2513 = vpop.f32.mrf.mxu0
        %v2514 = vadd.f32 0.0, %v2513
        %v2515 = vpop.f32.mrf.mxu0
        %v2516 = vpop.f32.mrf.mxu0
        %v2517 = vadd.f32 0.0, %v2516
        %v2518 = vpop.f32.mrf.mxu0
        %2519 = vdwg.mxu0
        %v2520 = vadd.f32 %v2214, %v2394
        %v2521 = vadd.f32 %v2215, %v2397
        %v2522 = vadd.f32 %v2216, %v2402
        %v2523 = vadd.f32 %v2217, %v2405
        %v2524 = vadd.f32 %v2218, %v2410
        %v2525 = vadd.f32 %v2219, %v2413
        %v2526 = vadd.f32 %v2220, %v2418
        %v2527 = vadd.f32 %v2221, %v2421
        %v2528 = vadd.f32 %v2222, %v2426
        %v2529 = vadd.f32 %v2223, %v2429
        %v2530 = vadd.f32 %v2224, %v2434
        %v2531 = vadd.f32 %v2225, %v2437
        %v2532 = vadd.f32 %v2226, %v2442
        %v2533 = vadd.f32 %v2227, %v2445
        %v2534 = vadd.f32 %v2228, %v2450
        %v2535 = vadd.f32 %v2229, %v2453
        %v2536 = vadd.f32 %v2230, %v2458
        %v2537 = vadd.f32 %v2231, %v2461
        %v2538 = vadd.f32 %v2232, %v2466
        %v2539 = vadd.f32 %v2233, %v2469
        %v2540 = vadd.f32 %v2234, %v2474
        %v2541 = vadd.f32 %v2235, %v2477
        %v2542 = vadd.f32 %v2236, %v2482
        %v2543 = vadd.f32 %v2237, %v2485
        %v2544 = vadd.f32 %v2238, %v2490
        %v2545 = vadd.f32 %v2239, %v2493
        %v2546 = vadd.f32 %v2240, %v2498
        %v2547 = vadd.f32 %v2241, %v2501
        %v2548 = vadd.f32 %v2242, %v2506
        %v2549 = vadd.f32 %v2243, %v2509
        %v2550 = vadd.f32 %v2244, %v2514
        %v2551 = vadd.f32 %v2245, %v2517
        %s2552 = scalar_lea.vmem [#allocation2], 32
        %v2553 = vld [vmem:[%s2552] sm:$0xff]
        %v2554 = vld [vmem:[%s2552 + $0x10] sm:$0xff]
        %v2555 = vld [vmem:[%s2552 + $0x20] sm:$0xff]
        %v2556 = vld [vmem:[%s2552 + $0x30] sm:$0xff]
        %v2557 = vld [vmem:[%s2552 + $0x40] sm:$0xff]
        %v2558 = vld [vmem:[%s2552 + $0x50] sm:$0xff]
        %v2559 = vld [vmem:[%s2552 + $0x60] sm:$0xff]
        %v2560 = vld [vmem:[%s2552 + $0x70] sm:$0xff]
        %v2561 = vld [vmem:[%s2552 + $0xa0] sm:$0xff]
        %v2562 = vld [vmem:[%s2552 + $0xb0] sm:$0xff]
        %v2563 = vld [vmem:[%s2552 + $0xc0] sm:$0xff]
        %v2564 = vld [vmem:[%s2552 + $0xd0] sm:$0xff]
        %v2565 = vld [vmem:[%s2552 + $0xe0] sm:$0xff]
        %v2566 = vld [vmem:[%s2552 + $0xf0] sm:$0xff]
        %v2567 = vld [vmem:[%s2552 + $0x100] sm:$0xff]
        %v2568 = vld [vmem:[%s2552 + $0x110] sm:$0xff]
        %v2569 = vld [vmem:[%s2552 + $0x140] sm:$0xff]
        %v2570 = vld [vmem:[%s2552 + $0x150] sm:$0xff]
        %v2571 = vld [vmem:[%s2552 + $0x160] sm:$0xff]
        %v2572 = vld [vmem:[%s2552 + $0x170] sm:$0xff]
        %v2573 = vld [vmem:[%s2552 + $0x180] sm:$0xff]
        %v2574 = vld [vmem:[%s2552 + $0x190] sm:$0xff]
        %v2575 = vld [vmem:[%s2552 + $0x1a0] sm:$0xff]
        %v2576 = vld [vmem:[%s2552 + $0x1b0] sm:$0xff]
        %v2577 = vld [vmem:[%s2552 + $0x1e0] sm:$0xff]
        %v2578 = vld [vmem:[%s2552 + $0x1f0] sm:$0xff]
        %v2579 = vld [vmem:[%s2552 + $0x200] sm:$0xff]
        %v2580 = vld [vmem:[%s2552 + $0x210] sm:$0xff]
        %v2581 = vld [vmem:[%s2552 + $0x220] sm:$0xff]
        %v2582 = vld [vmem:[%s2552 + $0x230] sm:$0xff]
        %v2583 = vld [vmem:[%s2552 + $0x240] sm:$0xff]
        %v2584 = vld [vmem:[%s2552 + $0x250] sm:$0xff]
        %v2585 = vpack.c.bf16 %v2554, %v2553
        %v2586 = vpack.c.bf16 %v2556, %v2555
        %v2587 = vpack.c.bf16 %v2558, %v2557
        %v2588 = vpack.c.bf16 %v2560, %v2559
        %v2589 = vpack.c.bf16 %v2562, %v2561
        %v2590 = vpack.c.bf16 %v2564, %v2563
        %v2591 = vpack.c.bf16 %v2566, %v2565
        %v2592 = vpack.c.bf16 %v2568, %v2567
        %v2593 = vpack.c.bf16 %v2570, %v2569
        %v2594 = vpack.c.bf16 %v2572, %v2571
        %v2595 = vpack.c.bf16 %v2574, %v2573
        %v2596 = vpack.c.bf16 %v2576, %v2575
        %v2597 = vpack.c.bf16 %v2578, %v2577
        %v2598 = vpack.c.bf16 %v2580, %v2579
        %v2599 = vpack.c.bf16 %v2582, %v2581
        %v2600 = vpack.c.bf16 %v2584, %v2583
        %s2601 = scalar_lea.vmem [#allocation6], 96
        %v2602 = vld [vmem:[%s2601] sm:$0xf]
        %v2603 = vld [vmem:[%s2601 + $0x4] sm:$0xf]
        %v2604 = vld [vmem:[%s2601 + $0x8] sm:$0xf]
        %v2605 = vld [vmem:[%s2601 + $0xc] sm:$0xf]
        %v2610 = vunpack.c.l.b16 %v2602
        %v2611 = vunpack.c.l.b16 %v2603
        %v2612 = vunpack.c.l.b16 %v2604
        %v2613 = vunpack.c.l.b16 %v2605
        %v2614 = vpack.c.b16 %v2611, %v2610
        %v2615 = vpack.c.b16 %v2613, %v2612
        %v2619 = vsel %vm625, %v2585, 0
        %v2622 = vsel %vm625, %v2586, 0
        %v2625 = vsel %vm625, %v2587, 0
        %v2628 = vsel %vm625, %v2588, 0
        %v2631 = vsel %vm625, %v2589, 0
        %v2634 = vsel %vm625, %v2590, 0
        %v2637 = vsel %vm625, %v2591, 0
        %v2640 = vsel %vm625, %v2592, 0
        %v2643 = vsel %vm625, %v2593, 0
        %v2646 = vsel %vm625, %v2594, 0
        %v2649 = vsel %vm625, %v2595, 0
        %v2652 = vsel %vm625, %v2596, 0
        %v2655 = vsel %vm625, %v2597, 0
        %v2658 = vsel %vm625, %v2598, 0
        %v2661 = vsel %vm625, %v2599, 0
        %v2664 = vsel %vm625, %v2600, 0
        %2666 = vmatprep.subr.bf16.mxu0 0
        %2667 = vmatpush1.bf16.msra.mxu0 0
        %2668 = vmatprep.subr.bf16.mxu0 0
        %2669 = vmatpush1.bf16.msra.mxu0 0
        %2670 = vmatprep.subr.bf16.mxu0 0
        %2671 = vmatpush1.bf16.msra.mxu0 0
        %2672 = vmatprep.subr.bf16.mxu0 0
        %2673 = vmatpush1.bf16.msra.mxu0 0
        %2674 = vmatprep.subr.bf16.mxu0 0
        %2675 = vmatpush1.bf16.msra.mxu0 0
        %2676 = vmatprep.subr.bf16.mxu0 0
        %2677 = vmatpush1.bf16.msra.mxu0 0
        %2678 = vmatprep.subr.bf16.mxu0 0
        %2679 = vmatpush1.bf16.msra.mxu0 %v2615
        %2680 = vmatprep.subr.bf16.mxu0 0
        %2681 = vmatpush1.bf16.msra.mxu0 %v2614
        %2682 = vmatprep.subr.bf16.mxu0 0
        %2683 = vmatpush2.bf16.msra.mxu0 0
        %2684 = vmatprep.subr.bf16.mxu0 0
        %2685 = vmatpush2.bf16.msra.mxu0 0
        %2686 = vmatprep.subr.bf16.mxu0 0
        %2687 = vmatpush2.bf16.msra.mxu0 0
        %2688 = vmatprep.subr.bf16.mxu0 0
        %2689 = vmatpush2.bf16.msra.mxu0 0
        %2690 = vmatprep.subr.bf16.mxu0 0
        %2691 = vmatpush2.bf16.msra.mxu0 0
        %2692 = vmatprep.subr.bf16.mxu0 0
        %2693 = vmatpush2.bf16.msra.mxu0 0
        %2694 = vmatprep.subr.bf16.mxu0 0
        %2695 = vmatpush2.bf16.msra.mxu0 0
        %2696 = vmatprep.subr.bf16.mxu0 0
        %2697 = vmatpush2.bf16.msra.mxu0 0
        %2698 = vmatprep.mubr.bf16.mxu0 0
        %2699 = vmatmul.mubr.bf16.gmra.mxu0 %v2619
        %v2700 = vpop.f32.mrf.mxu0
        %v2701 = vadd.f32 0.0, %v2700
        %v2702 = vpop.f32.mrf.mxu0
        %v2703 = vpop.f32.mrf.mxu0
        %v2704 = vadd.f32 0.0, %v2703
        %v2705 = vpop.f32.mrf.mxu0
        %2706 = vmatprep.mubr.bf16.mxu0 0
        %2707 = vmatmul.mubr.bf16.gmra.mxu0 %v2622
        %v2708 = vpop.f32.mrf.mxu0
        %v2709 = vadd.f32 0.0, %v2708
        %v2710 = vpop.f32.mrf.mxu0
        %v2711 = vpop.f32.mrf.mxu0
        %v2712 = vadd.f32 0.0, %v2711
        %v2713 = vpop.f32.mrf.mxu0
        %2714 = vmatprep.mubr.bf16.mxu0 0
        %2715 = vmatmul.mubr.bf16.gmra.mxu0 %v2625
        %v2716 = vpop.f32.mrf.mxu0
        %v2717 = vadd.f32 0.0, %v2716
        %v2718 = vpop.f32.mrf.mxu0
        %v2719 = vpop.f32.mrf.mxu0
        %v2720 = vadd.f32 0.0, %v2719
        %v2721 = vpop.f32.mrf.mxu0
        %2722 = vmatprep.mubr.bf16.mxu0 0
        %2723 = vmatmul.mubr.bf16.gmra.mxu0 %v2628
        %v2724 = vpop.f32.mrf.mxu0
        %v2725 = vadd.f32 0.0, %v2724
        %v2726 = vpop.f32.mrf.mxu0
        %v2727 = vpop.f32.mrf.mxu0
        %v2728 = vadd.f32 0.0, %v2727
        %v2729 = vpop.f32.mrf.mxu0
        %2730 = vmatprep.mubr.bf16.mxu0 0
        %2731 = vmatmul.mubr.bf16.gmra.mxu0 %v2631
        %v2732 = vpop.f32.mrf.mxu0
        %v2733 = vadd.f32 0.0, %v2732
        %v2734 = vpop.f32.mrf.mxu0
        %v2735 = vpop.f32.mrf.mxu0
        %v2736 = vadd.f32 0.0, %v2735
        %v2737 = vpop.f32.mrf.mxu0
        %2738 = vmatprep.mubr.bf16.mxu0 0
        %2739 = vmatmul.mubr.bf16.gmra.mxu0 %v2634
        %v2740 = vpop.f32.mrf.mxu0
        %v2741 = vadd.f32 0.0, %v2740
        %v2742 = vpop.f32.mrf.mxu0
        %v2743 = vpop.f32.mrf.mxu0
        %v2744 = vadd.f32 0.0, %v2743
        %v2745 = vpop.f32.mrf.mxu0
        %2746 = vmatprep.mubr.bf16.mxu0 0
        %2747 = vmatmul.mubr.bf16.gmra.mxu0 %v2637
        %v2748 = vpop.f32.mrf.mxu0
        %v2749 = vadd.f32 0.0, %v2748
        %v2750 = vpop.f32.mrf.mxu0
        %v2751 = vpop.f32.mrf.mxu0
        %v2752 = vadd.f32 0.0, %v2751
        %v2753 = vpop.f32.mrf.mxu0
        %2754 = vmatprep.mubr.bf16.mxu0 0
        %2755 = vmatmul.mubr.bf16.gmra.mxu0 %v2640
        %v2756 = vpop.f32.mrf.mxu0
        %v2757 = vadd.f32 0.0, %v2756
        %v2758 = vpop.f32.mrf.mxu0
        %v2759 = vpop.f32.mrf.mxu0
        %v2760 = vadd.f32 0.0, %v2759
        %v2761 = vpop.f32.mrf.mxu0
        %2762 = vmatprep.mubr.bf16.mxu0 0
        %2763 = vmatmul.mubr.bf16.gmra.mxu0 %v2643
        %v2764 = vpop.f32.mrf.mxu0
        %v2765 = vadd.f32 0.0, %v2764
        %v2766 = vpop.f32.mrf.mxu0
        %v2767 = vpop.f32.mrf.mxu0
        %v2768 = vadd.f32 0.0, %v2767
        %v2769 = vpop.f32.mrf.mxu0
        %2770 = vmatprep.mubr.bf16.mxu0 0
        %2771 = vmatmul.mubr.bf16.gmra.mxu0 %v2646
        %v2772 = vpop.f32.mrf.mxu0
        %v2773 = vadd.f32 0.0, %v2772
        %v2774 = vpop.f32.mrf.mxu0
        %v2775 = vpop.f32.mrf.mxu0
        %v2776 = vadd.f32 0.0, %v2775
        %v2777 = vpop.f32.mrf.mxu0
        %2778 = vmatprep.mubr.bf16.mxu0 0
        %2779 = vmatmul.mubr.bf16.gmra.mxu0 %v2649
        %v2780 = vpop.f32.mrf.mxu0
        %v2781 = vadd.f32 0.0, %v2780
        %v2782 = vpop.f32.mrf.mxu0
        %v2783 = vpop.f32.mrf.mxu0
        %v2784 = vadd.f32 0.0, %v2783
        %v2785 = vpop.f32.mrf.mxu0
        %2786 = vmatprep.mubr.bf16.mxu0 0
        %2787 = vmatmul.mubr.bf16.gmra.mxu0 %v2652
        %v2788 = vpop.f32.mrf.mxu0
        %v2789 = vadd.f32 0.0, %v2788
        %v2790 = vpop.f32.mrf.mxu0
        %v2791 = vpop.f32.mrf.mxu0
        %v2792 = vadd.f32 0.0, %v2791
        %v2793 = vpop.f32.mrf.mxu0
        %2794 = vmatprep.mubr.bf16.mxu0 0
        %2795 = vmatmul.mubr.bf16.gmra.mxu0 %v2655
        %v2796 = vpop.f32.mrf.mxu0
        %v2797 = vadd.f32 0.0, %v2796
        %v2798 = vpop.f32.mrf.mxu0
        %v2799 = vpop.f32.mrf.mxu0
        %v2800 = vadd.f32 0.0, %v2799
        %v2801 = vpop.f32.mrf.mxu0
        %2802 = vmatprep.mubr.bf16.mxu0 0
        %2803 = vmatmul.mubr.bf16.gmra.mxu0 %v2658
        %v2804 = vpop.f32.mrf.mxu0
        %v2805 = vadd.f32 0.0, %v2804
        %v2806 = vpop.f32.mrf.mxu0
        %v2807 = vpop.f32.mrf.mxu0
        %v2808 = vadd.f32 0.0, %v2807
        %v2809 = vpop.f32.mrf.mxu0
        %2810 = vmatprep.mubr.bf16.mxu0 0
        %2811 = vmatmul.mubr.bf16.gmra.mxu0 %v2661
        %v2812 = vpop.f32.mrf.mxu0
        %v2813 = vadd.f32 0.0, %v2812
        %v2814 = vpop.f32.mrf.mxu0
        %v2815 = vpop.f32.mrf.mxu0
        %v2816 = vadd.f32 0.0, %v2815
        %v2817 = vpop.f32.mrf.mxu0
        %2818 = vmatprep.mubr.bf16.mxu0 0
        %2819 = vmatmul.mubr.bf16.gmra.mxu0 %v2664
        %v2820 = vpop.f32.mrf.mxu0
        %v2821 = vadd.f32 0.0, %v2820
        %v2822 = vpop.f32.mrf.mxu0
        %v2823 = vpop.f32.mrf.mxu0
        %v2824 = vadd.f32 0.0, %v2823
        %v2825 = vpop.f32.mrf.mxu0
        %2826 = vdwg.mxu0
        %v2827 = vadd.f32 %v2520, %v2701
        %v2828 = vadd.f32 %v2521, %v2704
        %v2829 = vadd.f32 %v2522, %v2709
        %v2830 = vadd.f32 %v2523, %v2712
        %v2831 = vadd.f32 %v2524, %v2717
        %v2832 = vadd.f32 %v2525, %v2720
        %v2833 = vadd.f32 %v2526, %v2725
        %v2834 = vadd.f32 %v2527, %v2728
        %v2835 = vadd.f32 %v2528, %v2733
        %v2836 = vadd.f32 %v2529, %v2736
        %v2837 = vadd.f32 %v2530, %v2741
        %v2838 = vadd.f32 %v2531, %v2744
        %v2839 = vadd.f32 %v2532, %v2749
        %v2840 = vadd.f32 %v2533, %v2752
        %v2841 = vadd.f32 %v2534, %v2757
        %v2842 = vadd.f32 %v2535, %v2760
        %v2843 = vadd.f32 %v2536, %v2765
        %v2844 = vadd.f32 %v2537, %v2768
        %v2845 = vadd.f32 %v2538, %v2773
        %v2846 = vadd.f32 %v2539, %v2776
        %v2847 = vadd.f32 %v2540, %v2781
        %v2848 = vadd.f32 %v2541, %v2784
        %v2849 = vadd.f32 %v2542, %v2789
        %v2850 = vadd.f32 %v2543, %v2792
        %v2851 = vadd.f32 %v2544, %v2797
        %v2852 = vadd.f32 %v2545, %v2800
        %v2853 = vadd.f32 %v2546, %v2805
        %v2854 = vadd.f32 %v2547, %v2808
        %v2855 = vadd.f32 %v2548, %v2813
        %v2856 = vadd.f32 %v2549, %v2816
        %v2857 = vadd.f32 %v2550, %v2821
        %v2858 = vadd.f32 %v2551, %v2824
        %v2859 = vld [vmem:[%s2552 + $0x1] sm:$0xff]
        %v2860 = vld [vmem:[%s2552 + $0x11] sm:$0xff]
        %v2861 = vld [vmem:[%s2552 + $0x21] sm:$0xff]
        %v2862 = vld [vmem:[%s2552 + $0x31] sm:$0xff]
        %v2863 = vld [vmem:[%s2552 + $0x41] sm:$0xff]
        %v2864 = vld [vmem:[%s2552 + $0x51] sm:$0xff]
        %v2865 = vld [vmem:[%s2552 + $0x61] sm:$0xff]
        %v2866 = vld [vmem:[%s2552 + $0x71] sm:$0xff]
        %v2867 = vld [vmem:[%s2552 + $0xa1] sm:$0xff]
        %v2868 = vld [vmem:[%s2552 + $0xb1] sm:$0xff]
        %v2869 = vld [vmem:[%s2552 + $0xc1] sm:$0xff]
        %v2870 = vld [vmem:[%s2552 + $0xd1] sm:$0xff]
        %v2871 = vld [vmem:[%s2552 + $0xe1] sm:$0xff]
        %v2872 = vld [vmem:[%s2552 + $0xf1] sm:$0xff]
        %v2873 = vld [vmem:[%s2552 + $0x101] sm:$0xff]
        %v2874 = vld [vmem:[%s2552 + $0x111] sm:$0xff]
        %v2875 = vld [vmem:[%s2552 + $0x141] sm:$0xff]
        %v2876 = vld [vmem:[%s2552 + $0x151] sm:$0xff]
        %v2877 = vld [vmem:[%s2552 + $0x161] sm:$0xff]
        %v2878 = vld [vmem:[%s2552 + $0x171] sm:$0xff]
        %v2879 = vld [vmem:[%s2552 + $0x181] sm:$0xff]
        %v2880 = vld [vmem:[%s2552 + $0x191] sm:$0xff]
        %v2881 = vld [vmem:[%s2552 + $0x1a1] sm:$0xff]
        %v2882 = vld [vmem:[%s2552 + $0x1b1] sm:$0xff]
        %v2883 = vld [vmem:[%s2552 + $0x1e1] sm:$0xff]
        %v2884 = vld [vmem:[%s2552 + $0x1f1] sm:$0xff]
        %v2885 = vld [vmem:[%s2552 + $0x201] sm:$0xff]
        %v2886 = vld [vmem:[%s2552 + $0x211] sm:$0xff]
        %v2887 = vld [vmem:[%s2552 + $0x221] sm:$0xff]
        %v2888 = vld [vmem:[%s2552 + $0x231] sm:$0xff]
        %v2889 = vld [vmem:[%s2552 + $0x241] sm:$0xff]
        %v2890 = vld [vmem:[%s2552 + $0x251] sm:$0xff]
        %v2891 = vpack.c.bf16 %v2860, %v2859
        %v2892 = vpack.c.bf16 %v2862, %v2861
        %v2893 = vpack.c.bf16 %v2864, %v2863
        %v2894 = vpack.c.bf16 %v2866, %v2865
        %v2895 = vpack.c.bf16 %v2868, %v2867
        %v2896 = vpack.c.bf16 %v2870, %v2869
        %v2897 = vpack.c.bf16 %v2872, %v2871
        %v2898 = vpack.c.bf16 %v2874, %v2873
        %v2899 = vpack.c.bf16 %v2876, %v2875
        %v2900 = vpack.c.bf16 %v2878, %v2877
        %v2901 = vpack.c.bf16 %v2880, %v2879
        %v2902 = vpack.c.bf16 %v2882, %v2881
        %v2903 = vpack.c.bf16 %v2884, %v2883
        %v2904 = vpack.c.bf16 %v2886, %v2885
        %v2905 = vpack.c.bf16 %v2888, %v2887
        %v2906 = vpack.c.bf16 %v2890, %v2889
        %s2907 = scalar_lea.vmem [#allocation6], 112
        %v2908 = vld [vmem:[%s2907] sm:$0xf]
        %v2909 = vld [vmem:[%s2907 + $0x4] sm:$0xf]
        %v2910 = vld [vmem:[%s2907 + $0x8] sm:$0xf]
        %v2911 = vld [vmem:[%s2907 + $0xc] sm:$0xf]
        %v2916 = vunpack.c.l.b16 %v2908
        %v2917 = vunpack.c.l.b16 %v2909
        %v2918 = vunpack.c.l.b16 %v2910
        %v2919 = vunpack.c.l.b16 %v2911
        %v2920 = vpack.c.b16 %v2917, %v2916
        %v2921 = vpack.c.b16 %v2919, %v2918
        %v2925 = vsel %vm625, %v2891, 0
        %v2928 = vsel %vm625, %v2892, 0
        %v2931 = vsel %vm625, %v2893, 0
        %v2934 = vsel %vm625, %v2894, 0
        %v2937 = vsel %vm625, %v2895, 0
        %v2940 = vsel %vm625, %v2896, 0
        %v2943 = vsel %vm625, %v2897, 0
        %v2946 = vsel %vm625, %v2898, 0
        %v2949 = vsel %vm625, %v2899, 0
        %v2952 = vsel %vm625, %v2900, 0
        %v2955 = vsel %vm625, %v2901, 0
        %v2958 = vsel %vm625, %v2902, 0
        %v2961 = vsel %vm625, %v2903, 0
        %v2964 = vsel %vm625, %v2904, 0
        %v2967 = vsel %vm625, %v2905, 0
        %v2970 = vsel %vm625, %v2906, 0
        %2972 = vmatprep.subr.bf16.mxu0 0
        %2973 = vmatpush1.bf16.msra.mxu0 0
        %2974 = vmatprep.subr.bf16.mxu0 0
        %2975 = vmatpush1.bf16.msra.mxu0 0
        %2976 = vmatprep.subr.bf16.mxu0 0
        %2977 = vmatpush1.bf16.msra.mxu0 0
        %2978 = vmatprep.subr.bf16.mxu0 0
        %2979 = vmatpush1.bf16.msra.mxu0 0
        %2980 = vmatprep.subr.bf16.mxu0 0
        %2981 = vmatpush1.bf16.msra.mxu0 0
        %2982 = vmatprep.subr.bf16.mxu0 0
        %2983 = vmatpush1.bf16.msra.mxu0 0
        %2984 = vmatprep.subr.bf16.mxu0 0
        %2985 = vmatpush1.bf16.msra.mxu0 %v2921
        %2986 = vmatprep.subr.bf16.mxu0 0
        %2987 = vmatpush1.bf16.msra.mxu0 %v2920
        %2988 = vmatprep.subr.bf16.mxu0 0
        %2989 = vmatpush2.bf16.msra.mxu0 0
        %2990 = vmatprep.subr.bf16.mxu0 0
        %2991 = vmatpush2.bf16.msra.mxu0 0
        %2992 = vmatprep.subr.bf16.mxu0 0
        %2993 = vmatpush2.bf16.msra.mxu0 0
        %2994 = vmatprep.subr.bf16.mxu0 0
        %2995 = vmatpush2.bf16.msra.mxu0 0
        %2996 = vmatprep.subr.bf16.mxu0 0
        %2997 = vmatpush2.bf16.msra.mxu0 0
        %2998 = vmatprep.subr.bf16.mxu0 0
        %2999 = vmatpush2.bf16.msra.mxu0 0
        %3000 = vmatprep.subr.bf16.mxu0 0
        %3001 = vmatpush2.bf16.msra.mxu0 0
        %3002 = vmatprep.subr.bf16.mxu0 0
        %3003 = vmatpush2.bf16.msra.mxu0 0
        %3004 = vmatprep.mubr.bf16.mxu0 0
        %3005 = vmatmul.mubr.bf16.gmra.mxu0 %v2925
        %v3006 = vpop.f32.mrf.mxu0
        %v3007 = vadd.f32 0.0, %v3006
        %v3008 = vpop.f32.mrf.mxu0
        %v3009 = vpop.f32.mrf.mxu0
        %v3010 = vadd.f32 0.0, %v3009
        %v3011 = vpop.f32.mrf.mxu0
        %3012 = vmatprep.mubr.bf16.mxu0 0
        %3013 = vmatmul.mubr.bf16.gmra.mxu0 %v2928
        %v3014 = vpop.f32.mrf.mxu0
        %v3015 = vadd.f32 0.0, %v3014
        %v3016 = vpop.f32.mrf.mxu0
        %v3017 = vpop.f32.mrf.mxu0
        %v3018 = vadd.f32 0.0, %v3017
        %v3019 = vpop.f32.mrf.mxu0
        %3020 = vmatprep.mubr.bf16.mxu0 0
        %3021 = vmatmul.mubr.bf16.gmra.mxu0 %v2931
        %v3022 = vpop.f32.mrf.mxu0
        %v3023 = vadd.f32 0.0, %v3022
        %v3024 = vpop.f32.mrf.mxu0
        %v3025 = vpop.f32.mrf.mxu0
        %v3026 = vadd.f32 0.0, %v3025
        %v3027 = vpop.f32.mrf.mxu0
        %3028 = vmatprep.mubr.bf16.mxu0 0
        %3029 = vmatmul.mubr.bf16.gmra.mxu0 %v2934
        %v3030 = vpop.f32.mrf.mxu0
        %v3031 = vadd.f32 0.0, %v3030
        %v3032 = vpop.f32.mrf.mxu0
        %v3033 = vpop.f32.mrf.mxu0
        %v3034 = vadd.f32 0.0, %v3033
        %v3035 = vpop.f32.mrf.mxu0
        %3036 = vmatprep.mubr.bf16.mxu0 0
        %3037 = vmatmul.mubr.bf16.gmra.mxu0 %v2937
        %v3038 = vpop.f32.mrf.mxu0
        %v3039 = vadd.f32 0.0, %v3038
        %v3040 = vpop.f32.mrf.mxu0
        %v3041 = vpop.f32.mrf.mxu0
        %v3042 = vadd.f32 0.0, %v3041
        %v3043 = vpop.f32.mrf.mxu0
        %3044 = vmatprep.mubr.bf16.mxu0 0
        %3045 = vmatmul.mubr.bf16.gmra.mxu0 %v2940
        %v3046 = vpop.f32.mrf.mxu0
        %v3047 = vadd.f32 0.0, %v3046
        %v3048 = vpop.f32.mrf.mxu0
        %v3049 = vpop.f32.mrf.mxu0
        %v3050 = vadd.f32 0.0, %v3049
        %v3051 = vpop.f32.mrf.mxu0
        %3052 = vmatprep.mubr.bf16.mxu0 0
        %3053 = vmatmul.mubr.bf16.gmra.mxu0 %v2943
        %v3054 = vpop.f32.mrf.mxu0
        %v3055 = vadd.f32 0.0, %v3054
        %v3056 = vpop.f32.mrf.mxu0
        %v3057 = vpop.f32.mrf.mxu0
        %v3058 = vadd.f32 0.0, %v3057
        %v3059 = vpop.f32.mrf.mxu0
        %3060 = vmatprep.mubr.bf16.mxu0 0
        %3061 = vmatmul.mubr.bf16.gmra.mxu0 %v2946
        %v3062 = vpop.f32.mrf.mxu0
        %v3063 = vadd.f32 0.0, %v3062
        %v3064 = vpop.f32.mrf.mxu0
        %v3065 = vpop.f32.mrf.mxu0
        %v3066 = vadd.f32 0.0, %v3065
        %v3067 = vpop.f32.mrf.mxu0
        %3068 = vmatprep.mubr.bf16.mxu0 0
        %3069 = vmatmul.mubr.bf16.gmra.mxu0 %v2949
        %v3070 = vpop.f32.mrf.mxu0
        %v3071 = vadd.f32 0.0, %v3070
        %v3072 = vpop.f32.mrf.mxu0
        %v3073 = vpop.f32.mrf.mxu0
        %v3074 = vadd.f32 0.0, %v3073
        %v3075 = vpop.f32.mrf.mxu0
        %3076 = vmatprep.mubr.bf16.mxu0 0
        %3077 = vmatmul.mubr.bf16.gmra.mxu0 %v2952
        %v3078 = vpop.f32.mrf.mxu0
        %v3079 = vadd.f32 0.0, %v3078
        %v3080 = vpop.f32.mrf.mxu0
        %v3081 = vpop.f32.mrf.mxu0
        %v3082 = vadd.f32 0.0, %v3081
        %v3083 = vpop.f32.mrf.mxu0
        %3084 = vmatprep.mubr.bf16.mxu0 0
        %3085 = vmatmul.mubr.bf16.gmra.mxu0 %v2955
        %v3086 = vpop.f32.mrf.mxu0
        %v3087 = vadd.f32 0.0, %v3086
        %v3088 = vpop.f32.mrf.mxu0
        %v3089 = vpop.f32.mrf.mxu0
        %v3090 = vadd.f32 0.0, %v3089
        %v3091 = vpop.f32.mrf.mxu0
        %3092 = vmatprep.mubr.bf16.mxu0 0
        %3093 = vmatmul.mubr.bf16.gmra.mxu0 %v2958
        %v3094 = vpop.f32.mrf.mxu0
        %v3095 = vadd.f32 0.0, %v3094
        %v3096 = vpop.f32.mrf.mxu0
        %v3097 = vpop.f32.mrf.mxu0
        %v3098 = vadd.f32 0.0, %v3097
        %v3099 = vpop.f32.mrf.mxu0
        %3100 = vmatprep.mubr.bf16.mxu0 0
        %3101 = vmatmul.mubr.bf16.gmra.mxu0 %v2961
        %v3102 = vpop.f32.mrf.mxu0
        %v3103 = vadd.f32 0.0, %v3102
        %v3104 = vpop.f32.mrf.mxu0
        %v3105 = vpop.f32.mrf.mxu0
        %v3106 = vadd.f32 0.0, %v3105
        %v3107 = vpop.f32.mrf.mxu0
        %3108 = vmatprep.mubr.bf16.mxu0 0
        %3109 = vmatmul.mubr.bf16.gmra.mxu0 %v2964
        %v3110 = vpop.f32.mrf.mxu0
        %v3111 = vadd.f32 0.0, %v3110
        %v3112 = vpop.f32.mrf.mxu0
        %v3113 = vpop.f32.mrf.mxu0
        %v3114 = vadd.f32 0.0, %v3113
        %v3115 = vpop.f32.mrf.mxu0
        %3116 = vmatprep.mubr.bf16.mxu0 0
        %3117 = vmatmul.mubr.bf16.gmra.mxu0 %v2967
        %v3118 = vpop.f32.mrf.mxu0
        %v3119 = vadd.f32 0.0, %v3118
        %v3120 = vpop.f32.mrf.mxu0
        %v3121 = vpop.f32.mrf.mxu0
        %v3122 = vadd.f32 0.0, %v3121
        %v3123 = vpop.f32.mrf.mxu0
        %3124 = vmatprep.mubr.bf16.mxu0 0
        %3125 = vmatmul.mubr.bf16.gmra.mxu0 %v2970
        %v3126 = vpop.f32.mrf.mxu0
        %v3127 = vadd.f32 0.0, %v3126
        %v3128 = vpop.f32.mrf.mxu0
        %v3129 = vpop.f32.mrf.mxu0
        %v3130 = vadd.f32 0.0, %v3129
        %v3131 = vpop.f32.mrf.mxu0
        %3132 = vdwg.mxu0
        %v3133 = vadd.f32 %v2827, %v3007
        %v3134 = vadd.f32 %v2828, %v3010
        %v3135 = vadd.f32 %v2829, %v3015
        %v3136 = vadd.f32 %v2830, %v3018
        %v3137 = vadd.f32 %v2831, %v3023
        %v3138 = vadd.f32 %v2832, %v3026
        %v3139 = vadd.f32 %v2833, %v3031
        %v3140 = vadd.f32 %v2834, %v3034
        %v3141 = vadd.f32 %v2835, %v3039
        %v3142 = vadd.f32 %v2836, %v3042
        %v3143 = vadd.f32 %v2837, %v3047
        %v3144 = vadd.f32 %v2838, %v3050
        %v3145 = vadd.f32 %v2839, %v3055
        %v3146 = vadd.f32 %v2840, %v3058
        %v3147 = vadd.f32 %v2841, %v3063
        %v3148 = vadd.f32 %v2842, %v3066
        %v3149 = vadd.f32 %v2843, %v3071
        %v3150 = vadd.f32 %v2844, %v3074
        %v3151 = vadd.f32 %v2845, %v3079
        %v3152 = vadd.f32 %v2846, %v3082
        %v3153 = vadd.f32 %v2847, %v3087
        %v3154 = vadd.f32 %v2848, %v3090
        %v3155 = vadd.f32 %v2849, %v3095
        %v3156 = vadd.f32 %v2850, %v3098
        %v3157 = vadd.f32 %v2851, %v3103
        %v3158 = vadd.f32 %v2852, %v3106
        %v3159 = vadd.f32 %v2853, %v3111
        %v3160 = vadd.f32 %v2854, %v3114
        %v3161 = vadd.f32 %v2855, %v3119
        %v3162 = vadd.f32 %v2856, %v3122
        %v3163 = vadd.f32 %v2857, %v3127
        %v3164 = vadd.f32 %v2858, %v3130
        %v3165 = vld [vmem:[%s2552 + $0x2] sm:$0xff]
        %v3166 = vld [vmem:[%s2552 + $0x12] sm:$0xff]
        %v3167 = vld [vmem:[%s2552 + $0x22] sm:$0xff]
        %v3168 = vld [vmem:[%s2552 + $0x32] sm:$0xff]
        %v3169 = vld [vmem:[%s2552 + $0x42] sm:$0xff]
        %v3170 = vld [vmem:[%s2552 + $0x52] sm:$0xff]
        %v3171 = vld [vmem:[%s2552 + $0x62] sm:$0xff]
        %v3172 = vld [vmem:[%s2552 + $0x72] sm:$0xff]
        %v3173 = vld [vmem:[%s2552 + $0xa2] sm:$0xff]
        %v3174 = vld [vmem:[%s2552 + $0xb2] sm:$0xff]
        %v3175 = vld [vmem:[%s2552 + $0xc2] sm:$0xff]
        %v3176 = vld [vmem:[%s2552 + $0xd2] sm:$0xff]
        %v3177 = vld [vmem:[%s2552 + $0xe2] sm:$0xff]
        %v3178 = vld [vmem:[%s2552 + $0xf2] sm:$0xff]
        %v3179 = vld [vmem:[%s2552 + $0x102] sm:$0xff]
        %v3180 = vld [vmem:[%s2552 + $0x112] sm:$0xff]
        %v3181 = vld [vmem:[%s2552 + $0x142] sm:$0xff]
        %v3182 = vld [vmem:[%s2552 + $0x152] sm:$0xff]
        %v3183 = vld [vmem:[%s2552 + $0x162] sm:$0xff]
        %v3184 = vld [vmem:[%s2552 + $0x172] sm:$0xff]
        %v3185 = vld [vmem:[%s2552 + $0x182] sm:$0xff]
        %v3186 = vld [vmem:[%s2552 + $0x192] sm:$0xff]
        %v3187 = vld [vmem:[%s2552 + $0x1a2] sm:$0xff]
        %v3188 = vld [vmem:[%s2552 + $0x1b2] sm:$0xff]
        %v3189 = vld [vmem:[%s2552 + $0x1e2] sm:$0xff]
        %v3190 = vld [vmem:[%s2552 + $0x1f2] sm:$0xff]
        %v3191 = vld [vmem:[%s2552 + $0x202] sm:$0xff]
        %v3192 = vld [vmem:[%s2552 + $0x212] sm:$0xff]
        %v3193 = vld [vmem:[%s2552 + $0x222] sm:$0xff]
        %v3194 = vld [vmem:[%s2552 + $0x232] sm:$0xff]
        %v3195 = vld [vmem:[%s2552 + $0x242] sm:$0xff]
        %v3196 = vld [vmem:[%s2552 + $0x252] sm:$0xff]
        %v3197 = vpack.c.bf16 %v3166, %v3165
        %v3198 = vpack.c.bf16 %v3168, %v3167
        %v3199 = vpack.c.bf16 %v3170, %v3169
        %v3200 = vpack.c.bf16 %v3172, %v3171
        %v3201 = vpack.c.bf16 %v3174, %v3173
        %v3202 = vpack.c.bf16 %v3176, %v3175
        %v3203 = vpack.c.bf16 %v3178, %v3177
        %v3204 = vpack.c.bf16 %v3180, %v3179
        %v3205 = vpack.c.bf16 %v3182, %v3181
        %v3206 = vpack.c.bf16 %v3184, %v3183
        %v3207 = vpack.c.bf16 %v3186, %v3185
        %v3208 = vpack.c.bf16 %v3188, %v3187
        %v3209 = vpack.c.bf16 %v3190, %v3189
        %v3210 = vpack.c.bf16 %v3192, %v3191
        %v3211 = vpack.c.bf16 %v3194, %v3193
        %v3212 = vpack.c.bf16 %v3196, %v3195
        %s3213 = scalar_lea.vmem [#allocation6], 128
        %v3214 = vld [vmem:[%s3213] sm:$0xf]
        %v3215 = vld [vmem:[%s3213 + $0x4] sm:$0xf]
        %v3216 = vld [vmem:[%s3213 + $0x8] sm:$0xf]
        %v3217 = vld [vmem:[%s3213 + $0xc] sm:$0xf]
        %v3222 = vunpack.c.l.b16 %v3214
        %v3223 = vunpack.c.l.b16 %v3215
        %v3224 = vunpack.c.l.b16 %v3216
        %v3225 = vunpack.c.l.b16 %v3217
        %v3226 = vpack.c.b16 %v3223, %v3222
        %v3227 = vpack.c.b16 %v3225, %v3224
        %v3231 = vsel %vm625, %v3197, 0
        %v3234 = vsel %vm625, %v3198, 0
        %v3237 = vsel %vm625, %v3199, 0
        %v3240 = vsel %vm625, %v3200, 0
        %v3243 = vsel %vm625, %v3201, 0
        %v3246 = vsel %vm625, %v3202, 0
        %v3249 = vsel %vm625, %v3203, 0
        %v3252 = vsel %vm625, %v3204, 0
        %v3255 = vsel %vm625, %v3205, 0
        %v3258 = vsel %vm625, %v3206, 0
        %v3261 = vsel %vm625, %v3207, 0
        %v3264 = vsel %vm625, %v3208, 0
        %v3267 = vsel %vm625, %v3209, 0
        %v3270 = vsel %vm625, %v3210, 0
        %v3273 = vsel %vm625, %v3211, 0
        %v3276 = vsel %vm625, %v3212, 0
        %3278 = vmatprep.subr.bf16.mxu0 0
        %3279 = vmatpush1.bf16.msra.mxu0 0
        %3280 = vmatprep.subr.bf16.mxu0 0
        %3281 = vmatpush1.bf16.msra.mxu0 0
        %3282 = vmatprep.subr.bf16.mxu0 0
        %3283 = vmatpush1.bf16.msra.mxu0 0
        %3284 = vmatprep.subr.bf16.mxu0 0
        %3285 = vmatpush1.bf16.msra.mxu0 0
        %3286 = vmatprep.subr.bf16.mxu0 0
        %3287 = vmatpush1.bf16.msra.mxu0 0
        %3288 = vmatprep.subr.bf16.mxu0 0
        %3289 = vmatpush1.bf16.msra.mxu0 0
        %3290 = vmatprep.subr.bf16.mxu0 0
        %3291 = vmatpush1.bf16.msra.mxu0 %v3227
        %3292 = vmatprep.subr.bf16.mxu0 0
        %3293 = vmatpush1.bf16.msra.mxu0 %v3226
        %3294 = vmatprep.subr.bf16.mxu0 0
        %3295 = vmatpush2.bf16.msra.mxu0 0
        %3296 = vmatprep.subr.bf16.mxu0 0
        %3297 = vmatpush2.bf16.msra.mxu0 0
        %3298 = vmatprep.subr.bf16.mxu0 0
        %3299 = vmatpush2.bf16.msra.mxu0 0
        %3300 = vmatprep.subr.bf16.mxu0 0
        %3301 = vmatpush2.bf16.msra.mxu0 0
        %3302 = vmatprep.subr.bf16.mxu0 0
        %3303 = vmatpush2.bf16.msra.mxu0 0
        %3304 = vmatprep.subr.bf16.mxu0 0
        %3305 = vmatpush2.bf16.msra.mxu0 0
        %3306 = vmatprep.subr.bf16.mxu0 0
        %3307 = vmatpush2.bf16.msra.mxu0 0
        %3308 = vmatprep.subr.bf16.mxu0 0
        %3309 = vmatpush2.bf16.msra.mxu0 0
        %3310 = vmatprep.mubr.bf16.mxu0 0
        %3311 = vmatmul.mubr.bf16.gmra.mxu0 %v3231
        %v3312 = vpop.f32.mrf.mxu0
        %v3313 = vadd.f32 0.0, %v3312
        %v3314 = vpop.f32.mrf.mxu0
        %v3315 = vpop.f32.mrf.mxu0
        %v3316 = vadd.f32 0.0, %v3315
        %v3317 = vpop.f32.mrf.mxu0
        %3318 = vmatprep.mubr.bf16.mxu0 0
        %3319 = vmatmul.mubr.bf16.gmra.mxu0 %v3234
        %v3320 = vpop.f32.mrf.mxu0
        %v3321 = vadd.f32 0.0, %v3320
        %v3322 = vpop.f32.mrf.mxu0
        %v3323 = vpop.f32.mrf.mxu0
        %v3324 = vadd.f32 0.0, %v3323
        %v3325 = vpop.f32.mrf.mxu0
        %3326 = vmatprep.mubr.bf16.mxu0 0
        %3327 = vmatmul.mubr.bf16.gmra.mxu0 %v3237
        %v3328 = vpop.f32.mrf.mxu0
        %v3329 = vadd.f32 0.0, %v3328
        %v3330 = vpop.f32.mrf.mxu0
        %v3331 = vpop.f32.mrf.mxu0
        %v3332 = vadd.f32 0.0, %v3331
        %v3333 = vpop.f32.mrf.mxu0
        %3334 = vmatprep.mubr.bf16.mxu0 0
        %3335 = vmatmul.mubr.bf16.gmra.mxu0 %v3240
        %v3336 = vpop.f32.mrf.mxu0
        %v3337 = vadd.f32 0.0, %v3336
        %v3338 = vpop.f32.mrf.mxu0
        %v3339 = vpop.f32.mrf.mxu0
        %v3340 = vadd.f32 0.0, %v3339
        %v3341 = vpop.f32.mrf.mxu0
        %3342 = vmatprep.mubr.bf16.mxu0 0
        %3343 = vmatmul.mubr.bf16.gmra.mxu0 %v3243
        %v3344 = vpop.f32.mrf.mxu0
        %v3345 = vadd.f32 0.0, %v3344
        %v3346 = vpop.f32.mrf.mxu0
        %v3347 = vpop.f32.mrf.mxu0
        %v3348 = vadd.f32 0.0, %v3347
        %v3349 = vpop.f32.mrf.mxu0
        %3350 = vmatprep.mubr.bf16.mxu0 0
        %3351 = vmatmul.mubr.bf16.gmra.mxu0 %v3246
        %v3352 = vpop.f32.mrf.mxu0
        %v3353 = vadd.f32 0.0, %v3352
        %v3354 = vpop.f32.mrf.mxu0
        %v3355 = vpop.f32.mrf.mxu0
        %v3356 = vadd.f32 0.0, %v3355
        %v3357 = vpop.f32.mrf.mxu0
        %3358 = vmatprep.mubr.bf16.mxu0 0
        %3359 = vmatmul.mubr.bf16.gmra.mxu0 %v3249
        %v3360 = vpop.f32.mrf.mxu0
        %v3361 = vadd.f32 0.0, %v3360
        %v3362 = vpop.f32.mrf.mxu0
        %v3363 = vpop.f32.mrf.mxu0
        %v3364 = vadd.f32 0.0, %v3363
        %v3365 = vpop.f32.mrf.mxu0
        %3366 = vmatprep.mubr.bf16.mxu0 0
        %3367 = vmatmul.mubr.bf16.gmra.mxu0 %v3252
        %v3368 = vpop.f32.mrf.mxu0
        %v3369 = vadd.f32 0.0, %v3368
        %v3370 = vpop.f32.mrf.mxu0
        %v3371 = vpop.f32.mrf.mxu0
        %v3372 = vadd.f32 0.0, %v3371
        %v3373 = vpop.f32.mrf.mxu0
        %3374 = vmatprep.mubr.bf16.mxu0 0
        %3375 = vmatmul.mubr.bf16.gmra.mxu0 %v3255
        %v3376 = vpop.f32.mrf.mxu0
        %v3377 = vadd.f32 0.0, %v3376
        %v3378 = vpop.f32.mrf.mxu0
        %v3379 = vpop.f32.mrf.mxu0
        %v3380 = vadd.f32 0.0, %v3379
        %v3381 = vpop.f32.mrf.mxu0
        %3382 = vmatprep.mubr.bf16.mxu0 0
        %3383 = vmatmul.mubr.bf16.gmra.mxu0 %v3258
        %v3384 = vpop.f32.mrf.mxu0
        %v3385 = vadd.f32 0.0, %v3384
        %v3386 = vpop.f32.mrf.mxu0
        %v3387 = vpop.f32.mrf.mxu0
        %v3388 = vadd.f32 0.0, %v3387
        %v3389 = vpop.f32.mrf.mxu0
        %3390 = vmatprep.mubr.bf16.mxu0 0
        %3391 = vmatmul.mubr.bf16.gmra.mxu0 %v3261
        %v3392 = vpop.f32.mrf.mxu0
        %v3393 = vadd.f32 0.0, %v3392
        %v3394 = vpop.f32.mrf.mxu0
        %v3395 = vpop.f32.mrf.mxu0
        %v3396 = vadd.f32 0.0, %v3395
        %v3397 = vpop.f32.mrf.mxu0
        %3398 = vmatprep.mubr.bf16.mxu0 0
        %3399 = vmatmul.mubr.bf16.gmra.mxu0 %v3264
        %v3400 = vpop.f32.mrf.mxu0
        %v3401 = vadd.f32 0.0, %v3400
        %v3402 = vpop.f32.mrf.mxu0
        %v3403 = vpop.f32.mrf.mxu0
        %v3404 = vadd.f32 0.0, %v3403
        %v3405 = vpop.f32.mrf.mxu0
        %3406 = vmatprep.mubr.bf16.mxu0 0
        %3407 = vmatmul.mubr.bf16.gmra.mxu0 %v3267
        %v3408 = vpop.f32.mrf.mxu0
        %v3409 = vadd.f32 0.0, %v3408
        %v3410 = vpop.f32.mrf.mxu0
        %v3411 = vpop.f32.mrf.mxu0
        %v3412 = vadd.f32 0.0, %v3411
        %v3413 = vpop.f32.mrf.mxu0
        %3414 = vmatprep.mubr.bf16.mxu0 0
        %3415 = vmatmul.mubr.bf16.gmra.mxu0 %v3270
        %v3416 = vpop.f32.mrf.mxu0
        %v3417 = vadd.f32 0.0, %v3416
        %v3418 = vpop.f32.mrf.mxu0
        %v3419 = vpop.f32.mrf.mxu0
        %v3420 = vadd.f32 0.0, %v3419
        %v3421 = vpop.f32.mrf.mxu0
        %3422 = vmatprep.mubr.bf16.mxu0 0
        %3423 = vmatmul.mubr.bf16.gmra.mxu0 %v3273
        %v3424 = vpop.f32.mrf.mxu0
        %v3425 = vadd.f32 0.0, %v3424
        %v3426 = vpop.f32.mrf.mxu0
        %v3427 = vpop.f32.mrf.mxu0
        %v3428 = vadd.f32 0.0, %v3427
        %v3429 = vpop.f32.mrf.mxu0
        %3430 = vmatprep.mubr.bf16.mxu0 0
        %3431 = vmatmul.mubr.bf16.gmra.mxu0 %v3276
        %v3432 = vpop.f32.mrf.mxu0
        %v3433 = vadd.f32 0.0, %v3432
        %v3434 = vpop.f32.mrf.mxu0
        %v3435 = vpop.f32.mrf.mxu0
        %v3436 = vadd.f32 0.0, %v3435
        %v3437 = vpop.f32.mrf.mxu0
        %3438 = vdwg.mxu0
        %v3439 = vadd.f32 %v3133, %v3313
        %v3440 = vadd.f32 %v3134, %v3316
        %v3441 = vadd.f32 %v3135, %v3321
        %v3442 = vadd.f32 %v3136, %v3324
        %v3443 = vadd.f32 %v3137, %v3329
        %v3444 = vadd.f32 %v3138, %v3332
        %v3445 = vadd.f32 %v3139, %v3337
        %v3446 = vadd.f32 %v3140, %v3340
        %v3447 = vadd.f32 %v3141, %v3345
        %v3448 = vadd.f32 %v3142, %v3348
        %v3449 = vadd.f32 %v3143, %v3353
        %v3450 = vadd.f32 %v3144, %v3356
        %v3451 = vadd.f32 %v3145, %v3361
        %v3452 = vadd.f32 %v3146, %v3364
        %v3453 = vadd.f32 %v3147, %v3369
        %v3454 = vadd.f32 %v3148, %v3372
        %v3455 = vadd.f32 %v3149, %v3377
        %v3456 = vadd.f32 %v3150, %v3380
        %v3457 = vadd.f32 %v3151, %v3385
        %v3458 = vadd.f32 %v3152, %v3388
        %v3459 = vadd.f32 %v3153, %v3393
        %v3460 = vadd.f32 %v3154, %v3396
        %v3461 = vadd.f32 %v3155, %v3401
        %v3462 = vadd.f32 %v3156, %v3404
        %v3463 = vadd.f32 %v3157, %v3409
        %v3464 = vadd.f32 %v3158, %v3412
        %v3465 = vadd.f32 %v3159, %v3417
        %v3466 = vadd.f32 %v3160, %v3420
        %v3467 = vadd.f32 %v3161, %v3425
        %v3468 = vadd.f32 %v3162, %v3428
        %v3469 = vadd.f32 %v3163, %v3433
        %v3470 = vadd.f32 %v3164, %v3436
        %s3471 = scalar_lea.vmem [#allocation2], 160
        %v3472 = vld [vmem:[%s3471] sm:$0xff]
        %v3473 = vld [vmem:[%s3471 + $0x10] sm:$0xff]
        %v3474 = vld [vmem:[%s3471 + $0x20] sm:$0xff]
        %v3475 = vld [vmem:[%s3471 + $0x30] sm:$0xff]
        %v3476 = vld [vmem:[%s3471 + $0x40] sm:$0xff]
        %v3477 = vld [vmem:[%s3471 + $0x50] sm:$0xff]
        %v3478 = vld [vmem:[%s3471 + $0x60] sm:$0xff]
        %v3479 = vld [vmem:[%s3471 + $0x70] sm:$0xff]
        %v3480 = vld [vmem:[%s3471 + $0xa0] sm:$0xff]
        %v3481 = vld [vmem:[%s3471 + $0xb0] sm:$0xff]
        %v3482 = vld [vmem:[%s3471 + $0xc0] sm:$0xff]
        %v3483 = vld [vmem:[%s3471 + $0xd0] sm:$0xff]
        %v3484 = vld [vmem:[%s3471 + $0xe0] sm:$0xff]
        %v3485 = vld [vmem:[%s3471 + $0xf0] sm:$0xff]
        %v3486 = vld [vmem:[%s3471 + $0x100] sm:$0xff]
        %v3487 = vld [vmem:[%s3471 + $0x110] sm:$0xff]
        %v3488 = vld [vmem:[%s3471 + $0x140] sm:$0xff]
        %v3489 = vld [vmem:[%s3471 + $0x150] sm:$0xff]
        %v3490 = vld [vmem:[%s3471 + $0x160] sm:$0xff]
        %v3491 = vld [vmem:[%s3471 + $0x170] sm:$0xff]
        %v3492 = vld [vmem:[%s3471 + $0x180] sm:$0xff]
        %v3493 = vld [vmem:[%s3471 + $0x190] sm:$0xff]
        %v3494 = vld [vmem:[%s3471 + $0x1a0] sm:$0xff]
        %v3495 = vld [vmem:[%s3471 + $0x1b0] sm:$0xff]
        %v3496 = vld [vmem:[%s3471 + $0x1e0] sm:$0xff]
        %v3497 = vld [vmem:[%s3471 + $0x1f0] sm:$0xff]
        %v3498 = vld [vmem:[%s3471 + $0x200] sm:$0xff]
        %v3499 = vld [vmem:[%s3471 + $0x210] sm:$0xff]
        %v3500 = vld [vmem:[%s3471 + $0x220] sm:$0xff]
        %v3501 = vld [vmem:[%s3471 + $0x230] sm:$0xff]
        %v3502 = vld [vmem:[%s3471 + $0x240] sm:$0xff]
        %v3503 = vld [vmem:[%s3471 + $0x250] sm:$0xff]
        %v3504 = vpack.c.bf16 %v3473, %v3472
        %v3505 = vpack.c.bf16 %v3475, %v3474
        %v3506 = vpack.c.bf16 %v3477, %v3476
        %v3507 = vpack.c.bf16 %v3479, %v3478
        %v3508 = vpack.c.bf16 %v3481, %v3480
        %v3509 = vpack.c.bf16 %v3483, %v3482
        %v3510 = vpack.c.bf16 %v3485, %v3484
        %v3511 = vpack.c.bf16 %v3487, %v3486
        %v3512 = vpack.c.bf16 %v3489, %v3488
        %v3513 = vpack.c.bf16 %v3491, %v3490
        %v3514 = vpack.c.bf16 %v3493, %v3492
        %v3515 = vpack.c.bf16 %v3495, %v3494
        %v3516 = vpack.c.bf16 %v3497, %v3496
        %v3517 = vpack.c.bf16 %v3499, %v3498
        %v3518 = vpack.c.bf16 %v3501, %v3500
        %v3519 = vpack.c.bf16 %v3503, %v3502
        %s3520 = scalar_lea.vmem [#allocation6], 144
        %v3521 = vld [vmem:[%s3520] sm:$0xf]
        %v3522 = vld [vmem:[%s3520 + $0x4] sm:$0xf]
        %v3523 = vld [vmem:[%s3520 + $0x8] sm:$0xf]
        %v3524 = vld [vmem:[%s3520 + $0xc] sm:$0xf]
        %v3529 = vunpack.c.l.b16 %v3521
        %v3530 = vunpack.c.l.b16 %v3522
        %v3531 = vunpack.c.l.b16 %v3523
        %v3532 = vunpack.c.l.b16 %v3524
        %v3533 = vpack.c.b16 %v3530, %v3529
        %v3534 = vpack.c.b16 %v3532, %v3531
        %v3538 = vsel %vm625, %v3504, 0
        %v3541 = vsel %vm625, %v3505, 0
        %v3544 = vsel %vm625, %v3506, 0
        %v3547 = vsel %vm625, %v3507, 0
        %v3550 = vsel %vm625, %v3508, 0
        %v3553 = vsel %vm625, %v3509, 0
        %v3556 = vsel %vm625, %v3510, 0
        %v3559 = vsel %vm625, %v3511, 0
        %v3562 = vsel %vm625, %v3512, 0
        %v3565 = vsel %vm625, %v3513, 0
        %v3568 = vsel %vm625, %v3514, 0
        %v3571 = vsel %vm625, %v3515, 0
        %v3574 = vsel %vm625, %v3516, 0
        %v3577 = vsel %vm625, %v3517, 0
        %v3580 = vsel %vm625, %v3518, 0
        %v3583 = vsel %vm625, %v3519, 0
        %3585 = vmatprep.subr.bf16.mxu0 0
        %3586 = vmatpush1.bf16.msra.mxu0 0
        %3587 = vmatprep.subr.bf16.mxu0 0
        %3588 = vmatpush1.bf16.msra.mxu0 0
        %3589 = vmatprep.subr.bf16.mxu0 0
        %3590 = vmatpush1.bf16.msra.mxu0 0
        %3591 = vmatprep.subr.bf16.mxu0 0
        %3592 = vmatpush1.bf16.msra.mxu0 0
        %3593 = vmatprep.subr.bf16.mxu0 0
        %3594 = vmatpush1.bf16.msra.mxu0 0
        %3595 = vmatprep.subr.bf16.mxu0 0
        %3596 = vmatpush1.bf16.msra.mxu0 0
        %3597 = vmatprep.subr.bf16.mxu0 0
        %3598 = vmatpush1.bf16.msra.mxu0 %v3534
        %3599 = vmatprep.subr.bf16.mxu0 0
        %3600 = vmatpush1.bf16.msra.mxu0 %v3533
        %3601 = vmatprep.subr.bf16.mxu0 0
        %3602 = vmatpush2.bf16.msra.mxu0 0
        %3603 = vmatprep.subr.bf16.mxu0 0
        %3604 = vmatpush2.bf16.msra.mxu0 0
        %3605 = vmatprep.subr.bf16.mxu0 0
        %3606 = vmatpush2.bf16.msra.mxu0 0
        %3607 = vmatprep.subr.bf16.mxu0 0
        %3608 = vmatpush2.bf16.msra.mxu0 0
        %3609 = vmatprep.subr.bf16.mxu0 0
        %3610 = vmatpush2.bf16.msra.mxu0 0
        %3611 = vmatprep.subr.bf16.mxu0 0
        %3612 = vmatpush2.bf16.msra.mxu0 0
        %3613 = vmatprep.subr.bf16.mxu0 0
        %3614 = vmatpush2.bf16.msra.mxu0 0
        %3615 = vmatprep.subr.bf16.mxu0 0
        %3616 = vmatpush2.bf16.msra.mxu0 0
        %3617 = vmatprep.mubr.bf16.mxu0 0
        %3618 = vmatmul.mubr.bf16.gmra.mxu0 %v3538
        %v3619 = vpop.f32.mrf.mxu0
        %v3620 = vadd.f32 0.0, %v3619
        %v3621 = vpop.f32.mrf.mxu0
        %v3622 = vpop.f32.mrf.mxu0
        %v3623 = vadd.f32 0.0, %v3622
        %v3624 = vpop.f32.mrf.mxu0
        %3625 = vmatprep.mubr.bf16.mxu0 0
        %3626 = vmatmul.mubr.bf16.gmra.mxu0 %v3541
        %v3627 = vpop.f32.mrf.mxu0
        %v3628 = vadd.f32 0.0, %v3627
        %v3629 = vpop.f32.mrf.mxu0
        %v3630 = vpop.f32.mrf.mxu0
        %v3631 = vadd.f32 0.0, %v3630
        %v3632 = vpop.f32.mrf.mxu0
        %3633 = vmatprep.mubr.bf16.mxu0 0
        %3634 = vmatmul.mubr.bf16.gmra.mxu0 %v3544
        %v3635 = vpop.f32.mrf.mxu0
        %v3636 = vadd.f32 0.0, %v3635
        %v3637 = vpop.f32.mrf.mxu0
        %v3638 = vpop.f32.mrf.mxu0
        %v3639 = vadd.f32 0.0, %v3638
        %v3640 = vpop.f32.mrf.mxu0
        %3641 = vmatprep.mubr.bf16.mxu0 0
        %3642 = vmatmul.mubr.bf16.gmra.mxu0 %v3547
        %v3643 = vpop.f32.mrf.mxu0
        %v3644 = vadd.f32 0.0, %v3643
        %v3645 = vpop.f32.mrf.mxu0
        %v3646 = vpop.f32.mrf.mxu0
        %v3647 = vadd.f32 0.0, %v3646
        %v3648 = vpop.f32.mrf.mxu0
        %3649 = vmatprep.mubr.bf16.mxu0 0
        %3650 = vmatmul.mubr.bf16.gmra.mxu0 %v3550
        %v3651 = vpop.f32.mrf.mxu0
        %v3652 = vadd.f32 0.0, %v3651
        %v3653 = vpop.f32.mrf.mxu0
        %v3654 = vpop.f32.mrf.mxu0
        %v3655 = vadd.f32 0.0, %v3654
        %v3656 = vpop.f32.mrf.mxu0
        %3657 = vmatprep.mubr.bf16.mxu0 0
        %3658 = vmatmul.mubr.bf16.gmra.mxu0 %v3553
        %v3659 = vpop.f32.mrf.mxu0
        %v3660 = vadd.f32 0.0, %v3659
        %v3661 = vpop.f32.mrf.mxu0
        %v3662 = vpop.f32.mrf.mxu0
        %v3663 = vadd.f32 0.0, %v3662
        %v3664 = vpop.f32.mrf.mxu0
        %3665 = vmatprep.mubr.bf16.mxu0 0
        %3666 = vmatmul.mubr.bf16.gmra.mxu0 %v3556
        %v3667 = vpop.f32.mrf.mxu0
        %v3668 = vadd.f32 0.0, %v3667
        %v3669 = vpop.f32.mrf.mxu0
        %v3670 = vpop.f32.mrf.mxu0
        %v3671 = vadd.f32 0.0, %v3670
        %v3672 = vpop.f32.mrf.mxu0
        %3673 = vmatprep.mubr.bf16.mxu0 0
        %3674 = vmatmul.mubr.bf16.gmra.mxu0 %v3559
        %v3675 = vpop.f32.mrf.mxu0
        %v3676 = vadd.f32 0.0, %v3675
        %v3677 = vpop.f32.mrf.mxu0
        %v3678 = vpop.f32.mrf.mxu0
        %v3679 = vadd.f32 0.0, %v3678
        %v3680 = vpop.f32.mrf.mxu0
        %3681 = vmatprep.mubr.bf16.mxu0 0
        %3682 = vmatmul.mubr.bf16.gmra.mxu0 %v3562
        %v3683 = vpop.f32.mrf.mxu0
        %v3684 = vadd.f32 0.0, %v3683
        %v3685 = vpop.f32.mrf.mxu0
        %v3686 = vpop.f32.mrf.mxu0
        %v3687 = vadd.f32 0.0, %v3686
        %v3688 = vpop.f32.mrf.mxu0
        %3689 = vmatprep.mubr.bf16.mxu0 0
        %3690 = vmatmul.mubr.bf16.gmra.mxu0 %v3565
        %v3691 = vpop.f32.mrf.mxu0
        %v3692 = vadd.f32 0.0, %v3691
        %v3693 = vpop.f32.mrf.mxu0
        %v3694 = vpop.f32.mrf.mxu0
        %v3695 = vadd.f32 0.0, %v3694
        %v3696 = vpop.f32.mrf.mxu0
        %3697 = vmatprep.mubr.bf16.mxu0 0
        %3698 = vmatmul.mubr.bf16.gmra.mxu0 %v3568
        %v3699 = vpop.f32.mrf.mxu0
        %v3700 = vadd.f32 0.0, %v3699
        %v3701 = vpop.f32.mrf.mxu0
        %v3702 = vpop.f32.mrf.mxu0
        %v3703 = vadd.f32 0.0, %v3702
        %v3704 = vpop.f32.mrf.mxu0
        %3705 = vmatprep.mubr.bf16.mxu0 0
        %3706 = vmatmul.mubr.bf16.gmra.mxu0 %v3571
        %v3707 = vpop.f32.mrf.mxu0
        %v3708 = vadd.f32 0.0, %v3707
        %v3709 = vpop.f32.mrf.mxu0
        %v3710 = vpop.f32.mrf.mxu0
        %v3711 = vadd.f32 0.0, %v3710
        %v3712 = vpop.f32.mrf.mxu0
        %3713 = vmatprep.mubr.bf16.mxu0 0
        %3714 = vmatmul.mubr.bf16.gmra.mxu0 %v3574
        %v3715 = vpop.f32.mrf.mxu0
        %v3716 = vadd.f32 0.0, %v3715
        %v3717 = vpop.f32.mrf.mxu0
        %v3718 = vpop.f32.mrf.mxu0
        %v3719 = vadd.f32 0.0, %v3718
        %v3720 = vpop.f32.mrf.mxu0
        %3721 = vmatprep.mubr.bf16.mxu0 0
        %3722 = vmatmul.mubr.bf16.gmra.mxu0 %v3577
        %v3723 = vpop.f32.mrf.mxu0
        %v3724 = vadd.f32 0.0, %v3723
        %v3725 = vpop.f32.mrf.mxu0
        %v3726 = vpop.f32.mrf.mxu0
        %v3727 = vadd.f32 0.0, %v3726
        %v3728 = vpop.f32.mrf.mxu0
        %3729 = vmatprep.mubr.bf16.mxu0 0
        %3730 = vmatmul.mubr.bf16.gmra.mxu0 %v3580
        %v3731 = vpop.f32.mrf.mxu0
        %v3732 = vadd.f32 0.0, %v3731
        %v3733 = vpop.f32.mrf.mxu0
        %v3734 = vpop.f32.mrf.mxu0
        %v3735 = vadd.f32 0.0, %v3734
        %v3736 = vpop.f32.mrf.mxu0
        %3737 = vmatprep.mubr.bf16.mxu0 0
        %3738 = vmatmul.mubr.bf16.gmra.mxu0 %v3583
        %v3739 = vpop.f32.mrf.mxu0
        %v3740 = vadd.f32 0.0, %v3739
        %v3741 = vpop.f32.mrf.mxu0
        %v3742 = vpop.f32.mrf.mxu0
        %v3743 = vadd.f32 0.0, %v3742
        %v3744 = vpop.f32.mrf.mxu0
        %3745 = vdwg.mxu0
        %v3746 = vadd.f32 %v3439, %v3620
        %v3747 = vadd.f32 %v3440, %v3623
        %v3748 = vadd.f32 %v3441, %v3628
        %v3749 = vadd.f32 %v3442, %v3631
        %v3750 = vadd.f32 %v3443, %v3636
        %v3751 = vadd.f32 %v3444, %v3639
        %v3752 = vadd.f32 %v3445, %v3644
        %v3753 = vadd.f32 %v3446, %v3647
        %v3754 = vadd.f32 %v3447, %v3652
        %v3755 = vadd.f32 %v3448, %v3655
        %v3756 = vadd.f32 %v3449, %v3660
        %v3757 = vadd.f32 %v3450, %v3663
        %v3758 = vadd.f32 %v3451, %v3668
        %v3759 = vadd.f32 %v3452, %v3671
        %v3760 = vadd.f32 %v3453, %v3676
        %v3761 = vadd.f32 %v3454, %v3679
        %v3762 = vadd.f32 %v3455, %v3684
        %v3763 = vadd.f32 %v3456, %v3687
        %v3764 = vadd.f32 %v3457, %v3692
        %v3765 = vadd.f32 %v3458, %v3695
        %v3766 = vadd.f32 %v3459, %v3700
        %v3767 = vadd.f32 %v3460, %v3703
        %v3768 = vadd.f32 %v3461, %v3708
        %v3769 = vadd.f32 %v3462, %v3711
        %v3770 = vadd.f32 %v3463, %v3716
        %v3771 = vadd.f32 %v3464, %v3719
        %v3772 = vadd.f32 %v3465, %v3724
        %v3773 = vadd.f32 %v3466, %v3727
        %v3774 = vadd.f32 %v3467, %v3732
        %v3775 = vadd.f32 %v3468, %v3735
        %v3776 = vadd.f32 %v3469, %v3740
        %v3777 = vadd.f32 %v3470, %v3743
        %v3778 = vld [vmem:[%s3471 + $0x1] sm:$0xff]
        %v3779 = vld [vmem:[%s3471 + $0x11] sm:$0xff]
        %v3780 = vld [vmem:[%s3471 + $0x21] sm:$0xff]
        %v3781 = vld [vmem:[%s3471 + $0x31] sm:$0xff]
        %v3782 = vld [vmem:[%s3471 + $0x41] sm:$0xff]
        %v3783 = vld [vmem:[%s3471 + $0x51] sm:$0xff]
        %v3784 = vld [vmem:[%s3471 + $0x61] sm:$0xff]
        %v3785 = vld [vmem:[%s3471 + $0x71] sm:$0xff]
        %v3786 = vld [vmem:[%s3471 + $0xa1] sm:$0xff]
        %v3787 = vld [vmem:[%s3471 + $0xb1] sm:$0xff]
        %v3788 = vld [vmem:[%s3471 + $0xc1] sm:$0xff]
        %v3789 = vld [vmem:[%s3471 + $0xd1] sm:$0xff]
        %v3790 = vld [vmem:[%s3471 + $0xe1] sm:$0xff]
        %v3791 = vld [vmem:[%s3471 + $0xf1] sm:$0xff]
        %v3792 = vld [vmem:[%s3471 + $0x101] sm:$0xff]
        %v3793 = vld [vmem:[%s3471 + $0x111] sm:$0xff]
        %v3794 = vld [vmem:[%s3471 + $0x141] sm:$0xff]
        %v3795 = vld [vmem:[%s3471 + $0x151] sm:$0xff]
        %v3796 = vld [vmem:[%s3471 + $0x161] sm:$0xff]
        %v3797 = vld [vmem:[%s3471 + $0x171] sm:$0xff]
        %v3798 = vld [vmem:[%s3471 + $0x181] sm:$0xff]
        %v3799 = vld [vmem:[%s3471 + $0x191] sm:$0xff]
        %v3800 = vld [vmem:[%s3471 + $0x1a1] sm:$0xff]
        %v3801 = vld [vmem:[%s3471 + $0x1b1] sm:$0xff]
        %v3802 = vld [vmem:[%s3471 + $0x1e1] sm:$0xff]
        %v3803 = vld [vmem:[%s3471 + $0x1f1] sm:$0xff]
        %v3804 = vld [vmem:[%s3471 + $0x201] sm:$0xff]
        %v3805 = vld [vmem:[%s3471 + $0x211] sm:$0xff]
        %v3806 = vld [vmem:[%s3471 + $0x221] sm:$0xff]
        %v3807 = vld [vmem:[%s3471 + $0x231] sm:$0xff]
        %v3808 = vld [vmem:[%s3471 + $0x241] sm:$0xff]
        %v3809 = vld [vmem:[%s3471 + $0x251] sm:$0xff]
        %v3810 = vpack.c.bf16 %v3779, %v3778
        %v3811 = vpack.c.bf16 %v3781, %v3780
        %v3812 = vpack.c.bf16 %v3783, %v3782
        %v3813 = vpack.c.bf16 %v3785, %v3784
        %v3814 = vpack.c.bf16 %v3787, %v3786
        %v3815 = vpack.c.bf16 %v3789, %v3788
        %v3816 = vpack.c.bf16 %v3791, %v3790
        %v3817 = vpack.c.bf16 %v3793, %v3792
        %v3818 = vpack.c.bf16 %v3795, %v3794
        %v3819 = vpack.c.bf16 %v3797, %v3796
        %v3820 = vpack.c.bf16 %v3799, %v3798
        %v3821 = vpack.c.bf16 %v3801, %v3800
        %v3822 = vpack.c.bf16 %v3803, %v3802
        %v3823 = vpack.c.bf16 %v3805, %v3804
        %v3824 = vpack.c.bf16 %v3807, %v3806
        %v3825 = vpack.c.bf16 %v3809, %v3808
        %s3826 = scalar_lea.vmem [#allocation6], 160
        %v3827 = vld [vmem:[%s3826] sm:$0xf]
        %v3828 = vld [vmem:[%s3826 + $0x4] sm:$0xf]
        %v3829 = vld [vmem:[%s3826 + $0x8] sm:$0xf]
        %v3830 = vld [vmem:[%s3826 + $0xc] sm:$0xf]
        %v3835 = vunpack.c.l.b16 %v3827
        %v3836 = vunpack.c.l.b16 %v3828
        %v3837 = vunpack.c.l.b16 %v3829
        %v3838 = vunpack.c.l.b16 %v3830
        %v3839 = vpack.c.b16 %v3836, %v3835
        %v3840 = vpack.c.b16 %v3838, %v3837
        %v3844 = vsel %vm625, %v3810, 0
        %v3847 = vsel %vm625, %v3811, 0
        %v3850 = vsel %vm625, %v3812, 0
        %v3853 = vsel %vm625, %v3813, 0
        %v3856 = vsel %vm625, %v3814, 0
        %v3859 = vsel %vm625, %v3815, 0
        %v3862 = vsel %vm625, %v3816, 0
        %v3865 = vsel %vm625, %v3817, 0
        %v3868 = vsel %vm625, %v3818, 0
        %v3871 = vsel %vm625, %v3819, 0
        %v3874 = vsel %vm625, %v3820, 0
        %v3877 = vsel %vm625, %v3821, 0
        %v3880 = vsel %vm625, %v3822, 0
        %v3883 = vsel %vm625, %v3823, 0
        %v3886 = vsel %vm625, %v3824, 0
        %v3889 = vsel %vm625, %v3825, 0
        %3891 = vmatprep.subr.bf16.mxu0 0
        %3892 = vmatpush1.bf16.msra.mxu0 0
        %3893 = vmatprep.subr.bf16.mxu0 0
        %3894 = vmatpush1.bf16.msra.mxu0 0
        %3895 = vmatprep.subr.bf16.mxu0 0
        %3896 = vmatpush1.bf16.msra.mxu0 0
        %3897 = vmatprep.subr.bf16.mxu0 0
        %3898 = vmatpush1.bf16.msra.mxu0 0
        %3899 = vmatprep.subr.bf16.mxu0 0
        %3900 = vmatpush1.bf16.msra.mxu0 0
        %3901 = vmatprep.subr.bf16.mxu0 0
        %3902 = vmatpush1.bf16.msra.mxu0 0
        %3903 = vmatprep.subr.bf16.mxu0 0
        %3904 = vmatpush1.bf16.msra.mxu0 %v3840
        %3905 = vmatprep.subr.bf16.mxu0 0
        %3906 = vmatpush1.bf16.msra.mxu0 %v3839
        %3907 = vmatprep.subr.bf16.mxu0 0
        %3908 = vmatpush2.bf16.msra.mxu0 0
        %3909 = vmatprep.subr.bf16.mxu0 0
        %3910 = vmatpush2.bf16.msra.mxu0 0
        %3911 = vmatprep.subr.bf16.mxu0 0
        %3912 = vmatpush2.bf16.msra.mxu0 0
        %3913 = vmatprep.subr.bf16.mxu0 0
        %3914 = vmatpush2.bf16.msra.mxu0 0
        %3915 = vmatprep.subr.bf16.mxu0 0
        %3916 = vmatpush2.bf16.msra.mxu0 0
        %3917 = vmatprep.subr.bf16.mxu0 0
        %3918 = vmatpush2.bf16.msra.mxu0 0
        %3919 = vmatprep.subr.bf16.mxu0 0
        %3920 = vmatpush2.bf16.msra.mxu0 0
        %3921 = vmatprep.subr.bf16.mxu0 0
        %3922 = vmatpush2.bf16.msra.mxu0 0
        %3923 = vmatprep.mubr.bf16.mxu0 0
        %3924 = vmatmul.mubr.bf16.gmra.mxu0 %v3844
        %v3925 = vpop.f32.mrf.mxu0
        %v3926 = vadd.f32 0.0, %v3925
        %v3927 = vpop.f32.mrf.mxu0
        %v3928 = vpop.f32.mrf.mxu0
        %v3929 = vadd.f32 0.0, %v3928
        %v3930 = vpop.f32.mrf.mxu0
        %3931 = vmatprep.mubr.bf16.mxu0 0
        %3932 = vmatmul.mubr.bf16.gmra.mxu0 %v3847
        %v3933 = vpop.f32.mrf.mxu0
        %v3934 = vadd.f32 0.0, %v3933
        %v3935 = vpop.f32.mrf.mxu0
        %v3936 = vpop.f32.mrf.mxu0
        %v3937 = vadd.f32 0.0, %v3936
        %v3938 = vpop.f32.mrf.mxu0
        %3939 = vmatprep.mubr.bf16.mxu0 0
        %3940 = vmatmul.mubr.bf16.gmra.mxu0 %v3850
        %v3941 = vpop.f32.mrf.mxu0
        %v3942 = vadd.f32 0.0, %v3941
        %v3943 = vpop.f32.mrf.mxu0
        %v3944 = vpop.f32.mrf.mxu0
        %v3945 = vadd.f32 0.0, %v3944
        %v3946 = vpop.f32.mrf.mxu0
        %3947 = vmatprep.mubr.bf16.mxu0 0
        %3948 = vmatmul.mubr.bf16.gmra.mxu0 %v3853
        %v3949 = vpop.f32.mrf.mxu0
        %v3950 = vadd.f32 0.0, %v3949
        %v3951 = vpop.f32.mrf.mxu0
        %v3952 = vpop.f32.mrf.mxu0
        %v3953 = vadd.f32 0.0, %v3952
        %v3954 = vpop.f32.mrf.mxu0
        %3955 = vmatprep.mubr.bf16.mxu0 0
        %3956 = vmatmul.mubr.bf16.gmra.mxu0 %v3856
        %v3957 = vpop.f32.mrf.mxu0
        %v3958 = vadd.f32 0.0, %v3957
        %v3959 = vpop.f32.mrf.mxu0
        %v3960 = vpop.f32.mrf.mxu0
        %v3961 = vadd.f32 0.0, %v3960
        %v3962 = vpop.f32.mrf.mxu0
        %3963 = vmatprep.mubr.bf16.mxu0 0
        %3964 = vmatmul.mubr.bf16.gmra.mxu0 %v3859
        %v3965 = vpop.f32.mrf.mxu0
        %v3966 = vadd.f32 0.0, %v3965
        %v3967 = vpop.f32.mrf.mxu0
        %v3968 = vpop.f32.mrf.mxu0
        %v3969 = vadd.f32 0.0, %v3968
        %v3970 = vpop.f32.mrf.mxu0
        %3971 = vmatprep.mubr.bf16.mxu0 0
        %3972 = vmatmul.mubr.bf16.gmra.mxu0 %v3862
        %v3973 = vpop.f32.mrf.mxu0
        %v3974 = vadd.f32 0.0, %v3973
        %v3975 = vpop.f32.mrf.mxu0
        %v3976 = vpop.f32.mrf.mxu0
        %v3977 = vadd.f32 0.0, %v3976
        %v3978 = vpop.f32.mrf.mxu0
        %3979 = vmatprep.mubr.bf16.mxu0 0
        %3980 = vmatmul.mubr.bf16.gmra.mxu0 %v3865
        %v3981 = vpop.f32.mrf.mxu0
        %v3982 = vadd.f32 0.0, %v3981
        %v3983 = vpop.f32.mrf.mxu0
        %v3984 = vpop.f32.mrf.mxu0
        %v3985 = vadd.f32 0.0, %v3984
        %v3986 = vpop.f32.mrf.mxu0
        %3987 = vmatprep.mubr.bf16.mxu0 0
        %3988 = vmatmul.mubr.bf16.gmra.mxu0 %v3868
        %v3989 = vpop.f32.mrf.mxu0
        %v3990 = vadd.f32 0.0, %v3989
        %v3991 = vpop.f32.mrf.mxu0
        %v3992 = vpop.f32.mrf.mxu0
        %v3993 = vadd.f32 0.0, %v3992
        %v3994 = vpop.f32.mrf.mxu0
        %3995 = vmatprep.mubr.bf16.mxu0 0
        %3996 = vmatmul.mubr.bf16.gmra.mxu0 %v3871
        %v3997 = vpop.f32.mrf.mxu0
        %v3998 = vadd.f32 0.0, %v3997
        %v3999 = vpop.f32.mrf.mxu0
        %v4000 = vpop.f32.mrf.mxu0
        %v4001 = vadd.f32 0.0, %v4000
        %v4002 = vpop.f32.mrf.mxu0
        %4003 = vmatprep.mubr.bf16.mxu0 0
        %4004 = vmatmul.mubr.bf16.gmra.mxu0 %v3874
        %v4005 = vpop.f32.mrf.mxu0
        %v4006 = vadd.f32 0.0, %v4005
        %v4007 = vpop.f32.mrf.mxu0
        %v4008 = vpop.f32.mrf.mxu0
        %v4009 = vadd.f32 0.0, %v4008
        %v4010 = vpop.f32.mrf.mxu0
        %4011 = vmatprep.mubr.bf16.mxu0 0
        %4012 = vmatmul.mubr.bf16.gmra.mxu0 %v3877
        %v4013 = vpop.f32.mrf.mxu0
        %v4014 = vadd.f32 0.0, %v4013
        %v4015 = vpop.f32.mrf.mxu0
        %v4016 = vpop.f32.mrf.mxu0
        %v4017 = vadd.f32 0.0, %v4016
        %v4018 = vpop.f32.mrf.mxu0
        %4019 = vmatprep.mubr.bf16.mxu0 0
        %4020 = vmatmul.mubr.bf16.gmra.mxu0 %v3880
        %v4021 = vpop.f32.mrf.mxu0
        %v4022 = vadd.f32 0.0, %v4021
        %v4023 = vpop.f32.mrf.mxu0
        %v4024 = vpop.f32.mrf.mxu0
        %v4025 = vadd.f32 0.0, %v4024
        %v4026 = vpop.f32.mrf.mxu0
        %4027 = vmatprep.mubr.bf16.mxu0 0
        %4028 = vmatmul.mubr.bf16.gmra.mxu0 %v3883
        %v4029 = vpop.f32.mrf.mxu0
        %v4030 = vadd.f32 0.0, %v4029
        %v4031 = vpop.f32.mrf.mxu0
        %v4032 = vpop.f32.mrf.mxu0
        %v4033 = vadd.f32 0.0, %v4032
        %v4034 = vpop.f32.mrf.mxu0
        %4035 = vmatprep.mubr.bf16.mxu0 0
        %4036 = vmatmul.mubr.bf16.gmra.mxu0 %v3886
        %v4037 = vpop.f32.mrf.mxu0
        %v4038 = vadd.f32 0.0, %v4037
        %v4039 = vpop.f32.mrf.mxu0
        %v4040 = vpop.f32.mrf.mxu0
        %v4041 = vadd.f32 0.0, %v4040
        %v4042 = vpop.f32.mrf.mxu0
        %4043 = vmatprep.mubr.bf16.mxu0 0
        %4044 = vmatmul.mubr.bf16.gmra.mxu0 %v3889
        %v4045 = vpop.f32.mrf.mxu0
        %v4046 = vadd.f32 0.0, %v4045
        %v4047 = vpop.f32.mrf.mxu0
        %v4048 = vpop.f32.mrf.mxu0
        %v4049 = vadd.f32 0.0, %v4048
        %v4050 = vpop.f32.mrf.mxu0
        %4051 = vdwg.mxu0
        %v4052 = vadd.f32 %v3746, %v3926
        %v4053 = vadd.f32 %v3747, %v3929
        %v4054 = vadd.f32 %v3748, %v3934
        %v4055 = vadd.f32 %v3749, %v3937
        %v4056 = vadd.f32 %v3750, %v3942
        %v4057 = vadd.f32 %v3751, %v3945
        %v4058 = vadd.f32 %v3752, %v3950
        %v4059 = vadd.f32 %v3753, %v3953
        %v4060 = vadd.f32 %v3754, %v3958
        %v4061 = vadd.f32 %v3755, %v3961
        %v4062 = vadd.f32 %v3756, %v3966
        %v4063 = vadd.f32 %v3757, %v3969
        %v4064 = vadd.f32 %v3758, %v3974
        %v4065 = vadd.f32 %v3759, %v3977
        %v4066 = vadd.f32 %v3760, %v3982
        %v4067 = vadd.f32 %v3761, %v3985
        %v4068 = vadd.f32 %v3762, %v3990
        %v4069 = vadd.f32 %v3763, %v3993
        %v4070 = vadd.f32 %v3764, %v3998
        %v4071 = vadd.f32 %v3765, %v4001
        %v4072 = vadd.f32 %v3766, %v4006
        %v4073 = vadd.f32 %v3767, %v4009
        %v4074 = vadd.f32 %v3768, %v4014
        %v4075 = vadd.f32 %v3769, %v4017
        %v4076 = vadd.f32 %v3770, %v4022
        %v4077 = vadd.f32 %v3771, %v4025
        %v4078 = vadd.f32 %v3772, %v4030
        %v4079 = vadd.f32 %v3773, %v4033
        %v4080 = vadd.f32 %v3774, %v4038
        %v4081 = vadd.f32 %v3775, %v4041
        %v4082 = vadd.f32 %v3776, %v4046
        %v4083 = vadd.f32 %v3777, %v4049
        %v4084 = vld [vmem:[%s3471 + $0x2] sm:$0xff]
        %v4085 = vld [vmem:[%s3471 + $0x12] sm:$0xff]
        %v4086 = vld [vmem:[%s3471 + $0x22] sm:$0xff]
        %v4087 = vld [vmem:[%s3471 + $0x32] sm:$0xff]
        %v4088 = vld [vmem:[%s3471 + $0x42] sm:$0xff]
        %v4089 = vld [vmem:[%s3471 + $0x52] sm:$0xff]
        %v4090 = vld [vmem:[%s3471 + $0x62] sm:$0xff]
        %v4091 = vld [vmem:[%s3471 + $0x72] sm:$0xff]
        %v4092 = vld [vmem:[%s3471 + $0xa2] sm:$0xff]
        %v4093 = vld [vmem:[%s3471 + $0xb2] sm:$0xff]
        %v4094 = vld [vmem:[%s3471 + $0xc2] sm:$0xff]
        %v4095 = vld [vmem:[%s3471 + $0xd2] sm:$0xff]
        %v4096 = vld [vmem:[%s3471 + $0xe2] sm:$0xff]
        %v4097 = vld [vmem:[%s3471 + $0xf2] sm:$0xff]
        %v4098 = vld [vmem:[%s3471 + $0x102] sm:$0xff]
        %v4099 = vld [vmem:[%s3471 + $0x112] sm:$0xff]
        %v4100 = vld [vmem:[%s3471 + $0x142] sm:$0xff]
        %v4101 = vld [vmem:[%s3471 + $0x152] sm:$0xff]
        %v4102 = vld [vmem:[%s3471 + $0x162] sm:$0xff]
        %v4103 = vld [vmem:[%s3471 + $0x172] sm:$0xff]
        %v4104 = vld [vmem:[%s3471 + $0x182] sm:$0xff]
        %v4105 = vld [vmem:[%s3471 + $0x192] sm:$0xff]
        %v4106 = vld [vmem:[%s3471 + $0x1a2] sm:$0xff]
        %v4107 = vld [vmem:[%s3471 + $0x1b2] sm:$0xff]
        %v4108 = vld [vmem:[%s3471 + $0x1e2] sm:$0xff]
        %v4109 = vld [vmem:[%s3471 + $0x1f2] sm:$0xff]
        %v4110 = vld [vmem:[%s3471 + $0x202] sm:$0xff]
        %v4111 = vld [vmem:[%s3471 + $0x212] sm:$0xff]
        %v4112 = vld [vmem:[%s3471 + $0x222] sm:$0xff]
        %v4113 = vld [vmem:[%s3471 + $0x232] sm:$0xff]
        %v4114 = vld [vmem:[%s3471 + $0x242] sm:$0xff]
        %v4115 = vld [vmem:[%s3471 + $0x252] sm:$0xff]
        %v4116 = vpack.c.bf16 %v4085, %v4084
        %v4117 = vpack.c.bf16 %v4087, %v4086
        %v4118 = vpack.c.bf16 %v4089, %v4088
        %v4119 = vpack.c.bf16 %v4091, %v4090
        %v4120 = vpack.c.bf16 %v4093, %v4092
        %v4121 = vpack.c.bf16 %v4095, %v4094
        %v4122 = vpack.c.bf16 %v4097, %v4096
        %v4123 = vpack.c.bf16 %v4099, %v4098
        %v4124 = vpack.c.bf16 %v4101, %v4100
        %v4125 = vpack.c.bf16 %v4103, %v4102
        %v4126 = vpack.c.bf16 %v4105, %v4104
        %v4127 = vpack.c.bf16 %v4107, %v4106
        %v4128 = vpack.c.bf16 %v4109, %v4108
        %v4129 = vpack.c.bf16 %v4111, %v4110
        %v4130 = vpack.c.bf16 %v4113, %v4112
        %v4131 = vpack.c.bf16 %v4115, %v4114
        %s4132 = scalar_lea.vmem [#allocation6], 176
        %v4133 = vld [vmem:[%s4132] sm:$0xf]
        %v4134 = vld [vmem:[%s4132 + $0x4] sm:$0xf]
        %v4135 = vld [vmem:[%s4132 + $0x8] sm:$0xf]
        %v4136 = vld [vmem:[%s4132 + $0xc] sm:$0xf]
        %v4141 = vunpack.c.l.b16 %v4133
        %v4142 = vunpack.c.l.b16 %v4134
        %v4143 = vunpack.c.l.b16 %v4135
        %v4144 = vunpack.c.l.b16 %v4136
        %v4145 = vpack.c.b16 %v4142, %v4141
        %v4146 = vpack.c.b16 %v4144, %v4143
        %v4150 = vsel %vm625, %v4116, 0
        %v4153 = vsel %vm625, %v4117, 0
        %v4156 = vsel %vm625, %v4118, 0
        %v4159 = vsel %vm625, %v4119, 0
        %v4162 = vsel %vm625, %v4120, 0
        %v4165 = vsel %vm625, %v4121, 0
        %v4168 = vsel %vm625, %v4122, 0
        %v4171 = vsel %vm625, %v4123, 0
        %v4174 = vsel %vm625, %v4124, 0
        %v4177 = vsel %vm625, %v4125, 0
        %v4180 = vsel %vm625, %v4126, 0
        %v4183 = vsel %vm625, %v4127, 0
        %v4186 = vsel %vm625, %v4128, 0
        %v4189 = vsel %vm625, %v4129, 0
        %v4192 = vsel %vm625, %v4130, 0
        %v4195 = vsel %vm625, %v4131, 0
        %4197 = vmatprep.subr.bf16.mxu0 0
        %4198 = vmatpush1.bf16.msra.mxu0 0
        %4199 = vmatprep.subr.bf16.mxu0 0
        %4200 = vmatpush1.bf16.msra.mxu0 0
        %4201 = vmatprep.subr.bf16.mxu0 0
        %4202 = vmatpush1.bf16.msra.mxu0 0
        %4203 = vmatprep.subr.bf16.mxu0 0
        %4204 = vmatpush1.bf16.msra.mxu0 0
        %4205 = vmatprep.subr.bf16.mxu0 0
        %4206 = vmatpush1.bf16.msra.mxu0 0
        %4207 = vmatprep.subr.bf16.mxu0 0
        %4208 = vmatpush1.bf16.msra.mxu0 0
        %4209 = vmatprep.subr.bf16.mxu0 0
        %4210 = vmatpush1.bf16.msra.mxu0 %v4146
        %4211 = vmatprep.subr.bf16.mxu0 0
        %4212 = vmatpush1.bf16.msra.mxu0 %v4145
        %4213 = vmatprep.subr.bf16.mxu0 0
        %4214 = vmatpush2.bf16.msra.mxu0 0
        %4215 = vmatprep.subr.bf16.mxu0 0
        %4216 = vmatpush2.bf16.msra.mxu0 0
        %4217 = vmatprep.subr.bf16.mxu0 0
        %4218 = vmatpush2.bf16.msra.mxu0 0
        %4219 = vmatprep.subr.bf16.mxu0 0
        %4220 = vmatpush2.bf16.msra.mxu0 0
        %4221 = vmatprep.subr.bf16.mxu0 0
        %4222 = vmatpush2.bf16.msra.mxu0 0
        %4223 = vmatprep.subr.bf16.mxu0 0
        %4224 = vmatpush2.bf16.msra.mxu0 0
        %4225 = vmatprep.subr.bf16.mxu0 0
        %4226 = vmatpush2.bf16.msra.mxu0 0
        %4227 = vmatprep.subr.bf16.mxu0 0
        %4228 = vmatpush2.bf16.msra.mxu0 0
        %4229 = vmatprep.mubr.bf16.mxu0 0
        %4230 = vmatmul.mubr.bf16.gmra.mxu0 %v4150
        %v4231 = vpop.f32.mrf.mxu0
        %v4232 = vadd.f32 0.0, %v4231
        %v4233 = vpop.f32.mrf.mxu0
        %v4234 = vpop.f32.mrf.mxu0
        %v4235 = vadd.f32 0.0, %v4234
        %v4236 = vpop.f32.mrf.mxu0
        %4237 = vmatprep.mubr.bf16.mxu0 0
        %4238 = vmatmul.mubr.bf16.gmra.mxu0 %v4153
        %v4239 = vpop.f32.mrf.mxu0
        %v4240 = vadd.f32 0.0, %v4239
        %v4241 = vpop.f32.mrf.mxu0
        %v4242 = vpop.f32.mrf.mxu0
        %v4243 = vadd.f32 0.0, %v4242
        %v4244 = vpop.f32.mrf.mxu0
        %4245 = vmatprep.mubr.bf16.mxu0 0
        %4246 = vmatmul.mubr.bf16.gmra.mxu0 %v4156
        %v4247 = vpop.f32.mrf.mxu0
        %v4248 = vadd.f32 0.0, %v4247
        %v4249 = vpop.f32.mrf.mxu0
        %v4250 = vpop.f32.mrf.mxu0
        %v4251 = vadd.f32 0.0, %v4250
        %v4252 = vpop.f32.mrf.mxu0
        %4253 = vmatprep.mubr.bf16.mxu0 0
        %4254 = vmatmul.mubr.bf16.gmra.mxu0 %v4159
        %v4255 = vpop.f32.mrf.mxu0
        %v4256 = vadd.f32 0.0, %v4255
        %v4257 = vpop.f32.mrf.mxu0
        %v4258 = vpop.f32.mrf.mxu0
        %v4259 = vadd.f32 0.0, %v4258
        %v4260 = vpop.f32.mrf.mxu0
        %4261 = vmatprep.mubr.bf16.mxu0 0
        %4262 = vmatmul.mubr.bf16.gmra.mxu0 %v4162
        %v4263 = vpop.f32.mrf.mxu0
        %v4264 = vadd.f32 0.0, %v4263
        %v4265 = vpop.f32.mrf.mxu0
        %v4266 = vpop.f32.mrf.mxu0
        %v4267 = vadd.f32 0.0, %v4266
        %v4268 = vpop.f32.mrf.mxu0
        %4269 = vmatprep.mubr.bf16.mxu0 0
        %4270 = vmatmul.mubr.bf16.gmra.mxu0 %v4165
        %v4271 = vpop.f32.mrf.mxu0
        %v4272 = vadd.f32 0.0, %v4271
        %v4273 = vpop.f32.mrf.mxu0
        %v4274 = vpop.f32.mrf.mxu0
        %v4275 = vadd.f32 0.0, %v4274
        %v4276 = vpop.f32.mrf.mxu0
        %4277 = vmatprep.mubr.bf16.mxu0 0
        %4278 = vmatmul.mubr.bf16.gmra.mxu0 %v4168
        %v4279 = vpop.f32.mrf.mxu0
        %v4280 = vadd.f32 0.0, %v4279
        %v4281 = vpop.f32.mrf.mxu0
        %v4282 = vpop.f32.mrf.mxu0
        %v4283 = vadd.f32 0.0, %v4282
        %v4284 = vpop.f32.mrf.mxu0
        %4285 = vmatprep.mubr.bf16.mxu0 0
        %4286 = vmatmul.mubr.bf16.gmra.mxu0 %v4171
        %v4287 = vpop.f32.mrf.mxu0
        %v4288 = vadd.f32 0.0, %v4287
        %v4289 = vpop.f32.mrf.mxu0
        %v4290 = vpop.f32.mrf.mxu0
        %v4291 = vadd.f32 0.0, %v4290
        %v4292 = vpop.f32.mrf.mxu0
        %4293 = vmatprep.mubr.bf16.mxu0 0
        %4294 = vmatmul.mubr.bf16.gmra.mxu0 %v4174
        %v4295 = vpop.f32.mrf.mxu0
        %v4296 = vadd.f32 0.0, %v4295
        %v4297 = vpop.f32.mrf.mxu0
        %v4298 = vpop.f32.mrf.mxu0
        %v4299 = vadd.f32 0.0, %v4298
        %v4300 = vpop.f32.mrf.mxu0
        %4301 = vmatprep.mubr.bf16.mxu0 0
        %4302 = vmatmul.mubr.bf16.gmra.mxu0 %v4177
        %v4303 = vpop.f32.mrf.mxu0
        %v4304 = vadd.f32 0.0, %v4303
        %v4305 = vpop.f32.mrf.mxu0
        %v4306 = vpop.f32.mrf.mxu0
        %v4307 = vadd.f32 0.0, %v4306
        %v4308 = vpop.f32.mrf.mxu0
        %4309 = vmatprep.mubr.bf16.mxu0 0
        %4310 = vmatmul.mubr.bf16.gmra.mxu0 %v4180
        %v4311 = vpop.f32.mrf.mxu0
        %v4312 = vadd.f32 0.0, %v4311
        %v4313 = vpop.f32.mrf.mxu0
        %v4314 = vpop.f32.mrf.mxu0
        %v4315 = vadd.f32 0.0, %v4314
        %v4316 = vpop.f32.mrf.mxu0
        %4317 = vmatprep.mubr.bf16.mxu0 0
        %4318 = vmatmul.mubr.bf16.gmra.mxu0 %v4183
        %v4319 = vpop.f32.mrf.mxu0
        %v4320 = vadd.f32 0.0, %v4319
        %v4321 = vpop.f32.mrf.mxu0
        %v4322 = vpop.f32.mrf.mxu0
        %v4323 = vadd.f32 0.0, %v4322
        %v4324 = vpop.f32.mrf.mxu0
        %4325 = vmatprep.mubr.bf16.mxu0 0
        %4326 = vmatmul.mubr.bf16.gmra.mxu0 %v4186
        %v4327 = vpop.f32.mrf.mxu0
        %v4328 = vadd.f32 0.0, %v4327
        %v4329 = vpop.f32.mrf.mxu0
        %v4330 = vpop.f32.mrf.mxu0
        %v4331 = vadd.f32 0.0, %v4330
        %v4332 = vpop.f32.mrf.mxu0
        %4333 = vmatprep.mubr.bf16.mxu0 0
        %4334 = vmatmul.mubr.bf16.gmra.mxu0 %v4189
        %v4335 = vpop.f32.mrf.mxu0
        %v4336 = vadd.f32 0.0, %v4335
        %v4337 = vpop.f32.mrf.mxu0
        %v4338 = vpop.f32.mrf.mxu0
        %v4339 = vadd.f32 0.0, %v4338
        %v4340 = vpop.f32.mrf.mxu0
        %4341 = vmatprep.mubr.bf16.mxu0 0
        %4342 = vmatmul.mubr.bf16.gmra.mxu0 %v4192
        %v4343 = vpop.f32.mrf.mxu0
        %v4344 = vadd.f32 0.0, %v4343
        %v4345 = vpop.f32.mrf.mxu0
        %v4346 = vpop.f32.mrf.mxu0
        %v4347 = vadd.f32 0.0, %v4346
        %v4348 = vpop.f32.mrf.mxu0
        %4349 = vmatprep.mubr.bf16.mxu0 0
        %4350 = vmatmul.mubr.bf16.gmra.mxu0 %v4195
        %v4351 = vpop.f32.mrf.mxu0
        %v4352 = vadd.f32 0.0, %v4351
        %v4353 = vpop.f32.mrf.mxu0
        %v4354 = vpop.f32.mrf.mxu0
        %v4355 = vadd.f32 0.0, %v4354
        %v4356 = vpop.f32.mrf.mxu0
        %4357 = vdwg.mxu0
        %v4358 = vadd.f32 %v4052, %v4232
        %v4359 = vadd.f32 %v4053, %v4235
        %v4360 = vadd.f32 %v4054, %v4240
        %v4361 = vadd.f32 %v4055, %v4243
        %v4362 = vadd.f32 %v4056, %v4248
        %v4363 = vadd.f32 %v4057, %v4251
        %v4364 = vadd.f32 %v4058, %v4256
        %v4365 = vadd.f32 %v4059, %v4259
        %v4366 = vadd.f32 %v4060, %v4264
        %v4367 = vadd.f32 %v4061, %v4267
        %v4368 = vadd.f32 %v4062, %v4272
        %v4369 = vadd.f32 %v4063, %v4275
        %v4370 = vadd.f32 %v4064, %v4280
        %v4371 = vadd.f32 %v4065, %v4283
        %v4372 = vadd.f32 %v4066, %v4288
        %v4373 = vadd.f32 %v4067, %v4291
        %v4374 = vadd.f32 %v4068, %v4296
        %v4375 = vadd.f32 %v4069, %v4299
        %v4376 = vadd.f32 %v4070, %v4304
        %v4377 = vadd.f32 %v4071, %v4307
        %v4378 = vadd.f32 %v4072, %v4312
        %v4379 = vadd.f32 %v4073, %v4315
        %v4380 = vadd.f32 %v4074, %v4320
        %v4381 = vadd.f32 %v4075, %v4323
        %v4382 = vadd.f32 %v4076, %v4328
        %v4383 = vadd.f32 %v4077, %v4331
        %v4384 = vadd.f32 %v4078, %v4336
        %v4385 = vadd.f32 %v4079, %v4339
        %v4386 = vadd.f32 %v4080, %v4344
        %v4387 = vadd.f32 %v4081, %v4347
        %v4388 = vadd.f32 %v4082, %v4352
        %v4389 = vadd.f32 %v4083, %v4355
        %v4390 = vld [vmem:[%s747] sm:$0xff]
        %v4391 = vld [vmem:[%s747 + $0x10] sm:$0xff]
        %v4392 = vld [vmem:[%s747 + $0x20] sm:$0xff]
        %v4393 = vld [vmem:[%s747 + $0x30] sm:$0xff]
        %v4394 = vld [vmem:[%s747 + $0x40] sm:$0xff]
        %v4395 = vld [vmem:[%s747 + $0x50] sm:$0xff]
        %v4396 = vld [vmem:[%s747 + $0x60] sm:$0xff]
        %v4397 = vld [vmem:[%s747 + $0x70] sm:$0xff]
        %v4398 = vld [vmem:[%s747 + $0xa0] sm:$0xff]
        %v4399 = vld [vmem:[%s747 + $0xb0] sm:$0xff]
        %v4400 = vld [vmem:[%s747 + $0xc0] sm:$0xff]
        %v4401 = vld [vmem:[%s747 + $0xd0] sm:$0xff]
        %v4402 = vld [vmem:[%s747 + $0xe0] sm:$0xff]
        %v4403 = vld [vmem:[%s747 + $0xf0] sm:$0xff]
        %v4404 = vld [vmem:[%s747 + $0x100] sm:$0xff]
        %v4405 = vld [vmem:[%s747 + $0x110] sm:$0xff]
        %v4406 = vld [vmem:[%s747 + $0x140] sm:$0xff]
        %v4407 = vld [vmem:[%s747 + $0x150] sm:$0xff]
        %v4408 = vld [vmem:[%s747 + $0x160] sm:$0xff]
        %v4409 = vld [vmem:[%s747 + $0x170] sm:$0xff]
        %v4410 = vld [vmem:[%s747 + $0x180] sm:$0xff]
        %v4411 = vld [vmem:[%s747 + $0x190] sm:$0xff]
        %v4412 = vld [vmem:[%s747 + $0x1a0] sm:$0xff]
        %v4413 = vld [vmem:[%s747 + $0x1b0] sm:$0xff]
        %v4414 = vld [vmem:[%s747 + $0x1e0] sm:$0xff]
        %v4415 = vld [vmem:[%s747 + $0x1f0] sm:$0xff]
        %v4416 = vld [vmem:[%s747 + $0x200] sm:$0xff]
        %v4417 = vld [vmem:[%s747 + $0x210] sm:$0xff]
        %v4418 = vld [vmem:[%s747 + $0x220] sm:$0xff]
        %v4419 = vld [vmem:[%s747 + $0x230] sm:$0xff]
        %v4420 = vld [vmem:[%s747 + $0x240] sm:$0xff]
        %v4421 = vld [vmem:[%s747 + $0x250] sm:$0xff]
        %v4422 = vpack.c.bf16 %v4391, %v4390
        %v4423 = vpack.c.bf16 %v4393, %v4392
        %v4424 = vpack.c.bf16 %v4395, %v4394
        %v4425 = vpack.c.bf16 %v4397, %v4396
        %v4426 = vpack.c.bf16 %v4399, %v4398
        %v4427 = vpack.c.bf16 %v4401, %v4400
        %v4428 = vpack.c.bf16 %v4403, %v4402
        %v4429 = vpack.c.bf16 %v4405, %v4404
        %v4430 = vpack.c.bf16 %v4407, %v4406
        %v4431 = vpack.c.bf16 %v4409, %v4408
        %v4432 = vpack.c.bf16 %v4411, %v4410
        %v4433 = vpack.c.bf16 %v4413, %v4412
        %v4434 = vpack.c.bf16 %v4415, %v4414
        %v4435 = vpack.c.bf16 %v4417, %v4416
        %v4436 = vpack.c.bf16 %v4419, %v4418
        %v4437 = vpack.c.bf16 %v4421, %v4420
        %s4438 = scalar_lea.vmem [#allocation6], 192
        %v4439 = vld [vmem:[%s4438] sm:$0xf]
        %v4440 = vld [vmem:[%s4438 + $0x4] sm:$0xf]
        %v4441 = vld [vmem:[%s4438 + $0x8] sm:$0xf]
        %v4442 = vld [vmem:[%s4438 + $0xc] sm:$0xf]
        %v4447 = vunpack.c.l.b16 %v4439
        %v4448 = vunpack.c.l.b16 %v4440
        %v4449 = vunpack.c.l.b16 %v4441
        %v4450 = vunpack.c.l.b16 %v4442
        %v4451 = vpack.c.b16 %v4448, %v4447
        %v4452 = vpack.c.b16 %v4450, %v4449
        %v4456 = vsel %vm625, %v4422, 0
        %v4459 = vsel %vm625, %v4423, 0
        %v4462 = vsel %vm625, %v4424, 0
        %v4465 = vsel %vm625, %v4425, 0
        %v4468 = vsel %vm625, %v4426, 0
        %v4471 = vsel %vm625, %v4427, 0
        %v4474 = vsel %vm625, %v4428, 0
        %v4477 = vsel %vm625, %v4429, 0
        %v4480 = vsel %vm625, %v4430, 0
        %v4483 = vsel %vm625, %v4431, 0
        %v4486 = vsel %vm625, %v4432, 0
        %v4489 = vsel %vm625, %v4433, 0
        %v4492 = vsel %vm625, %v4434, 0
        %v4495 = vsel %vm625, %v4435, 0
        %v4498 = vsel %vm625, %v4436, 0
        %v4501 = vsel %vm625, %v4437, 0
        %4503 = vmatprep.subr.bf16.mxu0 0
        %4504 = vmatpush1.bf16.msra.mxu0 0
        %4505 = vmatprep.subr.bf16.mxu0 0
        %4506 = vmatpush1.bf16.msra.mxu0 0
        %4507 = vmatprep.subr.bf16.mxu0 0
        %4508 = vmatpush1.bf16.msra.mxu0 0
        %4509 = vmatprep.subr.bf16.mxu0 0
        %4510 = vmatpush1.bf16.msra.mxu0 0
        %4511 = vmatprep.subr.bf16.mxu0 0
        %4512 = vmatpush1.bf16.msra.mxu0 0
        %4513 = vmatprep.subr.bf16.mxu0 0
        %4514 = vmatpush1.bf16.msra.mxu0 0
        %4515 = vmatprep.subr.bf16.mxu0 0
        %4516 = vmatpush1.bf16.msra.mxu0 %v4452
        %4517 = vmatprep.subr.bf16.mxu0 0
        %4518 = vmatpush1.bf16.msra.mxu0 %v4451
        %4519 = vmatprep.subr.bf16.mxu0 0
        %4520 = vmatpush2.bf16.msra.mxu0 0
        %4521 = vmatprep.subr.bf16.mxu0 0
        %4522 = vmatpush2.bf16.msra.mxu0 0
        %4523 = vmatprep.subr.bf16.mxu0 0
        %4524 = vmatpush2.bf16.msra.mxu0 0
        %4525 = vmatprep.subr.bf16.mxu0 0
        %4526 = vmatpush2.bf16.msra.mxu0 0
        %4527 = vmatprep.subr.bf16.mxu0 0
        %4528 = vmatpush2.bf16.msra.mxu0 0
        %4529 = vmatprep.subr.bf16.mxu0 0
        %4530 = vmatpush2.bf16.msra.mxu0 0
        %4531 = vmatprep.subr.bf16.mxu0 0
        %4532 = vmatpush2.bf16.msra.mxu0 0
        %4533 = vmatprep.subr.bf16.mxu0 0
        %4534 = vmatpush2.bf16.msra.mxu0 0
        %4535 = vmatprep.mubr.bf16.mxu0 0
        %4536 = vmatmul.mubr.bf16.gmra.mxu0 %v4456
        %v4537 = vpop.f32.mrf.mxu0
        %v4538 = vadd.f32 0.0, %v4537
        %v4539 = vpop.f32.mrf.mxu0
        %v4540 = vpop.f32.mrf.mxu0
        %v4541 = vadd.f32 0.0, %v4540
        %v4542 = vpop.f32.mrf.mxu0
        %4543 = vmatprep.mubr.bf16.mxu0 0
        %4544 = vmatmul.mubr.bf16.gmra.mxu0 %v4459
        %v4545 = vpop.f32.mrf.mxu0
        %v4546 = vadd.f32 0.0, %v4545
        %v4547 = vpop.f32.mrf.mxu0
        %v4548 = vpop.f32.mrf.mxu0
        %v4549 = vadd.f32 0.0, %v4548
        %v4550 = vpop.f32.mrf.mxu0
        %4551 = vmatprep.mubr.bf16.mxu0 0
        %4552 = vmatmul.mubr.bf16.gmra.mxu0 %v4462
        %v4553 = vpop.f32.mrf.mxu0
        %v4554 = vadd.f32 0.0, %v4553
        %v4555 = vpop.f32.mrf.mxu0
        %v4556 = vpop.f32.mrf.mxu0
        %v4557 = vadd.f32 0.0, %v4556
        %v4558 = vpop.f32.mrf.mxu0
        %4559 = vmatprep.mubr.bf16.mxu0 0
        %4560 = vmatmul.mubr.bf16.gmra.mxu0 %v4465
        %v4561 = vpop.f32.mrf.mxu0
        %v4562 = vadd.f32 0.0, %v4561
        %v4563 = vpop.f32.mrf.mxu0
        %v4564 = vpop.f32.mrf.mxu0
        %v4565 = vadd.f32 0.0, %v4564
        %v4566 = vpop.f32.mrf.mxu0
        %4567 = vmatprep.mubr.bf16.mxu0 0
        %4568 = vmatmul.mubr.bf16.gmra.mxu0 %v4468
        %v4569 = vpop.f32.mrf.mxu0
        %v4570 = vadd.f32 0.0, %v4569
        %v4571 = vpop.f32.mrf.mxu0
        %v4572 = vpop.f32.mrf.mxu0
        %v4573 = vadd.f32 0.0, %v4572
        %v4574 = vpop.f32.mrf.mxu0
        %4575 = vmatprep.mubr.bf16.mxu0 0
        %4576 = vmatmul.mubr.bf16.gmra.mxu0 %v4471
        %v4577 = vpop.f32.mrf.mxu0
        %v4578 = vadd.f32 0.0, %v4577
        %v4579 = vpop.f32.mrf.mxu0
        %v4580 = vpop.f32.mrf.mxu0
        %v4581 = vadd.f32 0.0, %v4580
        %v4582 = vpop.f32.mrf.mxu0
        %4583 = vmatprep.mubr.bf16.mxu0 0
        %4584 = vmatmul.mubr.bf16.gmra.mxu0 %v4474
        %v4585 = vpop.f32.mrf.mxu0
        %v4586 = vadd.f32 0.0, %v4585
        %v4587 = vpop.f32.mrf.mxu0
        %v4588 = vpop.f32.mrf.mxu0
        %v4589 = vadd.f32 0.0, %v4588
        %v4590 = vpop.f32.mrf.mxu0
        %4591 = vmatprep.mubr.bf16.mxu0 0
        %4592 = vmatmul.mubr.bf16.gmra.mxu0 %v4477
        %v4593 = vpop.f32.mrf.mxu0
        %v4594 = vadd.f32 0.0, %v4593
        %v4595 = vpop.f32.mrf.mxu0
        %v4596 = vpop.f32.mrf.mxu0
        %v4597 = vadd.f32 0.0, %v4596
        %v4598 = vpop.f32.mrf.mxu0
        %4599 = vmatprep.mubr.bf16.mxu0 0
        %4600 = vmatmul.mubr.bf16.gmra.mxu0 %v4480
        %v4601 = vpop.f32.mrf.mxu0
        %v4602 = vadd.f32 0.0, %v4601
        %v4603 = vpop.f32.mrf.mxu0
        %v4604 = vpop.f32.mrf.mxu0
        %v4605 = vadd.f32 0.0, %v4604
        %v4606 = vpop.f32.mrf.mxu0
        %4607 = vmatprep.mubr.bf16.mxu0 0
        %4608 = vmatmul.mubr.bf16.gmra.mxu0 %v4483
        %v4609 = vpop.f32.mrf.mxu0
        %v4610 = vadd.f32 0.0, %v4609
        %v4611 = vpop.f32.mrf.mxu0
        %v4612 = vpop.f32.mrf.mxu0
        %v4613 = vadd.f32 0.0, %v4612
        %v4614 = vpop.f32.mrf.mxu0
        %4615 = vmatprep.mubr.bf16.mxu0 0
        %4616 = vmatmul.mubr.bf16.gmra.mxu0 %v4486
        %v4617 = vpop.f32.mrf.mxu0
        %v4618 = vadd.f32 0.0, %v4617
        %v4619 = vpop.f32.mrf.mxu0
        %v4620 = vpop.f32.mrf.mxu0
        %v4621 = vadd.f32 0.0, %v4620
        %v4622 = vpop.f32.mrf.mxu0
        %4623 = vmatprep.mubr.bf16.mxu0 0
        %4624 = vmatmul.mubr.bf16.gmra.mxu0 %v4489
        %v4625 = vpop.f32.mrf.mxu0
        %v4626 = vadd.f32 0.0, %v4625
        %v4627 = vpop.f32.mrf.mxu0
        %v4628 = vpop.f32.mrf.mxu0
        %v4629 = vadd.f32 0.0, %v4628
        %v4630 = vpop.f32.mrf.mxu0
        %4631 = vmatprep.mubr.bf16.mxu0 0
        %4632 = vmatmul.mubr.bf16.gmra.mxu0 %v4492
        %v4633 = vpop.f32.mrf.mxu0
        %v4634 = vadd.f32 0.0, %v4633
        %v4635 = vpop.f32.mrf.mxu0
        %v4636 = vpop.f32.mrf.mxu0
        %v4637 = vadd.f32 0.0, %v4636
        %v4638 = vpop.f32.mrf.mxu0
        %4639 = vmatprep.mubr.bf16.mxu0 0
        %4640 = vmatmul.mubr.bf16.gmra.mxu0 %v4495
        %v4641 = vpop.f32.mrf.mxu0
        %v4642 = vadd.f32 0.0, %v4641
        %v4643 = vpop.f32.mrf.mxu0
        %v4644 = vpop.f32.mrf.mxu0
        %v4645 = vadd.f32 0.0, %v4644
        %v4646 = vpop.f32.mrf.mxu0
        %4647 = vmatprep.mubr.bf16.mxu0 0
        %4648 = vmatmul.mubr.bf16.gmra.mxu0 %v4498
        %v4649 = vpop.f32.mrf.mxu0
        %v4650 = vadd.f32 0.0, %v4649
        %v4651 = vpop.f32.mrf.mxu0
        %v4652 = vpop.f32.mrf.mxu0
        %v4653 = vadd.f32 0.0, %v4652
        %v4654 = vpop.f32.mrf.mxu0
        %4655 = vmatprep.mubr.bf16.mxu0 0
        %4656 = vmatmul.mubr.bf16.gmra.mxu0 %v4501
        %v4657 = vpop.f32.mrf.mxu0
        %v4658 = vadd.f32 0.0, %v4657
        %v4659 = vpop.f32.mrf.mxu0
        %v4660 = vpop.f32.mrf.mxu0
        %v4661 = vadd.f32 0.0, %v4660
        %v4662 = vpop.f32.mrf.mxu0
        %4663 = vdwg.mxu0
        %v4664 = vadd.f32 %v4358, %v4538
        %v4665 = vadd.f32 %v4359, %v4541
        %v4666 = vadd.f32 %v4360, %v4546
        %v4667 = vadd.f32 %v4361, %v4549
        %v4668 = vadd.f32 %v4362, %v4554
        %v4669 = vadd.f32 %v4363, %v4557
        %v4670 = vadd.f32 %v4364, %v4562
        %v4671 = vadd.f32 %v4365, %v4565
        %v4672 = vadd.f32 %v4366, %v4570
        %v4673 = vadd.f32 %v4367, %v4573
        %v4674 = vadd.f32 %v4368, %v4578
        %v4675 = vadd.f32 %v4369, %v4581
        %v4676 = vadd.f32 %v4370, %v4586
        %v4677 = vadd.f32 %v4371, %v4589
        %v4678 = vadd.f32 %v4372, %v4594
        %v4679 = vadd.f32 %v4373, %v4597
        %v4680 = vadd.f32 %v4374, %v4602
        %v4681 = vadd.f32 %v4375, %v4605
        %v4682 = vadd.f32 %v4376, %v4610
        %v4683 = vadd.f32 %v4377, %v4613
        %v4684 = vadd.f32 %v4378, %v4618
        %v4685 = vadd.f32 %v4379, %v4621
        %v4686 = vadd.f32 %v4380, %v4626
        %v4687 = vadd.f32 %v4381, %v4629
        %v4688 = vadd.f32 %v4382, %v4634
        %v4689 = vadd.f32 %v4383, %v4637
        %v4690 = vadd.f32 %v4384, %v4642
        %v4691 = vadd.f32 %v4385, %v4645
        %v4692 = vadd.f32 %v4386, %v4650
        %v4693 = vadd.f32 %v4387, %v4653
        %v4694 = vadd.f32 %v4388, %v4658
        %v4695 = vadd.f32 %v4389, %v4661
        %v4696 = vld [vmem:[%s747 + $0x1] sm:$0xff]
        %v4697 = vld [vmem:[%s747 + $0x11] sm:$0xff]
        %v4698 = vld [vmem:[%s747 + $0x21] sm:$0xff]
        %v4699 = vld [vmem:[%s747 + $0x31] sm:$0xff]
        %v4700 = vld [vmem:[%s747 + $0x41] sm:$0xff]
        %v4701 = vld [vmem:[%s747 + $0x51] sm:$0xff]
        %v4702 = vld [vmem:[%s747 + $0x61] sm:$0xff]
        %v4703 = vld [vmem:[%s747 + $0x71] sm:$0xff]
        %v4704 = vld [vmem:[%s747 + $0xa1] sm:$0xff]
        %v4705 = vld [vmem:[%s747 + $0xb1] sm:$0xff]
        %v4706 = vld [vmem:[%s747 + $0xc1] sm:$0xff]
        %v4707 = vld [vmem:[%s747 + $0xd1] sm:$0xff]
        %v4708 = vld [vmem:[%s747 + $0xe1] sm:$0xff]
        %v4709 = vld [vmem:[%s747 + $0xf1] sm:$0xff]
        %v4710 = vld [vmem:[%s747 + $0x101] sm:$0xff]
        %v4711 = vld [vmem:[%s747 + $0x111] sm:$0xff]
        %v4712 = vld [vmem:[%s747 + $0x141] sm:$0xff]
        %v4713 = vld [vmem:[%s747 + $0x151] sm:$0xff]
        %v4714 = vld [vmem:[%s747 + $0x161] sm:$0xff]
        %v4715 = vld [vmem:[%s747 + $0x171] sm:$0xff]
        %v4716 = vld [vmem:[%s747 + $0x181] sm:$0xff]
        %v4717 = vld [vmem:[%s747 + $0x191] sm:$0xff]
        %v4718 = vld [vmem:[%s747 + $0x1a1] sm:$0xff]
        %v4719 = vld [vmem:[%s747 + $0x1b1] sm:$0xff]
        %v4720 = vld [vmem:[%s747 + $0x1e1] sm:$0xff]
        %v4721 = vld [vmem:[%s747 + $0x1f1] sm:$0xff]
        %v4722 = vld [vmem:[%s747 + $0x201] sm:$0xff]
        %v4723 = vld [vmem:[%s747 + $0x211] sm:$0xff]
        %v4724 = vld [vmem:[%s747 + $0x221] sm:$0xff]
        %v4725 = vld [vmem:[%s747 + $0x231] sm:$0xff]
        %v4726 = vld [vmem:[%s747 + $0x241] sm:$0xff]
        %v4727 = vld [vmem:[%s747 + $0x251] sm:$0xff]
        %v4728 = vpack.c.bf16 %v4697, %v4696
        %v4729 = vpack.c.bf16 %v4699, %v4698
        %v4730 = vpack.c.bf16 %v4701, %v4700
        %v4731 = vpack.c.bf16 %v4703, %v4702
        %v4732 = vpack.c.bf16 %v4705, %v4704
        %v4733 = vpack.c.bf16 %v4707, %v4706
        %v4734 = vpack.c.bf16 %v4709, %v4708
        %v4735 = vpack.c.bf16 %v4711, %v4710
        %v4736 = vpack.c.bf16 %v4713, %v4712
        %v4737 = vpack.c.bf16 %v4715, %v4714
        %v4738 = vpack.c.bf16 %v4717, %v4716
        %v4739 = vpack.c.bf16 %v4719, %v4718
        %v4740 = vpack.c.bf16 %v4721, %v4720
        %v4741 = vpack.c.bf16 %v4723, %v4722
        %v4742 = vpack.c.bf16 %v4725, %v4724
        %v4743 = vpack.c.bf16 %v4727, %v4726
        %s4744 = scalar_lea.vmem [#allocation6], 208
        %v4745 = vld [vmem:[%s4744] sm:$0xf]
        %v4746 = vld [vmem:[%s4744 + $0x4] sm:$0xf]
        %v4747 = vld [vmem:[%s4744 + $0x8] sm:$0xf]
        %v4748 = vld [vmem:[%s4744 + $0xc] sm:$0xf]
        %v4753 = vunpack.c.l.b16 %v4745
        %v4754 = vunpack.c.l.b16 %v4746
        %v4755 = vunpack.c.l.b16 %v4747
        %v4756 = vunpack.c.l.b16 %v4748
        %v4757 = vpack.c.b16 %v4754, %v4753
        %v4758 = vpack.c.b16 %v4756, %v4755
        %v4762 = vsel %vm625, %v4728, 0
        %v4765 = vsel %vm625, %v4729, 0
        %v4768 = vsel %vm625, %v4730, 0
        %v4771 = vsel %vm625, %v4731, 0
        %v4774 = vsel %vm625, %v4732, 0
        %v4777 = vsel %vm625, %v4733, 0
        %v4780 = vsel %vm625, %v4734, 0
        %v4783 = vsel %vm625, %v4735, 0
        %v4786 = vsel %vm625, %v4736, 0
        %v4789 = vsel %vm625, %v4737, 0
        %v4792 = vsel %vm625, %v4738, 0
        %v4795 = vsel %vm625, %v4739, 0
        %v4798 = vsel %vm625, %v4740, 0
        %v4801 = vsel %vm625, %v4741, 0
        %v4804 = vsel %vm625, %v4742, 0
        %v4807 = vsel %vm625, %v4743, 0
        %4809 = vmatprep.subr.bf16.mxu0 0
        %4810 = vmatpush1.bf16.msra.mxu0 0
        %4811 = vmatprep.subr.bf16.mxu0 0
        %4812 = vmatpush1.bf16.msra.mxu0 0
        %4813 = vmatprep.subr.bf16.mxu0 0
        %4814 = vmatpush1.bf16.msra.mxu0 0
        %4815 = vmatprep.subr.bf16.mxu0 0
        %4816 = vmatpush1.bf16.msra.mxu0 0
        %4817 = vmatprep.subr.bf16.mxu0 0
        %4818 = vmatpush1.bf16.msra.mxu0 0
        %4819 = vmatprep.subr.bf16.mxu0 0
        %4820 = vmatpush1.bf16.msra.mxu0 0
        %4821 = vmatprep.subr.bf16.mxu0 0
        %4822 = vmatpush1.bf16.msra.mxu0 %v4758
        %4823 = vmatprep.subr.bf16.mxu0 0
        %4824 = vmatpush1.bf16.msra.mxu0 %v4757
        %4825 = vmatprep.subr.bf16.mxu0 0
        %4826 = vmatpush2.bf16.msra.mxu0 0
        %4827 = vmatprep.subr.bf16.mxu0 0
        %4828 = vmatpush2.bf16.msra.mxu0 0
        %4829 = vmatprep.subr.bf16.mxu0 0
        %4830 = vmatpush2.bf16.msra.mxu0 0
        %4831 = vmatprep.subr.bf16.mxu0 0
        %4832 = vmatpush2.bf16.msra.mxu0 0
        %4833 = vmatprep.subr.bf16.mxu0 0
        %4834 = vmatpush2.bf16.msra.mxu0 0
        %4835 = vmatprep.subr.bf16.mxu0 0
        %4836 = vmatpush2.bf16.msra.mxu0 0
        %4837 = vmatprep.subr.bf16.mxu0 0
        %4838 = vmatpush2.bf16.msra.mxu0 0
        %4839 = vmatprep.subr.bf16.mxu0 0
        %4840 = vmatpush2.bf16.msra.mxu0 0
        %4841 = vmatprep.mubr.bf16.mxu0 0
        %4842 = vmatmul.mubr.bf16.gmra.mxu0 %v4762
        %v4843 = vpop.f32.mrf.mxu0
        %v4844 = vadd.f32 0.0, %v4843
        %v4845 = vpop.f32.mrf.mxu0
        %v4846 = vpop.f32.mrf.mxu0
        %v4847 = vadd.f32 0.0, %v4846
        %v4848 = vpop.f32.mrf.mxu0
        %4849 = vmatprep.mubr.bf16.mxu0 0
        %4850 = vmatmul.mubr.bf16.gmra.mxu0 %v4765
        %v4851 = vpop.f32.mrf.mxu0
        %v4852 = vadd.f32 0.0, %v4851
        %v4853 = vpop.f32.mrf.mxu0
        %v4854 = vpop.f32.mrf.mxu0
        %v4855 = vadd.f32 0.0, %v4854
        %v4856 = vpop.f32.mrf.mxu0
        %4857 = vmatprep.mubr.bf16.mxu0 0
        %4858 = vmatmul.mubr.bf16.gmra.mxu0 %v4768
        %v4859 = vpop.f32.mrf.mxu0
        %v4860 = vadd.f32 0.0, %v4859
        %v4861 = vpop.f32.mrf.mxu0
        %v4862 = vpop.f32.mrf.mxu0
        %v4863 = vadd.f32 0.0, %v4862
        %v4864 = vpop.f32.mrf.mxu0
        %4865 = vmatprep.mubr.bf16.mxu0 0
        %4866 = vmatmul.mubr.bf16.gmra.mxu0 %v4771
        %v4867 = vpop.f32.mrf.mxu0
        %v4868 = vadd.f32 0.0, %v4867
        %v4869 = vpop.f32.mrf.mxu0
        %v4870 = vpop.f32.mrf.mxu0
        %v4871 = vadd.f32 0.0, %v4870
        %v4872 = vpop.f32.mrf.mxu0
        %4873 = vmatprep.mubr.bf16.mxu0 0
        %4874 = vmatmul.mubr.bf16.gmra.mxu0 %v4774
        %v4875 = vpop.f32.mrf.mxu0
        %v4876 = vadd.f32 0.0, %v4875
        %v4877 = vpop.f32.mrf.mxu0
        %v4878 = vpop.f32.mrf.mxu0
        %v4879 = vadd.f32 0.0, %v4878
        %v4880 = vpop.f32.mrf.mxu0
        %4881 = vmatprep.mubr.bf16.mxu0 0
        %4882 = vmatmul.mubr.bf16.gmra.mxu0 %v4777
        %v4883 = vpop.f32.mrf.mxu0
        %v4884 = vadd.f32 0.0, %v4883
        %v4885 = vpop.f32.mrf.mxu0
        %v4886 = vpop.f32.mrf.mxu0
        %v4887 = vadd.f32 0.0, %v4886
        %v4888 = vpop.f32.mrf.mxu0
        %4889 = vmatprep.mubr.bf16.mxu0 0
        %4890 = vmatmul.mubr.bf16.gmra.mxu0 %v4780
        %v4891 = vpop.f32.mrf.mxu0
        %v4892 = vadd.f32 0.0, %v4891
        %v4893 = vpop.f32.mrf.mxu0
        %v4894 = vpop.f32.mrf.mxu0
        %v4895 = vadd.f32 0.0, %v4894
        %v4896 = vpop.f32.mrf.mxu0
        %4897 = vmatprep.mubr.bf16.mxu0 0
        %4898 = vmatmul.mubr.bf16.gmra.mxu0 %v4783
        %v4899 = vpop.f32.mrf.mxu0
        %v4900 = vadd.f32 0.0, %v4899
        %v4901 = vpop.f32.mrf.mxu0
        %v4902 = vpop.f32.mrf.mxu0
        %v4903 = vadd.f32 0.0, %v4902
        %v4904 = vpop.f32.mrf.mxu0
        %4905 = vmatprep.mubr.bf16.mxu0 0
        %4906 = vmatmul.mubr.bf16.gmra.mxu0 %v4786
        %v4907 = vpop.f32.mrf.mxu0
        %v4908 = vadd.f32 0.0, %v4907
        %v4909 = vpop.f32.mrf.mxu0
        %v4910 = vpop.f32.mrf.mxu0
        %v4911 = vadd.f32 0.0, %v4910
        %v4912 = vpop.f32.mrf.mxu0
        %4913 = vmatprep.mubr.bf16.mxu0 0
        %4914 = vmatmul.mubr.bf16.gmra.mxu0 %v4789
        %v4915 = vpop.f32.mrf.mxu0
        %v4916 = vadd.f32 0.0, %v4915
        %v4917 = vpop.f32.mrf.mxu0
        %v4918 = vpop.f32.mrf.mxu0
        %v4919 = vadd.f32 0.0, %v4918
        %v4920 = vpop.f32.mrf.mxu0
        %4921 = vmatprep.mubr.bf16.mxu0 0
        %4922 = vmatmul.mubr.bf16.gmra.mxu0 %v4792
        %v4923 = vpop.f32.mrf.mxu0
        %v4924 = vadd.f32 0.0, %v4923
        %v4925 = vpop.f32.mrf.mxu0
        %v4926 = vpop.f32.mrf.mxu0
        %v4927 = vadd.f32 0.0, %v4926
        %v4928 = vpop.f32.mrf.mxu0
        %4929 = vmatprep.mubr.bf16.mxu0 0
        %4930 = vmatmul.mubr.bf16.gmra.mxu0 %v4795
        %v4931 = vpop.f32.mrf.mxu0
        %v4932 = vadd.f32 0.0, %v4931
        %v4933 = vpop.f32.mrf.mxu0
        %v4934 = vpop.f32.mrf.mxu0
        %v4935 = vadd.f32 0.0, %v4934
        %v4936 = vpop.f32.mrf.mxu0
        %4937 = vmatprep.mubr.bf16.mxu0 0
        %4938 = vmatmul.mubr.bf16.gmra.mxu0 %v4798
        %v4939 = vpop.f32.mrf.mxu0
        %v4940 = vadd.f32 0.0, %v4939
        %v4941 = vpop.f32.mrf.mxu0
        %v4942 = vpop.f32.mrf.mxu0
        %v4943 = vadd.f32 0.0, %v4942
        %v4944 = vpop.f32.mrf.mxu0
        %4945 = vmatprep.mubr.bf16.mxu0 0
        %4946 = vmatmul.mubr.bf16.gmra.mxu0 %v4801
        %v4947 = vpop.f32.mrf.mxu0
        %v4948 = vadd.f32 0.0, %v4947
        %v4949 = vpop.f32.mrf.mxu0
        %v4950 = vpop.f32.mrf.mxu0
        %v4951 = vadd.f32 0.0, %v4950
        %v4952 = vpop.f32.mrf.mxu0
        %4953 = vmatprep.mubr.bf16.mxu0 0
        %4954 = vmatmul.mubr.bf16.gmra.mxu0 %v4804
        %v4955 = vpop.f32.mrf.mxu0
        %v4956 = vadd.f32 0.0, %v4955
        %v4957 = vpop.f32.mrf.mxu0
        %v4958 = vpop.f32.mrf.mxu0
        %v4959 = vadd.f32 0.0, %v4958
        %v4960 = vpop.f32.mrf.mxu0
        %4961 = vmatprep.mubr.bf16.mxu0 0
        %4962 = vmatmul.mubr.bf16.gmra.mxu0 %v4807
        %v4963 = vpop.f32.mrf.mxu0
        %v4964 = vadd.f32 0.0, %v4963
        %v4965 = vpop.f32.mrf.mxu0
        %v4966 = vpop.f32.mrf.mxu0
        %v4967 = vadd.f32 0.0, %v4966
        %v4968 = vpop.f32.mrf.mxu0
        %4969 = vdwg.mxu0
        %v4970 = vadd.f32 %v4664, %v4844
        %v4971 = vadd.f32 %v4665, %v4847
        %v4972 = vadd.f32 %v4666, %v4852
        %v4973 = vadd.f32 %v4667, %v4855
        %v4974 = vadd.f32 %v4668, %v4860
        %v4975 = vadd.f32 %v4669, %v4863
        %v4976 = vadd.f32 %v4670, %v4868
        %v4977 = vadd.f32 %v4671, %v4871
        %v4978 = vadd.f32 %v4672, %v4876
        %v4979 = vadd.f32 %v4673, %v4879
        %v4980 = vadd.f32 %v4674, %v4884
        %v4981 = vadd.f32 %v4675, %v4887
        %v4982 = vadd.f32 %v4676, %v4892
        %v4983 = vadd.f32 %v4677, %v4895
        %v4984 = vadd.f32 %v4678, %v4900
        %v4985 = vadd.f32 %v4679, %v4903
        %v4986 = vadd.f32 %v4680, %v4908
        %v4987 = vadd.f32 %v4681, %v4911
        %v4988 = vadd.f32 %v4682, %v4916
        %v4989 = vadd.f32 %v4683, %v4919
        %v4990 = vadd.f32 %v4684, %v4924
        %v4991 = vadd.f32 %v4685, %v4927
        %v4992 = vadd.f32 %v4686, %v4932
        %v4993 = vadd.f32 %v4687, %v4935
        %v4994 = vadd.f32 %v4688, %v4940
        %v4995 = vadd.f32 %v4689, %v4943
        %v4996 = vadd.f32 %v4690, %v4948
        %v4997 = vadd.f32 %v4691, %v4951
        %v4998 = vadd.f32 %v4692, %v4956
        %v4999 = vadd.f32 %v4693, %v4959
        %v5000 = vadd.f32 %v4694, %v4964
        %v5001 = vadd.f32 %v4695, %v4967
        %v5002 = vld [vmem:[%s747 + $0x2] sm:$0xff]
        %v5003 = vld [vmem:[%s747 + $0x12] sm:$0xff]
        %v5004 = vld [vmem:[%s747 + $0x22] sm:$0xff]
        %v5005 = vld [vmem:[%s747 + $0x32] sm:$0xff]
        %v5006 = vld [vmem:[%s747 + $0x42] sm:$0xff]
        %v5007 = vld [vmem:[%s747 + $0x52] sm:$0xff]
        %v5008 = vld [vmem:[%s747 + $0x62] sm:$0xff]
        %v5009 = vld [vmem:[%s747 + $0x72] sm:$0xff]
        %v5010 = vld [vmem:[%s747 + $0xa2] sm:$0xff]
        %v5011 = vld [vmem:[%s747 + $0xb2] sm:$0xff]
        %v5012 = vld [vmem:[%s747 + $0xc2] sm:$0xff]
        %v5013 = vld [vmem:[%s747 + $0xd2] sm:$0xff]
        %v5014 = vld [vmem:[%s747 + $0xe2] sm:$0xff]
        %v5015 = vld [vmem:[%s747 + $0xf2] sm:$0xff]
        %v5016 = vld [vmem:[%s747 + $0x102] sm:$0xff]
        %v5017 = vld [vmem:[%s747 + $0x112] sm:$0xff]
        %v5018 = vld [vmem:[%s747 + $0x142] sm:$0xff]
        %v5019 = vld [vmem:[%s747 + $0x152] sm:$0xff]
        %v5020 = vld [vmem:[%s747 + $0x162] sm:$0xff]
        %v5021 = vld [vmem:[%s747 + $0x172] sm:$0xff]
        %v5022 = vld [vmem:[%s747 + $0x182] sm:$0xff]
        %v5023 = vld [vmem:[%s747 + $0x192] sm:$0xff]
        %v5024 = vld [vmem:[%s747 + $0x1a2] sm:$0xff]
        %v5025 = vld [vmem:[%s747 + $0x1b2] sm:$0xff]
        %v5026 = vld [vmem:[%s747 + $0x1e2] sm:$0xff]
        %v5027 = vld [vmem:[%s747 + $0x1f2] sm:$0xff]
        %v5028 = vld [vmem:[%s747 + $0x202] sm:$0xff]
        %v5029 = vld [vmem:[%s747 + $0x212] sm:$0xff]
        %v5030 = vld [vmem:[%s747 + $0x222] sm:$0xff]
        %v5031 = vld [vmem:[%s747 + $0x232] sm:$0xff]
        %v5032 = vld [vmem:[%s747 + $0x242] sm:$0xff]
        %v5033 = vld [vmem:[%s747 + $0x252] sm:$0xff]
        %v5034 = vpack.c.bf16 %v5003, %v5002
        %v5035 = vpack.c.bf16 %v5005, %v5004
        %v5036 = vpack.c.bf16 %v5007, %v5006
        %v5037 = vpack.c.bf16 %v5009, %v5008
        %v5038 = vpack.c.bf16 %v5011, %v5010
        %v5039 = vpack.c.bf16 %v5013, %v5012
        %v5040 = vpack.c.bf16 %v5015, %v5014
        %v5041 = vpack.c.bf16 %v5017, %v5016
        %v5042 = vpack.c.bf16 %v5019, %v5018
        %v5043 = vpack.c.bf16 %v5021, %v5020
        %v5044 = vpack.c.bf16 %v5023, %v5022
        %v5045 = vpack.c.bf16 %v5025, %v5024
        %v5046 = vpack.c.bf16 %v5027, %v5026
        %v5047 = vpack.c.bf16 %v5029, %v5028
        %v5048 = vpack.c.bf16 %v5031, %v5030
        %v5049 = vpack.c.bf16 %v5033, %v5032
        %s5050 = scalar_lea.vmem [#allocation6], 224
        %v5051 = vld [vmem:[%s5050] sm:$0xf]
        %v5052 = vld [vmem:[%s5050 + $0x4] sm:$0xf]
        %v5053 = vld [vmem:[%s5050 + $0x8] sm:$0xf]
        %v5054 = vld [vmem:[%s5050 + $0xc] sm:$0xf]
        %v5059 = vunpack.c.l.b16 %v5051
        %v5060 = vunpack.c.l.b16 %v5052
        %v5061 = vunpack.c.l.b16 %v5053
        %v5062 = vunpack.c.l.b16 %v5054
        %v5063 = vpack.c.b16 %v5060, %v5059
        %v5064 = vpack.c.b16 %v5062, %v5061
        %v5068 = vsel %vm625, %v5034, 0
        %v5071 = vsel %vm625, %v5035, 0
        %v5074 = vsel %vm625, %v5036, 0
        %v5077 = vsel %vm625, %v5037, 0
        %v5080 = vsel %vm625, %v5038, 0
        %v5083 = vsel %vm625, %v5039, 0
        %v5086 = vsel %vm625, %v5040, 0
        %v5089 = vsel %vm625, %v5041, 0
        %v5092 = vsel %vm625, %v5042, 0
        %v5095 = vsel %vm625, %v5043, 0
        %v5098 = vsel %vm625, %v5044, 0
        %v5101 = vsel %vm625, %v5045, 0
        %v5104 = vsel %vm625, %v5046, 0
        %v5107 = vsel %vm625, %v5047, 0
        %v5110 = vsel %vm625, %v5048, 0
        %v5113 = vsel %vm625, %v5049, 0
        %5115 = vmatprep.subr.bf16.mxu0 0
        %5116 = vmatpush1.bf16.msra.mxu0 0
        %5117 = vmatprep.subr.bf16.mxu0 0
        %5118 = vmatpush1.bf16.msra.mxu0 0
        %5119 = vmatprep.subr.bf16.mxu0 0
        %5120 = vmatpush1.bf16.msra.mxu0 0
        %5121 = vmatprep.subr.bf16.mxu0 0
        %5122 = vmatpush1.bf16.msra.mxu0 0
        %5123 = vmatprep.subr.bf16.mxu0 0
        %5124 = vmatpush1.bf16.msra.mxu0 0
        %5125 = vmatprep.subr.bf16.mxu0 0
        %5126 = vmatpush1.bf16.msra.mxu0 0
        %5127 = vmatprep.subr.bf16.mxu0 0
        %5128 = vmatpush1.bf16.msra.mxu0 %v5064
        %5129 = vmatprep.subr.bf16.mxu0 0
        %5130 = vmatpush1.bf16.msra.mxu0 %v5063
        %5131 = vmatprep.subr.bf16.mxu0 0
        %5132 = vmatpush2.bf16.msra.mxu0 0
        %5133 = vmatprep.subr.bf16.mxu0 0
        %5134 = vmatpush2.bf16.msra.mxu0 0
        %5135 = vmatprep.subr.bf16.mxu0 0
        %5136 = vmatpush2.bf16.msra.mxu0 0
        %5137 = vmatprep.subr.bf16.mxu0 0
        %5138 = vmatpush2.bf16.msra.mxu0 0
        %5139 = vmatprep.subr.bf16.mxu0 0
        %5140 = vmatpush2.bf16.msra.mxu0 0
        %5141 = vmatprep.subr.bf16.mxu0 0
        %5142 = vmatpush2.bf16.msra.mxu0 0
        %5143 = vmatprep.subr.bf16.mxu0 0
        %5144 = vmatpush2.bf16.msra.mxu0 0
        %5145 = vmatprep.subr.bf16.mxu0 0
        %5146 = vmatpush2.bf16.msra.mxu0 0
        %5147 = vmatprep.mubr.bf16.mxu0 0
        %5148 = vmatmul.mubr.bf16.gmra.mxu0 %v5068
        %v5149 = vpop.f32.mrf.mxu0
        %v5150 = vadd.f32 0.0, %v5149
        %v5151 = vpop.f32.mrf.mxu0
        %v5152 = vpop.f32.mrf.mxu0
        %v5153 = vadd.f32 0.0, %v5152
        %v5154 = vpop.f32.mrf.mxu0
        %5155 = vmatprep.mubr.bf16.mxu0 0
        %5156 = vmatmul.mubr.bf16.gmra.mxu0 %v5071
        %v5157 = vpop.f32.mrf.mxu0
        %v5158 = vadd.f32 0.0, %v5157
        %v5159 = vpop.f32.mrf.mxu0
        %v5160 = vpop.f32.mrf.mxu0
        %v5161 = vadd.f32 0.0, %v5160
        %v5162 = vpop.f32.mrf.mxu0
        %5163 = vmatprep.mubr.bf16.mxu0 0
        %5164 = vmatmul.mubr.bf16.gmra.mxu0 %v5074
        %v5165 = vpop.f32.mrf.mxu0
        %v5166 = vadd.f32 0.0, %v5165
        %v5167 = vpop.f32.mrf.mxu0
        %v5168 = vpop.f32.mrf.mxu0
        %v5169 = vadd.f32 0.0, %v5168
        %v5170 = vpop.f32.mrf.mxu0
        %5171 = vmatprep.mubr.bf16.mxu0 0
        %5172 = vmatmul.mubr.bf16.gmra.mxu0 %v5077
        %v5173 = vpop.f32.mrf.mxu0
        %v5174 = vadd.f32 0.0, %v5173
        %v5175 = vpop.f32.mrf.mxu0
        %v5176 = vpop.f32.mrf.mxu0
        %v5177 = vadd.f32 0.0, %v5176
        %v5178 = vpop.f32.mrf.mxu0
        %5179 = vmatprep.mubr.bf16.mxu0 0
        %5180 = vmatmul.mubr.bf16.gmra.mxu0 %v5080
        %v5181 = vpop.f32.mrf.mxu0
        %v5182 = vadd.f32 0.0, %v5181
        %v5183 = vpop.f32.mrf.mxu0
        %v5184 = vpop.f32.mrf.mxu0
        %v5185 = vadd.f32 0.0, %v5184
        %v5186 = vpop.f32.mrf.mxu0
        %5187 = vmatprep.mubr.bf16.mxu0 0
        %5188 = vmatmul.mubr.bf16.gmra.mxu0 %v5083
        %v5189 = vpop.f32.mrf.mxu0
        %v5190 = vadd.f32 0.0, %v5189
        %v5191 = vpop.f32.mrf.mxu0
        %v5192 = vpop.f32.mrf.mxu0
        %v5193 = vadd.f32 0.0, %v5192
        %v5194 = vpop.f32.mrf.mxu0
        %5195 = vmatprep.mubr.bf16.mxu0 0
        %5196 = vmatmul.mubr.bf16.gmra.mxu0 %v5086
        %v5197 = vpop.f32.mrf.mxu0
        %v5198 = vadd.f32 0.0, %v5197
        %v5199 = vpop.f32.mrf.mxu0
        %v5200 = vpop.f32.mrf.mxu0
        %v5201 = vadd.f32 0.0, %v5200
        %v5202 = vpop.f32.mrf.mxu0
        %5203 = vmatprep.mubr.bf16.mxu0 0
        %5204 = vmatmul.mubr.bf16.gmra.mxu0 %v5089
        %v5205 = vpop.f32.mrf.mxu0
        %v5206 = vadd.f32 0.0, %v5205
        %v5207 = vpop.f32.mrf.mxu0
        %v5208 = vpop.f32.mrf.mxu0
        %v5209 = vadd.f32 0.0, %v5208
        %v5210 = vpop.f32.mrf.mxu0
        %5211 = vmatprep.mubr.bf16.mxu0 0
        %5212 = vmatmul.mubr.bf16.gmra.mxu0 %v5092
        %v5213 = vpop.f32.mrf.mxu0
        %v5214 = vadd.f32 0.0, %v5213
        %v5215 = vpop.f32.mrf.mxu0
        %v5216 = vpop.f32.mrf.mxu0
        %v5217 = vadd.f32 0.0, %v5216
        %v5218 = vpop.f32.mrf.mxu0
        %5219 = vmatprep.mubr.bf16.mxu0 0
        %5220 = vmatmul.mubr.bf16.gmra.mxu0 %v5095
        %v5221 = vpop.f32.mrf.mxu0
        %v5222 = vadd.f32 0.0, %v5221
        %v5223 = vpop.f32.mrf.mxu0
        %v5224 = vpop.f32.mrf.mxu0
        %v5225 = vadd.f32 0.0, %v5224
        %v5226 = vpop.f32.mrf.mxu0
        %5227 = vmatprep.mubr.bf16.mxu0 0
        %5228 = vmatmul.mubr.bf16.gmra.mxu0 %v5098
        %v5229 = vpop.f32.mrf.mxu0
        %v5230 = vadd.f32 0.0, %v5229
        %v5231 = vpop.f32.mrf.mxu0
        %v5232 = vpop.f32.mrf.mxu0
        %v5233 = vadd.f32 0.0, %v5232
        %v5234 = vpop.f32.mrf.mxu0
        %5235 = vmatprep.mubr.bf16.mxu0 0
        %5236 = vmatmul.mubr.bf16.gmra.mxu0 %v5101
        %v5237 = vpop.f32.mrf.mxu0
        %v5238 = vadd.f32 0.0, %v5237
        %v5239 = vpop.f32.mrf.mxu0
        %v5240 = vpop.f32.mrf.mxu0
        %v5241 = vadd.f32 0.0, %v5240
        %v5242 = vpop.f32.mrf.mxu0
        %5243 = vmatprep.mubr.bf16.mxu0 0
        %5244 = vmatmul.mubr.bf16.gmra.mxu0 %v5104
        %v5245 = vpop.f32.mrf.mxu0
        %v5246 = vadd.f32 0.0, %v5245
        %v5247 = vpop.f32.mrf.mxu0
        %v5248 = vpop.f32.mrf.mxu0
        %v5249 = vadd.f32 0.0, %v5248
        %v5250 = vpop.f32.mrf.mxu0
        %5251 = vmatprep.mubr.bf16.mxu0 0
        %5252 = vmatmul.mubr.bf16.gmra.mxu0 %v5107
        %v5253 = vpop.f32.mrf.mxu0
        %v5254 = vadd.f32 0.0, %v5253
        %v5255 = vpop.f32.mrf.mxu0
        %v5256 = vpop.f32.mrf.mxu0
        %v5257 = vadd.f32 0.0, %v5256
        %v5258 = vpop.f32.mrf.mxu0
        %5259 = vmatprep.mubr.bf16.mxu0 0
        %5260 = vmatmul.mubr.bf16.gmra.mxu0 %v5110
        %v5261 = vpop.f32.mrf.mxu0
        %v5262 = vadd.f32 0.0, %v5261
        %v5263 = vpop.f32.mrf.mxu0
        %v5264 = vpop.f32.mrf.mxu0
        %v5265 = vadd.f32 0.0, %v5264
        %v5266 = vpop.f32.mrf.mxu0
        %5267 = vmatprep.mubr.bf16.mxu0 0
        %5268 = vmatmul.mubr.bf16.gmra.mxu0 %v5113
        %v5269 = vpop.f32.mrf.mxu0
        %v5270 = vadd.f32 0.0, %v5269
        %v5271 = vpop.f32.mrf.mxu0
        %v5272 = vpop.f32.mrf.mxu0
        %v5273 = vadd.f32 0.0, %v5272
        %v5274 = vpop.f32.mrf.mxu0
        %5275 = vdwg.mxu0
        %v5276 = vadd.f32 %v4970, %v5150
        %v5277 = vadd.f32 %v4971, %v5153
        %v5278 = vadd.f32 %v4972, %v5158
        %v5279 = vadd.f32 %v4973, %v5161
        %v5280 = vadd.f32 %v4974, %v5166
        %v5281 = vadd.f32 %v4975, %v5169
        %v5282 = vadd.f32 %v4976, %v5174
        %v5283 = vadd.f32 %v4977, %v5177
        %v5284 = vadd.f32 %v4978, %v5182
        %v5285 = vadd.f32 %v4979, %v5185
        %v5286 = vadd.f32 %v4980, %v5190
        %v5287 = vadd.f32 %v4981, %v5193
        %v5288 = vadd.f32 %v4982, %v5198
        %v5289 = vadd.f32 %v4983, %v5201
        %v5290 = vadd.f32 %v4984, %v5206
        %v5291 = vadd.f32 %v4985, %v5209
        %v5292 = vadd.f32 %v4986, %v5214
        %v5293 = vadd.f32 %v4987, %v5217
        %v5294 = vadd.f32 %v4988, %v5222
        %v5295 = vadd.f32 %v4989, %v5225
        %v5296 = vadd.f32 %v4990, %v5230
        %v5297 = vadd.f32 %v4991, %v5233
        %v5298 = vadd.f32 %v4992, %v5238
        %v5299 = vadd.f32 %v4993, %v5241
        %v5300 = vadd.f32 %v4994, %v5246
        %v5301 = vadd.f32 %v4995, %v5249
        %v5302 = vadd.f32 %v4996, %v5254
        %v5303 = vadd.f32 %v4997, %v5257
        %v5304 = vadd.f32 %v4998, %v5262
        %v5305 = vadd.f32 %v4999, %v5265
        %v5306 = vadd.f32 %v5000, %v5270
        %v5307 = vadd.f32 %v5001, %v5273
        %s5308 = scalar_lea.vmem [#allocation2], 192
        %v5309 = vld [vmem:[%s5308] sm:$0xff]
        %v5310 = vld [vmem:[%s5308 + $0x10] sm:$0xff]
        %v5311 = vld [vmem:[%s5308 + $0x20] sm:$0xff]
        %v5312 = vld [vmem:[%s5308 + $0x30] sm:$0xff]
        %v5313 = vld [vmem:[%s5308 + $0x40] sm:$0xff]
        %v5314 = vld [vmem:[%s5308 + $0x50] sm:$0xff]
        %v5315 = vld [vmem:[%s5308 + $0x60] sm:$0xff]
        %v5316 = vld [vmem:[%s5308 + $0x70] sm:$0xff]
        %v5317 = vld [vmem:[%s5308 + $0xa0] sm:$0xff]
        %v5318 = vld [vmem:[%s5308 + $0xb0] sm:$0xff]
        %v5319 = vld [vmem:[%s5308 + $0xc0] sm:$0xff]
        %v5320 = vld [vmem:[%s5308 + $0xd0] sm:$0xff]
        %v5321 = vld [vmem:[%s5308 + $0xe0] sm:$0xff]
        %v5322 = vld [vmem:[%s5308 + $0xf0] sm:$0xff]
        %v5323 = vld [vmem:[%s5308 + $0x100] sm:$0xff]
        %v5324 = vld [vmem:[%s5308 + $0x110] sm:$0xff]
        %v5325 = vld [vmem:[%s5308 + $0x140] sm:$0xff]
        %v5326 = vld [vmem:[%s5308 + $0x150] sm:$0xff]
        %v5327 = vld [vmem:[%s5308 + $0x160] sm:$0xff]
        %v5328 = vld [vmem:[%s5308 + $0x170] sm:$0xff]
        %v5329 = vld [vmem:[%s5308 + $0x180] sm:$0xff]
        %v5330 = vld [vmem:[%s5308 + $0x190] sm:$0xff]
        %v5331 = vld [vmem:[%s5308 + $0x1a0] sm:$0xff]
        %v5332 = vld [vmem:[%s5308 + $0x1b0] sm:$0xff]
        %v5333 = vld [vmem:[%s5308 + $0x1e0] sm:$0xff]
        %v5334 = vld [vmem:[%s5308 + $0x1f0] sm:$0xff]
        %v5335 = vld [vmem:[%s5308 + $0x200] sm:$0xff]
        %v5336 = vld [vmem:[%s5308 + $0x210] sm:$0xff]
        %v5337 = vld [vmem:[%s5308 + $0x220] sm:$0xff]
        %v5338 = vld [vmem:[%s5308 + $0x230] sm:$0xff]
        %v5339 = vld [vmem:[%s5308 + $0x240] sm:$0xff]
        %v5340 = vld [vmem:[%s5308 + $0x250] sm:$0xff]
        %v5341 = vpack.c.bf16 %v5310, %v5309
        %v5342 = vpack.c.bf16 %v5312, %v5311
        %v5343 = vpack.c.bf16 %v5314, %v5313
        %v5344 = vpack.c.bf16 %v5316, %v5315
        %v5345 = vpack.c.bf16 %v5318, %v5317
        %v5346 = vpack.c.bf16 %v5320, %v5319
        %v5347 = vpack.c.bf16 %v5322, %v5321
        %v5348 = vpack.c.bf16 %v5324, %v5323
        %v5349 = vpack.c.bf16 %v5326, %v5325
        %v5350 = vpack.c.bf16 %v5328, %v5327
        %v5351 = vpack.c.bf16 %v5330, %v5329
        %v5352 = vpack.c.bf16 %v5332, %v5331
        %v5353 = vpack.c.bf16 %v5334, %v5333
        %v5354 = vpack.c.bf16 %v5336, %v5335
        %v5355 = vpack.c.bf16 %v5338, %v5337
        %v5356 = vpack.c.bf16 %v5340, %v5339
        %s5357 = scalar_lea.vmem [#allocation6], 240
        %v5358 = vld [vmem:[%s5357] sm:$0xf]
        %v5359 = vld [vmem:[%s5357 + $0x4] sm:$0xf]
        %v5360 = vld [vmem:[%s5357 + $0x8] sm:$0xf]
        %v5361 = vld [vmem:[%s5357 + $0xc] sm:$0xf]
        %v5366 = vunpack.c.l.b16 %v5358
        %v5367 = vunpack.c.l.b16 %v5359
        %v5368 = vunpack.c.l.b16 %v5360
        %v5369 = vunpack.c.l.b16 %v5361
        %v5370 = vpack.c.b16 %v5367, %v5366
        %v5371 = vpack.c.b16 %v5369, %v5368
        %v5375 = vsel %vm625, %v5341, 0
        %v5378 = vsel %vm625, %v5342, 0
        %v5381 = vsel %vm625, %v5343, 0
        %v5384 = vsel %vm625, %v5344, 0
        %v5387 = vsel %vm625, %v5345, 0
        %v5390 = vsel %vm625, %v5346, 0
        %v5393 = vsel %vm625, %v5347, 0
        %v5396 = vsel %vm625, %v5348, 0
        %v5399 = vsel %vm625, %v5349, 0
        %v5402 = vsel %vm625, %v5350, 0
        %v5405 = vsel %vm625, %v5351, 0
        %v5408 = vsel %vm625, %v5352, 0
        %v5411 = vsel %vm625, %v5353, 0
        %v5414 = vsel %vm625, %v5354, 0
        %v5417 = vsel %vm625, %v5355, 0
        %v5420 = vsel %vm625, %v5356, 0
        %5422 = vmatprep.subr.bf16.mxu0 0
        %5423 = vmatpush1.bf16.msra.mxu0 0
        %5424 = vmatprep.subr.bf16.mxu0 0
        %5425 = vmatpush1.bf16.msra.mxu0 0
        %5426 = vmatprep.subr.bf16.mxu0 0
        %5427 = vmatpush1.bf16.msra.mxu0 0
        %5428 = vmatprep.subr.bf16.mxu0 0
        %5429 = vmatpush1.bf16.msra.mxu0 0
        %5430 = vmatprep.subr.bf16.mxu0 0
        %5431 = vmatpush1.bf16.msra.mxu0 0
        %5432 = vmatprep.subr.bf16.mxu0 0
        %5433 = vmatpush1.bf16.msra.mxu0 0
        %5434 = vmatprep.subr.bf16.mxu0 0
        %5435 = vmatpush1.bf16.msra.mxu0 %v5371
        %5436 = vmatprep.subr.bf16.mxu0 0
        %5437 = vmatpush1.bf16.msra.mxu0 %v5370
        %5438 = vmatprep.subr.bf16.mxu0 0
        %5439 = vmatpush2.bf16.msra.mxu0 0
        %5440 = vmatprep.subr.bf16.mxu0 0
        %5441 = vmatpush2.bf16.msra.mxu0 0
        %5442 = vmatprep.subr.bf16.mxu0 0
        %5443 = vmatpush2.bf16.msra.mxu0 0
        %5444 = vmatprep.subr.bf16.mxu0 0
        %5445 = vmatpush2.bf16.msra.mxu0 0
        %5446 = vmatprep.subr.bf16.mxu0 0
        %5447 = vmatpush2.bf16.msra.mxu0 0
        %5448 = vmatprep.subr.bf16.mxu0 0
        %5449 = vmatpush2.bf16.msra.mxu0 0
        %5450 = vmatprep.subr.bf16.mxu0 0
        %5451 = vmatpush2.bf16.msra.mxu0 0
        %5452 = vmatprep.subr.bf16.mxu0 0
        %5453 = vmatpush2.bf16.msra.mxu0 0
        %5454 = vmatprep.mubr.bf16.mxu0 0
        %5455 = vmatmul.mubr.bf16.gmra.mxu0 %v5375
        %v5456 = vpop.f32.mrf.mxu0
        %v5457 = vadd.f32 0.0, %v5456
        %v5458 = vpop.f32.mrf.mxu0
        %v5459 = vpop.f32.mrf.mxu0
        %v5460 = vadd.f32 0.0, %v5459
        %v5461 = vpop.f32.mrf.mxu0
        %5462 = vmatprep.mubr.bf16.mxu0 0
        %5463 = vmatmul.mubr.bf16.gmra.mxu0 %v5378
        %v5464 = vpop.f32.mrf.mxu0
        %v5465 = vadd.f32 0.0, %v5464
        %v5466 = vpop.f32.mrf.mxu0
        %v5467 = vpop.f32.mrf.mxu0
        %v5468 = vadd.f32 0.0, %v5467
        %v5469 = vpop.f32.mrf.mxu0
        %5470 = vmatprep.mubr.bf16.mxu0 0
        %5471 = vmatmul.mubr.bf16.gmra.mxu0 %v5381
        %v5472 = vpop.f32.mrf.mxu0
        %v5473 = vadd.f32 0.0, %v5472
        %v5474 = vpop.f32.mrf.mxu0
        %v5475 = vpop.f32.mrf.mxu0
        %v5476 = vadd.f32 0.0, %v5475
        %v5477 = vpop.f32.mrf.mxu0
        %5478 = vmatprep.mubr.bf16.mxu0 0
        %5479 = vmatmul.mubr.bf16.gmra.mxu0 %v5384
        %v5480 = vpop.f32.mrf.mxu0
        %v5481 = vadd.f32 0.0, %v5480
        %v5482 = vpop.f32.mrf.mxu0
        %v5483 = vpop.f32.mrf.mxu0
        %v5484 = vadd.f32 0.0, %v5483
        %v5485 = vpop.f32.mrf.mxu0
        %5486 = vmatprep.mubr.bf16.mxu0 0
        %5487 = vmatmul.mubr.bf16.gmra.mxu0 %v5387
        %v5488 = vpop.f32.mrf.mxu0
        %v5489 = vadd.f32 0.0, %v5488
        %v5490 = vpop.f32.mrf.mxu0
        %v5491 = vpop.f32.mrf.mxu0
        %v5492 = vadd.f32 0.0, %v5491
        %v5493 = vpop.f32.mrf.mxu0
        %5494 = vmatprep.mubr.bf16.mxu0 0
        %5495 = vmatmul.mubr.bf16.gmra.mxu0 %v5390
        %v5496 = vpop.f32.mrf.mxu0
        %v5497 = vadd.f32 0.0, %v5496
        %v5498 = vpop.f32.mrf.mxu0
        %v5499 = vpop.f32.mrf.mxu0
        %v5500 = vadd.f32 0.0, %v5499
        %v5501 = vpop.f32.mrf.mxu0
        %5502 = vmatprep.mubr.bf16.mxu0 0
        %5503 = vmatmul.mubr.bf16.gmra.mxu0 %v5393
        %v5504 = vpop.f32.mrf.mxu0
        %v5505 = vadd.f32 0.0, %v5504
        %v5506 = vpop.f32.mrf.mxu0
        %v5507 = vpop.f32.mrf.mxu0
        %v5508 = vadd.f32 0.0, %v5507
        %v5509 = vpop.f32.mrf.mxu0
        %5510 = vmatprep.mubr.bf16.mxu0 0
        %5511 = vmatmul.mubr.bf16.gmra.mxu0 %v5396
        %v5512 = vpop.f32.mrf.mxu0
        %v5513 = vadd.f32 0.0, %v5512
        %v5514 = vpop.f32.mrf.mxu0
        %v5515 = vpop.f32.mrf.mxu0
        %v5516 = vadd.f32 0.0, %v5515
        %v5517 = vpop.f32.mrf.mxu0
        %5518 = vmatprep.mubr.bf16.mxu0 0
        %5519 = vmatmul.mubr.bf16.gmra.mxu0 %v5399
        %v5520 = vpop.f32.mrf.mxu0
        %v5521 = vadd.f32 0.0, %v5520
        %v5522 = vpop.f32.mrf.mxu0
        %v5523 = vpop.f32.mrf.mxu0
        %v5524 = vadd.f32 0.0, %v5523
        %v5525 = vpop.f32.mrf.mxu0
        %5526 = vmatprep.mubr.bf16.mxu0 0
        %5527 = vmatmul.mubr.bf16.gmra.mxu0 %v5402
        %v5528 = vpop.f32.mrf.mxu0
        %v5529 = vadd.f32 0.0, %v5528
        %v5530 = vpop.f32.mrf.mxu0
        %v5531 = vpop.f32.mrf.mxu0
        %v5532 = vadd.f32 0.0, %v5531
        %v5533 = vpop.f32.mrf.mxu0
        %5534 = vmatprep.mubr.bf16.mxu0 0
        %5535 = vmatmul.mubr.bf16.gmra.mxu0 %v5405
        %v5536 = vpop.f32.mrf.mxu0
        %v5537 = vadd.f32 0.0, %v5536
        %v5538 = vpop.f32.mrf.mxu0
        %v5539 = vpop.f32.mrf.mxu0
        %v5540 = vadd.f32 0.0, %v5539
        %v5541 = vpop.f32.mrf.mxu0
        %5542 = vmatprep.mubr.bf16.mxu0 0
        %5543 = vmatmul.mubr.bf16.gmra.mxu0 %v5408
        %v5544 = vpop.f32.mrf.mxu0
        %v5545 = vadd.f32 0.0, %v5544
        %v5546 = vpop.f32.mrf.mxu0
        %v5547 = vpop.f32.mrf.mxu0
        %v5548 = vadd.f32 0.0, %v5547
        %v5549 = vpop.f32.mrf.mxu0
        %5550 = vmatprep.mubr.bf16.mxu0 0
        %5551 = vmatmul.mubr.bf16.gmra.mxu0 %v5411
        %v5552 = vpop.f32.mrf.mxu0
        %v5553 = vadd.f32 0.0, %v5552
        %v5554 = vpop.f32.mrf.mxu0
        %v5555 = vpop.f32.mrf.mxu0
        %v5556 = vadd.f32 0.0, %v5555
        %v5557 = vpop.f32.mrf.mxu0
        %5558 = vmatprep.mubr.bf16.mxu0 0
        %5559 = vmatmul.mubr.bf16.gmra.mxu0 %v5414
        %v5560 = vpop.f32.mrf.mxu0
        %v5561 = vadd.f32 0.0, %v5560
        %v5562 = vpop.f32.mrf.mxu0
        %v5563 = vpop.f32.mrf.mxu0
        %v5564 = vadd.f32 0.0, %v5563
        %v5565 = vpop.f32.mrf.mxu0
        %5566 = vmatprep.mubr.bf16.mxu0 0
        %5567 = vmatmul.mubr.bf16.gmra.mxu0 %v5417
        %v5568 = vpop.f32.mrf.mxu0
        %v5569 = vadd.f32 0.0, %v5568
        %v5570 = vpop.f32.mrf.mxu0
        %v5571 = vpop.f32.mrf.mxu0
        %v5572 = vadd.f32 0.0, %v5571
        %v5573 = vpop.f32.mrf.mxu0
        %5574 = vmatprep.mubr.bf16.mxu0 0
        %5575 = vmatmul.mubr.bf16.gmra.mxu0 %v5420
        %v5576 = vpop.f32.mrf.mxu0
        %v5577 = vadd.f32 0.0, %v5576
        %v5578 = vpop.f32.mrf.mxu0
        %v5579 = vpop.f32.mrf.mxu0
        %v5580 = vadd.f32 0.0, %v5579
        %v5581 = vpop.f32.mrf.mxu0
        %5582 = vdwg.mxu0
        %v5583 = vadd.f32 %v5276, %v5457
        %v5584 = vadd.f32 %v5277, %v5460
        %v5585 = vadd.f32 %v5278, %v5465
        %v5586 = vadd.f32 %v5279, %v5468
        %v5587 = vadd.f32 %v5280, %v5473
        %v5588 = vadd.f32 %v5281, %v5476
        %v5589 = vadd.f32 %v5282, %v5481
        %v5590 = vadd.f32 %v5283, %v5484
        %v5591 = vadd.f32 %v5284, %v5489
        %v5592 = vadd.f32 %v5285, %v5492
        %v5593 = vadd.f32 %v5286, %v5497
        %v5594 = vadd.f32 %v5287, %v5500
        %v5595 = vadd.f32 %v5288, %v5505
        %v5596 = vadd.f32 %v5289, %v5508
        %v5597 = vadd.f32 %v5290, %v5513
        %v5598 = vadd.f32 %v5291, %v5516
        %v5599 = vadd.f32 %v5292, %v5521
        %v5600 = vadd.f32 %v5293, %v5524
        %v5601 = vadd.f32 %v5294, %v5529
        %v5602 = vadd.f32 %v5295, %v5532
        %v5603 = vadd.f32 %v5296, %v5537
        %v5604 = vadd.f32 %v5297, %v5540
        %v5605 = vadd.f32 %v5298, %v5545
        %v5606 = vadd.f32 %v5299, %v5548
        %v5607 = vadd.f32 %v5300, %v5553
        %v5608 = vadd.f32 %v5301, %v5556
        %v5609 = vadd.f32 %v5302, %v5561
        %v5610 = vadd.f32 %v5303, %v5564
        %v5611 = vadd.f32 %v5304, %v5569
        %v5612 = vadd.f32 %v5305, %v5572
        %v5613 = vadd.f32 %v5306, %v5577
        %v5614 = vadd.f32 %v5307, %v5580
        %v5615 = vld [vmem:[%s5308 + $0x1] sm:$0xff]
        %v5616 = vld [vmem:[%s5308 + $0x11] sm:$0xff]
        %v5617 = vld [vmem:[%s5308 + $0x21] sm:$0xff]
        %v5618 = vld [vmem:[%s5308 + $0x31] sm:$0xff]
        %v5619 = vld [vmem:[%s5308 + $0x41] sm:$0xff]
        %v5620 = vld [vmem:[%s5308 + $0x51] sm:$0xff]
        %v5621 = vld [vmem:[%s5308 + $0x61] sm:$0xff]
        %v5622 = vld [vmem:[%s5308 + $0x71] sm:$0xff]
        %v5623 = vld [vmem:[%s5308 + $0xa1] sm:$0xff]
        %v5624 = vld [vmem:[%s5308 + $0xb1] sm:$0xff]
        %v5625 = vld [vmem:[%s5308 + $0xc1] sm:$0xff]
        %v5626 = vld [vmem:[%s5308 + $0xd1] sm:$0xff]
        %v5627 = vld [vmem:[%s5308 + $0xe1] sm:$0xff]
        %v5628 = vld [vmem:[%s5308 + $0xf1] sm:$0xff]
        %v5629 = vld [vmem:[%s5308 + $0x101] sm:$0xff]
        %v5630 = vld [vmem:[%s5308 + $0x111] sm:$0xff]
        %v5631 = vld [vmem:[%s5308 + $0x141] sm:$0xff]
        %v5632 = vld [vmem:[%s5308 + $0x151] sm:$0xff]
        %v5633 = vld [vmem:[%s5308 + $0x161] sm:$0xff]
        %v5634 = vld [vmem:[%s5308 + $0x171] sm:$0xff]
        %v5635 = vld [vmem:[%s5308 + $0x181] sm:$0xff]
        %v5636 = vld [vmem:[%s5308 + $0x191] sm:$0xff]
        %v5637 = vld [vmem:[%s5308 + $0x1a1] sm:$0xff]
        %v5638 = vld [vmem:[%s5308 + $0x1b1] sm:$0xff]
        %v5639 = vld [vmem:[%s5308 + $0x1e1] sm:$0xff]
        %v5640 = vld [vmem:[%s5308 + $0x1f1] sm:$0xff]
        %v5641 = vld [vmem:[%s5308 + $0x201] sm:$0xff]
        %v5642 = vld [vmem:[%s5308 + $0x211] sm:$0xff]
        %v5643 = vld [vmem:[%s5308 + $0x221] sm:$0xff]
        %v5644 = vld [vmem:[%s5308 + $0x231] sm:$0xff]
        %v5645 = vld [vmem:[%s5308 + $0x241] sm:$0xff]
        %v5646 = vld [vmem:[%s5308 + $0x251] sm:$0xff]
        %v5647 = vpack.c.bf16 %v5616, %v5615
        %v5648 = vpack.c.bf16 %v5618, %v5617
        %v5649 = vpack.c.bf16 %v5620, %v5619
        %v5650 = vpack.c.bf16 %v5622, %v5621
        %v5651 = vpack.c.bf16 %v5624, %v5623
        %v5652 = vpack.c.bf16 %v5626, %v5625
        %v5653 = vpack.c.bf16 %v5628, %v5627
        %v5654 = vpack.c.bf16 %v5630, %v5629
        %v5655 = vpack.c.bf16 %v5632, %v5631
        %v5656 = vpack.c.bf16 %v5634, %v5633
        %v5657 = vpack.c.bf16 %v5636, %v5635
        %v5658 = vpack.c.bf16 %v5638, %v5637
        %v5659 = vpack.c.bf16 %v5640, %v5639
        %v5660 = vpack.c.bf16 %v5642, %v5641
        %v5661 = vpack.c.bf16 %v5644, %v5643
        %v5662 = vpack.c.bf16 %v5646, %v5645
        %s5663 = scalar_lea.vmem [#allocation6], 256
        %v5664 = vld [vmem:[%s5663] sm:$0xf]
        %v5665 = vld [vmem:[%s5663 + $0x4] sm:$0xf]
        %v5666 = vld [vmem:[%s5663 + $0x8] sm:$0xf]
        %v5667 = vld [vmem:[%s5663 + $0xc] sm:$0xf]
        %v5672 = vunpack.c.l.b16 %v5664
        %v5673 = vunpack.c.l.b16 %v5665
        %v5674 = vunpack.c.l.b16 %v5666
        %v5675 = vunpack.c.l.b16 %v5667
        %v5676 = vpack.c.b16 %v5673, %v5672
        %v5677 = vpack.c.b16 %v5675, %v5674
        %v5681 = vsel %vm625, %v5647, 0
        %v5684 = vsel %vm625, %v5648, 0
        %v5687 = vsel %vm625, %v5649, 0
        %v5690 = vsel %vm625, %v5650, 0
        %v5693 = vsel %vm625, %v5651, 0
        %v5696 = vsel %vm625, %v5652, 0
        %v5699 = vsel %vm625, %v5653, 0
        %v5702 = vsel %vm625, %v5654, 0
        %v5705 = vsel %vm625, %v5655, 0
        %v5708 = vsel %vm625, %v5656, 0
        %v5711 = vsel %vm625, %v5657, 0
        %v5714 = vsel %vm625, %v5658, 0
        %v5717 = vsel %vm625, %v5659, 0
        %v5720 = vsel %vm625, %v5660, 0
        %v5723 = vsel %vm625, %v5661, 0
        %v5726 = vsel %vm625, %v5662, 0
        %5728 = vmatprep.subr.bf16.mxu0 0
        %5729 = vmatpush1.bf16.msra.mxu0 0
        %5730 = vmatprep.subr.bf16.mxu0 0
        %5731 = vmatpush1.bf16.msra.mxu0 0
        %5732 = vmatprep.subr.bf16.mxu0 0
        %5733 = vmatpush1.bf16.msra.mxu0 0
        %5734 = vmatprep.subr.bf16.mxu0 0
        %5735 = vmatpush1.bf16.msra.mxu0 0
        %5736 = vmatprep.subr.bf16.mxu0 0
        %5737 = vmatpush1.bf16.msra.mxu0 0
        %5738 = vmatprep.subr.bf16.mxu0 0
        %5739 = vmatpush1.bf16.msra.mxu0 0
        %5740 = vmatprep.subr.bf16.mxu0 0
        %5741 = vmatpush1.bf16.msra.mxu0 %v5677
        %5742 = vmatprep.subr.bf16.mxu0 0
        %5743 = vmatpush1.bf16.msra.mxu0 %v5676
        %5744 = vmatprep.subr.bf16.mxu0 0
        %5745 = vmatpush2.bf16.msra.mxu0 0
        %5746 = vmatprep.subr.bf16.mxu0 0
        %5747 = vmatpush2.bf16.msra.mxu0 0
        %5748 = vmatprep.subr.bf16.mxu0 0
        %5749 = vmatpush2.bf16.msra.mxu0 0
        %5750 = vmatprep.subr.bf16.mxu0 0
        %5751 = vmatpush2.bf16.msra.mxu0 0
        %5752 = vmatprep.subr.bf16.mxu0 0
        %5753 = vmatpush2.bf16.msra.mxu0 0
        %5754 = vmatprep.subr.bf16.mxu0 0
        %5755 = vmatpush2.bf16.msra.mxu0 0
        %5756 = vmatprep.subr.bf16.mxu0 0
        %5757 = vmatpush2.bf16.msra.mxu0 0
        %5758 = vmatprep.subr.bf16.mxu0 0
        %5759 = vmatpush2.bf16.msra.mxu0 0
        %5760 = vmatprep.mubr.bf16.mxu0 0
        %5761 = vmatmul.mubr.bf16.gmra.mxu0 %v5681
        %v5762 = vpop.f32.mrf.mxu0
        %v5763 = vadd.f32 0.0, %v5762
        %v5764 = vpop.f32.mrf.mxu0
        %v5765 = vpop.f32.mrf.mxu0
        %v5766 = vadd.f32 0.0, %v5765
        %v5767 = vpop.f32.mrf.mxu0
        %5768 = vmatprep.mubr.bf16.mxu0 0
        %5769 = vmatmul.mubr.bf16.gmra.mxu0 %v5684
        %v5770 = vpop.f32.mrf.mxu0
        %v5771 = vadd.f32 0.0, %v5770
        %v5772 = vpop.f32.mrf.mxu0
        %v5773 = vpop.f32.mrf.mxu0
        %v5774 = vadd.f32 0.0, %v5773
        %v5775 = vpop.f32.mrf.mxu0
        %5776 = vmatprep.mubr.bf16.mxu0 0
        %5777 = vmatmul.mubr.bf16.gmra.mxu0 %v5687
        %v5778 = vpop.f32.mrf.mxu0
        %v5779 = vadd.f32 0.0, %v5778
        %v5780 = vpop.f32.mrf.mxu0
        %v5781 = vpop.f32.mrf.mxu0
        %v5782 = vadd.f32 0.0, %v5781
        %v5783 = vpop.f32.mrf.mxu0
        %5784 = vmatprep.mubr.bf16.mxu0 0
        %5785 = vmatmul.mubr.bf16.gmra.mxu0 %v5690
        %v5786 = vpop.f32.mrf.mxu0
        %v5787 = vadd.f32 0.0, %v5786
        %v5788 = vpop.f32.mrf.mxu0
        %v5789 = vpop.f32.mrf.mxu0
        %v5790 = vadd.f32 0.0, %v5789
        %v5791 = vpop.f32.mrf.mxu0
        %5792 = vmatprep.mubr.bf16.mxu0 0
        %5793 = vmatmul.mubr.bf16.gmra.mxu0 %v5693
        %v5794 = vpop.f32.mrf.mxu0
        %v5795 = vadd.f32 0.0, %v5794
        %v5796 = vpop.f32.mrf.mxu0
        %v5797 = vpop.f32.mrf.mxu0
        %v5798 = vadd.f32 0.0, %v5797
        %v5799 = vpop.f32.mrf.mxu0
        %5800 = vmatprep.mubr.bf16.mxu0 0
        %5801 = vmatmul.mubr.bf16.gmra.mxu0 %v5696
        %v5802 = vpop.f32.mrf.mxu0
        %v5803 = vadd.f32 0.0, %v5802
        %v5804 = vpop.f32.mrf.mxu0
        %v5805 = vpop.f32.mrf.mxu0
        %v5806 = vadd.f32 0.0, %v5805
        %v5807 = vpop.f32.mrf.mxu0
        %5808 = vmatprep.mubr.bf16.mxu0 0
        %5809 = vmatmul.mubr.bf16.gmra.mxu0 %v5699
        %v5810 = vpop.f32.mrf.mxu0
        %v5811 = vadd.f32 0.0, %v5810
        %v5812 = vpop.f32.mrf.mxu0
        %v5813 = vpop.f32.mrf.mxu0
        %v5814 = vadd.f32 0.0, %v5813
        %v5815 = vpop.f32.mrf.mxu0
        %5816 = vmatprep.mubr.bf16.mxu0 0
        %5817 = vmatmul.mubr.bf16.gmra.mxu0 %v5702
        %v5818 = vpop.f32.mrf.mxu0
        %v5819 = vadd.f32 0.0, %v5818
        %v5820 = vpop.f32.mrf.mxu0
        %v5821 = vpop.f32.mrf.mxu0
        %v5822 = vadd.f32 0.0, %v5821
        %v5823 = vpop.f32.mrf.mxu0
        %5824 = vmatprep.mubr.bf16.mxu0 0
        %5825 = vmatmul.mubr.bf16.gmra.mxu0 %v5705
        %v5826 = vpop.f32.mrf.mxu0
        %v5827 = vadd.f32 0.0, %v5826
        %v5828 = vpop.f32.mrf.mxu0
        %v5829 = vpop.f32.mrf.mxu0
        %v5830 = vadd.f32 0.0, %v5829
        %v5831 = vpop.f32.mrf.mxu0
        %5832 = vmatprep.mubr.bf16.mxu0 0
        %5833 = vmatmul.mubr.bf16.gmra.mxu0 %v5708
        %v5834 = vpop.f32.mrf.mxu0
        %v5835 = vadd.f32 0.0, %v5834
        %v5836 = vpop.f32.mrf.mxu0
        %v5837 = vpop.f32.mrf.mxu0
        %v5838 = vadd.f32 0.0, %v5837
        %v5839 = vpop.f32.mrf.mxu0
        %5840 = vmatprep.mubr.bf16.mxu0 0
        %5841 = vmatmul.mubr.bf16.gmra.mxu0 %v5711
        %v5842 = vpop.f32.mrf.mxu0
        %v5843 = vadd.f32 0.0, %v5842
        %v5844 = vpop.f32.mrf.mxu0
        %v5845 = vpop.f32.mrf.mxu0
        %v5846 = vadd.f32 0.0, %v5845
        %v5847 = vpop.f32.mrf.mxu0
        %5848 = vmatprep.mubr.bf16.mxu0 0
        %5849 = vmatmul.mubr.bf16.gmra.mxu0 %v5714
        %v5850 = vpop.f32.mrf.mxu0
        %v5851 = vadd.f32 0.0, %v5850
        %v5852 = vpop.f32.mrf.mxu0
        %v5853 = vpop.f32.mrf.mxu0
        %v5854 = vadd.f32 0.0, %v5853
        %v5855 = vpop.f32.mrf.mxu0
        %5856 = vmatprep.mubr.bf16.mxu0 0
        %5857 = vmatmul.mubr.bf16.gmra.mxu0 %v5717
        %v5858 = vpop.f32.mrf.mxu0
        %v5859 = vadd.f32 0.0, %v5858
        %v5860 = vpop.f32.mrf.mxu0
        %v5861 = vpop.f32.mrf.mxu0
        %v5862 = vadd.f32 0.0, %v5861
        %v5863 = vpop.f32.mrf.mxu0
        %5864 = vmatprep.mubr.bf16.mxu0 0
        %5865 = vmatmul.mubr.bf16.gmra.mxu0 %v5720
        %v5866 = vpop.f32.mrf.mxu0
        %v5867 = vadd.f32 0.0, %v5866
        %v5868 = vpop.f32.mrf.mxu0
        %v5869 = vpop.f32.mrf.mxu0
        %v5870 = vadd.f32 0.0, %v5869
        %v5871 = vpop.f32.mrf.mxu0
        %5872 = vmatprep.mubr.bf16.mxu0 0
        %5873 = vmatmul.mubr.bf16.gmra.mxu0 %v5723
        %v5874 = vpop.f32.mrf.mxu0
        %v5875 = vadd.f32 0.0, %v5874
        %v5876 = vpop.f32.mrf.mxu0
        %v5877 = vpop.f32.mrf.mxu0
        %v5878 = vadd.f32 0.0, %v5877
        %v5879 = vpop.f32.mrf.mxu0
        %5880 = vmatprep.mubr.bf16.mxu0 0
        %5881 = vmatmul.mubr.bf16.gmra.mxu0 %v5726
        %v5882 = vpop.f32.mrf.mxu0
        %v5883 = vadd.f32 0.0, %v5882
        %v5884 = vpop.f32.mrf.mxu0
        %v5885 = vpop.f32.mrf.mxu0
        %v5886 = vadd.f32 0.0, %v5885
        %v5887 = vpop.f32.mrf.mxu0
        %5888 = vdwg.mxu0
        %v5889 = vadd.f32 %v5583, %v5763
        %v5890 = vadd.f32 %v5584, %v5766
        %v5891 = vadd.f32 %v5585, %v5771
        %v5892 = vadd.f32 %v5586, %v5774
        %v5893 = vadd.f32 %v5587, %v5779
        %v5894 = vadd.f32 %v5588, %v5782
        %v5895 = vadd.f32 %v5589, %v5787
        %v5896 = vadd.f32 %v5590, %v5790
        %v5897 = vadd.f32 %v5591, %v5795
        %v5898 = vadd.f32 %v5592, %v5798
        %v5899 = vadd.f32 %v5593, %v5803
        %v5900 = vadd.f32 %v5594, %v5806
        %v5901 = vadd.f32 %v5595, %v5811
        %v5902 = vadd.f32 %v5596, %v5814
        %v5903 = vadd.f32 %v5597, %v5819
        %v5904 = vadd.f32 %v5598, %v5822
        %v5905 = vadd.f32 %v5599, %v5827
        %v5906 = vadd.f32 %v5600, %v5830
        %v5907 = vadd.f32 %v5601, %v5835
        %v5908 = vadd.f32 %v5602, %v5838
        %v5909 = vadd.f32 %v5603, %v5843
        %v5910 = vadd.f32 %v5604, %v5846
        %v5911 = vadd.f32 %v5605, %v5851
        %v5912 = vadd.f32 %v5606, %v5854
        %v5913 = vadd.f32 %v5607, %v5859
        %v5914 = vadd.f32 %v5608, %v5862
        %v5915 = vadd.f32 %v5609, %v5867
        %v5916 = vadd.f32 %v5610, %v5870
        %v5917 = vadd.f32 %v5611, %v5875
        %v5918 = vadd.f32 %v5612, %v5878
        %v5919 = vadd.f32 %v5613, %v5883
        %v5920 = vadd.f32 %v5614, %v5886
        %v5921 = vld [vmem:[%s5308 + $0x2] sm:$0xff]
        %v5922 = vld [vmem:[%s5308 + $0x12] sm:$0xff]
        %v5923 = vld [vmem:[%s5308 + $0x22] sm:$0xff]
        %v5924 = vld [vmem:[%s5308 + $0x32] sm:$0xff]
        %v5925 = vld [vmem:[%s5308 + $0x42] sm:$0xff]
        %v5926 = vld [vmem:[%s5308 + $0x52] sm:$0xff]
        %v5927 = vld [vmem:[%s5308 + $0x62] sm:$0xff]
        %v5928 = vld [vmem:[%s5308 + $0x72] sm:$0xff]
        %v5929 = vld [vmem:[%s5308 + $0xa2] sm:$0xff]
        %v5930 = vld [vmem:[%s5308 + $0xb2] sm:$0xff]
        %v5931 = vld [vmem:[%s5308 + $0xc2] sm:$0xff]
        %v5932 = vld [vmem:[%s5308 + $0xd2] sm:$0xff]
        %v5933 = vld [vmem:[%s5308 + $0xe2] sm:$0xff]
        %v5934 = vld [vmem:[%s5308 + $0xf2] sm:$0xff]
        %v5935 = vld [vmem:[%s5308 + $0x102] sm:$0xff]
        %v5936 = vld [vmem:[%s5308 + $0x112] sm:$0xff]
        %v5937 = vld [vmem:[%s5308 + $0x142] sm:$0xff]
        %v5938 = vld [vmem:[%s5308 + $0x152] sm:$0xff]
        %v5939 = vld [vmem:[%s5308 + $0x162] sm:$0xff]
        %v5940 = vld [vmem:[%s5308 + $0x172] sm:$0xff]
        %v5941 = vld [vmem:[%s5308 + $0x182] sm:$0xff]
        %v5942 = vld [vmem:[%s5308 + $0x192] sm:$0xff]
        %v5943 = vld [vmem:[%s5308 + $0x1a2] sm:$0xff]
        %v5944 = vld [vmem:[%s5308 + $0x1b2] sm:$0xff]
        %v5945 = vld [vmem:[%s5308 + $0x1e2] sm:$0xff]
        %v5946 = vld [vmem:[%s5308 + $0x1f2] sm:$0xff]
        %v5947 = vld [vmem:[%s5308 + $0x202] sm:$0xff]
        %v5948 = vld [vmem:[%s5308 + $0x212] sm:$0xff]
        %v5949 = vld [vmem:[%s5308 + $0x222] sm:$0xff]
        %v5950 = vld [vmem:[%s5308 + $0x232] sm:$0xff]
        %v5951 = vld [vmem:[%s5308 + $0x242] sm:$0xff]
        %v5952 = vld [vmem:[%s5308 + $0x252] sm:$0xff]
        %v5953 = vpack.c.bf16 %v5922, %v5921
        %v5954 = vpack.c.bf16 %v5924, %v5923
        %v5955 = vpack.c.bf16 %v5926, %v5925
        %v5956 = vpack.c.bf16 %v5928, %v5927
        %v5957 = vpack.c.bf16 %v5930, %v5929
        %v5958 = vpack.c.bf16 %v5932, %v5931
        %v5959 = vpack.c.bf16 %v5934, %v5933
        %v5960 = vpack.c.bf16 %v5936, %v5935
        %v5961 = vpack.c.bf16 %v5938, %v5937
        %v5962 = vpack.c.bf16 %v5940, %v5939
        %v5963 = vpack.c.bf16 %v5942, %v5941
        %v5964 = vpack.c.bf16 %v5944, %v5943
        %v5965 = vpack.c.bf16 %v5946, %v5945
        %v5966 = vpack.c.bf16 %v5948, %v5947
        %v5967 = vpack.c.bf16 %v5950, %v5949
        %v5968 = vpack.c.bf16 %v5952, %v5951
        %s5969 = scalar_lea.vmem [#allocation6], 272
        %v5970 = vld [vmem:[%s5969] sm:$0xf]
        %v5971 = vld [vmem:[%s5969 + $0x4] sm:$0xf]
        %v5972 = vld [vmem:[%s5969 + $0x8] sm:$0xf]
        %v5973 = vld [vmem:[%s5969 + $0xc] sm:$0xf]
        %v5978 = vunpack.c.l.b16 %v5970
        %v5979 = vunpack.c.l.b16 %v5971
        %v5980 = vunpack.c.l.b16 %v5972
        %v5981 = vunpack.c.l.b16 %v5973
        %v5982 = vpack.c.b16 %v5979, %v5978
        %v5983 = vpack.c.b16 %v5981, %v5980
        %v5987 = vsel %vm625, %v5953, 0
        %v5990 = vsel %vm625, %v5954, 0
        %v5993 = vsel %vm625, %v5955, 0
        %v5996 = vsel %vm625, %v5956, 0
        %v5999 = vsel %vm625, %v5957, 0
        %v6002 = vsel %vm625, %v5958, 0
        %v6005 = vsel %vm625, %v5959, 0
        %v6008 = vsel %vm625, %v5960, 0
        %v6011 = vsel %vm625, %v5961, 0
        %v6014 = vsel %vm625, %v5962, 0
        %v6017 = vsel %vm625, %v5963, 0
        %v6020 = vsel %vm625, %v5964, 0
        %v6023 = vsel %vm625, %v5965, 0
        %v6026 = vsel %vm625, %v5966, 0
        %v6029 = vsel %vm625, %v5967, 0
        %v6032 = vsel %vm625, %v5968, 0
        %6034 = vmatprep.subr.bf16.mxu0 0
        %6035 = vmatpush1.bf16.msra.mxu0 0
        %6036 = vmatprep.subr.bf16.mxu0 0
        %6037 = vmatpush1.bf16.msra.mxu0 0
        %6038 = vmatprep.subr.bf16.mxu0 0
        %6039 = vmatpush1.bf16.msra.mxu0 0
        %6040 = vmatprep.subr.bf16.mxu0 0
        %6041 = vmatpush1.bf16.msra.mxu0 0
        %6042 = vmatprep.subr.bf16.mxu0 0
        %6043 = vmatpush1.bf16.msra.mxu0 0
        %6044 = vmatprep.subr.bf16.mxu0 0
        %6045 = vmatpush1.bf16.msra.mxu0 0
        %6046 = vmatprep.subr.bf16.mxu0 0
        %6047 = vmatpush1.bf16.msra.mxu0 %v5983
        %6048 = vmatprep.subr.bf16.mxu0 0
        %6049 = vmatpush1.bf16.msra.mxu0 %v5982
        %6050 = vmatprep.subr.bf16.mxu0 0
        %6051 = vmatpush2.bf16.msra.mxu0 0
        %6052 = vmatprep.subr.bf16.mxu0 0
        %6053 = vmatpush2.bf16.msra.mxu0 0
        %6054 = vmatprep.subr.bf16.mxu0 0
        %6055 = vmatpush2.bf16.msra.mxu0 0
        %6056 = vmatprep.subr.bf16.mxu0 0
        %6057 = vmatpush2.bf16.msra.mxu0 0
        %6058 = vmatprep.subr.bf16.mxu0 0
        %6059 = vmatpush2.bf16.msra.mxu0 0
        %6060 = vmatprep.subr.bf16.mxu0 0
        %6061 = vmatpush2.bf16.msra.mxu0 0
        %6062 = vmatprep.subr.bf16.mxu0 0
        %6063 = vmatpush2.bf16.msra.mxu0 0
        %6064 = vmatprep.subr.bf16.mxu0 0
        %6065 = vmatpush2.bf16.msra.mxu0 0
        %6066 = vmatprep.mubr.bf16.mxu0 0
        %6067 = vmatmul.mubr.bf16.gmra.mxu0 %v5987
        %v6068 = vpop.f32.mrf.mxu0
        %v6069 = vadd.f32 0.0, %v6068
        %v6070 = vpop.f32.mrf.mxu0
        %v6071 = vpop.f32.mrf.mxu0
        %v6072 = vadd.f32 0.0, %v6071
        %v6073 = vpop.f32.mrf.mxu0
        %6074 = vmatprep.mubr.bf16.mxu0 0
        %6075 = vmatmul.mubr.bf16.gmra.mxu0 %v5990
        %v6076 = vpop.f32.mrf.mxu0
        %v6077 = vadd.f32 0.0, %v6076
        %v6078 = vpop.f32.mrf.mxu0
        %v6079 = vpop.f32.mrf.mxu0
        %v6080 = vadd.f32 0.0, %v6079
        %v6081 = vpop.f32.mrf.mxu0
        %6082 = vmatprep.mubr.bf16.mxu0 0
        %6083 = vmatmul.mubr.bf16.gmra.mxu0 %v5993
        %v6084 = vpop.f32.mrf.mxu0
        %v6085 = vadd.f32 0.0, %v6084
        %v6086 = vpop.f32.mrf.mxu0
        %v6087 = vpop.f32.mrf.mxu0
        %v6088 = vadd.f32 0.0, %v6087
        %v6089 = vpop.f32.mrf.mxu0
        %6090 = vmatprep.mubr.bf16.mxu0 0
        %6091 = vmatmul.mubr.bf16.gmra.mxu0 %v5996
        %v6092 = vpop.f32.mrf.mxu0
        %v6093 = vadd.f32 0.0, %v6092
        %v6094 = vpop.f32.mrf.mxu0
        %v6095 = vpop.f32.mrf.mxu0
        %v6096 = vadd.f32 0.0, %v6095
        %v6097 = vpop.f32.mrf.mxu0
        %6098 = vmatprep.mubr.bf16.mxu0 0
        %6099 = vmatmul.mubr.bf16.gmra.mxu0 %v5999
        %v6100 = vpop.f32.mrf.mxu0
        %v6101 = vadd.f32 0.0, %v6100
        %v6102 = vpop.f32.mrf.mxu0
        %v6103 = vpop.f32.mrf.mxu0
        %v6104 = vadd.f32 0.0, %v6103
        %v6105 = vpop.f32.mrf.mxu0
        %6106 = vmatprep.mubr.bf16.mxu0 0
        %6107 = vmatmul.mubr.bf16.gmra.mxu0 %v6002
        %v6108 = vpop.f32.mrf.mxu0
        %v6109 = vadd.f32 0.0, %v6108
        %v6110 = vpop.f32.mrf.mxu0
        %v6111 = vpop.f32.mrf.mxu0
        %v6112 = vadd.f32 0.0, %v6111
        %v6113 = vpop.f32.mrf.mxu0
        %6114 = vmatprep.mubr.bf16.mxu0 0
        %6115 = vmatmul.mubr.bf16.gmra.mxu0 %v6005
        %v6116 = vpop.f32.mrf.mxu0
        %v6117 = vadd.f32 0.0, %v6116
        %v6118 = vpop.f32.mrf.mxu0
        %v6119 = vpop.f32.mrf.mxu0
        %v6120 = vadd.f32 0.0, %v6119
        %v6121 = vpop.f32.mrf.mxu0
        %6122 = vmatprep.mubr.bf16.mxu0 0
        %6123 = vmatmul.mubr.bf16.gmra.mxu0 %v6008
        %v6124 = vpop.f32.mrf.mxu0
        %v6125 = vadd.f32 0.0, %v6124
        %v6126 = vpop.f32.mrf.mxu0
        %v6127 = vpop.f32.mrf.mxu0
        %v6128 = vadd.f32 0.0, %v6127
        %v6129 = vpop.f32.mrf.mxu0
        %6130 = vmatprep.mubr.bf16.mxu0 0
        %6131 = vmatmul.mubr.bf16.gmra.mxu0 %v6011
        %v6132 = vpop.f32.mrf.mxu0
        %v6133 = vadd.f32 0.0, %v6132
        %v6134 = vpop.f32.mrf.mxu0
        %v6135 = vpop.f32.mrf.mxu0
        %v6136 = vadd.f32 0.0, %v6135
        %v6137 = vpop.f32.mrf.mxu0
        %6138 = vmatprep.mubr.bf16.mxu0 0
        %6139 = vmatmul.mubr.bf16.gmra.mxu0 %v6014
        %v6140 = vpop.f32.mrf.mxu0
        %v6141 = vadd.f32 0.0, %v6140
        %v6142 = vpop.f32.mrf.mxu0
        %v6143 = vpop.f32.mrf.mxu0
        %v6144 = vadd.f32 0.0, %v6143
        %v6145 = vpop.f32.mrf.mxu0
        %6146 = vmatprep.mubr.bf16.mxu0 0
        %6147 = vmatmul.mubr.bf16.gmra.mxu0 %v6017
        %v6148 = vpop.f32.mrf.mxu0
        %v6149 = vadd.f32 0.0, %v6148
        %v6150 = vpop.f32.mrf.mxu0
        %v6151 = vpop.f32.mrf.mxu0
        %v6152 = vadd.f32 0.0, %v6151
        %v6153 = vpop.f32.mrf.mxu0
        %6154 = vmatprep.mubr.bf16.mxu0 0
        %6155 = vmatmul.mubr.bf16.gmra.mxu0 %v6020
        %v6156 = vpop.f32.mrf.mxu0
        %v6157 = vadd.f32 0.0, %v6156
        %v6158 = vpop.f32.mrf.mxu0
        %v6159 = vpop.f32.mrf.mxu0
        %v6160 = vadd.f32 0.0, %v6159
        %v6161 = vpop.f32.mrf.mxu0
        %6162 = vmatprep.mubr.bf16.mxu0 0
        %6163 = vmatmul.mubr.bf16.gmra.mxu0 %v6023
        %v6164 = vpop.f32.mrf.mxu0
        %v6165 = vadd.f32 0.0, %v6164
        %v6166 = vpop.f32.mrf.mxu0
        %v6167 = vpop.f32.mrf.mxu0
        %v6168 = vadd.f32 0.0, %v6167
        %v6169 = vpop.f32.mrf.mxu0
        %6170 = vmatprep.mubr.bf16.mxu0 0
        %6171 = vmatmul.mubr.bf16.gmra.mxu0 %v6026
        %v6172 = vpop.f32.mrf.mxu0
        %v6173 = vadd.f32 0.0, %v6172
        %v6174 = vpop.f32.mrf.mxu0
        %v6175 = vpop.f32.mrf.mxu0
        %v6176 = vadd.f32 0.0, %v6175
        %v6177 = vpop.f32.mrf.mxu0
        %6178 = vmatprep.mubr.bf16.mxu0 0
        %6179 = vmatmul.mubr.bf16.gmra.mxu0 %v6029
        %v6180 = vpop.f32.mrf.mxu0
        %v6181 = vadd.f32 0.0, %v6180
        %v6182 = vpop.f32.mrf.mxu0
        %v6183 = vpop.f32.mrf.mxu0
        %v6184 = vadd.f32 0.0, %v6183
        %v6185 = vpop.f32.mrf.mxu0
        %6186 = vmatprep.mubr.bf16.mxu0 0
        %6187 = vmatmul.mubr.bf16.gmra.mxu0 %v6032
        %v6188 = vpop.f32.mrf.mxu0
        %v6189 = vadd.f32 0.0, %v6188
        %v6190 = vpop.f32.mrf.mxu0
        %v6191 = vpop.f32.mrf.mxu0
        %v6192 = vadd.f32 0.0, %v6191
        %v6193 = vpop.f32.mrf.mxu0
        %6194 = vdwg.mxu0
        %v6195 = vadd.f32 %v5889, %v6069
        %v6196 = vadd.f32 %v5890, %v6072
        %v6197 = vadd.f32 %v5891, %v6077
        %v6198 = vadd.f32 %v5892, %v6080
        %v6199 = vadd.f32 %v5893, %v6085
        %v6200 = vadd.f32 %v5894, %v6088
        %v6201 = vadd.f32 %v5895, %v6093
        %v6202 = vadd.f32 %v5896, %v6096
        %v6203 = vadd.f32 %v5897, %v6101
        %v6204 = vadd.f32 %v5898, %v6104
        %v6205 = vadd.f32 %v5899, %v6109
        %v6206 = vadd.f32 %v5900, %v6112
        %v6207 = vadd.f32 %v5901, %v6117
        %v6208 = vadd.f32 %v5902, %v6120
        %v6209 = vadd.f32 %v5903, %v6125
        %v6210 = vadd.f32 %v5904, %v6128
        %v6211 = vadd.f32 %v5905, %v6133
        %v6212 = vadd.f32 %v5906, %v6136
        %v6213 = vadd.f32 %v5907, %v6141
        %v6214 = vadd.f32 %v5908, %v6144
        %v6215 = vadd.f32 %v5909, %v6149
        %v6216 = vadd.f32 %v5910, %v6152
        %v6217 = vadd.f32 %v5911, %v6157
        %v6218 = vadd.f32 %v5912, %v6160
        %v6219 = vadd.f32 %v5913, %v6165
        %v6220 = vadd.f32 %v5914, %v6168
        %v6221 = vadd.f32 %v5915, %v6173
        %v6222 = vadd.f32 %v5916, %v6176
        %v6223 = vadd.f32 %v5917, %v6181
        %v6224 = vadd.f32 %v5918, %v6184
        %v6225 = vadd.f32 %v5919, %v6189
        %v6226 = vadd.f32 %v5920, %v6192
        %s6227 = scalar_lea.vmem [#allocation2], 320
        %v6228 = vld [vmem:[%s6227] sm:$0xff]
        %v6229 = vld [vmem:[%s6227 + $0x10] sm:$0xff]
        %v6230 = vld [vmem:[%s6227 + $0x20] sm:$0xff]
        %v6231 = vld [vmem:[%s6227 + $0x30] sm:$0xff]
        %v6232 = vld [vmem:[%s6227 + $0x40] sm:$0xff]
        %v6233 = vld [vmem:[%s6227 + $0x50] sm:$0xff]
        %v6234 = vld [vmem:[%s6227 + $0x60] sm:$0xff]
        %v6235 = vld [vmem:[%s6227 + $0x70] sm:$0xff]
        %v6236 = vld [vmem:[%s6227 + $0xa0] sm:$0xff]
        %v6237 = vld [vmem:[%s6227 + $0xb0] sm:$0xff]
        %v6238 = vld [vmem:[%s6227 + $0xc0] sm:$0xff]
        %v6239 = vld [vmem:[%s6227 + $0xd0] sm:$0xff]
        %v6240 = vld [vmem:[%s6227 + $0xe0] sm:$0xff]
        %v6241 = vld [vmem:[%s6227 + $0xf0] sm:$0xff]
        %v6242 = vld [vmem:[%s6227 + $0x100] sm:$0xff]
        %v6243 = vld [vmem:[%s6227 + $0x110] sm:$0xff]
        %v6244 = vld [vmem:[%s6227 + $0x140] sm:$0xff]
        %v6245 = vld [vmem:[%s6227 + $0x150] sm:$0xff]
        %v6246 = vld [vmem:[%s6227 + $0x160] sm:$0xff]
        %v6247 = vld [vmem:[%s6227 + $0x170] sm:$0xff]
        %v6248 = vld [vmem:[%s6227 + $0x180] sm:$0xff]
        %v6249 = vld [vmem:[%s6227 + $0x190] sm:$0xff]
        %v6250 = vld [vmem:[%s6227 + $0x1a0] sm:$0xff]
        %v6251 = vld [vmem:[%s6227 + $0x1b0] sm:$0xff]
        %v6252 = vld [vmem:[%s6227 + $0x1e0] sm:$0xff]
        %v6253 = vld [vmem:[%s6227 + $0x1f0] sm:$0xff]
        %v6254 = vld [vmem:[%s6227 + $0x200] sm:$0xff]
        %v6255 = vld [vmem:[%s6227 + $0x210] sm:$0xff]
        %v6256 = vld [vmem:[%s6227 + $0x220] sm:$0xff]
        %v6257 = vld [vmem:[%s6227 + $0x230] sm:$0xff]
        %v6258 = vld [vmem:[%s6227 + $0x240] sm:$0xff]
        %v6259 = vld [vmem:[%s6227 + $0x250] sm:$0xff]
        %v6260 = vpack.c.bf16 %v6229, %v6228
        %v6261 = vpack.c.bf16 %v6231, %v6230
        %v6262 = vpack.c.bf16 %v6233, %v6232
        %v6263 = vpack.c.bf16 %v6235, %v6234
        %v6264 = vpack.c.bf16 %v6237, %v6236
        %v6265 = vpack.c.bf16 %v6239, %v6238
        %v6266 = vpack.c.bf16 %v6241, %v6240
        %v6267 = vpack.c.bf16 %v6243, %v6242
        %v6268 = vpack.c.bf16 %v6245, %v6244
        %v6269 = vpack.c.bf16 %v6247, %v6246
        %v6270 = vpack.c.bf16 %v6249, %v6248
        %v6271 = vpack.c.bf16 %v6251, %v6250
        %v6272 = vpack.c.bf16 %v6253, %v6252
        %v6273 = vpack.c.bf16 %v6255, %v6254
        %v6274 = vpack.c.bf16 %v6257, %v6256
        %v6275 = vpack.c.bf16 %v6259, %v6258
        %s6276 = scalar_lea.vmem [#allocation6], 288
        %v6277 = vld [vmem:[%s6276] sm:$0xf]
        %v6278 = vld [vmem:[%s6276 + $0x4] sm:$0xf]
        %v6279 = vld [vmem:[%s6276 + $0x8] sm:$0xf]
        %v6280 = vld [vmem:[%s6276 + $0xc] sm:$0xf]
        %v6285 = vunpack.c.l.b16 %v6277
        %v6286 = vunpack.c.l.b16 %v6278
        %v6287 = vunpack.c.l.b16 %v6279
        %v6288 = vunpack.c.l.b16 %v6280
        %v6289 = vpack.c.b16 %v6286, %v6285
        %v6290 = vpack.c.b16 %v6288, %v6287
        %v6294 = vsel %vm625, %v6260, 0
        %v6297 = vsel %vm625, %v6261, 0
        %v6300 = vsel %vm625, %v6262, 0
        %v6303 = vsel %vm625, %v6263, 0
        %v6306 = vsel %vm625, %v6264, 0
        %v6309 = vsel %vm625, %v6265, 0
        %v6312 = vsel %vm625, %v6266, 0
        %v6315 = vsel %vm625, %v6267, 0
        %v6318 = vsel %vm625, %v6268, 0
        %v6321 = vsel %vm625, %v6269, 0
        %v6324 = vsel %vm625, %v6270, 0
        %v6327 = vsel %vm625, %v6271, 0
        %v6330 = vsel %vm625, %v6272, 0
        %v6333 = vsel %vm625, %v6273, 0
        %v6336 = vsel %vm625, %v6274, 0
        %v6339 = vsel %vm625, %v6275, 0
        %6341 = vmatprep.subr.bf16.mxu0 0
        %6342 = vmatpush1.bf16.msra.mxu0 0
        %6343 = vmatprep.subr.bf16.mxu0 0
        %6344 = vmatpush1.bf16.msra.mxu0 0
        %6345 = vmatprep.subr.bf16.mxu0 0
        %6346 = vmatpush1.bf16.msra.mxu0 0
        %6347 = vmatprep.subr.bf16.mxu0 0
        %6348 = vmatpush1.bf16.msra.mxu0 0
        %6349 = vmatprep.subr.bf16.mxu0 0
        %6350 = vmatpush1.bf16.msra.mxu0 0
        %6351 = vmatprep.subr.bf16.mxu0 0
        %6352 = vmatpush1.bf16.msra.mxu0 0
        %6353 = vmatprep.subr.bf16.mxu0 0
        %6354 = vmatpush1.bf16.msra.mxu0 %v6290
        %6355 = vmatprep.subr.bf16.mxu0 0
        %6356 = vmatpush1.bf16.msra.mxu0 %v6289
        %6357 = vmatprep.subr.bf16.mxu0 0
        %6358 = vmatpush2.bf16.msra.mxu0 0
        %6359 = vmatprep.subr.bf16.mxu0 0
        %6360 = vmatpush2.bf16.msra.mxu0 0
        %6361 = vmatprep.subr.bf16.mxu0 0
        %6362 = vmatpush2.bf16.msra.mxu0 0
        %6363 = vmatprep.subr.bf16.mxu0 0
        %6364 = vmatpush2.bf16.msra.mxu0 0
        %6365 = vmatprep.subr.bf16.mxu0 0
        %6366 = vmatpush2.bf16.msra.mxu0 0
        %6367 = vmatprep.subr.bf16.mxu0 0
        %6368 = vmatpush2.bf16.msra.mxu0 0
        %6369 = vmatprep.subr.bf16.mxu0 0
        %6370 = vmatpush2.bf16.msra.mxu0 0
        %6371 = vmatprep.subr.bf16.mxu0 0
        %6372 = vmatpush2.bf16.msra.mxu0 0
        %6373 = vmatprep.mubr.bf16.mxu0 0
        %6374 = vmatmul.mubr.bf16.gmra.mxu0 %v6294
        %v6375 = vpop.f32.mrf.mxu0
        %v6376 = vadd.f32 0.0, %v6375
        %v6377 = vpop.f32.mrf.mxu0
        %v6378 = vpop.f32.mrf.mxu0
        %v6379 = vadd.f32 0.0, %v6378
        %v6380 = vpop.f32.mrf.mxu0
        %6381 = vmatprep.mubr.bf16.mxu0 0
        %6382 = vmatmul.mubr.bf16.gmra.mxu0 %v6297
        %v6383 = vpop.f32.mrf.mxu0
        %v6384 = vadd.f32 0.0, %v6383
        %v6385 = vpop.f32.mrf.mxu0
        %v6386 = vpop.f32.mrf.mxu0
        %v6387 = vadd.f32 0.0, %v6386
        %v6388 = vpop.f32.mrf.mxu0
        %6389 = vmatprep.mubr.bf16.mxu0 0
        %6390 = vmatmul.mubr.bf16.gmra.mxu0 %v6300
        %v6391 = vpop.f32.mrf.mxu0
        %v6392 = vadd.f32 0.0, %v6391
        %v6393 = vpop.f32.mrf.mxu0
        %v6394 = vpop.f32.mrf.mxu0
        %v6395 = vadd.f32 0.0, %v6394
        %v6396 = vpop.f32.mrf.mxu0
        %6397 = vmatprep.mubr.bf16.mxu0 0
        %6398 = vmatmul.mubr.bf16.gmra.mxu0 %v6303
        %v6399 = vpop.f32.mrf.mxu0
        %v6400 = vadd.f32 0.0, %v6399
        %v6401 = vpop.f32.mrf.mxu0
        %v6402 = vpop.f32.mrf.mxu0
        %v6403 = vadd.f32 0.0, %v6402
        %v6404 = vpop.f32.mrf.mxu0
        %6405 = vmatprep.mubr.bf16.mxu0 0
        %6406 = vmatmul.mubr.bf16.gmra.mxu0 %v6306
        %v6407 = vpop.f32.mrf.mxu0
        %v6408 = vadd.f32 0.0, %v6407
        %v6409 = vpop.f32.mrf.mxu0
        %v6410 = vpop.f32.mrf.mxu0
        %v6411 = vadd.f32 0.0, %v6410
        %v6412 = vpop.f32.mrf.mxu0
        %6413 = vmatprep.mubr.bf16.mxu0 0
        %6414 = vmatmul.mubr.bf16.gmra.mxu0 %v6309
        %v6415 = vpop.f32.mrf.mxu0
        %v6416 = vadd.f32 0.0, %v6415
        %v6417 = vpop.f32.mrf.mxu0
        %v6418 = vpop.f32.mrf.mxu0
        %v6419 = vadd.f32 0.0, %v6418
        %v6420 = vpop.f32.mrf.mxu0
        %6421 = vmatprep.mubr.bf16.mxu0 0
        %6422 = vmatmul.mubr.bf16.gmra.mxu0 %v6312
        %v6423 = vpop.f32.mrf.mxu0
        %v6424 = vadd.f32 0.0, %v6423
        %v6425 = vpop.f32.mrf.mxu0
        %v6426 = vpop.f32.mrf.mxu0
        %v6427 = vadd.f32 0.0, %v6426
        %v6428 = vpop.f32.mrf.mxu0
        %6429 = vmatprep.mubr.bf16.mxu0 0
        %6430 = vmatmul.mubr.bf16.gmra.mxu0 %v6315
        %v6431 = vpop.f32.mrf.mxu0
        %v6432 = vadd.f32 0.0, %v6431
        %v6433 = vpop.f32.mrf.mxu0
        %v6434 = vpop.f32.mrf.mxu0
        %v6435 = vadd.f32 0.0, %v6434
        %v6436 = vpop.f32.mrf.mxu0
        %6437 = vmatprep.mubr.bf16.mxu0 0
        %6438 = vmatmul.mubr.bf16.gmra.mxu0 %v6318
        %v6439 = vpop.f32.mrf.mxu0
        %v6440 = vadd.f32 0.0, %v6439
        %v6441 = vpop.f32.mrf.mxu0
        %v6442 = vpop.f32.mrf.mxu0
        %v6443 = vadd.f32 0.0, %v6442
        %v6444 = vpop.f32.mrf.mxu0
        %6445 = vmatprep.mubr.bf16.mxu0 0
        %6446 = vmatmul.mubr.bf16.gmra.mxu0 %v6321
        %v6447 = vpop.f32.mrf.mxu0
        %v6448 = vadd.f32 0.0, %v6447
        %v6449 = vpop.f32.mrf.mxu0
        %v6450 = vpop.f32.mrf.mxu0
        %v6451 = vadd.f32 0.0, %v6450
        %v6452 = vpop.f32.mrf.mxu0
        %6453 = vmatprep.mubr.bf16.mxu0 0
        %6454 = vmatmul.mubr.bf16.gmra.mxu0 %v6324
        %v6455 = vpop.f32.mrf.mxu0
        %v6456 = vadd.f32 0.0, %v6455
        %v6457 = vpop.f32.mrf.mxu0
        %v6458 = vpop.f32.mrf.mxu0
        %v6459 = vadd.f32 0.0, %v6458
        %v6460 = vpop.f32.mrf.mxu0
        %6461 = vmatprep.mubr.bf16.mxu0 0
        %6462 = vmatmul.mubr.bf16.gmra.mxu0 %v6327
        %v6463 = vpop.f32.mrf.mxu0
        %v6464 = vadd.f32 0.0, %v6463
        %v6465 = vpop.f32.mrf.mxu0
        %v6466 = vpop.f32.mrf.mxu0
        %v6467 = vadd.f32 0.0, %v6466
        %v6468 = vpop.f32.mrf.mxu0
        %6469 = vmatprep.mubr.bf16.mxu0 0
        %6470 = vmatmul.mubr.bf16.gmra.mxu0 %v6330
        %v6471 = vpop.f32.mrf.mxu0
        %v6472 = vadd.f32 0.0, %v6471
        %v6473 = vpop.f32.mrf.mxu0
        %v6474 = vpop.f32.mrf.mxu0
        %v6475 = vadd.f32 0.0, %v6474
        %v6476 = vpop.f32.mrf.mxu0
        %6477 = vmatprep.mubr.bf16.mxu0 0
        %6478 = vmatmul.mubr.bf16.gmra.mxu0 %v6333
        %v6479 = vpop.f32.mrf.mxu0
        %v6480 = vadd.f32 0.0, %v6479
        %v6481 = vpop.f32.mrf.mxu0
        %v6482 = vpop.f32.mrf.mxu0
        %v6483 = vadd.f32 0.0, %v6482
        %v6484 = vpop.f32.mrf.mxu0
        %6485 = vmatprep.mubr.bf16.mxu0 0
        %6486 = vmatmul.mubr.bf16.gmra.mxu0 %v6336
        %v6487 = vpop.f32.mrf.mxu0
        %v6488 = vadd.f32 0.0, %v6487
        %v6489 = vpop.f32.mrf.mxu0
        %v6490 = vpop.f32.mrf.mxu0
        %v6491 = vadd.f32 0.0, %v6490
        %v6492 = vpop.f32.mrf.mxu0
        %6493 = vmatprep.mubr.bf16.mxu0 0
        %6494 = vmatmul.mubr.bf16.gmra.mxu0 %v6339
        %v6495 = vpop.f32.mrf.mxu0
        %v6496 = vadd.f32 0.0, %v6495
        %v6497 = vpop.f32.mrf.mxu0
        %v6498 = vpop.f32.mrf.mxu0
        %v6499 = vadd.f32 0.0, %v6498
        %v6500 = vpop.f32.mrf.mxu0
        %6501 = vdwg.mxu0
        %v6502 = vadd.f32 %v6195, %v6376
        %v6503 = vadd.f32 %v6196, %v6379
        %v6504 = vadd.f32 %v6197, %v6384
        %v6505 = vadd.f32 %v6198, %v6387
        %v6506 = vadd.f32 %v6199, %v6392
        %v6507 = vadd.f32 %v6200, %v6395
        %v6508 = vadd.f32 %v6201, %v6400
        %v6509 = vadd.f32 %v6202, %v6403
        %v6510 = vadd.f32 %v6203, %v6408
        %v6511 = vadd.f32 %v6204, %v6411
        %v6512 = vadd.f32 %v6205, %v6416
        %v6513 = vadd.f32 %v6206, %v6419
        %v6514 = vadd.f32 %v6207, %v6424
        %v6515 = vadd.f32 %v6208, %v6427
        %v6516 = vadd.f32 %v6209, %v6432
        %v6517 = vadd.f32 %v6210, %v6435
        %v6518 = vadd.f32 %v6211, %v6440
        %v6519 = vadd.f32 %v6212, %v6443
        %v6520 = vadd.f32 %v6213, %v6448
        %v6521 = vadd.f32 %v6214, %v6451
        %v6522 = vadd.f32 %v6215, %v6456
        %v6523 = vadd.f32 %v6216, %v6459
        %v6524 = vadd.f32 %v6217, %v6464
        %v6525 = vadd.f32 %v6218, %v6467
        %v6526 = vadd.f32 %v6219, %v6472
        %v6527 = vadd.f32 %v6220, %v6475
        %v6528 = vadd.f32 %v6221, %v6480
        %v6529 = vadd.f32 %v6222, %v6483
        %v6530 = vadd.f32 %v6223, %v6488
        %v6531 = vadd.f32 %v6224, %v6491
        %v6532 = vadd.f32 %v6225, %v6496
        %v6533 = vadd.f32 %v6226, %v6499
        %v6534 = vld [vmem:[%s6227 + $0x1] sm:$0xff]
        %v6535 = vld [vmem:[%s6227 + $0x11] sm:$0xff]
        %v6536 = vld [vmem:[%s6227 + $0x21] sm:$0xff]
        %v6537 = vld [vmem:[%s6227 + $0x31] sm:$0xff]
        %v6538 = vld [vmem:[%s6227 + $0x41] sm:$0xff]
        %v6539 = vld [vmem:[%s6227 + $0x51] sm:$0xff]
        %v6540 = vld [vmem:[%s6227 + $0x61] sm:$0xff]
        %v6541 = vld [vmem:[%s6227 + $0x71] sm:$0xff]
        %v6542 = vld [vmem:[%s6227 + $0xa1] sm:$0xff]
        %v6543 = vld [vmem:[%s6227 + $0xb1] sm:$0xff]
        %v6544 = vld [vmem:[%s6227 + $0xc1] sm:$0xff]
        %v6545 = vld [vmem:[%s6227 + $0xd1] sm:$0xff]
        %v6546 = vld [vmem:[%s6227 + $0xe1] sm:$0xff]
        %v6547 = vld [vmem:[%s6227 + $0xf1] sm:$0xff]
        %v6548 = vld [vmem:[%s6227 + $0x101] sm:$0xff]
        %v6549 = vld [vmem:[%s6227 + $0x111] sm:$0xff]
        %v6550 = vld [vmem:[%s6227 + $0x141] sm:$0xff]
        %v6551 = vld [vmem:[%s6227 + $0x151] sm:$0xff]
        %v6552 = vld [vmem:[%s6227 + $0x161] sm:$0xff]
        %v6553 = vld [vmem:[%s6227 + $0x171] sm:$0xff]
        %v6554 = vld [vmem:[%s6227 + $0x181] sm:$0xff]
        %v6555 = vld [vmem:[%s6227 + $0x191] sm:$0xff]
        %v6556 = vld [vmem:[%s6227 + $0x1a1] sm:$0xff]
        %v6557 = vld [vmem:[%s6227 + $0x1b1] sm:$0xff]
        %v6558 = vld [vmem:[%s6227 + $0x1e1] sm:$0xff]
        %v6559 = vld [vmem:[%s6227 + $0x1f1] sm:$0xff]
        %v6560 = vld [vmem:[%s6227 + $0x201] sm:$0xff]
        %v6561 = vld [vmem:[%s6227 + $0x211] sm:$0xff]
        %v6562 = vld [vmem:[%s6227 + $0x221] sm:$0xff]
        %v6563 = vld [vmem:[%s6227 + $0x231] sm:$0xff]
        %v6564 = vld [vmem:[%s6227 + $0x241] sm:$0xff]
        %v6565 = vld [vmem:[%s6227 + $0x251] sm:$0xff]
        %v6566 = vpack.c.bf16 %v6535, %v6534
        %v6567 = vpack.c.bf16 %v6537, %v6536
        %v6568 = vpack.c.bf16 %v6539, %v6538
        %v6569 = vpack.c.bf16 %v6541, %v6540
        %v6570 = vpack.c.bf16 %v6543, %v6542
        %v6571 = vpack.c.bf16 %v6545, %v6544
        %v6572 = vpack.c.bf16 %v6547, %v6546
        %v6573 = vpack.c.bf16 %v6549, %v6548
        %v6574 = vpack.c.bf16 %v6551, %v6550
        %v6575 = vpack.c.bf16 %v6553, %v6552
        %v6576 = vpack.c.bf16 %v6555, %v6554
        %v6577 = vpack.c.bf16 %v6557, %v6556
        %v6578 = vpack.c.bf16 %v6559, %v6558
        %v6579 = vpack.c.bf16 %v6561, %v6560
        %v6580 = vpack.c.bf16 %v6563, %v6562
        %v6581 = vpack.c.bf16 %v6565, %v6564
        %s6582 = scalar_lea.vmem [#allocation6], 304
        %v6583 = vld [vmem:[%s6582] sm:$0xf]
        %v6584 = vld [vmem:[%s6582 + $0x4] sm:$0xf]
        %v6585 = vld [vmem:[%s6582 + $0x8] sm:$0xf]
        %v6586 = vld [vmem:[%s6582 + $0xc] sm:$0xf]
        %v6591 = vunpack.c.l.b16 %v6583
        %v6592 = vunpack.c.l.b16 %v6584
        %v6593 = vunpack.c.l.b16 %v6585
        %v6594 = vunpack.c.l.b16 %v6586
        %v6595 = vpack.c.b16 %v6592, %v6591
        %v6596 = vpack.c.b16 %v6594, %v6593
        %v6600 = vsel %vm625, %v6566, 0
        %v6603 = vsel %vm625, %v6567, 0
        %v6606 = vsel %vm625, %v6568, 0
        %v6609 = vsel %vm625, %v6569, 0
        %v6612 = vsel %vm625, %v6570, 0
        %v6615 = vsel %vm625, %v6571, 0
        %v6618 = vsel %vm625, %v6572, 0
        %v6621 = vsel %vm625, %v6573, 0
        %v6624 = vsel %vm625, %v6574, 0
        %v6627 = vsel %vm625, %v6575, 0
        %v6630 = vsel %vm625, %v6576, 0
        %v6633 = vsel %vm625, %v6577, 0
        %v6636 = vsel %vm625, %v6578, 0
        %v6639 = vsel %vm625, %v6579, 0
        %v6642 = vsel %vm625, %v6580, 0
        %v6645 = vsel %vm625, %v6581, 0
        %6647 = vmatprep.subr.bf16.mxu0 0
        %6648 = vmatpush1.bf16.msra.mxu0 0
        %6649 = vmatprep.subr.bf16.mxu0 0
        %6650 = vmatpush1.bf16.msra.mxu0 0
        %6651 = vmatprep.subr.bf16.mxu0 0
        %6652 = vmatpush1.bf16.msra.mxu0 0
        %6653 = vmatprep.subr.bf16.mxu0 0
        %6654 = vmatpush1.bf16.msra.mxu0 0
        %6655 = vmatprep.subr.bf16.mxu0 0
        %6656 = vmatpush1.bf16.msra.mxu0 0
        %6657 = vmatprep.subr.bf16.mxu0 0
        %6658 = vmatpush1.bf16.msra.mxu0 0
        %6659 = vmatprep.subr.bf16.mxu0 0
        %6660 = vmatpush1.bf16.msra.mxu0 %v6596
        %6661 = vmatprep.subr.bf16.mxu0 0
        %6662 = vmatpush1.bf16.msra.mxu0 %v6595
        %6663 = vmatprep.subr.bf16.mxu0 0
        %6664 = vmatpush2.bf16.msra.mxu0 0
        %6665 = vmatprep.subr.bf16.mxu0 0
        %6666 = vmatpush2.bf16.msra.mxu0 0
        %6667 = vmatprep.subr.bf16.mxu0 0
        %6668 = vmatpush2.bf16.msra.mxu0 0
        %6669 = vmatprep.subr.bf16.mxu0 0
        %6670 = vmatpush2.bf16.msra.mxu0 0
        %6671 = vmatprep.subr.bf16.mxu0 0
        %6672 = vmatpush2.bf16.msra.mxu0 0
        %6673 = vmatprep.subr.bf16.mxu0 0
        %6674 = vmatpush2.bf16.msra.mxu0 0
        %6675 = vmatprep.subr.bf16.mxu0 0
        %6676 = vmatpush2.bf16.msra.mxu0 0
        %6677 = vmatprep.subr.bf16.mxu0 0
        %6678 = vmatpush2.bf16.msra.mxu0 0
        %6679 = vmatprep.mubr.bf16.mxu0 0
        %6680 = vmatmul.mubr.bf16.gmra.mxu0 %v6600
        %v6681 = vpop.f32.mrf.mxu0
        %v6682 = vadd.f32 0.0, %v6681
        %v6683 = vpop.f32.mrf.mxu0
        %v6684 = vpop.f32.mrf.mxu0
        %v6685 = vadd.f32 0.0, %v6684
        %v6686 = vpop.f32.mrf.mxu0
        %6687 = vmatprep.mubr.bf16.mxu0 0
        %6688 = vmatmul.mubr.bf16.gmra.mxu0 %v6603
        %v6689 = vpop.f32.mrf.mxu0
        %v6690 = vadd.f32 0.0, %v6689
        %v6691 = vpop.f32.mrf.mxu0
        %v6692 = vpop.f32.mrf.mxu0
        %v6693 = vadd.f32 0.0, %v6692
        %v6694 = vpop.f32.mrf.mxu0
        %6695 = vmatprep.mubr.bf16.mxu0 0
        %6696 = vmatmul.mubr.bf16.gmra.mxu0 %v6606
        %v6697 = vpop.f32.mrf.mxu0
        %v6698 = vadd.f32 0.0, %v6697
        %v6699 = vpop.f32.mrf.mxu0
        %v6700 = vpop.f32.mrf.mxu0
        %v6701 = vadd.f32 0.0, %v6700
        %v6702 = vpop.f32.mrf.mxu0
        %6703 = vmatprep.mubr.bf16.mxu0 0
        %6704 = vmatmul.mubr.bf16.gmra.mxu0 %v6609
        %v6705 = vpop.f32.mrf.mxu0
        %v6706 = vadd.f32 0.0, %v6705
        %v6707 = vpop.f32.mrf.mxu0
        %v6708 = vpop.f32.mrf.mxu0
        %v6709 = vadd.f32 0.0, %v6708
        %v6710 = vpop.f32.mrf.mxu0
        %6711 = vmatprep.mubr.bf16.mxu0 0
        %6712 = vmatmul.mubr.bf16.gmra.mxu0 %v6612
        %v6713 = vpop.f32.mrf.mxu0
        %v6714 = vadd.f32 0.0, %v6713
        %v6715 = vpop.f32.mrf.mxu0
        %v6716 = vpop.f32.mrf.mxu0
        %v6717 = vadd.f32 0.0, %v6716
        %v6718 = vpop.f32.mrf.mxu0
        %6719 = vmatprep.mubr.bf16.mxu0 0
        %6720 = vmatmul.mubr.bf16.gmra.mxu0 %v6615
        %v6721 = vpop.f32.mrf.mxu0
        %v6722 = vadd.f32 0.0, %v6721
        %v6723 = vpop.f32.mrf.mxu0
        %v6724 = vpop.f32.mrf.mxu0
        %v6725 = vadd.f32 0.0, %v6724
        %v6726 = vpop.f32.mrf.mxu0
        %6727 = vmatprep.mubr.bf16.mxu0 0
        %6728 = vmatmul.mubr.bf16.gmra.mxu0 %v6618
        %v6729 = vpop.f32.mrf.mxu0
        %v6730 = vadd.f32 0.0, %v6729
        %v6731 = vpop.f32.mrf.mxu0
        %v6732 = vpop.f32.mrf.mxu0
        %v6733 = vadd.f32 0.0, %v6732
        %v6734 = vpop.f32.mrf.mxu0
        %6735 = vmatprep.mubr.bf16.mxu0 0
        %6736 = vmatmul.mubr.bf16.gmra.mxu0 %v6621
        %v6737 = vpop.f32.mrf.mxu0
        %v6738 = vadd.f32 0.0, %v6737
        %v6739 = vpop.f32.mrf.mxu0
        %v6740 = vpop.f32.mrf.mxu0
        %v6741 = vadd.f32 0.0, %v6740
        %v6742 = vpop.f32.mrf.mxu0
        %6743 = vmatprep.mubr.bf16.mxu0 0
        %6744 = vmatmul.mubr.bf16.gmra.mxu0 %v6624
        %v6745 = vpop.f32.mrf.mxu0
        %v6746 = vadd.f32 0.0, %v6745
        %v6747 = vpop.f32.mrf.mxu0
        %v6748 = vpop.f32.mrf.mxu0
        %v6749 = vadd.f32 0.0, %v6748
        %v6750 = vpop.f32.mrf.mxu0
        %6751 = vmatprep.mubr.bf16.mxu0 0
        %6752 = vmatmul.mubr.bf16.gmra.mxu0 %v6627
        %v6753 = vpop.f32.mrf.mxu0
        %v6754 = vadd.f32 0.0, %v6753
        %v6755 = vpop.f32.mrf.mxu0
        %v6756 = vpop.f32.mrf.mxu0
        %v6757 = vadd.f32 0.0, %v6756
        %v6758 = vpop.f32.mrf.mxu0
        %6759 = vmatprep.mubr.bf16.mxu0 0
        %6760 = vmatmul.mubr.bf16.gmra.mxu0 %v6630
        %v6761 = vpop.f32.mrf.mxu0
        %v6762 = vadd.f32 0.0, %v6761
        %v6763 = vpop.f32.mrf.mxu0
        %v6764 = vpop.f32.mrf.mxu0
        %v6765 = vadd.f32 0.0, %v6764
        %v6766 = vpop.f32.mrf.mxu0
        %6767 = vmatprep.mubr.bf16.mxu0 0
        %6768 = vmatmul.mubr.bf16.gmra.mxu0 %v6633
        %v6769 = vpop.f32.mrf.mxu0
        %v6770 = vadd.f32 0.0, %v6769
        %v6771 = vpop.f32.mrf.mxu0
        %v6772 = vpop.f32.mrf.mxu0
        %v6773 = vadd.f32 0.0, %v6772
        %v6774 = vpop.f32.mrf.mxu0
        %6775 = vmatprep.mubr.bf16.mxu0 0
        %6776 = vmatmul.mubr.bf16.gmra.mxu0 %v6636
        %v6777 = vpop.f32.mrf.mxu0
        %v6778 = vadd.f32 0.0, %v6777
        %v6779 = vpop.f32.mrf.mxu0
        %v6780 = vpop.f32.mrf.mxu0
        %v6781 = vadd.f32 0.0, %v6780
        %v6782 = vpop.f32.mrf.mxu0
        %6783 = vmatprep.mubr.bf16.mxu0 0
        %6784 = vmatmul.mubr.bf16.gmra.mxu0 %v6639
        %v6785 = vpop.f32.mrf.mxu0
        %v6786 = vadd.f32 0.0, %v6785
        %v6787 = vpop.f32.mrf.mxu0
        %v6788 = vpop.f32.mrf.mxu0
        %v6789 = vadd.f32 0.0, %v6788
        %v6790 = vpop.f32.mrf.mxu0
        %6791 = vmatprep.mubr.bf16.mxu0 0
        %6792 = vmatmul.mubr.bf16.gmra.mxu0 %v6642
        %v6793 = vpop.f32.mrf.mxu0
        %v6794 = vadd.f32 0.0, %v6793
        %v6795 = vpop.f32.mrf.mxu0
        %v6796 = vpop.f32.mrf.mxu0
        %v6797 = vadd.f32 0.0, %v6796
        %v6798 = vpop.f32.mrf.mxu0
        %6799 = vmatprep.mubr.bf16.mxu0 0
        %6800 = vmatmul.mubr.bf16.gmra.mxu0 %v6645
        %v6801 = vpop.f32.mrf.mxu0
        %v6802 = vadd.f32 0.0, %v6801
        %v6803 = vpop.f32.mrf.mxu0
        %v6804 = vpop.f32.mrf.mxu0
        %v6805 = vadd.f32 0.0, %v6804
        %v6806 = vpop.f32.mrf.mxu0
        %6807 = vdwg.mxu0
        %v6808 = vadd.f32 %v6502, %v6682
        %v6809 = vadd.f32 %v6503, %v6685
        %v6810 = vadd.f32 %v6504, %v6690
        %v6811 = vadd.f32 %v6505, %v6693
        %v6812 = vadd.f32 %v6506, %v6698
        %v6813 = vadd.f32 %v6507, %v6701
        %v6814 = vadd.f32 %v6508, %v6706
        %v6815 = vadd.f32 %v6509, %v6709
        %v6816 = vadd.f32 %v6510, %v6714
        %v6817 = vadd.f32 %v6511, %v6717
        %v6818 = vadd.f32 %v6512, %v6722
        %v6819 = vadd.f32 %v6513, %v6725
        %v6820 = vadd.f32 %v6514, %v6730
        %v6821 = vadd.f32 %v6515, %v6733
        %v6822 = vadd.f32 %v6516, %v6738
        %v6823 = vadd.f32 %v6517, %v6741
        %v6824 = vadd.f32 %v6518, %v6746
        %v6825 = vadd.f32 %v6519, %v6749
        %v6826 = vadd.f32 %v6520, %v6754
        %v6827 = vadd.f32 %v6521, %v6757
        %v6828 = vadd.f32 %v6522, %v6762
        %v6829 = vadd.f32 %v6523, %v6765
        %v6830 = vadd.f32 %v6524, %v6770
        %v6831 = vadd.f32 %v6525, %v6773
        %v6832 = vadd.f32 %v6526, %v6778
        %v6833 = vadd.f32 %v6527, %v6781
        %v6834 = vadd.f32 %v6528, %v6786
        %v6835 = vadd.f32 %v6529, %v6789
        %v6836 = vadd.f32 %v6530, %v6794
        %v6837 = vadd.f32 %v6531, %v6797
        %v6838 = vadd.f32 %v6532, %v6802
        %v6839 = vadd.f32 %v6533, %v6805
        %v6840 = vld [vmem:[%s6227 + $0x2] sm:$0xff]
        %v6841 = vld [vmem:[%s6227 + $0x12] sm:$0xff]
        %v6842 = vld [vmem:[%s6227 + $0x22] sm:$0xff]
        %v6843 = vld [vmem:[%s6227 + $0x32] sm:$0xff]
        %v6844 = vld [vmem:[%s6227 + $0x42] sm:$0xff]
        %v6845 = vld [vmem:[%s6227 + $0x52] sm:$0xff]
        %v6846 = vld [vmem:[%s6227 + $0x62] sm:$0xff]
        %v6847 = vld [vmem:[%s6227 + $0x72] sm:$0xff]
        %v6848 = vld [vmem:[%s6227 + $0xa2] sm:$0xff]
        %v6849 = vld [vmem:[%s6227 + $0xb2] sm:$0xff]
        %v6850 = vld [vmem:[%s6227 + $0xc2] sm:$0xff]
        %v6851 = vld [vmem:[%s6227 + $0xd2] sm:$0xff]
        %v6852 = vld [vmem:[%s6227 + $0xe2] sm:$0xff]
        %v6853 = vld [vmem:[%s6227 + $0xf2] sm:$0xff]
        %v6854 = vld [vmem:[%s6227 + $0x102] sm:$0xff]
        %v6855 = vld [vmem:[%s6227 + $0x112] sm:$0xff]
        %v6856 = vld [vmem:[%s6227 + $0x142] sm:$0xff]
        %v6857 = vld [vmem:[%s6227 + $0x152] sm:$0xff]
        %v6858 = vld [vmem:[%s6227 + $0x162] sm:$0xff]
        %v6859 = vld [vmem:[%s6227 + $0x172] sm:$0xff]
        %v6860 = vld [vmem:[%s6227 + $0x182] sm:$0xff]
        %v6861 = vld [vmem:[%s6227 + $0x192] sm:$0xff]
        %v6862 = vld [vmem:[%s6227 + $0x1a2] sm:$0xff]
        %v6863 = vld [vmem:[%s6227 + $0x1b2] sm:$0xff]
        %v6864 = vld [vmem:[%s6227 + $0x1e2] sm:$0xff]
        %v6865 = vld [vmem:[%s6227 + $0x1f2] sm:$0xff]
        %v6866 = vld [vmem:[%s6227 + $0x202] sm:$0xff]
        %v6867 = vld [vmem:[%s6227 + $0x212] sm:$0xff]
        %v6868 = vld [vmem:[%s6227 + $0x222] sm:$0xff]
        %v6869 = vld [vmem:[%s6227 + $0x232] sm:$0xff]
        %v6870 = vld [vmem:[%s6227 + $0x242] sm:$0xff]
        %v6871 = vld [vmem:[%s6227 + $0x252] sm:$0xff]
        %v6872 = vpack.c.bf16 %v6841, %v6840
        %v6873 = vpack.c.bf16 %v6843, %v6842
        %v6874 = vpack.c.bf16 %v6845, %v6844
        %v6875 = vpack.c.bf16 %v6847, %v6846
        %v6876 = vpack.c.bf16 %v6849, %v6848
        %v6877 = vpack.c.bf16 %v6851, %v6850
        %v6878 = vpack.c.bf16 %v6853, %v6852
        %v6879 = vpack.c.bf16 %v6855, %v6854
        %v6880 = vpack.c.bf16 %v6857, %v6856
        %v6881 = vpack.c.bf16 %v6859, %v6858
        %v6882 = vpack.c.bf16 %v6861, %v6860
        %v6883 = vpack.c.bf16 %v6863, %v6862
        %v6884 = vpack.c.bf16 %v6865, %v6864
        %v6885 = vpack.c.bf16 %v6867, %v6866
        %v6886 = vpack.c.bf16 %v6869, %v6868
        %v6887 = vpack.c.bf16 %v6871, %v6870
        %s6888 = scalar_lea.vmem [#allocation6], 320
        %v6889 = vld [vmem:[%s6888] sm:$0xf]
        %v6890 = vld [vmem:[%s6888 + $0x4] sm:$0xf]
        %v6891 = vld [vmem:[%s6888 + $0x8] sm:$0xf]
        %v6892 = vld [vmem:[%s6888 + $0xc] sm:$0xf]
        %v6897 = vunpack.c.l.b16 %v6889
        %v6898 = vunpack.c.l.b16 %v6890
        %v6899 = vunpack.c.l.b16 %v6891
        %v6900 = vunpack.c.l.b16 %v6892
        %v6901 = vpack.c.b16 %v6898, %v6897
        %v6902 = vpack.c.b16 %v6900, %v6899
        %v6906 = vsel %vm625, %v6872, 0
        %v6909 = vsel %vm625, %v6873, 0
        %v6912 = vsel %vm625, %v6874, 0
        %v6915 = vsel %vm625, %v6875, 0
        %v6918 = vsel %vm625, %v6876, 0
        %v6921 = vsel %vm625, %v6877, 0
        %v6924 = vsel %vm625, %v6878, 0
        %v6927 = vsel %vm625, %v6879, 0
        %v6930 = vsel %vm625, %v6880, 0
        %v6933 = vsel %vm625, %v6881, 0
        %v6936 = vsel %vm625, %v6882, 0
        %v6939 = vsel %vm625, %v6883, 0
        %v6942 = vsel %vm625, %v6884, 0
        %v6945 = vsel %vm625, %v6885, 0
        %v6948 = vsel %vm625, %v6886, 0
        %v6951 = vsel %vm625, %v6887, 0
        %6953 = vmatprep.subr.bf16.mxu0 0
        %6954 = vmatpush1.bf16.msra.mxu0 0
        %6955 = vmatprep.subr.bf16.mxu0 0
        %6956 = vmatpush1.bf16.msra.mxu0 0
        %6957 = vmatprep.subr.bf16.mxu0 0
        %6958 = vmatpush1.bf16.msra.mxu0 0
        %6959 = vmatprep.subr.bf16.mxu0 0
        %6960 = vmatpush1.bf16.msra.mxu0 0
        %6961 = vmatprep.subr.bf16.mxu0 0
        %6962 = vmatpush1.bf16.msra.mxu0 0
        %6963 = vmatprep.subr.bf16.mxu0 0
        %6964 = vmatpush1.bf16.msra.mxu0 0
        %6965 = vmatprep.subr.bf16.mxu0 0
        %6966 = vmatpush1.bf16.msra.mxu0 %v6902
        %6967 = vmatprep.subr.bf16.mxu0 0
        %6968 = vmatpush1.bf16.msra.mxu0 %v6901
        %6969 = vmatprep.subr.bf16.mxu0 0
        %6970 = vmatpush2.bf16.msra.mxu0 0
        %6971 = vmatprep.subr.bf16.mxu0 0
        %6972 = vmatpush2.bf16.msra.mxu0 0
        %6973 = vmatprep.subr.bf16.mxu0 0
        %6974 = vmatpush2.bf16.msra.mxu0 0
        %6975 = vmatprep.subr.bf16.mxu0 0
        %6976 = vmatpush2.bf16.msra.mxu0 0
        %6977 = vmatprep.subr.bf16.mxu0 0
        %6978 = vmatpush2.bf16.msra.mxu0 0
        %6979 = vmatprep.subr.bf16.mxu0 0
        %6980 = vmatpush2.bf16.msra.mxu0 0
        %6981 = vmatprep.subr.bf16.mxu0 0
        %6982 = vmatpush2.bf16.msra.mxu0 0
        %6983 = vmatprep.subr.bf16.mxu0 0
        %6984 = vmatpush2.bf16.msra.mxu0 0
        %6985 = vmatprep.mubr.bf16.mxu0 0
        %6986 = vmatmul.mubr.bf16.gmra.mxu0 %v6906
        %v6987 = vpop.f32.mrf.mxu0
        %v6988 = vadd.f32 0.0, %v6987
        %v6989 = vpop.f32.mrf.mxu0
        %v6990 = vpop.f32.mrf.mxu0
        %v6991 = vadd.f32 0.0, %v6990
        %v6992 = vpop.f32.mrf.mxu0
        %6993 = vmatprep.mubr.bf16.mxu0 0
        %6994 = vmatmul.mubr.bf16.gmra.mxu0 %v6909
        %v6995 = vpop.f32.mrf.mxu0
        %v6996 = vadd.f32 0.0, %v6995
        %v6997 = vpop.f32.mrf.mxu0
        %v6998 = vpop.f32.mrf.mxu0
        %v6999 = vadd.f32 0.0, %v6998
        %v7000 = vpop.f32.mrf.mxu0
        %7001 = vmatprep.mubr.bf16.mxu0 0
        %7002 = vmatmul.mubr.bf16.gmra.mxu0 %v6912
        %v7003 = vpop.f32.mrf.mxu0
        %v7004 = vadd.f32 0.0, %v7003
        %v7005 = vpop.f32.mrf.mxu0
        %v7006 = vpop.f32.mrf.mxu0
        %v7007 = vadd.f32 0.0, %v7006
        %v7008 = vpop.f32.mrf.mxu0
        %7009 = vmatprep.mubr.bf16.mxu0 0
        %7010 = vmatmul.mubr.bf16.gmra.mxu0 %v6915
        %v7011 = vpop.f32.mrf.mxu0
        %v7012 = vadd.f32 0.0, %v7011
        %v7013 = vpop.f32.mrf.mxu0
        %v7014 = vpop.f32.mrf.mxu0
        %v7015 = vadd.f32 0.0, %v7014
        %v7016 = vpop.f32.mrf.mxu0
        %7017 = vmatprep.mubr.bf16.mxu0 0
        %7018 = vmatmul.mubr.bf16.gmra.mxu0 %v6918
        %v7019 = vpop.f32.mrf.mxu0
        %v7020 = vadd.f32 0.0, %v7019
        %v7021 = vpop.f32.mrf.mxu0
        %v7022 = vpop.f32.mrf.mxu0
        %v7023 = vadd.f32 0.0, %v7022
        %v7024 = vpop.f32.mrf.mxu0
        %7025 = vmatprep.mubr.bf16.mxu0 0
        %7026 = vmatmul.mubr.bf16.gmra.mxu0 %v6921
        %v7027 = vpop.f32.mrf.mxu0
        %v7028 = vadd.f32 0.0, %v7027
        %v7029 = vpop.f32.mrf.mxu0
        %v7030 = vpop.f32.mrf.mxu0
        %v7031 = vadd.f32 0.0, %v7030
        %v7032 = vpop.f32.mrf.mxu0
        %7033 = vmatprep.mubr.bf16.mxu0 0
        %7034 = vmatmul.mubr.bf16.gmra.mxu0 %v6924
        %v7035 = vpop.f32.mrf.mxu0
        %v7036 = vadd.f32 0.0, %v7035
        %v7037 = vpop.f32.mrf.mxu0
        %v7038 = vpop.f32.mrf.mxu0
        %v7039 = vadd.f32 0.0, %v7038
        %v7040 = vpop.f32.mrf.mxu0
        %7041 = vmatprep.mubr.bf16.mxu0 0
        %7042 = vmatmul.mubr.bf16.gmra.mxu0 %v6927
        %v7043 = vpop.f32.mrf.mxu0
        %v7044 = vadd.f32 0.0, %v7043
        %v7045 = vpop.f32.mrf.mxu0
        %v7046 = vpop.f32.mrf.mxu0
        %v7047 = vadd.f32 0.0, %v7046
        %v7048 = vpop.f32.mrf.mxu0
        %7049 = vmatprep.mubr.bf16.mxu0 0
        %7050 = vmatmul.mubr.bf16.gmra.mxu0 %v6930
        %v7051 = vpop.f32.mrf.mxu0
        %v7052 = vadd.f32 0.0, %v7051
        %v7053 = vpop.f32.mrf.mxu0
        %v7054 = vpop.f32.mrf.mxu0
        %v7055 = vadd.f32 0.0, %v7054
        %v7056 = vpop.f32.mrf.mxu0
        %7057 = vmatprep.mubr.bf16.mxu0 0
        %7058 = vmatmul.mubr.bf16.gmra.mxu0 %v6933
        %v7059 = vpop.f32.mrf.mxu0
        %v7060 = vadd.f32 0.0, %v7059
        %v7061 = vpop.f32.mrf.mxu0
        %v7062 = vpop.f32.mrf.mxu0
        %v7063 = vadd.f32 0.0, %v7062
        %v7064 = vpop.f32.mrf.mxu0
        %7065 = vmatprep.mubr.bf16.mxu0 0
        %7066 = vmatmul.mubr.bf16.gmra.mxu0 %v6936
        %v7067 = vpop.f32.mrf.mxu0
        %v7068 = vadd.f32 0.0, %v7067
        %v7069 = vpop.f32.mrf.mxu0
        %v7070 = vpop.f32.mrf.mxu0
        %v7071 = vadd.f32 0.0, %v7070
        %v7072 = vpop.f32.mrf.mxu0
        %7073 = vmatprep.mubr.bf16.mxu0 0
        %7074 = vmatmul.mubr.bf16.gmra.mxu0 %v6939
        %v7075 = vpop.f32.mrf.mxu0
        %v7076 = vadd.f32 0.0, %v7075
        %v7077 = vpop.f32.mrf.mxu0
        %v7078 = vpop.f32.mrf.mxu0
        %v7079 = vadd.f32 0.0, %v7078
        %v7080 = vpop.f32.mrf.mxu0
        %7081 = vmatprep.mubr.bf16.mxu0 0
        %7082 = vmatmul.mubr.bf16.gmra.mxu0 %v6942
        %v7083 = vpop.f32.mrf.mxu0
        %v7084 = vadd.f32 0.0, %v7083
        %v7085 = vpop.f32.mrf.mxu0
        %v7086 = vpop.f32.mrf.mxu0
        %v7087 = vadd.f32 0.0, %v7086
        %v7088 = vpop.f32.mrf.mxu0
        %7089 = vmatprep.mubr.bf16.mxu0 0
        %7090 = vmatmul.mubr.bf16.gmra.mxu0 %v6945
        %v7091 = vpop.f32.mrf.mxu0
        %v7092 = vadd.f32 0.0, %v7091
        %v7093 = vpop.f32.mrf.mxu0
        %v7094 = vpop.f32.mrf.mxu0
        %v7095 = vadd.f32 0.0, %v7094
        %v7096 = vpop.f32.mrf.mxu0
        %7097 = vmatprep.mubr.bf16.mxu0 0
        %7098 = vmatmul.mubr.bf16.gmra.mxu0 %v6948
        %v7099 = vpop.f32.mrf.mxu0
        %v7100 = vadd.f32 0.0, %v7099
        %v7101 = vpop.f32.mrf.mxu0
        %v7102 = vpop.f32.mrf.mxu0
        %v7103 = vadd.f32 0.0, %v7102
        %v7104 = vpop.f32.mrf.mxu0
        %7105 = vmatprep.mubr.bf16.mxu0 0
        %7106 = vmatmul.mubr.bf16.gmra.mxu0 %v6951
        %v7107 = vpop.f32.mrf.mxu0
        %v7108 = vadd.f32 0.0, %v7107
        %v7109 = vpop.f32.mrf.mxu0
        %v7110 = vpop.f32.mrf.mxu0
        %v7111 = vadd.f32 0.0, %v7110
        %v7112 = vpop.f32.mrf.mxu0
        %7113 = vdwg.mxu0
        %v7114 = vadd.f32 %v6808, %v6988
        %v7115 = vadd.f32 %v6809, %v6991
        %v7116 = vadd.f32 %v6810, %v6996
        %v7117 = vadd.f32 %v6811, %v6999
        %v7118 = vadd.f32 %v6812, %v7004
        %v7119 = vadd.f32 %v6813, %v7007
        %v7120 = vadd.f32 %v6814, %v7012
        %v7121 = vadd.f32 %v6815, %v7015
        %v7122 = vadd.f32 %v6816, %v7020
        %v7123 = vadd.f32 %v6817, %v7023
        %v7124 = vadd.f32 %v6818, %v7028
        %v7125 = vadd.f32 %v6819, %v7031
        %v7126 = vadd.f32 %v6820, %v7036
        %v7127 = vadd.f32 %v6821, %v7039
        %v7128 = vadd.f32 %v6822, %v7044
        %v7129 = vadd.f32 %v6823, %v7047
        %v7130 = vadd.f32 %v6824, %v7052
        %v7131 = vadd.f32 %v6825, %v7055
        %v7132 = vadd.f32 %v6826, %v7060
        %v7133 = vadd.f32 %v6827, %v7063
        %v7134 = vadd.f32 %v6828, %v7068
        %v7135 = vadd.f32 %v6829, %v7071
        %v7136 = vadd.f32 %v6830, %v7076
        %v7137 = vadd.f32 %v6831, %v7079
        %v7138 = vadd.f32 %v6832, %v7084
        %v7139 = vadd.f32 %v6833, %v7087
        %v7140 = vadd.f32 %v6834, %v7092
        %v7141 = vadd.f32 %v6835, %v7095
        %v7142 = vadd.f32 %v6836, %v7100
        %v7143 = vadd.f32 %v6837, %v7103
        %v7144 = vadd.f32 %v6838, %v7108
        %v7145 = vadd.f32 %v6839, %v7111
        %s7146 = scalar_lea.vmem [#allocation2], 336
        %v7147 = vld [vmem:[%s7146] sm:$0xff]
        %v7148 = vld [vmem:[%s7146 + $0x10] sm:$0xff]
        %v7149 = vld [vmem:[%s7146 + $0x20] sm:$0xff]
        %v7150 = vld [vmem:[%s7146 + $0x30] sm:$0xff]
        %v7151 = vld [vmem:[%s7146 + $0x40] sm:$0xff]
        %v7152 = vld [vmem:[%s7146 + $0x50] sm:$0xff]
        %v7153 = vld [vmem:[%s7146 + $0x60] sm:$0xff]
        %v7154 = vld [vmem:[%s7146 + $0x70] sm:$0xff]
        %v7155 = vld [vmem:[%s7146 + $0xa0] sm:$0xff]
        %v7156 = vld [vmem:[%s7146 + $0xb0] sm:$0xff]
        %v7157 = vld [vmem:[%s7146 + $0xc0] sm:$0xff]
        %v7158 = vld [vmem:[%s7146 + $0xd0] sm:$0xff]
        %v7159 = vld [vmem:[%s7146 + $0xe0] sm:$0xff]
        %v7160 = vld [vmem:[%s7146 + $0xf0] sm:$0xff]
        %v7161 = vld [vmem:[%s7146 + $0x100] sm:$0xff]
        %v7162 = vld [vmem:[%s7146 + $0x110] sm:$0xff]
        %v7163 = vld [vmem:[%s7146 + $0x140] sm:$0xff]
        %v7164 = vld [vmem:[%s7146 + $0x150] sm:$0xff]
        %v7165 = vld [vmem:[%s7146 + $0x160] sm:$0xff]
        %v7166 = vld [vmem:[%s7146 + $0x170] sm:$0xff]
        %v7167 = vld [vmem:[%s7146 + $0x180] sm:$0xff]
        %v7168 = vld [vmem:[%s7146 + $0x190] sm:$0xff]
        %v7169 = vld [vmem:[%s7146 + $0x1a0] sm:$0xff]
        %v7170 = vld [vmem:[%s7146 + $0x1b0] sm:$0xff]
        %v7171 = vld [vmem:[%s7146 + $0x1e0] sm:$0xff]
        %v7172 = vld [vmem:[%s7146 + $0x1f0] sm:$0xff]
        %v7173 = vld [vmem:[%s7146 + $0x200] sm:$0xff]
        %v7174 = vld [vmem:[%s7146 + $0x210] sm:$0xff]
        %v7175 = vld [vmem:[%s7146 + $0x220] sm:$0xff]
        %v7176 = vld [vmem:[%s7146 + $0x230] sm:$0xff]
        %v7177 = vld [vmem:[%s7146 + $0x240] sm:$0xff]
        %v7178 = vld [vmem:[%s7146 + $0x250] sm:$0xff]
        %v7179 = vpack.c.bf16 %v7148, %v7147
        %v7180 = vpack.c.bf16 %v7150, %v7149
        %v7181 = vpack.c.bf16 %v7152, %v7151
        %v7182 = vpack.c.bf16 %v7154, %v7153
        %v7183 = vpack.c.bf16 %v7156, %v7155
        %v7184 = vpack.c.bf16 %v7158, %v7157
        %v7185 = vpack.c.bf16 %v7160, %v7159
        %v7186 = vpack.c.bf16 %v7162, %v7161
        %v7187 = vpack.c.bf16 %v7164, %v7163
        %v7188 = vpack.c.bf16 %v7166, %v7165
        %v7189 = vpack.c.bf16 %v7168, %v7167
        %v7190 = vpack.c.bf16 %v7170, %v7169
        %v7191 = vpack.c.bf16 %v7172, %v7171
        %v7192 = vpack.c.bf16 %v7174, %v7173
        %v7193 = vpack.c.bf16 %v7176, %v7175
        %v7194 = vpack.c.bf16 %v7178, %v7177
        %s7195 = scalar_lea.vmem [#allocation6], 336
        %v7196 = vld [vmem:[%s7195] sm:$0xf]
        %v7197 = vld [vmem:[%s7195 + $0x4] sm:$0xf]
        %v7198 = vld [vmem:[%s7195 + $0x8] sm:$0xf]
        %v7199 = vld [vmem:[%s7195 + $0xc] sm:$0xf]
        %v7204 = vunpack.c.l.b16 %v7196
        %v7205 = vunpack.c.l.b16 %v7197
        %v7206 = vunpack.c.l.b16 %v7198
        %v7207 = vunpack.c.l.b16 %v7199
        %v7208 = vpack.c.b16 %v7205, %v7204
        %v7209 = vpack.c.b16 %v7207, %v7206
        %v7213 = vsel %vm625, %v7179, 0
        %v7216 = vsel %vm625, %v7180, 0
        %v7219 = vsel %vm625, %v7181, 0
        %v7222 = vsel %vm625, %v7182, 0
        %v7225 = vsel %vm625, %v7183, 0
        %v7228 = vsel %vm625, %v7184, 0
        %v7231 = vsel %vm625, %v7185, 0
        %v7234 = vsel %vm625, %v7186, 0
        %v7237 = vsel %vm625, %v7187, 0
        %v7240 = vsel %vm625, %v7188, 0
        %v7243 = vsel %vm625, %v7189, 0
        %v7246 = vsel %vm625, %v7190, 0
        %v7249 = vsel %vm625, %v7191, 0
        %v7252 = vsel %vm625, %v7192, 0
        %v7255 = vsel %vm625, %v7193, 0
        %v7258 = vsel %vm625, %v7194, 0
        %7260 = vmatprep.subr.bf16.mxu0 0
        %7261 = vmatpush1.bf16.msra.mxu0 0
        %7262 = vmatprep.subr.bf16.mxu0 0
        %7263 = vmatpush1.bf16.msra.mxu0 0
        %7264 = vmatprep.subr.bf16.mxu0 0
        %7265 = vmatpush1.bf16.msra.mxu0 0
        %7266 = vmatprep.subr.bf16.mxu0 0
        %7267 = vmatpush1.bf16.msra.mxu0 0
        %7268 = vmatprep.subr.bf16.mxu0 0
        %7269 = vmatpush1.bf16.msra.mxu0 0
        %7270 = vmatprep.subr.bf16.mxu0 0
        %7271 = vmatpush1.bf16.msra.mxu0 0
        %7272 = vmatprep.subr.bf16.mxu0 0
        %7273 = vmatpush1.bf16.msra.mxu0 %v7209
        %7274 = vmatprep.subr.bf16.mxu0 0
        %7275 = vmatpush1.bf16.msra.mxu0 %v7208
        %7276 = vmatprep.subr.bf16.mxu0 0
        %7277 = vmatpush2.bf16.msra.mxu0 0
        %7278 = vmatprep.subr.bf16.mxu0 0
        %7279 = vmatpush2.bf16.msra.mxu0 0
        %7280 = vmatprep.subr.bf16.mxu0 0
        %7281 = vmatpush2.bf16.msra.mxu0 0
        %7282 = vmatprep.subr.bf16.mxu0 0
        %7283 = vmatpush2.bf16.msra.mxu0 0
        %7284 = vmatprep.subr.bf16.mxu0 0
        %7285 = vmatpush2.bf16.msra.mxu0 0
        %7286 = vmatprep.subr.bf16.mxu0 0
        %7287 = vmatpush2.bf16.msra.mxu0 0
        %7288 = vmatprep.subr.bf16.mxu0 0
        %7289 = vmatpush2.bf16.msra.mxu0 0
        %7290 = vmatprep.subr.bf16.mxu0 0
        %7291 = vmatpush2.bf16.msra.mxu0 0
        %7292 = vmatprep.mubr.bf16.mxu0 0
        %7293 = vmatmul.mubr.bf16.gmra.mxu0 %v7213
        %v7294 = vpop.f32.mrf.mxu0
        %v7295 = vadd.f32 0.0, %v7294
        %v7296 = vpop.f32.mrf.mxu0
        %v7297 = vpop.f32.mrf.mxu0
        %v7298 = vadd.f32 0.0, %v7297
        %v7299 = vpop.f32.mrf.mxu0
        %7300 = vmatprep.mubr.bf16.mxu0 0
        %7301 = vmatmul.mubr.bf16.gmra.mxu0 %v7216
        %v7302 = vpop.f32.mrf.mxu0
        %v7303 = vadd.f32 0.0, %v7302
        %v7304 = vpop.f32.mrf.mxu0
        %v7305 = vpop.f32.mrf.mxu0
        %v7306 = vadd.f32 0.0, %v7305
        %v7307 = vpop.f32.mrf.mxu0
        %7308 = vmatprep.mubr.bf16.mxu0 0
        %7309 = vmatmul.mubr.bf16.gmra.mxu0 %v7219
        %v7310 = vpop.f32.mrf.mxu0
        %v7311 = vadd.f32 0.0, %v7310
        %v7312 = vpop.f32.mrf.mxu0
        %v7313 = vpop.f32.mrf.mxu0
        %v7314 = vadd.f32 0.0, %v7313
        %v7315 = vpop.f32.mrf.mxu0
        %7316 = vmatprep.mubr.bf16.mxu0 0
        %7317 = vmatmul.mubr.bf16.gmra.mxu0 %v7222
        %v7318 = vpop.f32.mrf.mxu0
        %v7319 = vadd.f32 0.0, %v7318
        %v7320 = vpop.f32.mrf.mxu0
        %v7321 = vpop.f32.mrf.mxu0
        %v7322 = vadd.f32 0.0, %v7321
        %v7323 = vpop.f32.mrf.mxu0
        %7324 = vmatprep.mubr.bf16.mxu0 0
        %7325 = vmatmul.mubr.bf16.gmra.mxu0 %v7225
        %v7326 = vpop.f32.mrf.mxu0
        %v7327 = vadd.f32 0.0, %v7326
        %v7328 = vpop.f32.mrf.mxu0
        %v7329 = vpop.f32.mrf.mxu0
        %v7330 = vadd.f32 0.0, %v7329
        %v7331 = vpop.f32.mrf.mxu0
        %7332 = vmatprep.mubr.bf16.mxu0 0
        %7333 = vmatmul.mubr.bf16.gmra.mxu0 %v7228
        %v7334 = vpop.f32.mrf.mxu0
        %v7335 = vadd.f32 0.0, %v7334
        %v7336 = vpop.f32.mrf.mxu0
        %v7337 = vpop.f32.mrf.mxu0
        %v7338 = vadd.f32 0.0, %v7337
        %v7339 = vpop.f32.mrf.mxu0
        %7340 = vmatprep.mubr.bf16.mxu0 0
        %7341 = vmatmul.mubr.bf16.gmra.mxu0 %v7231
        %v7342 = vpop.f32.mrf.mxu0
        %v7343 = vadd.f32 0.0, %v7342
        %v7344 = vpop.f32.mrf.mxu0
        %v7345 = vpop.f32.mrf.mxu0
        %v7346 = vadd.f32 0.0, %v7345
        %v7347 = vpop.f32.mrf.mxu0
        %7348 = vmatprep.mubr.bf16.mxu0 0
        %7349 = vmatmul.mubr.bf16.gmra.mxu0 %v7234
        %v7350 = vpop.f32.mrf.mxu0
        %v7351 = vadd.f32 0.0, %v7350
        %v7352 = vpop.f32.mrf.mxu0
        %v7353 = vpop.f32.mrf.mxu0
        %v7354 = vadd.f32 0.0, %v7353
        %v7355 = vpop.f32.mrf.mxu0
        %7356 = vmatprep.mubr.bf16.mxu0 0
        %7357 = vmatmul.mubr.bf16.gmra.mxu0 %v7237
        %v7358 = vpop.f32.mrf.mxu0
        %v7359 = vadd.f32 0.0, %v7358
        %v7360 = vpop.f32.mrf.mxu0
        %v7361 = vpop.f32.mrf.mxu0
        %v7362 = vadd.f32 0.0, %v7361
        %v7363 = vpop.f32.mrf.mxu0
        %7364 = vmatprep.mubr.bf16.mxu0 0
        %7365 = vmatmul.mubr.bf16.gmra.mxu0 %v7240
        %v7366 = vpop.f32.mrf.mxu0
        %v7367 = vadd.f32 0.0, %v7366
        %v7368 = vpop.f32.mrf.mxu0
        %v7369 = vpop.f32.mrf.mxu0
        %v7370 = vadd.f32 0.0, %v7369
        %v7371 = vpop.f32.mrf.mxu0
        %7372 = vmatprep.mubr.bf16.mxu0 0
        %7373 = vmatmul.mubr.bf16.gmra.mxu0 %v7243
        %v7374 = vpop.f32.mrf.mxu0
        %v7375 = vadd.f32 0.0, %v7374
        %v7376 = vpop.f32.mrf.mxu0
        %v7377 = vpop.f32.mrf.mxu0
        %v7378 = vadd.f32 0.0, %v7377
        %v7379 = vpop.f32.mrf.mxu0
        %7380 = vmatprep.mubr.bf16.mxu0 0
        %7381 = vmatmul.mubr.bf16.gmra.mxu0 %v7246
        %v7382 = vpop.f32.mrf.mxu0
        %v7383 = vadd.f32 0.0, %v7382
        %v7384 = vpop.f32.mrf.mxu0
        %v7385 = vpop.f32.mrf.mxu0
        %v7386 = vadd.f32 0.0, %v7385
        %v7387 = vpop.f32.mrf.mxu0
        %7388 = vmatprep.mubr.bf16.mxu0 0
        %7389 = vmatmul.mubr.bf16.gmra.mxu0 %v7249
        %v7390 = vpop.f32.mrf.mxu0
        %v7391 = vadd.f32 0.0, %v7390
        %v7392 = vpop.f32.mrf.mxu0
        %v7393 = vpop.f32.mrf.mxu0
        %v7394 = vadd.f32 0.0, %v7393
        %v7395 = vpop.f32.mrf.mxu0
        %7396 = vmatprep.mubr.bf16.mxu0 0
        %7397 = vmatmul.mubr.bf16.gmra.mxu0 %v7252
        %v7398 = vpop.f32.mrf.mxu0
        %v7399 = vadd.f32 0.0, %v7398
        %v7400 = vpop.f32.mrf.mxu0
        %v7401 = vpop.f32.mrf.mxu0
        %v7402 = vadd.f32 0.0, %v7401
        %v7403 = vpop.f32.mrf.mxu0
        %7404 = vmatprep.mubr.bf16.mxu0 0
        %7405 = vmatmul.mubr.bf16.gmra.mxu0 %v7255
        %v7406 = vpop.f32.mrf.mxu0
        %v7407 = vadd.f32 0.0, %v7406
        %v7408 = vpop.f32.mrf.mxu0
        %v7409 = vpop.f32.mrf.mxu0
        %v7410 = vadd.f32 0.0, %v7409
        %v7411 = vpop.f32.mrf.mxu0
        %7412 = vmatprep.mubr.bf16.mxu0 0
        %7413 = vmatmul.mubr.bf16.gmra.mxu0 %v7258
        %v7414 = vpop.f32.mrf.mxu0
        %v7415 = vadd.f32 0.0, %v7414
        %v7416 = vpop.f32.mrf.mxu0
        %v7417 = vpop.f32.mrf.mxu0
        %v7418 = vadd.f32 0.0, %v7417
        %v7419 = vpop.f32.mrf.mxu0
        %7420 = vdwg.mxu0
        %v7421 = vadd.f32 %v7114, %v7295
        %v7422 = vadd.f32 %v7115, %v7298
        %v7423 = vadd.f32 %v7116, %v7303
        %v7424 = vadd.f32 %v7117, %v7306
        %v7425 = vadd.f32 %v7118, %v7311
        %v7426 = vadd.f32 %v7119, %v7314
        %v7427 = vadd.f32 %v7120, %v7319
        %v7428 = vadd.f32 %v7121, %v7322
        %v7429 = vadd.f32 %v7122, %v7327
        %v7430 = vadd.f32 %v7123, %v7330
        %v7431 = vadd.f32 %v7124, %v7335
        %v7432 = vadd.f32 %v7125, %v7338
        %v7433 = vadd.f32 %v7126, %v7343
        %v7434 = vadd.f32 %v7127, %v7346
        %v7435 = vadd.f32 %v7128, %v7351
        %v7436 = vadd.f32 %v7129, %v7354
        %v7437 = vadd.f32 %v7130, %v7359
        %v7438 = vadd.f32 %v7131, %v7362
        %v7439 = vadd.f32 %v7132, %v7367
        %v7440 = vadd.f32 %v7133, %v7370
        %v7441 = vadd.f32 %v7134, %v7375
        %v7442 = vadd.f32 %v7135, %v7378
        %v7443 = vadd.f32 %v7136, %v7383
        %v7444 = vadd.f32 %v7137, %v7386
        %v7445 = vadd.f32 %v7138, %v7391
        %v7446 = vadd.f32 %v7139, %v7394
        %v7447 = vadd.f32 %v7140, %v7399
        %v7448 = vadd.f32 %v7141, %v7402
        %v7449 = vadd.f32 %v7142, %v7407
        %v7450 = vadd.f32 %v7143, %v7410
        %v7451 = vadd.f32 %v7144, %v7415
        %v7452 = vadd.f32 %v7145, %v7418
        %v7453 = vld [vmem:[%s7146 + $0x1] sm:$0xff]
        %v7454 = vld [vmem:[%s7146 + $0x11] sm:$0xff]
        %v7455 = vld [vmem:[%s7146 + $0x21] sm:$0xff]
        %v7456 = vld [vmem:[%s7146 + $0x31] sm:$0xff]
        %v7457 = vld [vmem:[%s7146 + $0x41] sm:$0xff]
        %v7458 = vld [vmem:[%s7146 + $0x51] sm:$0xff]
        %v7459 = vld [vmem:[%s7146 + $0x61] sm:$0xff]
        %v7460 = vld [vmem:[%s7146 + $0x71] sm:$0xff]
        %v7461 = vld [vmem:[%s7146 + $0xa1] sm:$0xff]
        %v7462 = vld [vmem:[%s7146 + $0xb1] sm:$0xff]
        %v7463 = vld [vmem:[%s7146 + $0xc1] sm:$0xff]
        %v7464 = vld [vmem:[%s7146 + $0xd1] sm:$0xff]
        %v7465 = vld [vmem:[%s7146 + $0xe1] sm:$0xff]
        %v7466 = vld [vmem:[%s7146 + $0xf1] sm:$0xff]
        %v7467 = vld [vmem:[%s7146 + $0x101] sm:$0xff]
        %v7468 = vld [vmem:[%s7146 + $0x111] sm:$0xff]
        %v7469 = vld [vmem:[%s7146 + $0x141] sm:$0xff]
        %v7470 = vld [vmem:[%s7146 + $0x151] sm:$0xff]
        %v7471 = vld [vmem:[%s7146 + $0x161] sm:$0xff]
        %v7472 = vld [vmem:[%s7146 + $0x171] sm:$0xff]
        %v7473 = vld [vmem:[%s7146 + $0x181] sm:$0xff]
        %v7474 = vld [vmem:[%s7146 + $0x191] sm:$0xff]
        %v7475 = vld [vmem:[%s7146 + $0x1a1] sm:$0xff]
        %v7476 = vld [vmem:[%s7146 + $0x1b1] sm:$0xff]
        %v7477 = vld [vmem:[%s7146 + $0x1e1] sm:$0xff]
        %v7478 = vld [vmem:[%s7146 + $0x1f1] sm:$0xff]
        %v7479 = vld [vmem:[%s7146 + $0x201] sm:$0xff]
        %v7480 = vld [vmem:[%s7146 + $0x211] sm:$0xff]
        %v7481 = vld [vmem:[%s7146 + $0x221] sm:$0xff]
        %v7482 = vld [vmem:[%s7146 + $0x231] sm:$0xff]
        %v7483 = vld [vmem:[%s7146 + $0x241] sm:$0xff]
        %v7484 = vld [vmem:[%s7146 + $0x251] sm:$0xff]
        %v7485 = vpack.c.bf16 %v7454, %v7453
        %v7486 = vpack.c.bf16 %v7456, %v7455
        %v7487 = vpack.c.bf16 %v7458, %v7457
        %v7488 = vpack.c.bf16 %v7460, %v7459
        %v7489 = vpack.c.bf16 %v7462, %v7461
        %v7490 = vpack.c.bf16 %v7464, %v7463
        %v7491 = vpack.c.bf16 %v7466, %v7465
        %v7492 = vpack.c.bf16 %v7468, %v7467
        %v7493 = vpack.c.bf16 %v7470, %v7469
        %v7494 = vpack.c.bf16 %v7472, %v7471
        %v7495 = vpack.c.bf16 %v7474, %v7473
        %v7496 = vpack.c.bf16 %v7476, %v7475
        %v7497 = vpack.c.bf16 %v7478, %v7477
        %v7498 = vpack.c.bf16 %v7480, %v7479
        %v7499 = vpack.c.bf16 %v7482, %v7481
        %v7500 = vpack.c.bf16 %v7484, %v7483
        %s7501 = scalar_lea.vmem [#allocation6], 352
        %v7502 = vld [vmem:[%s7501] sm:$0xf]
        %v7503 = vld [vmem:[%s7501 + $0x4] sm:$0xf]
        %v7504 = vld [vmem:[%s7501 + $0x8] sm:$0xf]
        %v7505 = vld [vmem:[%s7501 + $0xc] sm:$0xf]
        %v7510 = vunpack.c.l.b16 %v7502
        %v7511 = vunpack.c.l.b16 %v7503
        %v7512 = vunpack.c.l.b16 %v7504
        %v7513 = vunpack.c.l.b16 %v7505
        %v7514 = vpack.c.b16 %v7511, %v7510
        %v7515 = vpack.c.b16 %v7513, %v7512
        %v7519 = vsel %vm625, %v7485, 0
        %v7522 = vsel %vm625, %v7486, 0
        %v7525 = vsel %vm625, %v7487, 0
        %v7528 = vsel %vm625, %v7488, 0
        %v7531 = vsel %vm625, %v7489, 0
        %v7534 = vsel %vm625, %v7490, 0
        %v7537 = vsel %vm625, %v7491, 0
        %v7540 = vsel %vm625, %v7492, 0
        %v7543 = vsel %vm625, %v7493, 0
        %v7546 = vsel %vm625, %v7494, 0
        %v7549 = vsel %vm625, %v7495, 0
        %v7552 = vsel %vm625, %v7496, 0
        %v7555 = vsel %vm625, %v7497, 0
        %v7558 = vsel %vm625, %v7498, 0
        %v7561 = vsel %vm625, %v7499, 0
        %v7564 = vsel %vm625, %v7500, 0
        %7566 = vmatprep.subr.bf16.mxu0 0
        %7567 = vmatpush1.bf16.msra.mxu0 0
        %7568 = vmatprep.subr.bf16.mxu0 0
        %7569 = vmatpush1.bf16.msra.mxu0 0
        %7570 = vmatprep.subr.bf16.mxu0 0
        %7571 = vmatpush1.bf16.msra.mxu0 0
        %7572 = vmatprep.subr.bf16.mxu0 0
        %7573 = vmatpush1.bf16.msra.mxu0 0
        %7574 = vmatprep.subr.bf16.mxu0 0
        %7575 = vmatpush1.bf16.msra.mxu0 0
        %7576 = vmatprep.subr.bf16.mxu0 0
        %7577 = vmatpush1.bf16.msra.mxu0 0
        %7578 = vmatprep.subr.bf16.mxu0 0
        %7579 = vmatpush1.bf16.msra.mxu0 %v7515
        %7580 = vmatprep.subr.bf16.mxu0 0
        %7581 = vmatpush1.bf16.msra.mxu0 %v7514
        %7582 = vmatprep.subr.bf16.mxu0 0
        %7583 = vmatpush2.bf16.msra.mxu0 0
        %7584 = vmatprep.subr.bf16.mxu0 0
        %7585 = vmatpush2.bf16.msra.mxu0 0
        %7586 = vmatprep.subr.bf16.mxu0 0
        %7587 = vmatpush2.bf16.msra.mxu0 0
        %7588 = vmatprep.subr.bf16.mxu0 0
        %7589 = vmatpush2.bf16.msra.mxu0 0
        %7590 = vmatprep.subr.bf16.mxu0 0
        %7591 = vmatpush2.bf16.msra.mxu0 0
        %7592 = vmatprep.subr.bf16.mxu0 0
        %7593 = vmatpush2.bf16.msra.mxu0 0
        %7594 = vmatprep.subr.bf16.mxu0 0
        %7595 = vmatpush2.bf16.msra.mxu0 0
        %7596 = vmatprep.subr.bf16.mxu0 0
        %7597 = vmatpush2.bf16.msra.mxu0 0
        %7598 = vmatprep.mubr.bf16.mxu0 0
        %7599 = vmatmul.mubr.bf16.gmra.mxu0 %v7519
        %v7600 = vpop.f32.mrf.mxu0
        %v7601 = vadd.f32 0.0, %v7600
        %v7602 = vpop.f32.mrf.mxu0
        %v7603 = vpop.f32.mrf.mxu0
        %v7604 = vadd.f32 0.0, %v7603
        %v7605 = vpop.f32.mrf.mxu0
        %7606 = vmatprep.mubr.bf16.mxu0 0
        %7607 = vmatmul.mubr.bf16.gmra.mxu0 %v7522
        %v7608 = vpop.f32.mrf.mxu0
        %v7609 = vadd.f32 0.0, %v7608
        %v7610 = vpop.f32.mrf.mxu0
        %v7611 = vpop.f32.mrf.mxu0
        %v7612 = vadd.f32 0.0, %v7611
        %v7613 = vpop.f32.mrf.mxu0
        %7614 = vmatprep.mubr.bf16.mxu0 0
        %7615 = vmatmul.mubr.bf16.gmra.mxu0 %v7525
        %v7616 = vpop.f32.mrf.mxu0
        %v7617 = vadd.f32 0.0, %v7616
        %v7618 = vpop.f32.mrf.mxu0
        %v7619 = vpop.f32.mrf.mxu0
        %v7620 = vadd.f32 0.0, %v7619
        %v7621 = vpop.f32.mrf.mxu0
        %7622 = vmatprep.mubr.bf16.mxu0 0
        %7623 = vmatmul.mubr.bf16.gmra.mxu0 %v7528
        %v7624 = vpop.f32.mrf.mxu0
        %v7625 = vadd.f32 0.0, %v7624
        %v7626 = vpop.f32.mrf.mxu0
        %v7627 = vpop.f32.mrf.mxu0
        %v7628 = vadd.f32 0.0, %v7627
        %v7629 = vpop.f32.mrf.mxu0
        %7630 = vmatprep.mubr.bf16.mxu0 0
        %7631 = vmatmul.mubr.bf16.gmra.mxu0 %v7531
        %v7632 = vpop.f32.mrf.mxu0
        %v7633 = vadd.f32 0.0, %v7632
        %v7634 = vpop.f32.mrf.mxu0
        %v7635 = vpop.f32.mrf.mxu0
        %v7636 = vadd.f32 0.0, %v7635
        %v7637 = vpop.f32.mrf.mxu0
        %7638 = vmatprep.mubr.bf16.mxu0 0
        %7639 = vmatmul.mubr.bf16.gmra.mxu0 %v7534
        %v7640 = vpop.f32.mrf.mxu0
        %v7641 = vadd.f32 0.0, %v7640
        %v7642 = vpop.f32.mrf.mxu0
        %v7643 = vpop.f32.mrf.mxu0
        %v7644 = vadd.f32 0.0, %v7643
        %v7645 = vpop.f32.mrf.mxu0
        %7646 = vmatprep.mubr.bf16.mxu0 0
        %7647 = vmatmul.mubr.bf16.gmra.mxu0 %v7537
        %v7648 = vpop.f32.mrf.mxu0
        %v7649 = vadd.f32 0.0, %v7648
        %v7650 = vpop.f32.mrf.mxu0
        %v7651 = vpop.f32.mrf.mxu0
        %v7652 = vadd.f32 0.0, %v7651
        %v7653 = vpop.f32.mrf.mxu0
        %7654 = vmatprep.mubr.bf16.mxu0 0
        %7655 = vmatmul.mubr.bf16.gmra.mxu0 %v7540
        %v7656 = vpop.f32.mrf.mxu0
        %v7657 = vadd.f32 0.0, %v7656
        %v7658 = vpop.f32.mrf.mxu0
        %v7659 = vpop.f32.mrf.mxu0
        %v7660 = vadd.f32 0.0, %v7659
        %v7661 = vpop.f32.mrf.mxu0
        %7662 = vmatprep.mubr.bf16.mxu0 0
        %7663 = vmatmul.mubr.bf16.gmra.mxu0 %v7543
        %v7664 = vpop.f32.mrf.mxu0
        %v7665 = vadd.f32 0.0, %v7664
        %v7666 = vpop.f32.mrf.mxu0
        %v7667 = vpop.f32.mrf.mxu0
        %v7668 = vadd.f32 0.0, %v7667
        %v7669 = vpop.f32.mrf.mxu0
        %7670 = vmatprep.mubr.bf16.mxu0 0
        %7671 = vmatmul.mubr.bf16.gmra.mxu0 %v7546
        %v7672 = vpop.f32.mrf.mxu0
        %v7673 = vadd.f32 0.0, %v7672
        %v7674 = vpop.f32.mrf.mxu0
        %v7675 = vpop.f32.mrf.mxu0
        %v7676 = vadd.f32 0.0, %v7675
        %v7677 = vpop.f32.mrf.mxu0
        %7678 = vmatprep.mubr.bf16.mxu0 0
        %7679 = vmatmul.mubr.bf16.gmra.mxu0 %v7549
        %v7680 = vpop.f32.mrf.mxu0
        %v7681 = vadd.f32 0.0, %v7680
        %v7682 = vpop.f32.mrf.mxu0
        %v7683 = vpop.f32.mrf.mxu0
        %v7684 = vadd.f32 0.0, %v7683
        %v7685 = vpop.f32.mrf.mxu0
        %7686 = vmatprep.mubr.bf16.mxu0 0
        %7687 = vmatmul.mubr.bf16.gmra.mxu0 %v7552
        %v7688 = vpop.f32.mrf.mxu0
        %v7689 = vadd.f32 0.0, %v7688
        %v7690 = vpop.f32.mrf.mxu0
        %v7691 = vpop.f32.mrf.mxu0
        %v7692 = vadd.f32 0.0, %v7691
        %v7693 = vpop.f32.mrf.mxu0
        %7694 = vmatprep.mubr.bf16.mxu0 0
        %7695 = vmatmul.mubr.bf16.gmra.mxu0 %v7555
        %v7696 = vpop.f32.mrf.mxu0
        %v7697 = vadd.f32 0.0, %v7696
        %v7698 = vpop.f32.mrf.mxu0
        %v7699 = vpop.f32.mrf.mxu0
        %v7700 = vadd.f32 0.0, %v7699
        %v7701 = vpop.f32.mrf.mxu0
        %7702 = vmatprep.mubr.bf16.mxu0 0
        %7703 = vmatmul.mubr.bf16.gmra.mxu0 %v7558
        %v7704 = vpop.f32.mrf.mxu0
        %v7705 = vadd.f32 0.0, %v7704
        %v7706 = vpop.f32.mrf.mxu0
        %v7707 = vpop.f32.mrf.mxu0
        %v7708 = vadd.f32 0.0, %v7707
        %v7709 = vpop.f32.mrf.mxu0
        %7710 = vmatprep.mubr.bf16.mxu0 0
        %7711 = vmatmul.mubr.bf16.gmra.mxu0 %v7561
        %v7712 = vpop.f32.mrf.mxu0
        %v7713 = vadd.f32 0.0, %v7712
        %v7714 = vpop.f32.mrf.mxu0
        %v7715 = vpop.f32.mrf.mxu0
        %v7716 = vadd.f32 0.0, %v7715
        %v7717 = vpop.f32.mrf.mxu0
        %7718 = vmatprep.mubr.bf16.mxu0 0
        %7719 = vmatmul.mubr.bf16.gmra.mxu0 %v7564
        %v7720 = vpop.f32.mrf.mxu0
        %v7721 = vadd.f32 0.0, %v7720
        %v7722 = vpop.f32.mrf.mxu0
        %v7723 = vpop.f32.mrf.mxu0
        %v7724 = vadd.f32 0.0, %v7723
        %v7725 = vpop.f32.mrf.mxu0
        %7726 = vdwg.mxu0
        %v7727 = vadd.f32 %v7421, %v7601
        %v7728 = vadd.f32 %v7422, %v7604
        %v7729 = vadd.f32 %v7423, %v7609
        %v7730 = vadd.f32 %v7424, %v7612
        %v7731 = vadd.f32 %v7425, %v7617
        %v7732 = vadd.f32 %v7426, %v7620
        %v7733 = vadd.f32 %v7427, %v7625
        %v7734 = vadd.f32 %v7428, %v7628
        %v7735 = vadd.f32 %v7429, %v7633
        %v7736 = vadd.f32 %v7430, %v7636
        %v7737 = vadd.f32 %v7431, %v7641
        %v7738 = vadd.f32 %v7432, %v7644
        %v7739 = vadd.f32 %v7433, %v7649
        %v7740 = vadd.f32 %v7434, %v7652
        %v7741 = vadd.f32 %v7435, %v7657
        %v7742 = vadd.f32 %v7436, %v7660
        %v7743 = vadd.f32 %v7437, %v7665
        %v7744 = vadd.f32 %v7438, %v7668
        %v7745 = vadd.f32 %v7439, %v7673
        %v7746 = vadd.f32 %v7440, %v7676
        %v7747 = vadd.f32 %v7441, %v7681
        %v7748 = vadd.f32 %v7442, %v7684
        %v7749 = vadd.f32 %v7443, %v7689
        %v7750 = vadd.f32 %v7444, %v7692
        %v7751 = vadd.f32 %v7445, %v7697
        %v7752 = vadd.f32 %v7446, %v7700
        %v7753 = vadd.f32 %v7447, %v7705
        %v7754 = vadd.f32 %v7448, %v7708
        %v7755 = vadd.f32 %v7449, %v7713
        %v7756 = vadd.f32 %v7450, %v7716
        %v7757 = vadd.f32 %v7451, %v7721
        %v7758 = vadd.f32 %v7452, %v7724
        %v7759 = vld [vmem:[%s7146 + $0x2] sm:$0xff]
        %v7760 = vld [vmem:[%s7146 + $0x12] sm:$0xff]
        %v7761 = vld [vmem:[%s7146 + $0x22] sm:$0xff]
        %v7762 = vld [vmem:[%s7146 + $0x32] sm:$0xff]
        %v7763 = vld [vmem:[%s7146 + $0x42] sm:$0xff]
        %v7764 = vld [vmem:[%s7146 + $0x52] sm:$0xff]
        %v7765 = vld [vmem:[%s7146 + $0x62] sm:$0xff]
        %v7766 = vld [vmem:[%s7146 + $0x72] sm:$0xff]
        %v7767 = vld [vmem:[%s7146 + $0xa2] sm:$0xff]
        %v7768 = vld [vmem:[%s7146 + $0xb2] sm:$0xff]
        %v7769 = vld [vmem:[%s7146 + $0xc2] sm:$0xff]
        %v7770 = vld [vmem:[%s7146 + $0xd2] sm:$0xff]
        %v7771 = vld [vmem:[%s7146 + $0xe2] sm:$0xff]
        %v7772 = vld [vmem:[%s7146 + $0xf2] sm:$0xff]
        %v7773 = vld [vmem:[%s7146 + $0x102] sm:$0xff]
        %v7774 = vld [vmem:[%s7146 + $0x112] sm:$0xff]
        %v7775 = vld [vmem:[%s7146 + $0x142] sm:$0xff]
        %v7776 = vld [vmem:[%s7146 + $0x152] sm:$0xff]
        %v7777 = vld [vmem:[%s7146 + $0x162] sm:$0xff]
        %v7778 = vld [vmem:[%s7146 + $0x172] sm:$0xff]
        %v7779 = vld [vmem:[%s7146 + $0x182] sm:$0xff]
        %v7780 = vld [vmem:[%s7146 + $0x192] sm:$0xff]
        %v7781 = vld [vmem:[%s7146 + $0x1a2] sm:$0xff]
        %v7782 = vld [vmem:[%s7146 + $0x1b2] sm:$0xff]
        %v7783 = vld [vmem:[%s7146 + $0x1e2] sm:$0xff]
        %v7784 = vld [vmem:[%s7146 + $0x1f2] sm:$0xff]
        %v7785 = vld [vmem:[%s7146 + $0x202] sm:$0xff]
        %v7786 = vld [vmem:[%s7146 + $0x212] sm:$0xff]
        %v7787 = vld [vmem:[%s7146 + $0x222] sm:$0xff]
        %v7788 = vld [vmem:[%s7146 + $0x232] sm:$0xff]
        %v7789 = vld [vmem:[%s7146 + $0x242] sm:$0xff]
        %v7790 = vld [vmem:[%s7146 + $0x252] sm:$0xff]
        %v7791 = vpack.c.bf16 %v7760, %v7759
        %v7792 = vpack.c.bf16 %v7762, %v7761
        %v7793 = vpack.c.bf16 %v7764, %v7763
        %v7794 = vpack.c.bf16 %v7766, %v7765
        %v7795 = vpack.c.bf16 %v7768, %v7767
        %v7796 = vpack.c.bf16 %v7770, %v7769
        %v7797 = vpack.c.bf16 %v7772, %v7771
        %v7798 = vpack.c.bf16 %v7774, %v7773
        %v7799 = vpack.c.bf16 %v7776, %v7775
        %v7800 = vpack.c.bf16 %v7778, %v7777
        %v7801 = vpack.c.bf16 %v7780, %v7779
        %v7802 = vpack.c.bf16 %v7782, %v7781
        %v7803 = vpack.c.bf16 %v7784, %v7783
        %v7804 = vpack.c.bf16 %v7786, %v7785
        %v7805 = vpack.c.bf16 %v7788, %v7787
        %v7806 = vpack.c.bf16 %v7790, %v7789
        %s7807 = scalar_lea.vmem [#allocation6], 368
        %v7808 = vld [vmem:[%s7807] sm:$0xf]
        %v7809 = vld [vmem:[%s7807 + $0x4] sm:$0xf]
        %v7810 = vld [vmem:[%s7807 + $0x8] sm:$0xf]
        %v7811 = vld [vmem:[%s7807 + $0xc] sm:$0xf]
        %v7816 = vunpack.c.l.b16 %v7808
        %v7817 = vunpack.c.l.b16 %v7809
        %v7818 = vunpack.c.l.b16 %v7810
        %v7819 = vunpack.c.l.b16 %v7811
        %v7820 = vpack.c.b16 %v7817, %v7816
        %v7821 = vpack.c.b16 %v7819, %v7818
        %v7825 = vsel %vm625, %v7791, 0
        %v7828 = vsel %vm625, %v7792, 0
        %v7831 = vsel %vm625, %v7793, 0
        %v7834 = vsel %vm625, %v7794, 0
        %v7837 = vsel %vm625, %v7795, 0
        %v7840 = vsel %vm625, %v7796, 0
        %v7843 = vsel %vm625, %v7797, 0
        %v7846 = vsel %vm625, %v7798, 0
        %v7849 = vsel %vm625, %v7799, 0
        %v7852 = vsel %vm625, %v7800, 0
        %v7855 = vsel %vm625, %v7801, 0
        %v7858 = vsel %vm625, %v7802, 0
        %v7861 = vsel %vm625, %v7803, 0
        %v7864 = vsel %vm625, %v7804, 0
        %v7867 = vsel %vm625, %v7805, 0
        %v7870 = vsel %vm625, %v7806, 0
        %7872 = vmatprep.subr.bf16.mxu0 0
        %7873 = vmatpush1.bf16.msra.mxu0 0
        %7874 = vmatprep.subr.bf16.mxu0 0
        %7875 = vmatpush1.bf16.msra.mxu0 0
        %7876 = vmatprep.subr.bf16.mxu0 0
        %7877 = vmatpush1.bf16.msra.mxu0 0
        %7878 = vmatprep.subr.bf16.mxu0 0
        %7879 = vmatpush1.bf16.msra.mxu0 0
        %7880 = vmatprep.subr.bf16.mxu0 0
        %7881 = vmatpush1.bf16.msra.mxu0 0
        %7882 = vmatprep.subr.bf16.mxu0 0
        %7883 = vmatpush1.bf16.msra.mxu0 0
        %7884 = vmatprep.subr.bf16.mxu0 0
        %7885 = vmatpush1.bf16.msra.mxu0 %v7821
        %7886 = vmatprep.subr.bf16.mxu0 0
        %7887 = vmatpush1.bf16.msra.mxu0 %v7820
        %7888 = vmatprep.subr.bf16.mxu0 0
        %7889 = vmatpush2.bf16.msra.mxu0 0
        %7890 = vmatprep.subr.bf16.mxu0 0
        %7891 = vmatpush2.bf16.msra.mxu0 0
        %7892 = vmatprep.subr.bf16.mxu0 0
        %7893 = vmatpush2.bf16.msra.mxu0 0
        %7894 = vmatprep.subr.bf16.mxu0 0
        %7895 = vmatpush2.bf16.msra.mxu0 0
        %7896 = vmatprep.subr.bf16.mxu0 0
        %7897 = vmatpush2.bf16.msra.mxu0 0
        %7898 = vmatprep.subr.bf16.mxu0 0
        %7899 = vmatpush2.bf16.msra.mxu0 0
        %7900 = vmatprep.subr.bf16.mxu0 0
        %7901 = vmatpush2.bf16.msra.mxu0 0
        %7902 = vmatprep.subr.bf16.mxu0 0
        %7903 = vmatpush2.bf16.msra.mxu0 0
        %7904 = vmatprep.mubr.bf16.mxu0 0
        %7905 = vmatmul.mubr.bf16.gmra.mxu0 %v7825
        %v7906 = vpop.f32.mrf.mxu0
        %v7907 = vadd.f32 0.0, %v7906
        %v7908 = vpop.f32.mrf.mxu0
        %v7909 = vpop.f32.mrf.mxu0
        %v7910 = vadd.f32 0.0, %v7909
        %v7911 = vpop.f32.mrf.mxu0
        %7912 = vmatprep.mubr.bf16.mxu0 0
        %7913 = vmatmul.mubr.bf16.gmra.mxu0 %v7828
        %v7914 = vpop.f32.mrf.mxu0
        %v7915 = vadd.f32 0.0, %v7914
        %v7916 = vpop.f32.mrf.mxu0
        %v7917 = vpop.f32.mrf.mxu0
        %v7918 = vadd.f32 0.0, %v7917
        %v7919 = vpop.f32.mrf.mxu0
        %7920 = vmatprep.mubr.bf16.mxu0 0
        %7921 = vmatmul.mubr.bf16.gmra.mxu0 %v7831
        %v7922 = vpop.f32.mrf.mxu0
        %v7923 = vadd.f32 0.0, %v7922
        %v7924 = vpop.f32.mrf.mxu0
        %v7925 = vpop.f32.mrf.mxu0
        %v7926 = vadd.f32 0.0, %v7925
        %v7927 = vpop.f32.mrf.mxu0
        %7928 = vmatprep.mubr.bf16.mxu0 0
        %7929 = vmatmul.mubr.bf16.gmra.mxu0 %v7834
        %v7930 = vpop.f32.mrf.mxu0
        %v7931 = vadd.f32 0.0, %v7930
        %v7932 = vpop.f32.mrf.mxu0
        %v7933 = vpop.f32.mrf.mxu0
        %v7934 = vadd.f32 0.0, %v7933
        %v7935 = vpop.f32.mrf.mxu0
        %7936 = vmatprep.mubr.bf16.mxu0 0
        %7937 = vmatmul.mubr.bf16.gmra.mxu0 %v7837
        %v7938 = vpop.f32.mrf.mxu0
        %v7939 = vadd.f32 0.0, %v7938
        %v7940 = vpop.f32.mrf.mxu0
        %v7941 = vpop.f32.mrf.mxu0
        %v7942 = vadd.f32 0.0, %v7941
        %v7943 = vpop.f32.mrf.mxu0
        %7944 = vmatprep.mubr.bf16.mxu0 0
        %7945 = vmatmul.mubr.bf16.gmra.mxu0 %v7840
        %v7946 = vpop.f32.mrf.mxu0
        %v7947 = vadd.f32 0.0, %v7946
        %v7948 = vpop.f32.mrf.mxu0
        %v7949 = vpop.f32.mrf.mxu0
        %v7950 = vadd.f32 0.0, %v7949
        %v7951 = vpop.f32.mrf.mxu0
        %7952 = vmatprep.mubr.bf16.mxu0 0
        %7953 = vmatmul.mubr.bf16.gmra.mxu0 %v7843
        %v7954 = vpop.f32.mrf.mxu0
        %v7955 = vadd.f32 0.0, %v7954
        %v7956 = vpop.f32.mrf.mxu0
        %v7957 = vpop.f32.mrf.mxu0
        %v7958 = vadd.f32 0.0, %v7957
        %v7959 = vpop.f32.mrf.mxu0
        %7960 = vmatprep.mubr.bf16.mxu0 0
        %7961 = vmatmul.mubr.bf16.gmra.mxu0 %v7846
        %v7962 = vpop.f32.mrf.mxu0
        %v7963 = vadd.f32 0.0, %v7962
        %v7964 = vpop.f32.mrf.mxu0
        %v7965 = vpop.f32.mrf.mxu0
        %v7966 = vadd.f32 0.0, %v7965
        %v7967 = vpop.f32.mrf.mxu0
        %7968 = vmatprep.mubr.bf16.mxu0 0
        %7969 = vmatmul.mubr.bf16.gmra.mxu0 %v7849
        %v7970 = vpop.f32.mrf.mxu0
        %v7971 = vadd.f32 0.0, %v7970
        %v7972 = vpop.f32.mrf.mxu0
        %v7973 = vpop.f32.mrf.mxu0
        %v7974 = vadd.f32 0.0, %v7973
        %v7975 = vpop.f32.mrf.mxu0
        %7976 = vmatprep.mubr.bf16.mxu0 0
        %7977 = vmatmul.mubr.bf16.gmra.mxu0 %v7852
        %v7978 = vpop.f32.mrf.mxu0
        %v7979 = vadd.f32 0.0, %v7978
        %v7980 = vpop.f32.mrf.mxu0
        %v7981 = vpop.f32.mrf.mxu0
        %v7982 = vadd.f32 0.0, %v7981
        %v7983 = vpop.f32.mrf.mxu0
        %7984 = vmatprep.mubr.bf16.mxu0 0
        %7985 = vmatmul.mubr.bf16.gmra.mxu0 %v7855
        %v7986 = vpop.f32.mrf.mxu0
        %v7987 = vadd.f32 0.0, %v7986
        %v7988 = vpop.f32.mrf.mxu0
        %v7989 = vpop.f32.mrf.mxu0
        %v7990 = vadd.f32 0.0, %v7989
        %v7991 = vpop.f32.mrf.mxu0
        %7992 = vmatprep.mubr.bf16.mxu0 0
        %7993 = vmatmul.mubr.bf16.gmra.mxu0 %v7858
        %v7994 = vpop.f32.mrf.mxu0
        %v7995 = vadd.f32 0.0, %v7994
        %v7996 = vpop.f32.mrf.mxu0
        %v7997 = vpop.f32.mrf.mxu0
        %v7998 = vadd.f32 0.0, %v7997
        %v7999 = vpop.f32.mrf.mxu0
        %8000 = vmatprep.mubr.bf16.mxu0 0
        %8001 = vmatmul.mubr.bf16.gmra.mxu0 %v7861
        %v8002 = vpop.f32.mrf.mxu0
        %v8003 = vadd.f32 0.0, %v8002
        %v8004 = vpop.f32.mrf.mxu0
        %v8005 = vpop.f32.mrf.mxu0
        %v8006 = vadd.f32 0.0, %v8005
        %v8007 = vpop.f32.mrf.mxu0
        %8008 = vmatprep.mubr.bf16.mxu0 0
        %8009 = vmatmul.mubr.bf16.gmra.mxu0 %v7864
        %v8010 = vpop.f32.mrf.mxu0
        %v8011 = vadd.f32 0.0, %v8010
        %v8012 = vpop.f32.mrf.mxu0
        %v8013 = vpop.f32.mrf.mxu0
        %v8014 = vadd.f32 0.0, %v8013
        %v8015 = vpop.f32.mrf.mxu0
        %8016 = vmatprep.mubr.bf16.mxu0 0
        %8017 = vmatmul.mubr.bf16.gmra.mxu0 %v7867
        %v8018 = vpop.f32.mrf.mxu0
        %v8019 = vadd.f32 0.0, %v8018
        %v8020 = vpop.f32.mrf.mxu0
        %v8021 = vpop.f32.mrf.mxu0
        %v8022 = vadd.f32 0.0, %v8021
        %v8023 = vpop.f32.mrf.mxu0
        %8024 = vmatprep.mubr.bf16.mxu0 0
        %8025 = vmatmul.mubr.bf16.gmra.mxu0 %v7870
        %v8026 = vpop.f32.mrf.mxu0
        %v8027 = vadd.f32 0.0, %v8026
        %v8028 = vpop.f32.mrf.mxu0
        %v8029 = vpop.f32.mrf.mxu0
        %v8030 = vadd.f32 0.0, %v8029
        %v8031 = vpop.f32.mrf.mxu0
        %8032 = vdwg.mxu0
        %v8033 = vadd.f32 %v7727, %v7907
        %v8034 = vadd.f32 %v7728, %v7910
        %v8035 = vadd.f32 %v7729, %v7915
        %v8036 = vadd.f32 %v7730, %v7918
        %v8037 = vadd.f32 %v7731, %v7923
        %v8038 = vadd.f32 %v7732, %v7926
        %v8039 = vadd.f32 %v7733, %v7931
        %v8040 = vadd.f32 %v7734, %v7934
        %v8041 = vadd.f32 %v7735, %v7939
        %v8042 = vadd.f32 %v7736, %v7942
        %v8043 = vadd.f32 %v7737, %v7947
        %v8044 = vadd.f32 %v7738, %v7950
        %v8045 = vadd.f32 %v7739, %v7955
        %v8046 = vadd.f32 %v7740, %v7958
        %v8047 = vadd.f32 %v7741, %v7963
        %v8048 = vadd.f32 %v7742, %v7966
        %v8049 = vadd.f32 %v7743, %v7971
        %v8050 = vadd.f32 %v7744, %v7974
        %v8051 = vadd.f32 %v7745, %v7979
        %v8052 = vadd.f32 %v7746, %v7982
        %v8053 = vadd.f32 %v7747, %v7987
        %v8054 = vadd.f32 %v7748, %v7990
        %v8055 = vadd.f32 %v7749, %v7995
        %v8056 = vadd.f32 %v7750, %v7998
        %v8057 = vadd.f32 %v7751, %v8003
        %v8058 = vadd.f32 %v7752, %v8006
        %v8059 = vadd.f32 %v7753, %v8011
        %v8060 = vadd.f32 %v7754, %v8014
        %v8061 = vadd.f32 %v7755, %v8019
        %v8062 = vadd.f32 %v7756, %v8022
        %v8063 = vadd.f32 %v7757, %v8027
        %v8064 = vadd.f32 %v7758, %v8030
        %s8065 = scalar_lea.vmem [#allocation2], 352
        %v8066 = vld [vmem:[%s8065] sm:$0xff]
        %v8067 = vld [vmem:[%s8065 + $0x10] sm:$0xff]
        %v8068 = vld [vmem:[%s8065 + $0x20] sm:$0xff]
        %v8069 = vld [vmem:[%s8065 + $0x30] sm:$0xff]
        %v8070 = vld [vmem:[%s8065 + $0x40] sm:$0xff]
        %v8071 = vld [vmem:[%s8065 + $0x50] sm:$0xff]
        %v8072 = vld [vmem:[%s8065 + $0x60] sm:$0xff]
        %v8073 = vld [vmem:[%s8065 + $0x70] sm:$0xff]
        %v8074 = vld [vmem:[%s8065 + $0xa0] sm:$0xff]
        %v8075 = vld [vmem:[%s8065 + $0xb0] sm:$0xff]
        %v8076 = vld [vmem:[%s8065 + $0xc0] sm:$0xff]
        %v8077 = vld [vmem:[%s8065 + $0xd0] sm:$0xff]
        %v8078 = vld [vmem:[%s8065 + $0xe0] sm:$0xff]
        %v8079 = vld [vmem:[%s8065 + $0xf0] sm:$0xff]
        %v8080 = vld [vmem:[%s8065 + $0x100] sm:$0xff]
        %v8081 = vld [vmem:[%s8065 + $0x110] sm:$0xff]
        %v8082 = vld [vmem:[%s8065 + $0x140] sm:$0xff]
        %v8083 = vld [vmem:[%s8065 + $0x150] sm:$0xff]
        %v8084 = vld [vmem:[%s8065 + $0x160] sm:$0xff]
        %v8085 = vld [vmem:[%s8065 + $0x170] sm:$0xff]
        %v8086 = vld [vmem:[%s8065 + $0x180] sm:$0xff]
        %v8087 = vld [vmem:[%s8065 + $0x190] sm:$0xff]
        %v8088 = vld [vmem:[%s8065 + $0x1a0] sm:$0xff]
        %v8089 = vld [vmem:[%s8065 + $0x1b0] sm:$0xff]
        %v8090 = vld [vmem:[%s8065 + $0x1e0] sm:$0xff]
        %v8091 = vld [vmem:[%s8065 + $0x1f0] sm:$0xff]
        %v8092 = vld [vmem:[%s8065 + $0x200] sm:$0xff]
        %v8093 = vld [vmem:[%s8065 + $0x210] sm:$0xff]
        %v8094 = vld [vmem:[%s8065 + $0x220] sm:$0xff]
        %v8095 = vld [vmem:[%s8065 + $0x230] sm:$0xff]
        %v8096 = vld [vmem:[%s8065 + $0x240] sm:$0xff]
        %v8097 = vld [vmem:[%s8065 + $0x250] sm:$0xff]
        %v8098 = vpack.c.bf16 %v8067, %v8066
        %v8099 = vpack.c.bf16 %v8069, %v8068
        %v8100 = vpack.c.bf16 %v8071, %v8070
        %v8101 = vpack.c.bf16 %v8073, %v8072
        %v8102 = vpack.c.bf16 %v8075, %v8074
        %v8103 = vpack.c.bf16 %v8077, %v8076
        %v8104 = vpack.c.bf16 %v8079, %v8078
        %v8105 = vpack.c.bf16 %v8081, %v8080
        %v8106 = vpack.c.bf16 %v8083, %v8082
        %v8107 = vpack.c.bf16 %v8085, %v8084
        %v8108 = vpack.c.bf16 %v8087, %v8086
        %v8109 = vpack.c.bf16 %v8089, %v8088
        %v8110 = vpack.c.bf16 %v8091, %v8090
        %v8111 = vpack.c.bf16 %v8093, %v8092
        %v8112 = vpack.c.bf16 %v8095, %v8094
        %v8113 = vpack.c.bf16 %v8097, %v8096
        %s8114 = scalar_lea.vmem [#allocation6], 384
        %v8115 = vld [vmem:[%s8114] sm:$0xf]
        %v8116 = vld [vmem:[%s8114 + $0x4] sm:$0xf]
        %v8117 = vld [vmem:[%s8114 + $0x8] sm:$0xf]
        %v8118 = vld [vmem:[%s8114 + $0xc] sm:$0xf]
        %v8123 = vunpack.c.l.b16 %v8115
        %v8124 = vunpack.c.l.b16 %v8116
        %v8125 = vunpack.c.l.b16 %v8117
        %v8126 = vunpack.c.l.b16 %v8118
        %v8127 = vpack.c.b16 %v8124, %v8123
        %v8128 = vpack.c.b16 %v8126, %v8125
        %v8132 = vsel %vm625, %v8098, 0
        %v8135 = vsel %vm625, %v8099, 0
        %v8138 = vsel %vm625, %v8100, 0
        %v8141 = vsel %vm625, %v8101, 0
        %v8144 = vsel %vm625, %v8102, 0
        %v8147 = vsel %vm625, %v8103, 0
        %v8150 = vsel %vm625, %v8104, 0
        %v8153 = vsel %vm625, %v8105, 0
        %v8156 = vsel %vm625, %v8106, 0
        %v8159 = vsel %vm625, %v8107, 0
        %v8162 = vsel %vm625, %v8108, 0
        %v8165 = vsel %vm625, %v8109, 0
        %v8168 = vsel %vm625, %v8110, 0
        %v8171 = vsel %vm625, %v8111, 0
        %v8174 = vsel %vm625, %v8112, 0
        %v8177 = vsel %vm625, %v8113, 0
        %8179 = vmatprep.subr.bf16.mxu0 0
        %8180 = vmatpush1.bf16.msra.mxu0 0
        %8181 = vmatprep.subr.bf16.mxu0 0
        %8182 = vmatpush1.bf16.msra.mxu0 0
        %8183 = vmatprep.subr.bf16.mxu0 0
        %8184 = vmatpush1.bf16.msra.mxu0 0
        %8185 = vmatprep.subr.bf16.mxu0 0
        %8186 = vmatpush1.bf16.msra.mxu0 0
        %8187 = vmatprep.subr.bf16.mxu0 0
        %8188 = vmatpush1.bf16.msra.mxu0 0
        %8189 = vmatprep.subr.bf16.mxu0 0
        %8190 = vmatpush1.bf16.msra.mxu0 0
        %8191 = vmatprep.subr.bf16.mxu0 0
        %8192 = vmatpush1.bf16.msra.mxu0 %v8128
        %8193 = vmatprep.subr.bf16.mxu0 0
        %8194 = vmatpush1.bf16.msra.mxu0 %v8127
        %8195 = vmatprep.subr.bf16.mxu0 0
        %8196 = vmatpush2.bf16.msra.mxu0 0
        %8197 = vmatprep.subr.bf16.mxu0 0
        %8198 = vmatpush2.bf16.msra.mxu0 0
        %8199 = vmatprep.subr.bf16.mxu0 0
        %8200 = vmatpush2.bf16.msra.mxu0 0
        %8201 = vmatprep.subr.bf16.mxu0 0
        %8202 = vmatpush2.bf16.msra.mxu0 0
        %8203 = vmatprep.subr.bf16.mxu0 0
        %8204 = vmatpush2.bf16.msra.mxu0 0
        %8205 = vmatprep.subr.bf16.mxu0 0
        %8206 = vmatpush2.bf16.msra.mxu0 0
        %8207 = vmatprep.subr.bf16.mxu0 0
        %8208 = vmatpush2.bf16.msra.mxu0 0
        %8209 = vmatprep.subr.bf16.mxu0 0
        %8210 = vmatpush2.bf16.msra.mxu0 0
        %8211 = vmatprep.mubr.bf16.mxu0 0
        %8212 = vmatmul.mubr.bf16.gmra.mxu0 %v8132
        %v8213 = vpop.f32.mrf.mxu0
        %v8214 = vadd.f32 0.0, %v8213
        %v8215 = vpop.f32.mrf.mxu0
        %v8216 = vpop.f32.mrf.mxu0
        %v8217 = vadd.f32 0.0, %v8216
        %v8218 = vpop.f32.mrf.mxu0
        %8219 = vmatprep.mubr.bf16.mxu0 0
        %8220 = vmatmul.mubr.bf16.gmra.mxu0 %v8135
        %v8221 = vpop.f32.mrf.mxu0
        %v8222 = vadd.f32 0.0, %v8221
        %v8223 = vpop.f32.mrf.mxu0
        %v8224 = vpop.f32.mrf.mxu0
        %v8225 = vadd.f32 0.0, %v8224
        %v8226 = vpop.f32.mrf.mxu0
        %8227 = vmatprep.mubr.bf16.mxu0 0
        %8228 = vmatmul.mubr.bf16.gmra.mxu0 %v8138
        %v8229 = vpop.f32.mrf.mxu0
        %v8230 = vadd.f32 0.0, %v8229
        %v8231 = vpop.f32.mrf.mxu0
        %v8232 = vpop.f32.mrf.mxu0
        %v8233 = vadd.f32 0.0, %v8232
        %v8234 = vpop.f32.mrf.mxu0
        %8235 = vmatprep.mubr.bf16.mxu0 0
        %8236 = vmatmul.mubr.bf16.gmra.mxu0 %v8141
        %v8237 = vpop.f32.mrf.mxu0
        %v8238 = vadd.f32 0.0, %v8237
        %v8239 = vpop.f32.mrf.mxu0
        %v8240 = vpop.f32.mrf.mxu0
        %v8241 = vadd.f32 0.0, %v8240
        %v8242 = vpop.f32.mrf.mxu0
        %8243 = vmatprep.mubr.bf16.mxu0 0
        %8244 = vmatmul.mubr.bf16.gmra.mxu0 %v8144
        %v8245 = vpop.f32.mrf.mxu0
        %v8246 = vadd.f32 0.0, %v8245
        %v8247 = vpop.f32.mrf.mxu0
        %v8248 = vpop.f32.mrf.mxu0
        %v8249 = vadd.f32 0.0, %v8248
        %v8250 = vpop.f32.mrf.mxu0
        %8251 = vmatprep.mubr.bf16.mxu0 0
        %8252 = vmatmul.mubr.bf16.gmra.mxu0 %v8147
        %v8253 = vpop.f32.mrf.mxu0
        %v8254 = vadd.f32 0.0, %v8253
        %v8255 = vpop.f32.mrf.mxu0
        %v8256 = vpop.f32.mrf.mxu0
        %v8257 = vadd.f32 0.0, %v8256
        %v8258 = vpop.f32.mrf.mxu0
        %8259 = vmatprep.mubr.bf16.mxu0 0
        %8260 = vmatmul.mubr.bf16.gmra.mxu0 %v8150
        %v8261 = vpop.f32.mrf.mxu0
        %v8262 = vadd.f32 0.0, %v8261
        %v8263 = vpop.f32.mrf.mxu0
        %v8264 = vpop.f32.mrf.mxu0
        %v8265 = vadd.f32 0.0, %v8264
        %v8266 = vpop.f32.mrf.mxu0
        %8267 = vmatprep.mubr.bf16.mxu0 0
        %8268 = vmatmul.mubr.bf16.gmra.mxu0 %v8153
        %v8269 = vpop.f32.mrf.mxu0
        %v8270 = vadd.f32 0.0, %v8269
        %v8271 = vpop.f32.mrf.mxu0
        %v8272 = vpop.f32.mrf.mxu0
        %v8273 = vadd.f32 0.0, %v8272
        %v8274 = vpop.f32.mrf.mxu0
        %8275 = vmatprep.mubr.bf16.mxu0 0
        %8276 = vmatmul.mubr.bf16.gmra.mxu0 %v8156
        %v8277 = vpop.f32.mrf.mxu0
        %v8278 = vadd.f32 0.0, %v8277
        %v8279 = vpop.f32.mrf.mxu0
        %v8280 = vpop.f32.mrf.mxu0
        %v8281 = vadd.f32 0.0, %v8280
        %v8282 = vpop.f32.mrf.mxu0
        %8283 = vmatprep.mubr.bf16.mxu0 0
        %8284 = vmatmul.mubr.bf16.gmra.mxu0 %v8159
        %v8285 = vpop.f32.mrf.mxu0
        %v8286 = vadd.f32 0.0, %v8285
        %v8287 = vpop.f32.mrf.mxu0
        %v8288 = vpop.f32.mrf.mxu0
        %v8289 = vadd.f32 0.0, %v8288
        %v8290 = vpop.f32.mrf.mxu0
        %8291 = vmatprep.mubr.bf16.mxu0 0
        %8292 = vmatmul.mubr.bf16.gmra.mxu0 %v8162
        %v8293 = vpop.f32.mrf.mxu0
        %v8294 = vadd.f32 0.0, %v8293
        %v8295 = vpop.f32.mrf.mxu0
        %v8296 = vpop.f32.mrf.mxu0
        %v8297 = vadd.f32 0.0, %v8296
        %v8298 = vpop.f32.mrf.mxu0
        %8299 = vmatprep.mubr.bf16.mxu0 0
        %8300 = vmatmul.mubr.bf16.gmra.mxu0 %v8165
        %v8301 = vpop.f32.mrf.mxu0
        %v8302 = vadd.f32 0.0, %v8301
        %v8303 = vpop.f32.mrf.mxu0
        %v8304 = vpop.f32.mrf.mxu0
        %v8305 = vadd.f32 0.0, %v8304
        %v8306 = vpop.f32.mrf.mxu0
        %8307 = vmatprep.mubr.bf16.mxu0 0
        %8308 = vmatmul.mubr.bf16.gmra.mxu0 %v8168
        %v8309 = vpop.f32.mrf.mxu0
        %v8310 = vadd.f32 0.0, %v8309
        %v8311 = vpop.f32.mrf.mxu0
        %v8312 = vpop.f32.mrf.mxu0
        %v8313 = vadd.f32 0.0, %v8312
        %v8314 = vpop.f32.mrf.mxu0
        %8315 = vmatprep.mubr.bf16.mxu0 0
        %8316 = vmatmul.mubr.bf16.gmra.mxu0 %v8171
        %v8317 = vpop.f32.mrf.mxu0
        %v8318 = vadd.f32 0.0, %v8317
        %v8319 = vpop.f32.mrf.mxu0
        %v8320 = vpop.f32.mrf.mxu0
        %v8321 = vadd.f32 0.0, %v8320
        %v8322 = vpop.f32.mrf.mxu0
        %8323 = vmatprep.mubr.bf16.mxu0 0
        %8324 = vmatmul.mubr.bf16.gmra.mxu0 %v8174
        %v8325 = vpop.f32.mrf.mxu0
        %v8326 = vadd.f32 0.0, %v8325
        %v8327 = vpop.f32.mrf.mxu0
        %v8328 = vpop.f32.mrf.mxu0
        %v8329 = vadd.f32 0.0, %v8328
        %v8330 = vpop.f32.mrf.mxu0
        %8331 = vmatprep.mubr.bf16.mxu0 0
        %8332 = vmatmul.mubr.bf16.gmra.mxu0 %v8177
        %v8333 = vpop.f32.mrf.mxu0
        %v8334 = vadd.f32 0.0, %v8333
        %v8335 = vpop.f32.mrf.mxu0
        %v8336 = vpop.f32.mrf.mxu0
        %v8337 = vadd.f32 0.0, %v8336
        %v8338 = vpop.f32.mrf.mxu0
        %8339 = vdwg.mxu0
        %v8340 = vadd.f32 %v8033, %v8214
        %v8341 = vadd.f32 %v8034, %v8217
        %v8342 = vadd.f32 %v8035, %v8222
        %v8343 = vadd.f32 %v8036, %v8225
        %v8344 = vadd.f32 %v8037, %v8230
        %v8345 = vadd.f32 %v8038, %v8233
        %v8346 = vadd.f32 %v8039, %v8238
        %v8347 = vadd.f32 %v8040, %v8241
        %v8348 = vadd.f32 %v8041, %v8246
        %v8349 = vadd.f32 %v8042, %v8249
        %v8350 = vadd.f32 %v8043, %v8254
        %v8351 = vadd.f32 %v8044, %v8257
        %v8352 = vadd.f32 %v8045, %v8262
        %v8353 = vadd.f32 %v8046, %v8265
        %v8354 = vadd.f32 %v8047, %v8270
        %v8355 = vadd.f32 %v8048, %v8273
        %v8356 = vadd.f32 %v8049, %v8278
        %v8357 = vadd.f32 %v8050, %v8281
        %v8358 = vadd.f32 %v8051, %v8286
        %v8359 = vadd.f32 %v8052, %v8289
        %v8360 = vadd.f32 %v8053, %v8294
        %v8361 = vadd.f32 %v8054, %v8297
        %v8362 = vadd.f32 %v8055, %v8302
        %v8363 = vadd.f32 %v8056, %v8305
        %v8364 = vadd.f32 %v8057, %v8310
        %v8365 = vadd.f32 %v8058, %v8313
        %v8366 = vadd.f32 %v8059, %v8318
        %v8367 = vadd.f32 %v8060, %v8321
        %v8368 = vadd.f32 %v8061, %v8326
        %v8369 = vadd.f32 %v8062, %v8329
        %v8370 = vadd.f32 %v8063, %v8334
        %v8371 = vadd.f32 %v8064, %v8337
        %v8372 = vld [vmem:[%s8065 + $0x1] sm:$0xff]
        %v8373 = vld [vmem:[%s8065 + $0x11] sm:$0xff]
        %v8374 = vld [vmem:[%s8065 + $0x21] sm:$0xff]
        %v8375 = vld [vmem:[%s8065 + $0x31] sm:$0xff]
        %v8376 = vld [vmem:[%s8065 + $0x41] sm:$0xff]
        %v8377 = vld [vmem:[%s8065 + $0x51] sm:$0xff]
        %v8378 = vld [vmem:[%s8065 + $0x61] sm:$0xff]
        %v8379 = vld [vmem:[%s8065 + $0x71] sm:$0xff]
        %v8380 = vld [vmem:[%s8065 + $0xa1] sm:$0xff]
        %v8381 = vld [vmem:[%s8065 + $0xb1] sm:$0xff]
        %v8382 = vld [vmem:[%s8065 + $0xc1] sm:$0xff]
        %v8383 = vld [vmem:[%s8065 + $0xd1] sm:$0xff]
        %v8384 = vld [vmem:[%s8065 + $0xe1] sm:$0xff]
        %v8385 = vld [vmem:[%s8065 + $0xf1] sm:$0xff]
        %v8386 = vld [vmem:[%s8065 + $0x101] sm:$0xff]
        %v8387 = vld [vmem:[%s8065 + $0x111] sm:$0xff]
        %v8388 = vld [vmem:[%s8065 + $0x141] sm:$0xff]
        %v8389 = vld [vmem:[%s8065 + $0x151] sm:$0xff]
        %v8390 = vld [vmem:[%s8065 + $0x161] sm:$0xff]
        %v8391 = vld [vmem:[%s8065 + $0x171] sm:$0xff]
        %v8392 = vld [vmem:[%s8065 + $0x181] sm:$0xff]
        %v8393 = vld [vmem:[%s8065 + $0x191] sm:$0xff]
        %v8394 = vld [vmem:[%s8065 + $0x1a1] sm:$0xff]
        %v8395 = vld [vmem:[%s8065 + $0x1b1] sm:$0xff]
        %v8396 = vld [vmem:[%s8065 + $0x1e1] sm:$0xff]
        %v8397 = vld [vmem:[%s8065 + $0x1f1] sm:$0xff]
        %v8398 = vld [vmem:[%s8065 + $0x201] sm:$0xff]
        %v8399 = vld [vmem:[%s8065 + $0x211] sm:$0xff]
        %v8400 = vld [vmem:[%s8065 + $0x221] sm:$0xff]
        %v8401 = vld [vmem:[%s8065 + $0x231] sm:$0xff]
        %v8402 = vld [vmem:[%s8065 + $0x241] sm:$0xff]
        %v8403 = vld [vmem:[%s8065 + $0x251] sm:$0xff]
        %v8404 = vpack.c.bf16 %v8373, %v8372
        %v8405 = vpack.c.bf16 %v8375, %v8374
        %v8406 = vpack.c.bf16 %v8377, %v8376
        %v8407 = vpack.c.bf16 %v8379, %v8378
        %v8408 = vpack.c.bf16 %v8381, %v8380
        %v8409 = vpack.c.bf16 %v8383, %v8382
        %v8410 = vpack.c.bf16 %v8385, %v8384
        %v8411 = vpack.c.bf16 %v8387, %v8386
        %v8412 = vpack.c.bf16 %v8389, %v8388
        %v8413 = vpack.c.bf16 %v8391, %v8390
        %v8414 = vpack.c.bf16 %v8393, %v8392
        %v8415 = vpack.c.bf16 %v8395, %v8394
        %v8416 = vpack.c.bf16 %v8397, %v8396
        %v8417 = vpack.c.bf16 %v8399, %v8398
        %v8418 = vpack.c.bf16 %v8401, %v8400
        %v8419 = vpack.c.bf16 %v8403, %v8402
        %s8420 = scalar_lea.vmem [#allocation6], 400
        %v8421 = vld [vmem:[%s8420] sm:$0xf]
        %v8422 = vld [vmem:[%s8420 + $0x4] sm:$0xf]
        %v8423 = vld [vmem:[%s8420 + $0x8] sm:$0xf]
        %v8424 = vld [vmem:[%s8420 + $0xc] sm:$0xf]
        %v8429 = vunpack.c.l.b16 %v8421
        %v8430 = vunpack.c.l.b16 %v8422
        %v8431 = vunpack.c.l.b16 %v8423
        %v8432 = vunpack.c.l.b16 %v8424
        %v8433 = vpack.c.b16 %v8430, %v8429
        %v8434 = vpack.c.b16 %v8432, %v8431
        %v8438 = vsel %vm625, %v8404, 0
        %v8441 = vsel %vm625, %v8405, 0
        %v8444 = vsel %vm625, %v8406, 0
        %v8447 = vsel %vm625, %v8407, 0
        %v8450 = vsel %vm625, %v8408, 0
        %v8453 = vsel %vm625, %v8409, 0
        %v8456 = vsel %vm625, %v8410, 0
        %v8459 = vsel %vm625, %v8411, 0
        %v8462 = vsel %vm625, %v8412, 0
        %v8465 = vsel %vm625, %v8413, 0
        %v8468 = vsel %vm625, %v8414, 0
        %v8471 = vsel %vm625, %v8415, 0
        %v8474 = vsel %vm625, %v8416, 0
        %v8477 = vsel %vm625, %v8417, 0
        %v8480 = vsel %vm625, %v8418, 0
        %v8483 = vsel %vm625, %v8419, 0
        %8485 = vmatprep.subr.bf16.mxu0 0
        %8486 = vmatpush1.bf16.msra.mxu0 0
        %8487 = vmatprep.subr.bf16.mxu0 0
        %8488 = vmatpush1.bf16.msra.mxu0 0
        %8489 = vmatprep.subr.bf16.mxu0 0
        %8490 = vmatpush1.bf16.msra.mxu0 0
        %8491 = vmatprep.subr.bf16.mxu0 0
        %8492 = vmatpush1.bf16.msra.mxu0 0
        %8493 = vmatprep.subr.bf16.mxu0 0
        %8494 = vmatpush1.bf16.msra.mxu0 0
        %8495 = vmatprep.subr.bf16.mxu0 0
        %8496 = vmatpush1.bf16.msra.mxu0 0
        %8497 = vmatprep.subr.bf16.mxu0 0
        %8498 = vmatpush1.bf16.msra.mxu0 %v8434
        %8499 = vmatprep.subr.bf16.mxu0 0
        %8500 = vmatpush1.bf16.msra.mxu0 %v8433
        %8501 = vmatprep.subr.bf16.mxu0 0
        %8502 = vmatpush2.bf16.msra.mxu0 0
        %8503 = vmatprep.subr.bf16.mxu0 0
        %8504 = vmatpush2.bf16.msra.mxu0 0
        %8505 = vmatprep.subr.bf16.mxu0 0
        %8506 = vmatpush2.bf16.msra.mxu0 0
        %8507 = vmatprep.subr.bf16.mxu0 0
        %8508 = vmatpush2.bf16.msra.mxu0 0
        %8509 = vmatprep.subr.bf16.mxu0 0
        %8510 = vmatpush2.bf16.msra.mxu0 0
        %8511 = vmatprep.subr.bf16.mxu0 0
        %8512 = vmatpush2.bf16.msra.mxu0 0
        %8513 = vmatprep.subr.bf16.mxu0 0
        %8514 = vmatpush2.bf16.msra.mxu0 0
        %8515 = vmatprep.subr.bf16.mxu0 0
        %8516 = vmatpush2.bf16.msra.mxu0 0
        %8517 = vmatprep.mubr.bf16.mxu0 0
        %8518 = vmatmul.mubr.bf16.gmra.mxu0 %v8438
        %v8519 = vpop.f32.mrf.mxu0
        %v8520 = vadd.f32 0.0, %v8519
        %v8521 = vpop.f32.mrf.mxu0
        %v8522 = vpop.f32.mrf.mxu0
        %v8523 = vadd.f32 0.0, %v8522
        %v8524 = vpop.f32.mrf.mxu0
        %8525 = vmatprep.mubr.bf16.mxu0 0
        %8526 = vmatmul.mubr.bf16.gmra.mxu0 %v8441
        %v8527 = vpop.f32.mrf.mxu0
        %v8528 = vadd.f32 0.0, %v8527
        %v8529 = vpop.f32.mrf.mxu0
        %v8530 = vpop.f32.mrf.mxu0
        %v8531 = vadd.f32 0.0, %v8530
        %v8532 = vpop.f32.mrf.mxu0
        %8533 = vmatprep.mubr.bf16.mxu0 0
        %8534 = vmatmul.mubr.bf16.gmra.mxu0 %v8444
        %v8535 = vpop.f32.mrf.mxu0
        %v8536 = vadd.f32 0.0, %v8535
        %v8537 = vpop.f32.mrf.mxu0
        %v8538 = vpop.f32.mrf.mxu0
        %v8539 = vadd.f32 0.0, %v8538
        %v8540 = vpop.f32.mrf.mxu0
        %8541 = vmatprep.mubr.bf16.mxu0 0
        %8542 = vmatmul.mubr.bf16.gmra.mxu0 %v8447
        %v8543 = vpop.f32.mrf.mxu0
        %v8544 = vadd.f32 0.0, %v8543
        %v8545 = vpop.f32.mrf.mxu0
        %v8546 = vpop.f32.mrf.mxu0
        %v8547 = vadd.f32 0.0, %v8546
        %v8548 = vpop.f32.mrf.mxu0
        %8549 = vmatprep.mubr.bf16.mxu0 0
        %8550 = vmatmul.mubr.bf16.gmra.mxu0 %v8450
        %v8551 = vpop.f32.mrf.mxu0
        %v8552 = vadd.f32 0.0, %v8551
        %v8553 = vpop.f32.mrf.mxu0
        %v8554 = vpop.f32.mrf.mxu0
        %v8555 = vadd.f32 0.0, %v8554
        %v8556 = vpop.f32.mrf.mxu0
        %8557 = vmatprep.mubr.bf16.mxu0 0
        %8558 = vmatmul.mubr.bf16.gmra.mxu0 %v8453
        %v8559 = vpop.f32.mrf.mxu0
        %v8560 = vadd.f32 0.0, %v8559
        %v8561 = vpop.f32.mrf.mxu0
        %v8562 = vpop.f32.mrf.mxu0
        %v8563 = vadd.f32 0.0, %v8562
        %v8564 = vpop.f32.mrf.mxu0
        %8565 = vmatprep.mubr.bf16.mxu0 0
        %8566 = vmatmul.mubr.bf16.gmra.mxu0 %v8456
        %v8567 = vpop.f32.mrf.mxu0
        %v8568 = vadd.f32 0.0, %v8567
        %v8569 = vpop.f32.mrf.mxu0
        %v8570 = vpop.f32.mrf.mxu0
        %v8571 = vadd.f32 0.0, %v8570
        %v8572 = vpop.f32.mrf.mxu0
        %8573 = vmatprep.mubr.bf16.mxu0 0
        %8574 = vmatmul.mubr.bf16.gmra.mxu0 %v8459
        %v8575 = vpop.f32.mrf.mxu0
        %v8576 = vadd.f32 0.0, %v8575
        %v8577 = vpop.f32.mrf.mxu0
        %v8578 = vpop.f32.mrf.mxu0
        %v8579 = vadd.f32 0.0, %v8578
        %v8580 = vpop.f32.mrf.mxu0
        %8581 = vmatprep.mubr.bf16.mxu0 0
        %8582 = vmatmul.mubr.bf16.gmra.mxu0 %v8462
        %v8583 = vpop.f32.mrf.mxu0
        %v8584 = vadd.f32 0.0, %v8583
        %v8585 = vpop.f32.mrf.mxu0
        %v8586 = vpop.f32.mrf.mxu0
        %v8587 = vadd.f32 0.0, %v8586
        %v8588 = vpop.f32.mrf.mxu0
        %8589 = vmatprep.mubr.bf16.mxu0 0
        %8590 = vmatmul.mubr.bf16.gmra.mxu0 %v8465
        %v8591 = vpop.f32.mrf.mxu0
        %v8592 = vadd.f32 0.0, %v8591
        %v8593 = vpop.f32.mrf.mxu0
        %v8594 = vpop.f32.mrf.mxu0
        %v8595 = vadd.f32 0.0, %v8594
        %v8596 = vpop.f32.mrf.mxu0
        %8597 = vmatprep.mubr.bf16.mxu0 0
        %8598 = vmatmul.mubr.bf16.gmra.mxu0 %v8468
        %v8599 = vpop.f32.mrf.mxu0
        %v8600 = vadd.f32 0.0, %v8599
        %v8601 = vpop.f32.mrf.mxu0
        %v8602 = vpop.f32.mrf.mxu0
        %v8603 = vadd.f32 0.0, %v8602
        %v8604 = vpop.f32.mrf.mxu0
        %8605 = vmatprep.mubr.bf16.mxu0 0
        %8606 = vmatmul.mubr.bf16.gmra.mxu0 %v8471
        %v8607 = vpop.f32.mrf.mxu0
        %v8608 = vadd.f32 0.0, %v8607
        %v8609 = vpop.f32.mrf.mxu0
        %v8610 = vpop.f32.mrf.mxu0
        %v8611 = vadd.f32 0.0, %v8610
        %v8612 = vpop.f32.mrf.mxu0
        %8613 = vmatprep.mubr.bf16.mxu0 0
        %8614 = vmatmul.mubr.bf16.gmra.mxu0 %v8474
        %v8615 = vpop.f32.mrf.mxu0
        %v8616 = vadd.f32 0.0, %v8615
        %v8617 = vpop.f32.mrf.mxu0
        %v8618 = vpop.f32.mrf.mxu0
        %v8619 = vadd.f32 0.0, %v8618
        %v8620 = vpop.f32.mrf.mxu0
        %8621 = vmatprep.mubr.bf16.mxu0 0
        %8622 = vmatmul.mubr.bf16.gmra.mxu0 %v8477
        %v8623 = vpop.f32.mrf.mxu0
        %v8624 = vadd.f32 0.0, %v8623
        %v8625 = vpop.f32.mrf.mxu0
        %v8626 = vpop.f32.mrf.mxu0
        %v8627 = vadd.f32 0.0, %v8626
        %v8628 = vpop.f32.mrf.mxu0
        %8629 = vmatprep.mubr.bf16.mxu0 0
        %8630 = vmatmul.mubr.bf16.gmra.mxu0 %v8480
        %v8631 = vpop.f32.mrf.mxu0
        %v8632 = vadd.f32 0.0, %v8631
        %v8633 = vpop.f32.mrf.mxu0
        %v8634 = vpop.f32.mrf.mxu0
        %v8635 = vadd.f32 0.0, %v8634
        %v8636 = vpop.f32.mrf.mxu0
        %8637 = vmatprep.mubr.bf16.mxu0 0
        %8638 = vmatmul.mubr.bf16.gmra.mxu0 %v8483
        %v8639 = vpop.f32.mrf.mxu0
        %v8640 = vadd.f32 0.0, %v8639
        %v8641 = vpop.f32.mrf.mxu0
        %v8642 = vpop.f32.mrf.mxu0
        %v8643 = vadd.f32 0.0, %v8642
        %v8644 = vpop.f32.mrf.mxu0
        %8645 = vdwg.mxu0
        %v8646 = vadd.f32 %v8340, %v8520
        %v8647 = vadd.f32 %v8341, %v8523
        %v8648 = vadd.f32 %v8342, %v8528
        %v8649 = vadd.f32 %v8343, %v8531
        %v8650 = vadd.f32 %v8344, %v8536
        %v8651 = vadd.f32 %v8345, %v8539
        %v8652 = vadd.f32 %v8346, %v8544
        %v8653 = vadd.f32 %v8347, %v8547
        %v8654 = vadd.f32 %v8348, %v8552
        %v8655 = vadd.f32 %v8349, %v8555
        %v8656 = vadd.f32 %v8350, %v8560
        %v8657 = vadd.f32 %v8351, %v8563
        %v8658 = vadd.f32 %v8352, %v8568
        %v8659 = vadd.f32 %v8353, %v8571
        %v8660 = vadd.f32 %v8354, %v8576
        %v8661 = vadd.f32 %v8355, %v8579
        %v8662 = vadd.f32 %v8356, %v8584
        %v8663 = vadd.f32 %v8357, %v8587
        %v8664 = vadd.f32 %v8358, %v8592
        %v8665 = vadd.f32 %v8359, %v8595
        %v8666 = vadd.f32 %v8360, %v8600
        %v8667 = vadd.f32 %v8361, %v8603
        %v8668 = vadd.f32 %v8362, %v8608
        %v8669 = vadd.f32 %v8363, %v8611
        %v8670 = vadd.f32 %v8364, %v8616
        %v8671 = vadd.f32 %v8365, %v8619
        %v8672 = vadd.f32 %v8366, %v8624
        %v8673 = vadd.f32 %v8367, %v8627
        %v8674 = vadd.f32 %v8368, %v8632
        %v8675 = vadd.f32 %v8369, %v8635
        %v8676 = vadd.f32 %v8370, %v8640
        %v8677 = vadd.f32 %v8371, %v8643
        %v8678 = vld [vmem:[%s8065 + $0x2] sm:$0xff]
        %v8679 = vld [vmem:[%s8065 + $0x12] sm:$0xff]
        %v8680 = vld [vmem:[%s8065 + $0x22] sm:$0xff]
        %v8681 = vld [vmem:[%s8065 + $0x32] sm:$0xff]
        %v8682 = vld [vmem:[%s8065 + $0x42] sm:$0xff]
        %v8683 = vld [vmem:[%s8065 + $0x52] sm:$0xff]
        %v8684 = vld [vmem:[%s8065 + $0x62] sm:$0xff]
        %v8685 = vld [vmem:[%s8065 + $0x72] sm:$0xff]
        %v8686 = vld [vmem:[%s8065 + $0xa2] sm:$0xff]
        %v8687 = vld [vmem:[%s8065 + $0xb2] sm:$0xff]
        %v8688 = vld [vmem:[%s8065 + $0xc2] sm:$0xff]
        %v8689 = vld [vmem:[%s8065 + $0xd2] sm:$0xff]
        %v8690 = vld [vmem:[%s8065 + $0xe2] sm:$0xff]
        %v8691 = vld [vmem:[%s8065 + $0xf2] sm:$0xff]
        %v8692 = vld [vmem:[%s8065 + $0x102] sm:$0xff]
        %v8693 = vld [vmem:[%s8065 + $0x112] sm:$0xff]
        %v8694 = vld [vmem:[%s8065 + $0x142] sm:$0xff]
        %v8695 = vld [vmem:[%s8065 + $0x152] sm:$0xff]
        %v8696 = vld [vmem:[%s8065 + $0x162] sm:$0xff]
        %v8697 = vld [vmem:[%s8065 + $0x172] sm:$0xff]
        %v8698 = vld [vmem:[%s8065 + $0x182] sm:$0xff]
        %v8699 = vld [vmem:[%s8065 + $0x192] sm:$0xff]
        %v8700 = vld [vmem:[%s8065 + $0x1a2] sm:$0xff]
        %v8701 = vld [vmem:[%s8065 + $0x1b2] sm:$0xff]
        %v8702 = vld [vmem:[%s8065 + $0x1e2] sm:$0xff]
        %v8703 = vld [vmem:[%s8065 + $0x1f2] sm:$0xff]
        %v8704 = vld [vmem:[%s8065 + $0x202] sm:$0xff]
        %v8705 = vld [vmem:[%s8065 + $0x212] sm:$0xff]
        %v8706 = vld [vmem:[%s8065 + $0x222] sm:$0xff]
        %v8707 = vld [vmem:[%s8065 + $0x232] sm:$0xff]
        %v8708 = vld [vmem:[%s8065 + $0x242] sm:$0xff]
        %v8709 = vld [vmem:[%s8065 + $0x252] sm:$0xff]
        %v8710 = vpack.c.bf16 %v8679, %v8678
        %v8711 = vpack.c.bf16 %v8681, %v8680
        %v8712 = vpack.c.bf16 %v8683, %v8682
        %v8713 = vpack.c.bf16 %v8685, %v8684
        %v8714 = vpack.c.bf16 %v8687, %v8686
        %v8715 = vpack.c.bf16 %v8689, %v8688
        %v8716 = vpack.c.bf16 %v8691, %v8690
        %v8717 = vpack.c.bf16 %v8693, %v8692
        %v8718 = vpack.c.bf16 %v8695, %v8694
        %v8719 = vpack.c.bf16 %v8697, %v8696
        %v8720 = vpack.c.bf16 %v8699, %v8698
        %v8721 = vpack.c.bf16 %v8701, %v8700
        %v8722 = vpack.c.bf16 %v8703, %v8702
        %v8723 = vpack.c.bf16 %v8705, %v8704
        %v8724 = vpack.c.bf16 %v8707, %v8706
        %v8725 = vpack.c.bf16 %v8709, %v8708
        %s8726 = scalar_lea.vmem [#allocation6], 416
        %v8727 = vld [vmem:[%s8726] sm:$0xf]
        %v8728 = vld [vmem:[%s8726 + $0x4] sm:$0xf]
        %v8729 = vld [vmem:[%s8726 + $0x8] sm:$0xf]
        %v8730 = vld [vmem:[%s8726 + $0xc] sm:$0xf]
        %v8735 = vunpack.c.l.b16 %v8727
        %v8736 = vunpack.c.l.b16 %v8728
        %v8737 = vunpack.c.l.b16 %v8729
        %v8738 = vunpack.c.l.b16 %v8730
        %v8739 = vpack.c.b16 %v8736, %v8735
        %v8740 = vpack.c.b16 %v8738, %v8737
        %v8744 = vsel %vm625, %v8710, 0
        %v8747 = vsel %vm625, %v8711, 0
        %v8750 = vsel %vm625, %v8712, 0
        %v8753 = vsel %vm625, %v8713, 0
        %v8756 = vsel %vm625, %v8714, 0
        %v8759 = vsel %vm625, %v8715, 0
        %v8762 = vsel %vm625, %v8716, 0
        %v8765 = vsel %vm625, %v8717, 0
        %v8768 = vsel %vm625, %v8718, 0
        %v8771 = vsel %vm625, %v8719, 0
        %v8774 = vsel %vm625, %v8720, 0
        %v8777 = vsel %vm625, %v8721, 0
        %v8780 = vsel %vm625, %v8722, 0
        %v8783 = vsel %vm625, %v8723, 0
        %v8786 = vsel %vm625, %v8724, 0
        %v8789 = vsel %vm625, %v8725, 0
        %8791 = vmatprep.subr.bf16.mxu0 0
        %8792 = vmatpush1.bf16.msra.mxu0 0
        %8793 = vmatprep.subr.bf16.mxu0 0
        %8794 = vmatpush1.bf16.msra.mxu0 0
        %8795 = vmatprep.subr.bf16.mxu0 0
        %8796 = vmatpush1.bf16.msra.mxu0 0
        %8797 = vmatprep.subr.bf16.mxu0 0
        %8798 = vmatpush1.bf16.msra.mxu0 0
        %8799 = vmatprep.subr.bf16.mxu0 0
        %8800 = vmatpush1.bf16.msra.mxu0 0
        %8801 = vmatprep.subr.bf16.mxu0 0
        %8802 = vmatpush1.bf16.msra.mxu0 0
        %8803 = vmatprep.subr.bf16.mxu0 0
        %8804 = vmatpush1.bf16.msra.mxu0 %v8740
        %8805 = vmatprep.subr.bf16.mxu0 0
        %8806 = vmatpush1.bf16.msra.mxu0 %v8739
        %8807 = vmatprep.subr.bf16.mxu0 0
        %8808 = vmatpush2.bf16.msra.mxu0 0
        %8809 = vmatprep.subr.bf16.mxu0 0
        %8810 = vmatpush2.bf16.msra.mxu0 0
        %8811 = vmatprep.subr.bf16.mxu0 0
        %8812 = vmatpush2.bf16.msra.mxu0 0
        %8813 = vmatprep.subr.bf16.mxu0 0
        %8814 = vmatpush2.bf16.msra.mxu0 0
        %8815 = vmatprep.subr.bf16.mxu0 0
        %8816 = vmatpush2.bf16.msra.mxu0 0
        %8817 = vmatprep.subr.bf16.mxu0 0
        %8818 = vmatpush2.bf16.msra.mxu0 0
        %8819 = vmatprep.subr.bf16.mxu0 0
        %8820 = vmatpush2.bf16.msra.mxu0 0
        %8821 = vmatprep.subr.bf16.mxu0 0
        %8822 = vmatpush2.bf16.msra.mxu0 0
        %8823 = vmatprep.mubr.bf16.mxu0 0
        %8824 = vmatmul.mubr.bf16.gmra.mxu0 %v8744
        %v8825 = vpop.f32.mrf.mxu0
        %v8826 = vadd.f32 0.0, %v8825
        %v8827 = vpop.f32.mrf.mxu0
        %v8828 = vpop.f32.mrf.mxu0
        %v8829 = vadd.f32 0.0, %v8828
        %v8830 = vpop.f32.mrf.mxu0
        %8831 = vmatprep.mubr.bf16.mxu0 0
        %8832 = vmatmul.mubr.bf16.gmra.mxu0 %v8747
        %v8833 = vpop.f32.mrf.mxu0
        %v8834 = vadd.f32 0.0, %v8833
        %v8835 = vpop.f32.mrf.mxu0
        %v8836 = vpop.f32.mrf.mxu0
        %v8837 = vadd.f32 0.0, %v8836
        %v8838 = vpop.f32.mrf.mxu0
        %8839 = vmatprep.mubr.bf16.mxu0 0
        %8840 = vmatmul.mubr.bf16.gmra.mxu0 %v8750
        %v8841 = vpop.f32.mrf.mxu0
        %v8842 = vadd.f32 0.0, %v8841
        %v8843 = vpop.f32.mrf.mxu0
        %v8844 = vpop.f32.mrf.mxu0
        %v8845 = vadd.f32 0.0, %v8844
        %v8846 = vpop.f32.mrf.mxu0
        %8847 = vmatprep.mubr.bf16.mxu0 0
        %8848 = vmatmul.mubr.bf16.gmra.mxu0 %v8753
        %v8849 = vpop.f32.mrf.mxu0
        %v8850 = vadd.f32 0.0, %v8849
        %v8851 = vpop.f32.mrf.mxu0
        %v8852 = vpop.f32.mrf.mxu0
        %v8853 = vadd.f32 0.0, %v8852
        %v8854 = vpop.f32.mrf.mxu0
        %8855 = vmatprep.mubr.bf16.mxu0 0
        %8856 = vmatmul.mubr.bf16.gmra.mxu0 %v8756
        %v8857 = vpop.f32.mrf.mxu0
        %v8858 = vadd.f32 0.0, %v8857
        %v8859 = vpop.f32.mrf.mxu0
        %v8860 = vpop.f32.mrf.mxu0
        %v8861 = vadd.f32 0.0, %v8860
        %v8862 = vpop.f32.mrf.mxu0
        %8863 = vmatprep.mubr.bf16.mxu0 0
        %8864 = vmatmul.mubr.bf16.gmra.mxu0 %v8759
        %v8865 = vpop.f32.mrf.mxu0
        %v8866 = vadd.f32 0.0, %v8865
        %v8867 = vpop.f32.mrf.mxu0
        %v8868 = vpop.f32.mrf.mxu0
        %v8869 = vadd.f32 0.0, %v8868
        %v8870 = vpop.f32.mrf.mxu0
        %8871 = vmatprep.mubr.bf16.mxu0 0
        %8872 = vmatmul.mubr.bf16.gmra.mxu0 %v8762
        %v8873 = vpop.f32.mrf.mxu0
        %v8874 = vadd.f32 0.0, %v8873
        %v8875 = vpop.f32.mrf.mxu0
        %v8876 = vpop.f32.mrf.mxu0
        %v8877 = vadd.f32 0.0, %v8876
        %v8878 = vpop.f32.mrf.mxu0
        %8879 = vmatprep.mubr.bf16.mxu0 0
        %8880 = vmatmul.mubr.bf16.gmra.mxu0 %v8765
        %v8881 = vpop.f32.mrf.mxu0
        %v8882 = vadd.f32 0.0, %v8881
        %v8883 = vpop.f32.mrf.mxu0
        %v8884 = vpop.f32.mrf.mxu0
        %v8885 = vadd.f32 0.0, %v8884
        %v8886 = vpop.f32.mrf.mxu0
        %8887 = vmatprep.mubr.bf16.mxu0 0
        %8888 = vmatmul.mubr.bf16.gmra.mxu0 %v8768
        %v8889 = vpop.f32.mrf.mxu0
        %v8890 = vadd.f32 0.0, %v8889
        %v8891 = vpop.f32.mrf.mxu0
        %v8892 = vpop.f32.mrf.mxu0
        %v8893 = vadd.f32 0.0, %v8892
        %v8894 = vpop.f32.mrf.mxu0
        %8895 = vmatprep.mubr.bf16.mxu0 0
        %8896 = vmatmul.mubr.bf16.gmra.mxu0 %v8771
        %v8897 = vpop.f32.mrf.mxu0
        %v8898 = vadd.f32 0.0, %v8897
        %v8899 = vpop.f32.mrf.mxu0
        %v8900 = vpop.f32.mrf.mxu0
        %v8901 = vadd.f32 0.0, %v8900
        %v8902 = vpop.f32.mrf.mxu0
        %8903 = vmatprep.mubr.bf16.mxu0 0
        %8904 = vmatmul.mubr.bf16.gmra.mxu0 %v8774
        %v8905 = vpop.f32.mrf.mxu0
        %v8906 = vadd.f32 0.0, %v8905
        %v8907 = vpop.f32.mrf.mxu0
        %v8908 = vpop.f32.mrf.mxu0
        %v8909 = vadd.f32 0.0, %v8908
        %v8910 = vpop.f32.mrf.mxu0
        %8911 = vmatprep.mubr.bf16.mxu0 0
        %8912 = vmatmul.mubr.bf16.gmra.mxu0 %v8777
        %v8913 = vpop.f32.mrf.mxu0
        %v8914 = vadd.f32 0.0, %v8913
        %v8915 = vpop.f32.mrf.mxu0
        %v8916 = vpop.f32.mrf.mxu0
        %v8917 = vadd.f32 0.0, %v8916
        %v8918 = vpop.f32.mrf.mxu0
        %8919 = vmatprep.mubr.bf16.mxu0 0
        %8920 = vmatmul.mubr.bf16.gmra.mxu0 %v8780
        %v8921 = vpop.f32.mrf.mxu0
        %v8922 = vadd.f32 0.0, %v8921
        %v8923 = vpop.f32.mrf.mxu0
        %v8924 = vpop.f32.mrf.mxu0
        %v8925 = vadd.f32 0.0, %v8924
        %v8926 = vpop.f32.mrf.mxu0
        %8927 = vmatprep.mubr.bf16.mxu0 0
        %8928 = vmatmul.mubr.bf16.gmra.mxu0 %v8783
        %v8929 = vpop.f32.mrf.mxu0
        %v8930 = vadd.f32 0.0, %v8929
        %v8931 = vpop.f32.mrf.mxu0
        %v8932 = vpop.f32.mrf.mxu0
        %v8933 = vadd.f32 0.0, %v8932
        %v8934 = vpop.f32.mrf.mxu0
        %8935 = vmatprep.mubr.bf16.mxu0 0
        %8936 = vmatmul.mubr.bf16.gmra.mxu0 %v8786
        %v8937 = vpop.f32.mrf.mxu0
        %v8938 = vadd.f32 0.0, %v8937
        %v8939 = vpop.f32.mrf.mxu0
        %v8940 = vpop.f32.mrf.mxu0
        %v8941 = vadd.f32 0.0, %v8940
        %v8942 = vpop.f32.mrf.mxu0
        %8943 = vmatprep.mubr.bf16.mxu0 0
        %8944 = vmatmul.mubr.bf16.gmra.mxu0 %v8789
        %v8945 = vpop.f32.mrf.mxu0
        %v8946 = vadd.f32 0.0, %v8945
        %v8947 = vpop.f32.mrf.mxu0
        %v8948 = vpop.f32.mrf.mxu0
        %v8949 = vadd.f32 0.0, %v8948
        %v8950 = vpop.f32.mrf.mxu0
        %8951 = vdwg.mxu0
        %v8952 = vadd.f32 %v8646, %v8826
        %v8953 = vadd.f32 %v8647, %v8829
        %v8954 = vadd.f32 %v8648, %v8834
        %v8955 = vadd.f32 %v8649, %v8837
        %v8956 = vadd.f32 %v8650, %v8842
        %v8957 = vadd.f32 %v8651, %v8845
        %v8958 = vadd.f32 %v8652, %v8850
        %v8959 = vadd.f32 %v8653, %v8853
        %v8960 = vadd.f32 %v8654, %v8858
        %v8961 = vadd.f32 %v8655, %v8861
        %v8962 = vadd.f32 %v8656, %v8866
        %v8963 = vadd.f32 %v8657, %v8869
        %v8964 = vadd.f32 %v8658, %v8874
        %v8965 = vadd.f32 %v8659, %v8877
        %v8966 = vadd.f32 %v8660, %v8882
        %v8967 = vadd.f32 %v8661, %v8885
        %v8968 = vadd.f32 %v8662, %v8890
        %v8969 = vadd.f32 %v8663, %v8893
        %v8970 = vadd.f32 %v8664, %v8898
        %v8971 = vadd.f32 %v8665, %v8901
        %v8972 = vadd.f32 %v8666, %v8906
        %v8973 = vadd.f32 %v8667, %v8909
        %v8974 = vadd.f32 %v8668, %v8914
        %v8975 = vadd.f32 %v8669, %v8917
        %v8976 = vadd.f32 %v8670, %v8922
        %v8977 = vadd.f32 %v8671, %v8925
        %v8978 = vadd.f32 %v8672, %v8930
        %v8979 = vadd.f32 %v8673, %v8933
        %v8980 = vadd.f32 %v8674, %v8938
        %v8981 = vadd.f32 %v8675, %v8941
        %v8982 = vadd.f32 %v8676, %v8946
        %v8983 = vadd.f32 %v8677, %v8949
        %v8984 = vld [vmem:[%s5] sm:$0x1]
        %v8986 = vlaneseq
        %v8987 = vshrl.u32 %v8986, 7
        %v8988 = vsub.s32 0, %v8987
        %v8989 = vrot.slane %v8984, %v8988
        %v8991 = vadd.f32 %v8952, %v8989
        %v8992 = vadd.f32 %v8953, %v8989
        %v8993 = vadd.f32 %v8954, %v8989
        %v8994 = vadd.f32 %v8955, %v8989
        %v8995 = vadd.f32 %v8956, %v8989
        %v8996 = vadd.f32 %v8957, %v8989
        %v8997 = vadd.f32 %v8958, %v8989
        %v8998 = vadd.f32 %v8959, %v8989
        %v8999 = vadd.f32 %v8960, %v8989
        %v9000 = vadd.f32 %v8961, %v8989
        %v9001 = vadd.f32 %v8962, %v8989
        %v9002 = vadd.f32 %v8963, %v8989
        %v9003 = vadd.f32 %v8964, %v8989
        %v9004 = vadd.f32 %v8965, %v8989
        %v9005 = vadd.f32 %v8966, %v8989
        %v9006 = vadd.f32 %v8967, %v8989
        %v9007 = vadd.f32 %v8968, %v8989
        %v9008 = vadd.f32 %v8969, %v8989
        %v9009 = vadd.f32 %v8970, %v8989
        %v9010 = vadd.f32 %v8971, %v8989
        %v9011 = vadd.f32 %v8972, %v8989
        %v9012 = vadd.f32 %v8973, %v8989
        %v9013 = vadd.f32 %v8974, %v8989
        %v9014 = vadd.f32 %v8975, %v8989
        %v9015 = vadd.f32 %v8976, %v8989
        %v9016 = vadd.f32 %v8977, %v8989
        %v9017 = vadd.f32 %v8978, %v8989
        %v9018 = vadd.f32 %v8979, %v8989
        %v9019 = vadd.f32 %v8980, %v8989
        %v9020 = vadd.f32 %v8981, %v8989
        %v9021 = vadd.f32 %v8982, %v8989
        %v9022 = vadd.f32 %v8983, %v8989
        %v9023 = vmax.f32 %v8991, 0.0
        %v9024 = vmax.f32 %v8992, 0.0
        %v9025 = vmax.f32 %v8993, 0.0
        %v9026 = vmax.f32 %v8994, 0.0
        %v9027 = vmax.f32 %v8995, 0.0
        %v9028 = vmax.f32 %v8996, 0.0
        %v9029 = vmax.f32 %v8997, 0.0
        %v9030 = vmax.f32 %v8998, 0.0
        %v9031 = vmax.f32 %v8999, 0.0
        %v9032 = vmax.f32 %v9000, 0.0
        %v9033 = vmax.f32 %v9001, 0.0
        %v9034 = vmax.f32 %v9002, 0.0
        %v9035 = vmax.f32 %v9003, 0.0
        %v9036 = vmax.f32 %v9004, 0.0
        %v9037 = vmax.f32 %v9005, 0.0
        %v9038 = vmax.f32 %v9006, 0.0
        %v9039 = vmax.f32 %v9007, 0.0
        %v9040 = vmax.f32 %v9008, 0.0
        %v9041 = vmax.f32 %v9009, 0.0
        %v9042 = vmax.f32 %v9010, 0.0
        %v9043 = vmax.f32 %v9011, 0.0
        %v9044 = vmax.f32 %v9012, 0.0
        %v9045 = vmax.f32 %v9013, 0.0
        %v9046 = vmax.f32 %v9014, 0.0
        %v9047 = vmax.f32 %v9015, 0.0
        %v9048 = vmax.f32 %v9016, 0.0
        %v9049 = vmax.f32 %v9017, 0.0
        %v9050 = vmax.f32 %v9018, 0.0
        %v9051 = vmax.f32 %v9019, 0.0
        %v9052 = vmax.f32 %v9020, 0.0
        %v9053 = vmax.f32 %v9021, 0.0
        %v9054 = vmax.f32 %v9022, 0.0
        %v9055 = vpack.c.bf16 %v9024, %v9023
        %v9056 = vpack.c.bf16 %v9026, %v9025
        %v9057 = vpack.c.bf16 %v9028, %v9027
        %v9058 = vpack.c.bf16 %v9030, %v9029
        %v9059 = vpack.c.bf16 %v9032, %v9031
        %v9060 = vpack.c.bf16 %v9034, %v9033
        %v9061 = vpack.c.bf16 %v9036, %v9035
        %v9062 = vpack.c.bf16 %v9038, %v9037
        %v9063 = vpack.c.bf16 %v9040, %v9039
        %v9064 = vpack.c.bf16 %v9042, %v9041
        %v9065 = vpack.c.bf16 %v9044, %v9043
        %v9066 = vpack.c.bf16 %v9046, %v9045
        %v9067 = vpack.c.bf16 %v9048, %v9047
        %v9068 = vpack.c.bf16 %v9050, %v9049
        %v9069 = vpack.c.bf16 %v9052, %v9051
        %v9070 = vpack.c.bf16 %v9054, %v9053
        %v9071 = vld [vmem:[%s3] sm:$0xf]
        %v9072 = vld [vmem:[%s3 + $0x4] sm:$0xf]
        %v9073 = vld [vmem:[%s3 + $0x8] sm:$0xf]
        %v9074 = vld [vmem:[%s3 + $0xc] sm:$0xf]
        %v9075 = vld [vmem:[%s6] sm:$0x1]
        %v9077 = vlaneseq
        %v9078 = vshrl.u32 %v9077, 7
        %v9079 = vsub.s32 0, %v9078
        %v9080 = vrot.slane %v9075, %v9079
        %v9086 = vunpack.c.l.b16 %v9071
        %v9087 = vunpack.c.l.b16 %v9072
        %v9088 = vunpack.c.l.b16 %v9073
        %v9089 = vunpack.c.l.b16 %v9074
        %v9090 = vpack.c.b16 %v9087, %v9086
        %v9091 = vpack.c.b16 %v9089, %v9088
        %v9095 = vsel %vm625, %v9055, 0
        %v9098 = vsel %vm625, %v9056, 0
        %v9101 = vsel %vm625, %v9057, 0
        %v9104 = vsel %vm625, %v9058, 0
        %v9107 = vsel %vm625, %v9059, 0
        %v9110 = vsel %vm625, %v9060, 0
        %v9113 = vsel %vm625, %v9061, 0
        %v9116 = vsel %vm625, %v9062, 0
        %v9119 = vsel %vm625, %v9063, 0
        %v9122 = vsel %vm625, %v9064, 0
        %v9125 = vsel %vm625, %v9065, 0
        %v9128 = vsel %vm625, %v9066, 0
        %v9131 = vsel %vm625, %v9067, 0
        %v9134 = vsel %vm625, %v9068, 0
        %v9137 = vsel %vm625, %v9069, 0
        %v9140 = vsel %vm625, %v9070, 0
        %9142 = vmatprep.subr.bf16.mxu0 0
        %9143 = vmatpush1.bf16.msra.mxu0 0
        %9144 = vmatprep.subr.bf16.mxu0 0
        %9145 = vmatpush1.bf16.msra.mxu0 0
        %9146 = vmatprep.subr.bf16.mxu0 0
        %9147 = vmatpush1.bf16.msra.mxu0 0
        %9148 = vmatprep.subr.bf16.mxu0 0
        %9149 = vmatpush1.bf16.msra.mxu0 0
        %9150 = vmatprep.subr.bf16.mxu0 0
        %9151 = vmatpush1.bf16.msra.mxu0 0
        %9152 = vmatprep.subr.bf16.mxu0 0
        %9153 = vmatpush1.bf16.msra.mxu0 0
        %9154 = vmatprep.subr.bf16.mxu0 0
        %9155 = vmatpush1.bf16.msra.mxu0 %v9091
        %9156 = vmatprep.subr.bf16.mxu0 0
        %9157 = vmatpush1.bf16.msra.mxu0 %v9090
        %9158 = vmatprep.subr.bf16.mxu0 0
        %9159 = vmatpush2.bf16.msra.mxu0 0
        %9160 = vmatprep.subr.bf16.mxu0 0
        %9161 = vmatpush2.bf16.msra.mxu0 0
        %9162 = vmatprep.subr.bf16.mxu0 0
        %9163 = vmatpush2.bf16.msra.mxu0 0
        %9164 = vmatprep.subr.bf16.mxu0 0
        %9165 = vmatpush2.bf16.msra.mxu0 0
        %9166 = vmatprep.subr.bf16.mxu0 0
        %9167 = vmatpush2.bf16.msra.mxu0 0
        %9168 = vmatprep.subr.bf16.mxu0 0
        %9169 = vmatpush2.bf16.msra.mxu0 0
        %9170 = vmatprep.subr.bf16.mxu0 0
        %9171 = vmatpush2.bf16.msra.mxu0 0
        %9172 = vmatprep.subr.bf16.mxu0 0
        %9173 = vmatpush2.bf16.msra.mxu0 0
        %9174 = vmatprep.mubr.bf16.mxu0 0
        %9175 = vmatmul.mubr.bf16.gmra.mxu0 %v9095
        %v9176 = vpop.f32.mrf.mxu0
        %v9177 = vadd.f32 %v9080, %v9176
        %v9178 = vpop.f32.mrf.mxu0
        %v9179 = vpop.f32.mrf.mxu0
        %v9180 = vadd.f32 %v9080, %v9179
        %v9181 = vpop.f32.mrf.mxu0
        %9182 = vmatprep.mubr.bf16.mxu0 0
        %9183 = vmatmul.mubr.bf16.gmra.mxu0 %v9098
        %v9184 = vpop.f32.mrf.mxu0
        %v9185 = vadd.f32 %v9080, %v9184
        %v9186 = vpop.f32.mrf.mxu0
        %v9187 = vpop.f32.mrf.mxu0
        %v9188 = vadd.f32 %v9080, %v9187
        %v9189 = vpop.f32.mrf.mxu0
        %9190 = vmatprep.mubr.bf16.mxu0 0
        %9191 = vmatmul.mubr.bf16.gmra.mxu0 %v9101
        %v9192 = vpop.f32.mrf.mxu0
        %v9193 = vadd.f32 %v9080, %v9192
        %v9194 = vpop.f32.mrf.mxu0
        %v9195 = vpop.f32.mrf.mxu0
        %v9196 = vadd.f32 %v9080, %v9195
        %v9197 = vpop.f32.mrf.mxu0
        %9198 = vmatprep.mubr.bf16.mxu0 0
        %9199 = vmatmul.mubr.bf16.gmra.mxu0 %v9104
        %v9200 = vpop.f32.mrf.mxu0
        %v9201 = vadd.f32 %v9080, %v9200
        %v9202 = vpop.f32.mrf.mxu0
        %v9203 = vpop.f32.mrf.mxu0
        %v9204 = vadd.f32 %v9080, %v9203
        %v9205 = vpop.f32.mrf.mxu0
        %9206 = vmatprep.mubr.bf16.mxu0 0
        %9207 = vmatmul.mubr.bf16.gmra.mxu0 %v9107
        %v9208 = vpop.f32.mrf.mxu0
        %v9209 = vadd.f32 %v9080, %v9208
        %v9210 = vpop.f32.mrf.mxu0
        %v9211 = vpop.f32.mrf.mxu0
        %v9212 = vadd.f32 %v9080, %v9211
        %v9213 = vpop.f32.mrf.mxu0
        %9214 = vmatprep.mubr.bf16.mxu0 0
        %9215 = vmatmul.mubr.bf16.gmra.mxu0 %v9110
        %v9216 = vpop.f32.mrf.mxu0
        %v9217 = vadd.f32 %v9080, %v9216
        %v9218 = vpop.f32.mrf.mxu0
        %v9219 = vpop.f32.mrf.mxu0
        %v9220 = vadd.f32 %v9080, %v9219
        %v9221 = vpop.f32.mrf.mxu0
        %9222 = vmatprep.mubr.bf16.mxu0 0
        %9223 = vmatmul.mubr.bf16.gmra.mxu0 %v9113
        %v9224 = vpop.f32.mrf.mxu0
        %v9225 = vadd.f32 %v9080, %v9224
        %v9226 = vpop.f32.mrf.mxu0
        %v9227 = vpop.f32.mrf.mxu0
        %v9228 = vadd.f32 %v9080, %v9227
        %v9229 = vpop.f32.mrf.mxu0
        %9230 = vmatprep.mubr.bf16.mxu0 0
        %9231 = vmatmul.mubr.bf16.gmra.mxu0 %v9116
        %v9232 = vpop.f32.mrf.mxu0
        %v9233 = vadd.f32 %v9080, %v9232
        %v9234 = vpop.f32.mrf.mxu0
        %v9235 = vpop.f32.mrf.mxu0
        %v9236 = vadd.f32 %v9080, %v9235
        %v9237 = vpop.f32.mrf.mxu0
        %9238 = vmatprep.mubr.bf16.mxu0 0
        %9239 = vmatmul.mubr.bf16.gmra.mxu0 %v9119
        %v9240 = vpop.f32.mrf.mxu0
        %v9241 = vadd.f32 %v9080, %v9240
        %v9242 = vpop.f32.mrf.mxu0
        %v9243 = vpop.f32.mrf.mxu0
        %v9244 = vadd.f32 %v9080, %v9243
        %v9245 = vpop.f32.mrf.mxu0
        %9246 = vmatprep.mubr.bf16.mxu0 0
        %9247 = vmatmul.mubr.bf16.gmra.mxu0 %v9122
        %v9248 = vpop.f32.mrf.mxu0
        %v9249 = vadd.f32 %v9080, %v9248
        %v9250 = vpop.f32.mrf.mxu0
        %v9251 = vpop.f32.mrf.mxu0
        %v9252 = vadd.f32 %v9080, %v9251
        %v9253 = vpop.f32.mrf.mxu0
        %9254 = vmatprep.mubr.bf16.mxu0 0
        %9255 = vmatmul.mubr.bf16.gmra.mxu0 %v9125
        %v9256 = vpop.f32.mrf.mxu0
        %v9257 = vadd.f32 %v9080, %v9256
        %v9258 = vpop.f32.mrf.mxu0
        %v9259 = vpop.f32.mrf.mxu0
        %v9260 = vadd.f32 %v9080, %v9259
        %v9261 = vpop.f32.mrf.mxu0
        %9262 = vmatprep.mubr.bf16.mxu0 0
        %9263 = vmatmul.mubr.bf16.gmra.mxu0 %v9128
        %v9264 = vpop.f32.mrf.mxu0
        %v9265 = vadd.f32 %v9080, %v9264
        %v9266 = vpop.f32.mrf.mxu0
        %v9267 = vpop.f32.mrf.mxu0
        %v9268 = vadd.f32 %v9080, %v9267
        %v9269 = vpop.f32.mrf.mxu0
        %9270 = vmatprep.mubr.bf16.mxu0 0
        %9271 = vmatmul.mubr.bf16.gmra.mxu0 %v9131
        %v9272 = vpop.f32.mrf.mxu0
        %v9273 = vadd.f32 %v9080, %v9272
        %v9274 = vpop.f32.mrf.mxu0
        %v9275 = vpop.f32.mrf.mxu0
        %v9276 = vadd.f32 %v9080, %v9275
        %v9277 = vpop.f32.mrf.mxu0
        %9278 = vmatprep.mubr.bf16.mxu0 0
        %9279 = vmatmul.mubr.bf16.gmra.mxu0 %v9134
        %v9280 = vpop.f32.mrf.mxu0
        %v9281 = vadd.f32 %v9080, %v9280
        %v9282 = vpop.f32.mrf.mxu0
        %v9283 = vpop.f32.mrf.mxu0
        %v9284 = vadd.f32 %v9080, %v9283
        %v9285 = vpop.f32.mrf.mxu0
        %9286 = vmatprep.mubr.bf16.mxu0 0
        %9287 = vmatmul.mubr.bf16.gmra.mxu0 %v9137
        %v9288 = vpop.f32.mrf.mxu0
        %v9289 = vadd.f32 %v9080, %v9288
        %v9290 = vpop.f32.mrf.mxu0
        %v9291 = vpop.f32.mrf.mxu0
        %v9292 = vadd.f32 %v9080, %v9291
        %v9293 = vpop.f32.mrf.mxu0
        %9294 = vmatprep.mubr.bf16.mxu0 0
        %9295 = vmatmul.mubr.bf16.gmra.mxu0 %v9140
        %v9296 = vpop.f32.mrf.mxu0
        %v9297 = vadd.f32 %v9080, %v9296
        %v9298 = vpop.f32.mrf.mxu0
        %v9299 = vpop.f32.mrf.mxu0
        %v9300 = vadd.f32 %v9080, %v9299
        %v9301 = vpop.f32.mrf.mxu0
        %9302 = vdwg.mxu0
        %v9303 = vadd.f32 %v9177, %v313
        %v9304 = vadd.f32 %v9180, %v314
        %v9305 = vadd.f32 %v9185, %v315
        %v9306 = vadd.f32 %v9188, %v316
        %v9307 = vadd.f32 %v9193, %v317
        %v9308 = vadd.f32 %v9196, %v318
        %v9309 = vadd.f32 %v9201, %v319
        %v9310 = vadd.f32 %v9204, %v320
        %v9311 = vadd.f32 %v9209, %v321
        %v9312 = vadd.f32 %v9212, %v322
        %v9313 = vadd.f32 %v9217, %v323
        %v9314 = vadd.f32 %v9220, %v324
        %v9315 = vadd.f32 %v9225, %v325
        %v9316 = vadd.f32 %v9228, %v326
        %v9317 = vadd.f32 %v9233, %v327
        %v9318 = vadd.f32 %v9236, %v328
        %v9319 = vadd.f32 %v9241, %v329
        %v9320 = vadd.f32 %v9244, %v330
        %v9321 = vadd.f32 %v9249, %v331
        %v9322 = vadd.f32 %v9252, %v332
        %v9323 = vadd.f32 %v9257, %v333
        %v9324 = vadd.f32 %v9260, %v334
        %v9325 = vadd.f32 %v9265, %v335
        %v9326 = vadd.f32 %v9268, %v336
        %v9327 = vadd.f32 %v9273, %v337
        %v9328 = vadd.f32 %v9276, %v338
        %v9329 = vadd.f32 %v9281, %v339
        %v9330 = vadd.f32 %v9284, %v340
        %v9331 = vadd.f32 %v9289, %v341
        %v9332 = vadd.f32 %v9292, %v342
        %v9333 = vadd.f32 %v9297, %v343
        %v9334 = vadd.f32 %v9300, %v344
        %v9335 = vmax.f32 %v9303, 0.0
        %v9336 = vmax.f32 %v9304, 0.0
        %v9337 = vmax.f32 %v9305, 0.0
        %v9338 = vmax.f32 %v9306, 0.0
        %v9339 = vmax.f32 %v9307, 0.0
        %v9340 = vmax.f32 %v9308, 0.0
        %v9341 = vmax.f32 %v9309, 0.0
        %v9342 = vmax.f32 %v9310, 0.0
        %v9343 = vmax.f32 %v9311, 0.0
        %v9344 = vmax.f32 %v9312, 0.0
        %v9345 = vmax.f32 %v9313, 0.0
        %v9346 = vmax.f32 %v9314, 0.0
        %v9347 = vmax.f32 %v9315, 0.0
        %v9348 = vmax.f32 %v9316, 0.0
        %v9349 = vmax.f32 %v9317, 0.0
        %v9350 = vmax.f32 %v9318, 0.0
        %v9351 = vmax.f32 %v9319, 0.0
        %v9352 = vmax.f32 %v9320, 0.0
        %v9353 = vmax.f32 %v9321, 0.0
        %v9354 = vmax.f32 %v9322, 0.0
        %v9355 = vmax.f32 %v9323, 0.0
        %v9356 = vmax.f32 %v9324, 0.0
        %v9357 = vmax.f32 %v9325, 0.0
        %v9358 = vmax.f32 %v9326, 0.0
        %v9359 = vmax.f32 %v9327, 0.0
        %v9360 = vmax.f32 %v9328, 0.0
        %v9361 = vmax.f32 %v9329, 0.0
        %v9362 = vmax.f32 %v9330, 0.0
        %v9363 = vmax.f32 %v9331, 0.0
        %v9364 = vmax.f32 %v9332, 0.0
        %v9365 = vmax.f32 %v9333, 0.0
        %v9366 = vmax.f32 %v9334, 0.0
        %9367 = vst [vmem:[%s311] sm:$0xff] %v9335
        %9368 = vst [vmem:[%s311 + $0x8] sm:$0xff] %v9336
        %9369 = vst [vmem:[%s311 + $0x10] sm:$0xff] %v9337
        %9370 = vst [vmem:[%s311 + $0x18] sm:$0xff] %v9338
        %9371 = vst [vmem:[%s311 + $0x20] sm:$0xff] %v9339
        %9372 = vst [vmem:[%s311 + $0x28] sm:$0xff] %v9340
        %9373 = vst [vmem:[%s311 + $0x30] sm:$0xff] %v9341
        %9374 = vst [vmem:[%s311 + $0x38] sm:$0xff] %v9342
        %9375 = vst [vmem:[%s311 + $0x40] sm:$0xff] %v9343
        %9376 = vst [vmem:[%s311 + $0x48] sm:$0xff] %v9344
        %9377 = vst [vmem:[%s311 + $0x50] sm:$0xff] %v9345
        %9378 = vst [vmem:[%s311 + $0x58] sm:$0xff] %v9346
        %9379 = vst [vmem:[%s311 + $0x60] sm:$0xff] %v9347
        %9380 = vst [vmem:[%s311 + $0x68] sm:$0xff] %v9348
        %9381 = vst [vmem:[%s311 + $0x70] sm:$0xff] %v9349
        %9382 = vst [vmem:[%s311 + $0x78] sm:$0xff] %v9350
        %9383 = vst [vmem:[%s311 + $0x80] sm:$0xff] %v9351
        %9384 = vst [vmem:[%s311 + $0x88] sm:$0xff] %v9352
        %9385 = vst [vmem:[%s311 + $0x90] sm:$0xff] %v9353
        %9386 = vst [vmem:[%s311 + $0x98] sm:$0xff] %v9354
        %9387 = vst [vmem:[%s311 + $0xa0] sm:$0xff] %v9355
        %9388 = vst [vmem:[%s311 + $0xa8] sm:$0xff] %v9356
        %9389 = vst [vmem:[%s311 + $0xb0] sm:$0xff] %v9357
        %9390 = vst [vmem:[%s311 + $0xb8] sm:$0xff] %v9358
        %9391 = vst [vmem:[%s311 + $0xc0] sm:$0xff] %v9359
        %9392 = vst [vmem:[%s311 + $0xc8] sm:$0xff] %v9360
        %9393 = vst [vmem:[%s311 + $0xd0] sm:$0xff] %v9361
        %9394 = vst [vmem:[%s311 + $0xd8] sm:$0xff] %v9362
        %9395 = vst [vmem:[%s311 + $0xe0] sm:$0xff] %v9363
        %9396 = vst [vmem:[%s311 + $0xe8] sm:$0xff] %v9364
        %9397 = vst [vmem:[%s311 + $0xf0] sm:$0xff] %v9365
        %9398 = vst [vmem:[%s311 + $0xf8] sm:$0xff] %v9366
        %s9399 = sand.u32 %s185, 1
        %s9400 = scalar_lea.sflag [#allocation5], %s9399
        %s9401 = sand.u32 %s185, 1
        %s9402 = smul.addr %s9401, 256
        %s9403 = scalar_lea.vmem [#allocation8], %s9402
        // Predicated region
        $region57: #{tpu_custom_call.1} parent=47 // pred_check
          %p9404 = pneg %p195
        $region58: #{tpu_custom_call.1} parent=47 // pred_check_branch
          %9406 = sbr.rel (%p9404) target = $region60
        $region59: #{tpu_custom_call.1} parent=47 // pred_region
          %s9408 = ssub.s32 4096, 4096
          %9409 = vsyncadd %s9400, %s9408
          %s9410 = smul.addr %s25, 32
          %s9411 = smul.addr %s9410, 128
          %s9412 = scalar_lea.hbm %s7, %s9411
          %s9413 = sshll.u32 %s9403, 4
          %s9414 = int_to_ptr.vmem [resolvable:$true] %s9413
          %9419 = dma.vmem_to_hbm [thread:$0]  %s9414, 4096, %s9412, %s9400, 128, 128, 8
        $region60: #{tpu_custom_call.1} parent=47 // pred_fallthru
          _
      $region48: #{tpu_custom_call.1} parent=5 // pred_fallthru
        _
      %p9420 = scmp.le.s32.totalorder 2, %s20
      // Predicated region
      $region61: #{tpu_custom_call.1} parent=5 // pred_check
        %p9421 = pneg %p9420
      $region62: #{tpu_custom_call.1} parent=5 // pred_check_branch
        %9423 = sbr.rel (%p9421) target = $region64
      $region63: #{tpu_custom_call.1} parent=5 // pred_region
        %s9424 = ssub.s32 %s20, 2
        // Predicated region
        $region65: #{tpu_custom_call.1} parent=63 // pred_check
          %p9425 = pneg %p201
        $region66: #{tpu_custom_call.1} parent=63 // pred_check_branch
          %9427 = sbr.rel (%p9425) target = $region68
        $region67: #{tpu_custom_call.1} parent=63 // pred_region
          %s9428 = sand.u32 %s186, 1
          %s9429 = scalar_lea.sflag [#allocation5], %s9428
          %s9430 = sand.u32 %s186, 1
          %s9431 = smul.addr %s9430, 256
          %s9432 = scalar_lea.vmem [#allocation8], %s9431
          %9433 = dma.done %s9429, 4096
        $region68: #{tpu_custom_call.1} parent=63 // pred_fallthru
          _
      $region64: #{tpu_custom_call.1} parent=5 // pred_fallthru
        _
    $region6: #{tpu_custom_call.1} parent=1 // loop_footer
      %s24 = sadd.s32 1, %s20
    $region7: #{tpu_custom_call.1} parent=1 // loop_footer_branch
      %19 = sbr.rel target = $region3
    $region8: #{tpu_custom_call.1} parent=1 // loop_exit
      _
    %9434 = vsyncpa [#allocation4], 1
    %s9435 = scalar_lea.sflag [#allocation4], 1
    %9436 = vsyncpa %s9435, 1
    %9437 = vsyncpa [#allocation7], 1
    %9438 = vsyncpa [#allocation5], 1
    %s9439 = scalar_lea.sflag [#allocation5], 1
    %9440 = vsyncpa %s9439, 1

</llo_original>
